<compile_context>
chip_gen: v7x
topology: tpu7x:2x2x1
jax: 0.10.0
libtpu: 0.0.40
codegen_flags: <defaults>
</compile_context>

<pallas_src>
import functools

import jax
import jax.numpy as jnp
from jax.experimental import pallas as pl
from jax.experimental.pallas import tpu as pltpu

GROUPS = 16
EPS = 1e-5
COMPUTE_DTYPE = jnp.bfloat16   # MXU operand dtype (accumulation stays f32)


# --------------------------- kernel 1: upconv -------------------------------

def _upconv_phase_kernel(x_ref, w_ref, b_ref, o_ref, *, H, W, Cout, compute_dtype):
    """ConvTranspose2d(k=4, s=2, p=1) via 4-phase decomposition.

    x_ref: (1, (H+2)*(W+2), Cin)  zero-padded input image, flattened row-major.
    w_ref: (16, Cin, Cout)        per-(phase, 2x2-tap) weight slices.
    b_ref: (1, 4*Cout)            bias tiled across the 4 phase blocks.
    o_ref: (1, H*W, 4*Cout)       phase-packed, lane-dense output:
           o[u*W + v, (2*py+px)*Cout + co] = upconv[2u+py, 2v+px, co]
    """
    Wp = W + 2
    R = (H - 1) * Wp + W              # contiguous "run" covering every valid (u, v)
    xv = x_ref[0]                     # ((H+2)*(W+2), Cin) f32
    phases = []
    for py in range(2):
        for px in range(2):
            acc = jnp.zeros((R, Cout), jnp.float32)
            for a in range(2):
                for bb in range(2):
                    s = (py + a) * Wp + (px + bb)
                    idx = py * 8 + px * 4 + a * 2 + bb
                    acc = acc + jnp.dot(
                        xv[s:s + R, :].astype(compute_dtype),
                        w_ref[idx],
                        preferred_element_type=jnp.float32)
            phases.append(acc)
    p_all = jnp.concatenate(phases, axis=-1) + b_ref[...]    # (R, 4*Cout)
    for u in range(H):                # compact: drop the (Wp - W) pad columns
        o_ref[0, u * W:(u + 1) * W, :] = (
            p_all[u * Wp:u * Wp + W, :].astype(o_ref.dtype))


def upconv_phases(xpf, w_ph, bias4, *, H, W):
    B, HpWp, Cin = xpf.shape
    Cout = w_ph.shape[-1]
    kernel = functools.partial(_upconv_phase_kernel, H=H, W=W, Cout=Cout,
                               compute_dtype=COMPUTE_DTYPE)
    return pl.pallas_call(
        kernel,
        out_shape=jax.ShapeDtypeStruct((B, H * W, 4 * Cout), jnp.float32),
        grid_spec=pltpu.PrefetchScalarGridSpec(
            num_scalar_prefetch=0,
            grid=(B,),
            in_specs=[
                pl.BlockSpec((1, HpWp, Cin), lambda b: (b, 0, 0)),
                pl.BlockSpec((16, Cin, Cout), lambda b: (0, 0, 0)),
                pl.BlockSpec((1, 4 * Cout), lambda b: (0, 0)),
            ],
            out_specs=pl.BlockSpec((1, H * W, 4 * Cout), lambda b: (b, 0, 0)),
        ),
        compiler_params=pltpu.CompilerParams(
            dimension_semantics=("parallel",),
            vmem_limit_bytes=32 * 1024 * 1024,
        ),
    )(xpf, w_ph, bias4)


# ------------------ kernel 2/3: fused GroupNorm + Conv3x3 -------------------

def _gn_conv3x3_kernel(*refs, has_residual, Hi, Wi, cpg, eps, apply_silu,
                       compute_dtype):
    """GroupNorm(16, C) fused with Conv2d(C->Cout, k=3, p=1) (+ optional SiLU).

    Spatial tensors are zero-padded (1 ring) images flattened row-major to
    ((Hi+2)*(Wi+2), channels); pad positions are exactly zero, so plain sums
    give valid-only statistics.  Output uses the same padded-flat layout so the
    next stage can consume it directly.
    """
    if has_residual:
        (x_ref, r_ref, mask_ref, gmat_ref, gam_ref, bet_ref,
         w_ref, b_ref, o_ref) = refs
    else:
        (x_ref, mask_ref, gmat_ref, gam_ref, bet_ref,
         w_ref, b_ref, o_ref) = refs
        r_ref = None
    Wp = Wi + 2
    F = (Hi + 2) * Wp
    R = (Hi - 1) * Wp + Wi
    base = Wp + 1
    Cout = o_ref.shape[-1]

    x = x_ref[0]
    if has_residual:                          # torch.cat(dim=1), done on lanes
        x = jnp.concatenate([x, r_ref[0]], axis=-1)
    mask = mask_ref[...]                      # (F, 1), 1.0 on the interior

    # GroupNorm statistics: VPU row-reductions + one tiny symmetric matmul.
    s1 = jnp.sum(x, axis=0, keepdims=True)
    s2 = jnp.sum(x * x, axis=0, keepdims=True)
    st = jnp.concatenate([s1, s2], axis=0)    # (2, C)
    grp = jnp.dot(st, gmat_ref[...], preferred_element_type=jnp.float32)
    inv_n = 1.0 / float(Hi * Wi * cpg)
    mean = grp[0:1, :] * inv_n
    var = jnp.maximum(grp[1:2, :] * inv_n - mean * mean, 0.0)
    scale = jax.lax.rsqrt(var + eps) * gam_ref[...]
    xn = ((x - mean) * scale + bet_ref[...]) * mask     # pads stay exactly zero

    # 3x3 conv: 9 row-shifted matmuls (in-VMEM, no materialized patch matrix).
    acc = jnp.zeros((R, Cout), jnp.float32)
    for t in range(9):
        dy, dx = t // 3 - 1, t % 3 - 1
        off = base + dy * Wp + dx
        acc = acc + jnp.dot(xn[off:off + R, :].astype(compute_dtype),
                            w_ref[t],
                            preferred_element_type=jnp.float32)
    acc = acc + b_ref[...]
    if apply_silu:
        acc = acc * jax.nn.sigmoid(acc)
    acc = acc * mask[base:base + R, :]        # re-zero the pad columns

    o_ref[0, 0:base, :] = jnp.zeros((base, Cout), o_ref.dtype)
    o_ref[0, base:base + R, :] = acc.astype(o_ref.dtype)
    o_ref[0, base + R:F, :] = jnp.zeros((F - base - R, Cout), o_ref.dtype)


def gn_conv3x3(x_pf, res_pf, mask, gmat, gamma, beta, w_taps, bias, *,
               Hi, Wi, cpg, apply_silu):
    B, F, Cx = x_pf.shape
    C = gmat.shape[0]
    Cout = w_taps.shape[-1]
    has_res = res_pf is not None
    kernel = functools.partial(
        _gn_conv3x3_kernel, has_residual=has_res, Hi=Hi, Wi=Wi, cpg=cpg,
        eps=EPS, apply_silu=apply_silu, compute_dtype=COMPUTE_DTYPE)

    in_specs = [pl.BlockSpec((1, F, Cx), lambda b: (b, 0, 0))]
    args = [x_pf]
    if has_res:
        Crs = res_pf.shape[-1]
        in_specs.append(pl.BlockSpec((1, F, Crs), lambda b: (b, 0, 0)))
        args.append(res_pf)
    in_specs += [
        pl.BlockSpec((F, 1), lambda b: (0, 0)),          # interior mask
        pl.BlockSpec((C, C), lambda b: (0, 0)),          # group-aggregation matrix
        pl.BlockSpec((1, C), lambda b: (0, 0)),          # gamma
        pl.BlockSpec((1, C), lambda b: (0, 0)),          # beta
        pl.BlockSpec((9, C, Cout), lambda b: (0, 0, 0)),  # conv tap weights
        pl.BlockSpec((1, Cout), lambda b: (0, 0)),       # conv bias
    ]
    args += [mask, gmat, gamma, beta, w_taps, bias]

    return pl.pallas_call(
        kernel,
        out_shape=jax.ShapeDtypeStruct((B, F, Cout), jnp.float32),
        grid_spec=pltpu.PrefetchScalarGridSpec(
            num_scalar_prefetch=0,
            grid=(B,),
            in_specs=in_specs,
            out_specs=pl.BlockSpec((1, F, Cout), lambda b: (b, 0, 0)),
        ),
        compiler_params=pltpu.CompilerParams(
            dimension_semantics=("parallel",),
            vmem_limit_bytes=32 * 1024 * 1024,
        ),
    )(*args)


# ------------------------------- parameters ---------------------------------

def init_upblock_params(key, in_channels, residual_channels, out_channels):
    """PyTorch-layout parameters (mirrors the nn.Module state_dict layouts)."""
    cat_ch = out_channels + residual_channels
    ks = jax.random.split(key, 10)
    n = lambda k, shape: 0.05 * jax.random.normal(k, shape, jnp.float32)
    return {
        "upconv_w": n(ks[0], (in_channels, out_channels, 4, 4)),
        "upconv_b": n(ks[1], (out_channels,)),
        "gn1_gamma": 1.0 + n(ks[2], (cat_ch,)),
        "gn1_beta": n(ks[3], (cat_ch,)),
        "conv1_w": n(ks[4], (out_channels, cat_ch, 3, 3)),
        "conv1_b": n(ks[5], (out_channels,)),
        "gn2_gamma": 1.0 + n(ks[6], (out_channels,)),
        "gn2_beta": n(ks[7], (out_channels,)),
        "conv2_w": n(ks[8], (out_channels, out_channels, 3, 3)),
        "conv2_b": n(ks[9], (out_channels,)),
    }


def _group_agg_matrix(C, groups):
    g = jnp.arange(C) // (C // groups)
    return (g[:, None] == g[None, :]).astype(jnp.float32)   # (C, C), symmetric


def prepare_upblock_params(p, groups=GROUPS, compute_dtype=COMPUTE_DTYPE):
    """One-time conversion of PyTorch-layout weights into kernel (GEMM) layouts."""
    Cin, Cout = p["upconv_w"].shape[0], p["upconv_w"].shape[1]
    cat_ch = p["gn1_gamma"].shape[0]
    # ConvTranspose2d 4x4/s2/p1 -> per-(output phase, 2x2 tap) weight slices.
    taps = []
    w = p["upconv_w"]
    for py in range(2):
        for px in range(2):
            for a in range(2):
                for bb in range(2):
                    taps.append(w[:, :, 3 - py - 2 * a, 3 - px - 2 * bb])
    return {
        "upconv_w_ph": jnp.stack(taps, axis=0).astype(compute_dtype),   # (16,Cin,Cout)
        "upconv_b4": jnp.tile(p["upconv_b"], 4).reshape(1, 4 * Cout)
                        .astype(jnp.float32),
        "gn1_gamma": p["gn1_gamma"].reshape(1, cat_ch),
        "gn1_beta": p["gn1_beta"].reshape(1, cat_ch),
        "gmat1": _group_agg_matrix(cat_ch, groups),
        "conv1_w": jnp.transpose(p["conv1_w"], (2, 3, 1, 0))
                      .reshape(9, cat_ch, Cout).astype(compute_dtype),
        "conv1_b": p["conv1_b"].reshape(1, Cout),
        "gn2_gamma": p["gn2_gamma"].reshape(1, Cout),
        "gn2_beta": p["gn2_beta"].reshape(1, Cout),
        "gmat2": _group_agg_matrix(Cout, groups),
        "conv2_w": jnp.transpose(p["conv2_w"], (2, 3, 1, 0))
                      .reshape(9, Cout, Cout).astype(compute_dtype),
        "conv2_b": p["conv2_b"].reshape(1, Cout),
    }


# -------------------------------- forward -----------------------------------

def _interior_mask(Hi, Wi):
    Hp, Wp = Hi + 2, Wi + 2
    idx = jnp.arange(Hp * Wp)
    row, col = idx // Wp, idx % Wp
    valid = (row >= 1) & (row <= Hi) & (col >= 1) & (col <= Wi)
    return valid.astype(jnp.float32).reshape(Hp * Wp, 1)


def up_block_forward(kp, x_nchw, residual_nchw):
    if x_nchw.ndim != 4 or residual_nchw.ndim != 4:
        raise Exception("Bad dimensions.")
    B, Cin, H, W = x_nchw.shape
    Cr = residual_nchw.shape[1]
    cat_ch = kp["gn1_gamma"].shape[-1]
    Cout = kp["conv2_b"].shape[-1]
    OH, OW = 2 * H, 2 * W

    # --- ConvTranspose2d (4-phase) -------------------------------------------
    x_nhwc = jnp.transpose(x_nchw, (0, 2, 3, 1))
    xpf = jnp.pad(x_nhwc, ((0, 0), (1, 1), (1, 1), (0, 0)))
    xpf = xpf.reshape(B, (H + 2) * (W + 2), Cin)
    up = upconv_phases(xpf, kp["upconv_w_ph"], kp["upconv_b4"], H=H, W=W)
    # wrapper-side layout plumbing only: un-pack the 4 phases into NHWC
    up = up.reshape(B, H, W, 2, 2, Cout).transpose(0, 1, 3, 2, 4, 5)
    up = up.reshape(B, OH, OW, Cout)

    # --- padded-flat layouts for the fused GN+conv kernels --------------------
    Fp = (OH + 2) * (OW + 2)
    u_pf = jnp.pad(up, ((0, 0), (1, 1), (1, 1), (0, 0))).reshape(B, Fp, Cout)
    r_nhwc = jnp.transpose(residual_nchw, (0, 2, 3, 1))
    r_pf = jnp.pad(r_nhwc, ((0, 0), (1, 1), (1, 1), (0, 0))).reshape(B, Fp, Cr)
    mask = _interior_mask(OH, OW)

    # GroupNorm(16, cat_ch) + Conv2d(cat_ch->Cout, 3, p=1); cat fused in-kernel.
    h1 = gn_conv3x3(u_pf, r_pf, mask, kp["gmat1"], kp["gn1_gamma"], kp["gn1_beta"],
                    kp["conv1_w"], kp["conv1_b"], Hi=OH, Wi=OW,
                    cpg=cat_ch // GROUPS, apply_silu=False)
    # GroupNorm(16, Cout) + Conv2d(Cout->Cout, 3, p=1) + SiLU.
    h2 = gn_conv3x3(h1, None, mask, kp["gmat2"], kp["gn2_gamma"], kp["gn2_beta"],
                    kp["conv2_w"], kp["conv2_b"], Hi=OH, Wi=OW,
                    cpg=Cout // GROUPS, apply_silu=True)

    out = h2.reshape(B, OH + 2, OW + 2, Cout)[:, 1:OH + 1, 1:OW + 1, :]
    return jnp.transpose(out, (0, 3, 1, 2))            # NHWC -> NCHW


# --------------------------- plain-JAX reference ----------------------------

def _group_norm_ref(x, gamma, beta, groups, eps):
    B, C, H, W = x.shape
    xg = x.reshape(B, groups, C // groups, H, W)
    mean = xg.mean(axis=(2, 3, 4), keepdims=True)
    var = xg.var(axis=(2, 3, 4), keepdims=True)
    xg = (xg - mean) * jax.lax.rsqrt(var + eps)
    x = xg.reshape(B, C, H, W)
    return x * gamma.reshape(1, C, 1, 1) + beta.reshape(1, C, 1, 1)


def up_block_reference(p, x, r, groups=GROUPS, eps=EPS):
    dn = ("NCHW", "OIHW", "NCHW")
    w_t = jnp.transpose(p["upconv_w"], (1, 0, 2, 3))[:, :, ::-1, ::-1]
    y = jax.lax.conv_general_dilated(x, w_t, window_strides=(1, 1),
                                     padding=((2, 2), (2, 2)),
                                     lhs_dilation=(2, 2), dimension_numbers=dn)
    y = y + p["upconv_b"].reshape(1, -1, 1, 1)
    y = jnp.concatenate([y, r], axis=1)
    y = _group_norm_ref(y, p["gn1_gamma"], p["gn1_beta"], groups, eps)
    y = jax.lax.conv_general_dilated(y, p["conv1_w"], (1, 1), ((1, 1), (1, 1)),
                                     dimension_numbers=dn)
    y = y + p["conv1_b"].reshape(1, -1, 1, 1)
    y = _group_norm_ref(y, p["gn2_gamma"], p["gn2_beta"], groups, eps)
    y = jax.lax.conv_general_dilated(y, p["conv2_w"], (1, 1), ((1, 1), (1, 1)),
                                     dimension_numbers=dn)
    y = y + p["conv2_b"].reshape(1, -1, 1, 1)
    return y * jax.nn.sigmoid(y)


# ----------------------------------- main -----------------------------------

if __name__ == "__main__":
    B = 2
    in_channels, residual_channels, out_channels = 32, 16, 32
    H = W = 8                                    # upconv doubles to 16x16

    key = jax.random.PRNGKey(0)
    k_param, k_x, k_r = jax.random.split(key, 3)
    params = init_upblock_params(k_param, in_channels, residual_channels,
                                 out_channels)
    kparams = prepare_upblock_params(params)     # one-time GEMM-layout conversion

    x = jax.random.normal(k_x, (B, in_channels, H, W), jnp.float32)
    residual = jax.random.normal(k_r, (B, residual_channels, 2 * H, 2 * W),
                                 jnp.float32)

    out = jax.jit(up_block_forward)(kparams, x, residual)
    out = jax.block_until_ready(out)
    assert out.shape == (B, out_channels, 2 * H, 2 * W), out.shape
    assert bool(jnp.all(jnp.isfinite(out)))

    # Cross-check against a plain-JAX (XLA) reference of the PyTorch module.
    ref = up_block_reference(params, x, residual)
    err = float(jnp.max(jnp.abs(out - ref)))
    assert err < 2e-1, f"max abs error vs reference: {err}"
    print("KERNEL_OK")
</pallas_src>

<mosaic_0001>
module attributes {stable_mosaic.version = 11 : i64} {
  func.func @_upconv_phase_kernel(%arg0: i32, %arg1: memref<1x100x32xf32, #tpu.memory_space<vmem>>, %arg2: memref<16x32x32xbf16, #tpu.memory_space<vmem>>, %arg3: memref<1x128xf32, #tpu.memory_space<vmem>>, %arg4: memref<1x64x128xf32, #tpu.memory_space<vmem>>) attributes {dimension_semantics = [#tpu.dimension_semantics<parallel>], iteration_bounds = array<i64: 2>, scalar_prefetch = 0 : i64, scratch_operands = 0 : i64, tpu.core_type = #tpu.core_type<tc>, window_params = [{transform_indices = @transform_0, window_bounds = array<i64: 1, 100, 32>}, {pipeline_mode = #tpu.pipeline_mode<synchronous>, transform_indices = @transform_1, window_bounds = array<i64: 16, 32, 32>}, {pipeline_mode = #tpu.pipeline_mode<synchronous>, transform_indices = @transform_2, window_bounds = array<i64: 1, 128>}, {transform_indices = @transform_3, window_bounds = array<i64: 1, 64, 128>}]} {
    %c0 = arith.constant 0 : index
    %c0_0 = arith.constant 0 : index
    %c0_1 = arith.constant 0 : index
    %0 = vector.load %arg1[%c0, %c0_0, %c0_1] : memref<1x100x32xf32, #tpu.memory_space<vmem>>, vector<1x100x32xf32>
    %1 = vector.shape_cast %0 : vector<1x100x32xf32> to vector<100x32xf32>
    %cst = arith.constant 0.000000e+00 : f32
    %2 = vector.broadcast %cst : f32 to vector<78x32xf32>
    %3 = vector.extract_strided_slice %1 {offsets = [0, 0], sizes = [78, 32], strides = [1, 1]} : vector<100x32xf32> to vector<78x32xf32>
    %4 = arith.truncf %3 : vector<78x32xf32> to vector<78x32xbf16>
    %c0_2 = arith.constant 0 : index
    %c0_3 = arith.constant 0 : index
    %c0_4 = arith.constant 0 : index
    %5 = vector.load %arg2[%c0_2, %c0_3, %c0_4] : memref<16x32x32xbf16, #tpu.memory_space<vmem>>, vector<1x32x32xbf16>
    %6 = vector.shape_cast %5 : vector<1x32x32xbf16> to vector<32x32xbf16>
    %cst_5 = arith.constant dense<0.000000e+00> : vector<78x32xf32>
    %7 = tpu.matmul %4, %6, %cst_5 {dimension_numbers = #tpu.dot_dimension_numbers<[1], [0], [0], [1], [0, 0, 1, 1], [], []>} : vector<78x32xbf16>, vector<32x32xbf16>, vector<78x32xf32> -> vector<78x32xf32>
    %8 = arith.addf %2, %7 : vector<78x32xf32>
    %9 = vector.extract_strided_slice %1 {offsets = [1, 0], sizes = [78, 32], strides = [1, 1]} : vector<100x32xf32> to vector<78x32xf32>
    %10 = arith.truncf %9 : vector<78x32xf32> to vector<78x32xbf16>
    %c1 = arith.constant 1 : index
    %c0_6 = arith.constant 0 : index
    %c0_7 = arith.constant 0 : index
    %11 = vector.load %arg2[%c1, %c0_6, %c0_7] : memref<16x32x32xbf16, #tpu.memory_space<vmem>>, vector<1x32x32xbf16>
    %12 = vector.shape_cast %11 : vector<1x32x32xbf16> to vector<32x32xbf16>
    %cst_8 = arith.constant dense<0.000000e+00> : vector<78x32xf32>
    %13 = tpu.matmul %10, %12, %cst_8 {dimension_numbers = #tpu.dot_dimension_numbers<[1], [0], [0], [1], [0, 0, 1, 1], [], []>} : vector<78x32xbf16>, vector<32x32xbf16>, vector<78x32xf32> -> vector<78x32xf32>
    %14 = arith.addf %8, %13 : vector<78x32xf32>
    %15 = vector.extract_strided_slice %1 {offsets = [10, 0], sizes = [78, 32], strides = [1, 1]} : vector<100x32xf32> to vector<78x32xf32>
    %16 = arith.truncf %15 : vector<78x32xf32> to vector<78x32xbf16>
    %c2 = arith.constant 2 : index
    %c0_9 = arith.constant 0 : index
    %c0_10 = arith.constant 0 : index
    %17 = vector.load %arg2[%c2, %c0_9, %c0_10] : memref<16x32x32xbf16, #tpu.memory_space<vmem>>, vector<1x32x32xbf16>
    %18 = vector.shape_cast %17 : vector<1x32x32xbf16> to vector<32x32xbf16>
    %cst_11 = arith.constant dense<0.000000e+00> : vector<78x32xf32>
    %19 = tpu.matmul %16, %18, %cst_11 {dimension_numbers = #tpu.dot_dimension_numbers<[1], [0], [0], [1], [0, 0, 1, 1], [], []>} : vector<78x32xbf16>, vector<32x32xbf16>, vector<78x32xf32> -> vector<78x32xf32>
    %20 = arith.addf %14, %19 : vector<78x32xf32>
    %21 = vector.extract_strided_slice %1 {offsets = [11, 0], sizes = [78, 32], strides = [1, 1]} : vector<100x32xf32> to vector<78x32xf32>
    %22 = arith.truncf %21 : vector<78x32xf32> to vector<78x32xbf16>
    %c3 = arith.constant 3 : index
    %c0_12 = arith.constant 0 : index
    %c0_13 = arith.constant 0 : index
    %23 = vector.load %arg2[%c3, %c0_12, %c0_13] : memref<16x32x32xbf16, #tpu.memory_space<vmem>>, vector<1x32x32xbf16>
    %24 = vector.shape_cast %23 : vector<1x32x32xbf16> to vector<32x32xbf16>
    %cst_14 = arith.constant dense<0.000000e+00> : vector<78x32xf32>
    %25 = tpu.matmul %22, %24, %cst_14 {dimension_numbers = #tpu.dot_dimension_numbers<[1], [0], [0], [1], [0, 0, 1, 1], [], []>} : vector<78x32xbf16>, vector<32x32xbf16>, vector<78x32xf32> -> vector<78x32xf32>
    %26 = arith.addf %20, %25 : vector<78x32xf32>
    %cst_15 = arith.constant 0.000000e+00 : f32
    %27 = vector.broadcast %cst_15 : f32 to vector<78x32xf32>
    %28 = vector.extract_strided_slice %1 {offsets = [1, 0], sizes = [78, 32], strides = [1, 1]} : vector<100x32xf32> to vector<78x32xf32>
    %29 = arith.truncf %28 : vector<78x32xf32> to vector<78x32xbf16>
    %c4 = arith.constant 4 : index
    %c0_16 = arith.constant 0 : index
    %c0_17 = arith.constant 0 : index
    %30 = vector.load %arg2[%c4, %c0_16, %c0_17] : memref<16x32x32xbf16, #tpu.memory_space<vmem>>, vector<1x32x32xbf16>
    %31 = vector.shape_cast %30 : vector<1x32x32xbf16> to vector<32x32xbf16>
    %cst_18 = arith.constant dense<0.000000e+00> : vector<78x32xf32>
    %32 = tpu.matmul %29, %31, %cst_18 {dimension_numbers = #tpu.dot_dimension_numbers<[1], [0], [0], [1], [0, 0, 1, 1], [], []>} : vector<78x32xbf16>, vector<32x32xbf16>, vector<78x32xf32> -> vector<78x32xf32>
    %33 = arith.addf %27, %32 : vector<78x32xf32>
    %34 = vector.extract_strided_slice %1 {offsets = [2, 0], sizes = [78, 32], strides = [1, 1]} : vector<100x32xf32> to vector<78x32xf32>
    %35 = arith.truncf %34 : vector<78x32xf32> to vector<78x32xbf16>
    %c5 = arith.constant 5 : index
    %c0_19 = arith.constant 0 : index
    %c0_20 = arith.constant 0 : index
    %36 = vector.load %arg2[%c5, %c0_19, %c0_20] : memref<16x32x32xbf16, #tpu.memory_space<vmem>>, vector<1x32x32xbf16>
    %37 = vector.shape_cast %36 : vector<1x32x32xbf16> to vector<32x32xbf16>
    %cst_21 = arith.constant dense<0.000000e+00> : vector<78x32xf32>
    %38 = tpu.matmul %35, %37, %cst_21 {dimension_numbers = #tpu.dot_dimension_numbers<[1], [0], [0], [1], [0, 0, 1, 1], [], []>} : vector<78x32xbf16>, vector<32x32xbf16>, vector<78x32xf32> -> vector<78x32xf32>
    %39 = arith.addf %33, %38 : vector<78x32xf32>
    %40 = vector.extract_strided_slice %1 {offsets = [11, 0], sizes = [78, 32], strides = [1, 1]} : vector<100x32xf32> to vector<78x32xf32>
    %41 = arith.truncf %40 : vector<78x32xf32> to vector<78x32xbf16>
    %c6 = arith.constant 6 : index
    %c0_22 = arith.constant 0 : index
    %c0_23 = arith.constant 0 : index
    %42 = vector.load %arg2[%c6, %c0_22, %c0_23] : memref<16x32x32xbf16, #tpu.memory_space<vmem>>, vector<1x32x32xbf16>
    %43 = vector.shape_cast %42 : vector<1x32x32xbf16> to vector<32x32xbf16>
    %cst_24 = arith.constant dense<0.000000e+00> : vector<78x32xf32>
    %44 = tpu.matmul %41, %43, %cst_24 {dimension_numbers = #tpu.dot_dimension_numbers<[1], [0], [0], [1], [0, 0, 1, 1], [], []>} : vector<78x32xbf16>, vector<32x32xbf16>, vector<78x32xf32> -> vector<78x32xf32>
    %45 = arith.addf %39, %44 : vector<78x32xf32>
    %46 = vector.extract_strided_slice %1 {offsets = [12, 0], sizes = [78, 32], strides = [1, 1]} : vector<100x32xf32> to vector<78x32xf32>
    %47 = arith.truncf %46 : vector<78x32xf32> to vector<78x32xbf16>
    %c7 = arith.constant 7 : index
    %c0_25 = arith.constant 0 : index
    %c0_26 = arith.constant 0 : index
    %48 = vector.load %arg2[%c7, %c0_25, %c0_26] : memref<16x32x32xbf16, #tpu.memory_space<vmem>>, vector<1x32x32xbf16>
    %49 = vector.shape_cast %48 : vector<1x32x32xbf16> to vector<32x32xbf16>
    %cst_27 = arith.constant dense<0.000000e+00> : vector<78x32xf32>
    %50 = tpu.matmul %47, %49, %cst_27 {dimension_numbers = #tpu.dot_dimension_numbers<[1], [0], [0], [1], [0, 0, 1, 1], [], []>} : vector<78x32xbf16>, vector<32x32xbf16>, vector<78x32xf32> -> vector<78x32xf32>
    %51 = arith.addf %45, %50 : vector<78x32xf32>
    %cst_28 = arith.constant 0.000000e+00 : f32
    %52 = vector.broadcast %cst_28 : f32 to vector<78x32xf32>
    %53 = vector.extract_strided_slice %1 {offsets = [10, 0], sizes = [78, 32], strides = [1, 1]} : vector<100x32xf32> to vector<78x32xf32>
    %54 = arith.truncf %53 : vector<78x32xf32> to vector<78x32xbf16>
    %c8 = arith.constant 8 : index
    %c0_29 = arith.constant 0 : index
    %c0_30 = arith.constant 0 : index
    %55 = vector.load %arg2[%c8, %c0_29, %c0_30] : memref<16x32x32xbf16, #tpu.memory_space<vmem>>, vector<1x32x32xbf16>
    %56 = vector.shape_cast %55 : vector<1x32x32xbf16> to vector<32x32xbf16>
    %cst_31 = arith.constant dense<0.000000e+00> : vector<78x32xf32>
    %57 = tpu.matmul %54, %56, %cst_31 {dimension_numbers = #tpu.dot_dimension_numbers<[1], [0], [0], [1], [0, 0, 1, 1], [], []>} : vector<78x32xbf16>, vector<32x32xbf16>, vector<78x32xf32> -> vector<78x32xf32>
    %58 = arith.addf %52, %57 : vector<78x32xf32>
    %59 = vector.extract_strided_slice %1 {offsets = [11, 0], sizes = [78, 32], strides = [1, 1]} : vector<100x32xf32> to vector<78x32xf32>
    %60 = arith.truncf %59 : vector<78x32xf32> to vector<78x32xbf16>
    %c9 = arith.constant 9 : index
    %c0_32 = arith.constant 0 : index
    %c0_33 = arith.constant 0 : index
    %61 = vector.load %arg2[%c9, %c0_32, %c0_33] : memref<16x32x32xbf16, #tpu.memory_space<vmem>>, vector<1x32x32xbf16>
    %62 = vector.shape_cast %61 : vector<1x32x32xbf16> to vector<32x32xbf16>
    %cst_34 = arith.constant dense<0.000000e+00> : vector<78x32xf32>
    %63 = tpu.matmul %60, %62, %cst_34 {dimension_numbers = #tpu.dot_dimension_numbers<[1], [0], [0], [1], [0, 0, 1, 1], [], []>} : vector<78x32xbf16>, vector<32x32xbf16>, vector<78x32xf32> -> vector<78x32xf32>
    %64 = arith.addf %58, %63 : vector<78x32xf32>
    %65 = vector.extract_strided_slice %1 {offsets = [20, 0], sizes = [78, 32], strides = [1, 1]} : vector<100x32xf32> to vector<78x32xf32>
    %66 = arith.truncf %65 : vector<78x32xf32> to vector<78x32xbf16>
    %c10 = arith.constant 10 : index
    %c0_35 = arith.constant 0 : index
    %c0_36 = arith.constant 0 : index
    %67 = vector.load %arg2[%c10, %c0_35, %c0_36] : memref<16x32x32xbf16, #tpu.memory_space<vmem>>, vector<1x32x32xbf16>
    %68 = vector.shape_cast %67 : vector<1x32x32xbf16> to vector<32x32xbf16>
    %cst_37 = arith.constant dense<0.000000e+00> : vector<78x32xf32>
    %69 = tpu.matmul %66, %68, %cst_37 {dimension_numbers = #tpu.dot_dimension_numbers<[1], [0], [0], [1], [0, 0, 1, 1], [], []>} : vector<78x32xbf16>, vector<32x32xbf16>, vector<78x32xf32> -> vector<78x32xf32>
    %70 = arith.addf %64, %69 : vector<78x32xf32>
    %71 = vector.extract_strided_slice %1 {offsets = [21, 0], sizes = [78, 32], strides = [1, 1]} : vector<100x32xf32> to vector<78x32xf32>
    %72 = arith.truncf %71 : vector<78x32xf32> to vector<78x32xbf16>
    %c11 = arith.constant 11 : index
    %c0_38 = arith.constant 0 : index
    %c0_39 = arith.constant 0 : index
    %73 = vector.load %arg2[%c11, %c0_38, %c0_39] : memref<16x32x32xbf16, #tpu.memory_space<vmem>>, vector<1x32x32xbf16>
    %74 = vector.shape_cast %73 : vector<1x32x32xbf16> to vector<32x32xbf16>
    %cst_40 = arith.constant dense<0.000000e+00> : vector<78x32xf32>
    %75 = tpu.matmul %72, %74, %cst_40 {dimension_numbers = #tpu.dot_dimension_numbers<[1], [0], [0], [1], [0, 0, 1, 1], [], []>} : vector<78x32xbf16>, vector<32x32xbf16>, vector<78x32xf32> -> vector<78x32xf32>
    %76 = arith.addf %70, %75 : vector<78x32xf32>
    %cst_41 = arith.constant 0.000000e+00 : f32
    %77 = vector.broadcast %cst_41 : f32 to vector<78x32xf32>
    %78 = vector.extract_strided_slice %1 {offsets = [11, 0], sizes = [78, 32], strides = [1, 1]} : vector<100x32xf32> to vector<78x32xf32>
    %79 = arith.truncf %78 : vector<78x32xf32> to vector<78x32xbf16>
    %c12 = arith.constant 12 : index
    %c0_42 = arith.constant 0 : index
    %c0_43 = arith.constant 0 : index
    %80 = vector.load %arg2[%c12, %c0_42, %c0_43] : memref<16x32x32xbf16, #tpu.memory_space<vmem>>, vector<1x32x32xbf16>
    %81 = vector.shape_cast %80 : vector<1x32x32xbf16> to vector<32x32xbf16>
    %cst_44 = arith.constant dense<0.000000e+00> : vector<78x32xf32>
    %82 = tpu.matmul %79, %81, %cst_44 {dimension_numbers = #tpu.dot_dimension_numbers<[1], [0], [0], [1], [0, 0, 1, 1], [], []>} : vector<78x32xbf16>, vector<32x32xbf16>, vector<78x32xf32> -> vector<78x32xf32>
    %83 = arith.addf %77, %82 : vector<78x32xf32>
    %84 = vector.extract_strided_slice %1 {offsets = [12, 0], sizes = [78, 32], strides = [1, 1]} : vector<100x32xf32> to vector<78x32xf32>
    %85 = arith.truncf %84 : vector<78x32xf32> to vector<78x32xbf16>
    %c13 = arith.constant 13 : index
    %c0_45 = arith.constant 0 : index
    %c0_46 = arith.constant 0 : index
    %86 = vector.load %arg2[%c13, %c0_45, %c0_46] : memref<16x32x32xbf16, #tpu.memory_space<vmem>>, vector<1x32x32xbf16>
    %87 = vector.shape_cast %86 : vector<1x32x32xbf16> to vector<32x32xbf16>
    %cst_47 = arith.constant dense<0.000000e+00> : vector<78x32xf32>
    %88 = tpu.matmul %85, %87, %cst_47 {dimension_numbers = #tpu.dot_dimension_numbers<[1], [0], [0], [1], [0, 0, 1, 1], [], []>} : vector<78x32xbf16>, vector<32x32xbf16>, vector<78x32xf32> -> vector<78x32xf32>
    %89 = arith.addf %83, %88 : vector<78x32xf32>
    %90 = vector.extract_strided_slice %1 {offsets = [21, 0], sizes = [78, 32], strides = [1, 1]} : vector<100x32xf32> to vector<78x32xf32>
    %91 = arith.truncf %90 : vector<78x32xf32> to vector<78x32xbf16>
    %c14 = arith.constant 14 : index
    %c0_48 = arith.constant 0 : index
    %c0_49 = arith.constant 0 : index
    %92 = vector.load %arg2[%c14, %c0_48, %c0_49] : memref<16x32x32xbf16, #tpu.memory_space<vmem>>, vector<1x32x32xbf16>
    %93 = vector.shape_cast %92 : vector<1x32x32xbf16> to vector<32x32xbf16>
    %cst_50 = arith.constant dense<0.000000e+00> : vector<78x32xf32>
    %94 = tpu.matmul %91, %93, %cst_50 {dimension_numbers = #tpu.dot_dimension_numbers<[1], [0], [0], [1], [0, 0, 1, 1], [], []>} : vector<78x32xbf16>, vector<32x32xbf16>, vector<78x32xf32> -> vector<78x32xf32>
    %95 = arith.addf %89, %94 : vector<78x32xf32>
    %96 = vector.extract_strided_slice %1 {offsets = [22, 0], sizes = [78, 32], strides = [1, 1]} : vector<100x32xf32> to vector<78x32xf32>
    %97 = arith.truncf %96 : vector<78x32xf32> to vector<78x32xbf16>
    %c15 = arith.constant 15 : index
    %c0_51 = arith.constant 0 : index
    %c0_52 = arith.constant 0 : index
    %98 = vector.load %arg2[%c15, %c0_51, %c0_52] : memref<16x32x32xbf16, #tpu.memory_space<vmem>>, vector<1x32x32xbf16>
    %99 = vector.shape_cast %98 : vector<1x32x32xbf16> to vector<32x32xbf16>
    %cst_53 = arith.constant dense<0.000000e+00> : vector<78x32xf32>
    %100 = tpu.matmul %97, %99, %cst_53 {dimension_numbers = #tpu.dot_dimension_numbers<[1], [0], [0], [1], [0, 0, 1, 1], [], []>} : vector<78x32xbf16>, vector<32x32xbf16>, vector<78x32xf32> -> vector<78x32xf32>
    %101 = arith.addf %95, %100 : vector<78x32xf32>
    %102 = tpu.concatenate %26, %51, %76, %101 in 1 : vector<78x32xf32>, vector<78x32xf32>, vector<78x32xf32>, vector<78x32xf32> -> vector<78x128xf32>
    %c0_54 = arith.constant 0 : index
    %c0_55 = arith.constant 0 : index
    %103 = vector.load %arg3[%c0_54, %c0_55] : memref<1x128xf32, #tpu.memory_space<vmem>>, vector<1x128xf32>
    %104 = vector.broadcast %103 : vector<1x128xf32> to vector<78x128xf32>
    %105 = arith.addf %102, %104 : vector<78x128xf32>
    %106 = vector.extract_strided_slice %105 {offsets = [0, 0], sizes = [8, 128], strides = [1, 1]} : vector<78x128xf32> to vector<8x128xf32>
    %c0_56 = arith.constant 0 : index
    %c0_57 = arith.constant 0 : index
    %c0_58 = arith.constant 0 : index
    %107 = vector.load %arg4[%c0_56, %c0_57, %c0_58] : memref<1x64x128xf32, #tpu.memory_space<vmem>>, vector<1x8x128xf32>
    %108 = vector.shape_cast %107 : vector<1x8x128xf32> to vector<8x128xf32>
    %109 = vector.shape_cast %106 : vector<8x128xf32> to vector<1x8x128xf32>
    tpu.vector_store %arg4[%c0_56, %c0_57, %c0_58], %109 {strides = array<i32>} : memref<1x64x128xf32, #tpu.memory_space<vmem>>, vector<1x8x128xf32>,
    %110 = vector.extract_strided_slice %105 {offsets = [10, 0], sizes = [8, 128], strides = [1, 1]} : vector<78x128xf32> to vector<8x128xf32>
    %c0_59 = arith.constant 0 : index
    %c8_60 = arith.constant 8 : index
    %c0_61 = arith.constant 0 : index
    %111 = vector.load %arg4[%c0_59, %c8_60, %c0_61] : memref<1x64x128xf32, #tpu.memory_space<vmem>>, vector<1x8x128xf32>
    %112 = vector.shape_cast %111 : vector<1x8x128xf32> to vector<8x128xf32>
    %113 = vector.shape_cast %110 : vector<8x128xf32> to vector<1x8x128xf32>
    tpu.vector_store %arg4[%c0_59, %c8_60, %c0_61], %113 {strides = array<i32>} : memref<1x64x128xf32, #tpu.memory_space<vmem>>, vector<1x8x128xf32>,
    %114 = vector.extract_strided_slice %105 {offsets = [20, 0], sizes = [8, 128], strides = [1, 1]} : vector<78x128xf32> to vector<8x128xf32>
    %c0_62 = arith.constant 0 : index
    %c16 = arith.constant 16 : index
    %c0_63 = arith.constant 0 : index
    %115 = vector.load %arg4[%c0_62, %c16, %c0_63] : memref<1x64x128xf32, #tpu.memory_space<vmem>>, vector<1x8x128xf32>
    %116 = vector.shape_cast %115 : vector<1x8x128xf32> to vector<8x128xf32>
    %117 = vector.shape_cast %114 : vector<8x128xf32> to vector<1x8x128xf32>
    tpu.vector_store %arg4[%c0_62, %c16, %c0_63], %117 {strides = array<i32>} : memref<1x64x128xf32, #tpu.memory_space<vmem>>, vector<1x8x128xf32>,
    %118 = vector.extract_strided_slice %105 {offsets = [30, 0], sizes = [8, 128], strides = [1, 1]} : vector<78x128xf32> to vector<8x128xf32>
    %c0_64 = arith.constant 0 : index
    %c24 = arith.constant 24 : index
    %c0_65 = arith.constant 0 : index
    %119 = vector.load %arg4[%c0_64, %c24, %c0_65] : memref<1x64x128xf32, #tpu.memory_space<vmem>>, vector<1x8x128xf32>
    %120 = vector.shape_cast %119 : vector<1x8x128xf32> to vector<8x128xf32>
    %121 = vector.shape_cast %118 : vector<8x128xf32> to vector<1x8x128xf32>
    tpu.vector_store %arg4[%c0_64, %c24, %c0_65], %121 {strides = array<i32>} : memref<1x64x128xf32, #tpu.memory_space<vmem>>, vector<1x8x128xf32>,
    %122 = vector.extract_strided_slice %105 {offsets = [40, 0], sizes = [8, 128], strides = [1, 1]} : vector<78x128xf32> to vector<8x128xf32>
    %c0_66 = arith.constant 0 : index
    %c32 = arith.constant 32 : index
    %c0_67 = arith.constant 0 : index
    %123 = vector.load %arg4[%c0_66, %c32, %c0_67] : memref<1x64x128xf32, #tpu.memory_space<vmem>>, vector<1x8x128xf32>
    %124 = vector.shape_cast %123 : vector<1x8x128xf32> to vector<8x128xf32>
    %125 = vector.shape_cast %122 : vector<8x128xf32> to vector<1x8x128xf32>
    tpu.vector_store %arg4[%c0_66, %c32, %c0_67], %125 {strides = array<i32>} : memref<1x64x128xf32, #tpu.memory_space<vmem>>, vector<1x8x128xf32>,
    %126 = vector.extract_strided_slice %105 {offsets = [50, 0], sizes = [8, 128], strides = [1, 1]} : vector<78x128xf32> to vector<8x128xf32>
    %c0_68 = arith.constant 0 : index
    %c40 = arith.constant 40 : index
    %c0_69 = arith.constant 0 : index
    %127 = vector.load %arg4[%c0_68, %c40, %c0_69] : memref<1x64x128xf32, #tpu.memory_space<vmem>>, vector<1x8x128xf32>
    %128 = vector.shape_cast %127 : vector<1x8x128xf32> to vector<8x128xf32>
    %129 = vector.shape_cast %126 : vector<8x128xf32> to vector<1x8x128xf32>
    tpu.vector_store %arg4[%c0_68, %c40, %c0_69], %129 {strides = array<i32>} : memref<1x64x128xf32, #tpu.memory_space<vmem>>, vector<1x8x128xf32>,
    %130 = vector.extract_strided_slice %105 {offsets = [60, 0], sizes = [8, 128], strides = [1, 1]} : vector<78x128xf32> to vector<8x128xf32>
    %c0_70 = arith.constant 0 : index
    %c48 = arith.constant 48 : index
    %c0_71 = arith.constant 0 : index
    %131 = vector.load %arg4[%c0_70, %c48, %c0_71] : memref<1x64x128xf32, #tpu.memory_space<vmem>>, vector<1x8x128xf32>
    %132 = vector.shape_cast %131 : vector<1x8x128xf32> to vector<8x128xf32>
    %133 = vector.shape_cast %130 : vector<8x128xf32> to vector<1x8x128xf32>
    tpu.vector_store %arg4[%c0_70, %c48, %c0_71], %133 {strides = array<i32>} : memref<1x64x128xf32, #tpu.memory_space<vmem>>, vector<1x8x128xf32>,
    %134 = vector.extract_strided_slice %105 {offsets = [70, 0], sizes = [8, 128], strides = [1, 1]} : vector<78x128xf32> to vector<8x128xf32>
    %c0_72 = arith.constant 0 : index
    %c56 = arith.constant 56 : index
    %c0_73 = arith.constant 0 : index
    %135 = vector.load %arg4[%c0_72, %c56, %c0_73] : memref<1x64x128xf32, #tpu.memory_space<vmem>>, vector<1x8x128xf32>
    %136 = vector.shape_cast %135 : vector<1x8x128xf32> to vector<8x128xf32>
    %137 = vector.shape_cast %134 : vector<8x128xf32> to vector<1x8x128xf32>
    tpu.vector_store %arg4[%c0_72, %c56, %c0_73], %137 {strides = array<i32>} : memref<1x64x128xf32, #tpu.memory_space<vmem>>, vector<1x8x128xf32>,
    return
  }
  func.func @transform_0(%arg0: i32) -> (i32, i32, i32) {
    %c0_i32 = arith.constant 0 : i32
    %c0_i32_0 = arith.constant 0 : i32
    %c0_i32_1 = arith.constant 0 : i32
    return %arg0, %c0_i32, %c0_i32_0 : i32, i32, i32
  }
  func.func @transform_1(%arg0: i32) -> (i32, i32, i32) {
    %c0_i32 = arith.constant 0 : i32
    %c0_i32_0 = arith.constant 0 : i32
    %c0_i32_1 = arith.constant 0 : i32
    %c0_i32_2 = arith.constant 0 : i32
    return %c0_i32, %c0_i32_0, %c0_i32_1 : i32, i32, i32
  }
  func.func @transform_2(%arg0: i32) -> (i32, i32) {
    %c0_i32 = arith.constant 0 : i32
    %c0_i32_0 = arith.constant 0 : i32
    %c0_i32_1 = arith.constant 0 : i32
    return %c0_i32, %c0_i32_0 : i32, i32
  }
  func.func @transform_3(%arg0: i32) -> (i32, i32, i32) {
    %c0_i32 = arith.constant 0 : i32
    %c0_i32_0 = arith.constant 0 : i32
    %c0_i32_1 = arith.constant 0 : i32
    return %arg0, %c0_i32, %c0_i32_0 : i32, i32, i32
  }
}

module attributes {stable_mosaic.version = 11 : i64} {
  func.func @_gn_conv3x3_kernel(%arg0: i32, %arg1: memref<1x324x32xf32, #tpu.memory_space<vmem>>, %arg2: memref<1x324x16xf32, #tpu.memory_space<vmem>>, %arg3: memref<324x1xf32, #tpu.memory_space<vmem>>, %arg4: memref<48x48xf32, #tpu.memory_space<vmem>>, %arg5: memref<1x48xf32, #tpu.memory_space<vmem>>, %arg6: memref<1x48xf32, #tpu.memory_space<vmem>>, %arg7: memref<9x48x32xbf16, #tpu.memory_space<vmem>>, %arg8: memref<1x32xf32, #tpu.memory_space<vmem>>, %arg9: memref<1x324x32xf32, #tpu.memory_space<vmem>>) attributes {dimension_semantics = [#tpu.dimension_semantics<parallel>], iteration_bounds = array<i64: 2>, scalar_prefetch = 0 : i64, scratch_operands = 0 : i64, tpu.core_type = #tpu.core_type<tc>, window_params = [{transform_indices = @transform_0, window_bounds = array<i64: 1, 324, 32>}, {transform_indices = @transform_1, window_bounds = array<i64: 1, 324, 16>}, {pipeline_mode = #tpu.pipeline_mode<synchronous>, transform_indices = @transform_2, window_bounds = array<i64: 324, 1>}, {pipeline_mode = #tpu.pipeline_mode<synchronous>, transform_indices = @transform_3, window_bounds = array<i64: 48, 48>}, {pipeline_mode = #tpu.pipeline_mode<synchronous>, transform_indices = @transform_4, window_bounds = array<i64: 1, 48>}, {pipeline_mode = #tpu.pipeline_mode<synchronous>, transform_indices = @transform_5, window_bounds = array<i64: 1, 48>}, {pipeline_mode = #tpu.pipeline_mode<synchronous>, transform_indices = @transform_6, window_bounds = array<i64: 9, 48, 32>}, {pipeline_mode = #tpu.pipeline_mode<synchronous>, transform_indices = @transform_7, window_bounds = array<i64: 1, 32>}, {transform_indices = @transform_8, window_bounds = array<i64: 1, 324, 32>}]} {
    %c0 = arith.constant 0 : index
    %c0_0 = arith.constant 0 : index
    %c0_1 = arith.constant 0 : index
    %0 = vector.load %arg1[%c0, %c0_0, %c0_1] : memref<1x324x32xf32, #tpu.memory_space<vmem>>, vector<1x324x32xf32>
    %1 = vector.shape_cast %0 : vector<1x324x32xf32> to vector<324x32xf32>
    %c0_2 = arith.constant 0 : index
    %c0_3 = arith.constant 0 : index
    %c0_4 = arith.constant 0 : index
    %2 = vector.load %arg2[%c0_2, %c0_3, %c0_4] : memref<1x324x16xf32, #tpu.memory_space<vmem>>, vector<1x324x16xf32>
    %3 = vector.shape_cast %2 : vector<1x324x16xf32> to vector<324x16xf32>
    %4 = tpu.concatenate %1, %3 in 1 : vector<324x32xf32>, vector<324x16xf32> -> vector<324x48xf32>
    %c0_5 = arith.constant 0 : index
    %c0_6 = arith.constant 0 : index
    %5 = vector.load %arg3[%c0_5, %c0_6] : memref<324x1xf32, #tpu.memory_space<vmem>>, vector<324x1xf32>
    %cst = arith.constant dense<0.000000e+00> : vector<48xf32>
    %6 = vector.multi_reduction <add>, %4, %cst [0] : vector<324x48xf32> to vector<48xf32>
    %7 = vector.shape_cast %6 : vector<48xf32> to vector<1x48xf32>
    %8 = arith.mulf %4, %4 : vector<324x48xf32>
    %cst_7 = arith.constant dense<0.000000e+00> : vector<48xf32>
    %9 = vector.multi_reduction <add>, %8, %cst_7 [0] : vector<324x48xf32> to vector<48xf32>
    %10 = vector.shape_cast %9 : vector<48xf32> to vector<1x48xf32>
    %11 = tpu.concatenate %7, %10 in 0 : vector<1x48xf32>, vector<1x48xf32> -> vector<2x48xf32>
    %c0_8 = arith.constant 0 : index
    %c0_9 = arith.constant 0 : index
    %12 = vector.load %arg4[%c0_8, %c0_9] : memref<48x48xf32, #tpu.memory_space<vmem>>, vector<48x48xf32>
    %cst_10 = arith.constant dense<0.000000e+00> : vector<2x48xf32>
    %13 = tpu.matmul %11, %12, %cst_10 {dimension_numbers = #tpu.dot_dimension_numbers<[1], [0], [0], [1], [0, 0, 1, 1], [], []>} : vector<2x48xf32>, vector<48x48xf32>, vector<2x48xf32> -> vector<2x48xf32>
    %14 = vector.extract_strided_slice %13 {offsets = [0, 0], sizes = [1, 48], strides = [1, 1]} : vector<2x48xf32> to vector<1x48xf32>
    %cst_11 = arith.constant 0.00130208337 : f32
    %15 = vector.broadcast %cst_11 : f32 to vector<1x48xf32>
    %16 = arith.mulf %14, %15 : vector<1x48xf32>
    %17 = vector.extract_strided_slice %13 {offsets = [1, 0], sizes = [1, 48], strides = [1, 1]} : vector<2x48xf32> to vector<1x48xf32>
    %cst_12 = arith.constant 0.00130208337 : f32
    %18 = vector.broadcast %cst_12 : f32 to vector<1x48xf32>
    %19 = arith.mulf %17, %18 : vector<1x48xf32>
    %20 = arith.mulf %16, %16 : vector<1x48xf32>
    %21 = arith.subf %19, %20 : vector<1x48xf32>
    %cst_13 = arith.constant 0.000000e+00 : f32
    %22 = vector.broadcast %cst_13 : f32 to vector<1x48xf32>
    %23 = arith.maximumf %21, %22 : vector<1x48xf32>
    %cst_14 = arith.constant 9.99999974E-6 : f32
    %24 = vector.broadcast %cst_14 : f32 to vector<1x48xf32>
    %25 = arith.addf %23, %24 : vector<1x48xf32>
    %26 = math.rsqrt %25 : vector<1x48xf32>
    %c0_15 = arith.constant 0 : index
    %c0_16 = arith.constant 0 : index
    %27 = vector.load %arg5[%c0_15, %c0_16] : memref<1x48xf32, #tpu.memory_space<vmem>>, vector<1x48xf32>
    %28 = arith.mulf %26, %27 : vector<1x48xf32>
    %29 = vector.broadcast %16 : vector<1x48xf32> to vector<324x48xf32>
    %30 = arith.subf %4, %29 : vector<324x48xf32>
    %31 = vector.broadcast %28 : vector<1x48xf32> to vector<324x48xf32>
    %32 = arith.mulf %30, %31 : vector<324x48xf32>
    %c0_17 = arith.constant 0 : index
    %c0_18 = arith.constant 0 : index
    %33 = vector.load %arg6[%c0_17, %c0_18] : memref<1x48xf32, #tpu.memory_space<vmem>>, vector<1x48xf32>
    %34 = vector.broadcast %33 : vector<1x48xf32> to vector<324x48xf32>
    %35 = arith.addf %32, %34 : vector<324x48xf32>
    %36 = vector.broadcast %5 : vector<324x1xf32> to vector<324x48xf32>
    %37 = arith.mulf %35, %36 : vector<324x48xf32>
    %cst_19 = arith.constant 0.000000e+00 : f32
    %38 = vector.broadcast %cst_19 : f32 to vector<286x32xf32>
    %39 = vector.extract_strided_slice %37 {offsets = [0, 0], sizes = [286, 48], strides = [1, 1]} : vector<324x48xf32> to vector<286x48xf32>
    %40 = arith.truncf %39 : vector<286x48xf32> to vector<286x48xbf16>
    %c0_20 = arith.constant 0 : index
    %c0_21 = arith.constant 0 : index
    %c0_22 = arith.constant 0 : index
    %41 = vector.load %arg7[%c0_20, %c0_21, %c0_22] : memref<9x48x32xbf16, #tpu.memory_space<vmem>>, vector<1x48x32xbf16>
    %42 = vector.shape_cast %41 : vector<1x48x32xbf16> to vector<48x32xbf16>
    %cst_23 = arith.constant dense<0.000000e+00> : vector<286x32xf32>
    %43 = tpu.matmul %40, %42, %cst_23 {dimension_numbers = #tpu.dot_dimension_numbers<[1], [0], [0], [1], [0, 0, 1, 1], [], []>} : vector<286x48xbf16>, vector<48x32xbf16>, vector<286x32xf32> -> vector<286x32xf32>
    %44 = arith.addf %38, %43 : vector<286x32xf32>
    %45 = vector.extract_strided_slice %37 {offsets = [1, 0], sizes = [286, 48], strides = [1, 1]} : vector<324x48xf32> to vector<286x48xf32>
    %46 = arith.truncf %45 : vector<286x48xf32> to vector<286x48xbf16>
    %c1 = arith.constant 1 : index
    %c0_24 = arith.constant 0 : index
    %c0_25 = arith.constant 0 : index
    %47 = vector.load %arg7[%c1, %c0_24, %c0_25] : memref<9x48x32xbf16, #tpu.memory_space<vmem>>, vector<1x48x32xbf16>
    %48 = vector.shape_cast %47 : vector<1x48x32xbf16> to vector<48x32xbf16>
    %cst_26 = arith.constant dense<0.000000e+00> : vector<286x32xf32>
    %49 = tpu.matmul %46, %48, %cst_26 {dimension_numbers = #tpu.dot_dimension_numbers<[1], [0], [0], [1], [0, 0, 1, 1], [], []>} : vector<286x48xbf16>, vector<48x32xbf16>, vector<286x32xf32> -> vector<286x32xf32>
    %50 = arith.addf %44, %49 : vector<286x32xf32>
    %51 = vector.extract_strided_slice %37 {offsets = [2, 0], sizes = [286, 48], strides = [1, 1]} : vector<324x48xf32> to vector<286x48xf32>
    %52 = arith.truncf %51 : vector<286x48xf32> to vector<286x48xbf16>
    %c2 = arith.constant 2 : index
    %c0_27 = arith.constant 0 : index
    %c0_28 = arith.constant 0 : index
    %53 = vector.load %arg7[%c2, %c0_27, %c0_28] : memref<9x48x32xbf16, #tpu.memory_space<vmem>>, vector<1x48x32xbf16>
    %54 = vector.shape_cast %53 : vector<1x48x32xbf16> to vector<48x32xbf16>
    %cst_29 = arith.constant dense<0.000000e+00> : vector<286x32xf32>
    %55 = tpu.matmul %52, %54, %cst_29 {dimension_numbers = #tpu.dot_dimension_numbers<[1], [0], [0], [1], [0, 0, 1, 1], [], []>} : vector<286x48xbf16>, vector<48x32xbf16>, vector<286x32xf32> -> vector<286x32xf32>
    %56 = arith.addf %50, %55 : vector<286x32xf32>
    %57 = vector.extract_strided_slice %37 {offsets = [18, 0], sizes = [286, 48], strides = [1, 1]} : vector<324x48xf32> to vector<286x48xf32>
    %58 = arith.truncf %57 : vector<286x48xf32> to vector<286x48xbf16>
    %c3 = arith.constant 3 : index
    %c0_30 = arith.constant 0 : index
    %c0_31 = arith.constant 0 : index
    %59 = vector.load %arg7[%c3, %c0_30, %c0_31] : memref<9x48x32xbf16, #tpu.memory_space<vmem>>, vector<1x48x32xbf16>
    %60 = vector.shape_cast %59 : vector<1x48x32xbf16> to vector<48x32xbf16>
    %cst_32 = arith.constant dense<0.000000e+00> : vector<286x32xf32>
    %61 = tpu.matmul %58, %60, %cst_32 {dimension_numbers = #tpu.dot_dimension_numbers<[1], [0], [0], [1], [0, 0, 1, 1], [], []>} : vector<286x48xbf16>, vector<48x32xbf16>, vector<286x32xf32> -> vector<286x32xf32>
    %62 = arith.addf %56, %61 : vector<286x32xf32>
    %63 = vector.extract_strided_slice %37 {offsets = [19, 0], sizes = [286, 48], strides = [1, 1]} : vector<324x48xf32> to vector<286x48xf32>
    %64 = arith.truncf %63 : vector<286x48xf32> to vector<286x48xbf16>
    %c4 = arith.constant 4 : index
    %c0_33 = arith.constant 0 : index
    %c0_34 = arith.constant 0 : index
    %65 = vector.load %arg7[%c4, %c0_33, %c0_34] : memref<9x48x32xbf16, #tpu.memory_space<vmem>>, vector<1x48x32xbf16>
    %66 = vector.shape_cast %65 : vector<1x48x32xbf16> to vector<48x32xbf16>
    %cst_35 = arith.constant dense<0.000000e+00> : vector<286x32xf32>
    %67 = tpu.matmul %64, %66, %cst_35 {dimension_numbers = #tpu.dot_dimension_numbers<[1], [0], [0], [1], [0, 0, 1, 1], [], []>} : vector<286x48xbf16>, vector<48x32xbf16>, vector<286x32xf32> -> vector<286x32xf32>
    %68 = arith.addf %62, %67 : vector<286x32xf32>
    %69 = vector.extract_strided_slice %37 {offsets = [20, 0], sizes = [286, 48], strides = [1, 1]} : vector<324x48xf32> to vector<286x48xf32>
    %70 = arith.truncf %69 : vector<286x48xf32> to vector<286x48xbf16>
    %c5 = arith.constant 5 : index
    %c0_36 = arith.constant 0 : index
    %c0_37 = arith.constant 0 : index
    %71 = vector.load %arg7[%c5, %c0_36, %c0_37] : memref<9x48x32xbf16, #tpu.memory_space<vmem>>, vector<1x48x32xbf16>
    %72 = vector.shape_cast %71 : vector<1x48x32xbf16> to vector<48x32xbf16>
    %cst_38 = arith.constant dense<0.000000e+00> : vector<286x32xf32>
    %73 = tpu.matmul %70, %72, %cst_38 {dimension_numbers = #tpu.dot_dimension_numbers<[1], [0], [0], [1], [0, 0, 1, 1], [], []>} : vector<286x48xbf16>, vector<48x32xbf16>, vector<286x32xf32> -> vector<286x32xf32>
    %74 = arith.addf %68, %73 : vector<286x32xf32>
    %75 = vector.extract_strided_slice %37 {offsets = [36, 0], sizes = [286, 48], strides = [1, 1]} : vector<324x48xf32> to vector<286x48xf32>
    %76 = arith.truncf %75 : vector<286x48xf32> to vector<286x48xbf16>
    %c6 = arith.constant 6 : index
    %c0_39 = arith.constant 0 : index
    %c0_40 = arith.constant 0 : index
    %77 = vector.load %arg7[%c6, %c0_39, %c0_40] : memref<9x48x32xbf16, #tpu.memory_space<vmem>>, vector<1x48x32xbf16>
    %78 = vector.shape_cast %77 : vector<1x48x32xbf16> to vector<48x32xbf16>
    %cst_41 = arith.constant dense<0.000000e+00> : vector<286x32xf32>
    %79 = tpu.matmul %76, %78, %cst_41 {dimension_numbers = #tpu.dot_dimension_numbers<[1], [0], [0], [1], [0, 0, 1, 1], [], []>} : vector<286x48xbf16>, vector<48x32xbf16>, vector<286x32xf32> -> vector<286x32xf32>
    %80 = arith.addf %74, %79 : vector<286x32xf32>
    %81 = vector.extract_strided_slice %37 {offsets = [37, 0], sizes = [286, 48], strides = [1, 1]} : vector<324x48xf32> to vector<286x48xf32>
    %82 = arith.truncf %81 : vector<286x48xf32> to vector<286x48xbf16>
    %c7 = arith.constant 7 : index
    %c0_42 = arith.constant 0 : index
    %c0_43 = arith.constant 0 : index
    %83 = vector.load %arg7[%c7, %c0_42, %c0_43] : memref<9x48x32xbf16, #tpu.memory_space<vmem>>, vector<1x48x32xbf16>
    %84 = vector.shape_cast %83 : vector<1x48x32xbf16> to vector<48x32xbf16>
    %cst_44 = arith.constant dense<0.000000e+00> : vector<286x32xf32>
    %85 = tpu.matmul %82, %84, %cst_44 {dimension_numbers = #tpu.dot_dimension_numbers<[1], [0], [0], [1], [0, 0, 1, 1], [], []>} : vector<286x48xbf16>, vector<48x32xbf16>, vector<286x32xf32> -> vector<286x32xf32>
    %86 = arith.addf %80, %85 : vector<286x32xf32>
    %87 = vector.extract_strided_slice %37 {offsets = [38, 0], sizes = [286, 48], strides = [1, 1]} : vector<324x48xf32> to vector<286x48xf32>
    %88 = arith.truncf %87 : vector<286x48xf32> to vector<286x48xbf16>
    %c8 = arith.constant 8 : index
    %c0_45 = arith.constant 0 : index
    %c0_46 = arith.constant 0 : index
    %89 = vector.load %arg7[%c8, %c0_45, %c0_46] : memref<9x48x32xbf16, #tpu.memory_space<vmem>>, vector<1x48x32xbf16>
    %90 = vector.shape_cast %89 : vector<1x48x32xbf16> to vector<48x32xbf16>
    %cst_47 = arith.constant dense<0.000000e+00> : vector<286x32xf32>
    %91 = tpu.matmul %88, %90, %cst_47 {dimension_numbers = #tpu.dot_dimension_numbers<[1], [0], [0], [1], [0, 0, 1, 1], [], []>} : vector<286x48xbf16>, vector<48x32xbf16>, vector<286x32xf32> -> vector<286x32xf32>
    %92 = arith.addf %86, %91 : vector<286x32xf32>
    %c0_48 = arith.constant 0 : index
    %c0_49 = arith.constant 0 : index
    %93 = vector.load %arg8[%c0_48, %c0_49] : memref<1x32xf32, #tpu.memory_space<vmem>>, vector<1x32xf32>
    %94 = vector.broadcast %93 : vector<1x32xf32> to vector<286x32xf32>
    %95 = arith.addf %92, %94 : vector<286x32xf32>
    %96 = vector.extract_strided_slice %5 {offsets = [19, 0], sizes = [286, 1], strides = [1, 1]} : vector<324x1xf32> to vector<286x1xf32>
    %97 = vector.broadcast %96 : vector<286x1xf32> to vector<286x32xf32>
    %98 = arith.mulf %95, %97 : vector<286x32xf32>
    %cst_50 = arith.constant 0.000000e+00 : f32
    %99 = vector.broadcast %cst_50 : f32 to vector<19x32xf32>
    %c0_51 = arith.constant 0 : index
    %c0_52 = arith.constant 0 : index
    %c0_53 = arith.constant 0 : index
    %100 = vector.load %arg9[%c0_51, %c0_52, %c0_53] : memref<1x324x32xf32, #tpu.memory_space<vmem>>, vector<1x19x32xf32>
    %101 = vector.shape_cast %100 : vector<1x19x32xf32> to vector<19x32xf32>
    %102 = vector.shape_cast %99 : vector<19x32xf32> to vector<1x19x32xf32>
    tpu.vector_store %arg9[%c0_51, %c0_52, %c0_53], %102 {strides = array<i32>} : memref<1x324x32xf32, #tpu.memory_space<vmem>>, vector<1x19x32xf32>,
    %c0_54 = arith.constant 0 : index
    %c19 = arith.constant 19 : index
    %c0_55 = arith.constant 0 : index
    %103 = vector.load %arg9[%c0_54, %c19, %c0_55] : memref<1x324x32xf32, #tpu.memory_space<vmem>>, vector<1x286x32xf32>
    %104 = vector.shape_cast %103 : vector<1x286x32xf32> to vector<286x32xf32>
    %105 = vector.shape_cast %98 : vector<286x32xf32> to vector<1x286x32xf32>
    tpu.vector_store %arg9[%c0_54, %c19, %c0_55], %105 {strides = array<i32>} : memref<1x324x32xf32, #tpu.memory_space<vmem>>, vector<1x286x32xf32>,
    %cst_56 = arith.constant 0.000000e+00 : f32
    %106 = vector.broadcast %cst_56 : f32 to vector<19x32xf32>
    %c0_57 = arith.constant 0 : index
    %c305 = arith.constant 305 : index
    %c0_58 = arith.constant 0 : index
    %107 = vector.load %arg9[%c0_57, %c305, %c0_58] : memref<1x324x32xf32, #tpu.memory_space<vmem>>, vector<1x19x32xf32>
    %108 = vector.shape_cast %107 : vector<1x19x32xf32> to vector<19x32xf32>
    %109 = vector.shape_cast %106 : vector<19x32xf32> to vector<1x19x32xf32>
    tpu.vector_store %arg9[%c0_57, %c305, %c0_58], %109 {strides = array<i32>} : memref<1x324x32xf32, #tpu.memory_space<vmem>>, vector<1x19x32xf32>,
    return
  }
  func.func @transform_0(%arg0: i32) -> (i32, i32, i32) {
    %c0_i32 = arith.constant 0 : i32
    %c0_i32_0 = arith.constant 0 : i32
    %c0_i32_1 = arith.constant 0 : i32
    return %arg0, %c0_i32, %c0_i32_0 : i32, i32, i32
  }
  func.func @transform_1(%arg0: i32) -> (i32, i32, i32) {
    %c0_i32 = arith.constant 0 : i32
    %c0_i32_0 = arith.constant 0 : i32
    %c0_i32_1 = arith.constant 0 : i32
    return %arg0, %c0_i32, %c0_i32_0 : i32, i32, i32
  }
  func.func @transform_2(%arg0: i32) -> (i32, i32) {
    %c0_i32 = arith.constant 0 : i32
    %c0_i32_0 = arith.constant 0 : i32
    %c0_i32_1 = arith.constant 0 : i32
    return %c0_i32, %c0_i32_0 : i32, i32
  }
  func.func @transform_3(%arg0: i32) -> (i32, i32) {
    %c0_i32 = arith.constant 0 : i32
    %c0_i32_0 = arith.constant 0 : i32
    %c0_i32_1 = arith.constant 0 : i32
    return %c0_i32, %c0_i32_0 : i32, i32
  }
  func.func @transform_4(%arg0: i32) -> (i32, i32) {
    %c0_i32 = arith.constant 0 : i32
    %c0_i32_0 = arith.constant 0 : i32
    %c0_i32_1 = arith.constant 0 : i32
    return %c0_i32, %c0_i32_0 : i32, i32
  }
  func.func @transform_5(%arg0: i32) -> (i32, i32) {
    %c0_i32 = arith.constant 0 : i32
    %c0_i32_0 = arith.constant 0 : i32
    %c0_i32_1 = arith.constant 0 : i32
    return %c0_i32, %c0_i32_0 : i32, i32
  }
  func.func @transform_6(%arg0: i32) -> (i32, i32, i32) {
    %c0_i32 = arith.constant 0 : i32
    %c0_i32_0 = arith.constant 0 : i32
    %c0_i32_1 = arith.constant 0 : i32
    %c0_i32_2 = arith.constant 0 : i32
    return %c0_i32, %c0_i32_0, %c0_i32_1 : i32, i32, i32
  }
  func.func @transform_7(%arg0: i32) -> (i32, i32) {
    %c0_i32 = arith.constant 0 : i32
    %c0_i32_0 = arith.constant 0 : i32
    %c0_i32_1 = arith.constant 0 : i32
    return %c0_i32, %c0_i32_0 : i32, i32
  }
  func.func @transform_8(%arg0: i32) -> (i32, i32, i32) {
    %c0_i32 = arith.constant 0 : i32
    %c0_i32_0 = arith.constant 0 : i32
    %c0_i32_1 = arith.constant 0 : i32
    return %arg0, %c0_i32, %c0_i32_0 : i32, i32, i32
  }
}

module attributes {stable_mosaic.version = 11 : i64} {
  func.func @_gn_conv3x3_kernel(%arg0: i32, %arg1: memref<1x324x32xf32, #tpu.memory_space<vmem>>, %arg2: memref<324x1xf32, #tpu.memory_space<vmem>>, %arg3: memref<32x32xf32, #tpu.memory_space<vmem>>, %arg4: memref<1x32xf32, #tpu.memory_space<vmem>>, %arg5: memref<1x32xf32, #tpu.memory_space<vmem>>, %arg6: memref<9x32x32xbf16, #tpu.memory_space<vmem>>, %arg7: memref<1x32xf32, #tpu.memory_space<vmem>>, %arg8: memref<1x324x32xf32, #tpu.memory_space<vmem>>) attributes {dimension_semantics = [#tpu.dimension_semantics<parallel>], iteration_bounds = array<i64: 2>, scalar_prefetch = 0 : i64, scratch_operands = 0 : i64, tpu.core_type = #tpu.core_type<tc>, window_params = [{transform_indices = @transform_0, window_bounds = array<i64: 1, 324, 32>}, {pipeline_mode = #tpu.pipeline_mode<synchronous>, transform_indices = @transform_1, window_bounds = array<i64: 324, 1>}, {pipeline_mode = #tpu.pipeline_mode<synchronous>, transform_indices = @transform_2, window_bounds = array<i64: 32, 32>}, {pipeline_mode = #tpu.pipeline_mode<synchronous>, transform_indices = @transform_3, window_bounds = array<i64: 1, 32>}, {pipeline_mode = #tpu.pipeline_mode<synchronous>, transform_indices = @transform_4, window_bounds = array<i64: 1, 32>}, {pipeline_mode = #tpu.pipeline_mode<synchronous>, transform_indices = @transform_5, window_bounds = array<i64: 9, 32, 32>}, {pipeline_mode = #tpu.pipeline_mode<synchronous>, transform_indices = @transform_6, window_bounds = array<i64: 1, 32>}, {transform_indices = @transform_7, window_bounds = array<i64: 1, 324, 32>}]} {
    %c0 = arith.constant 0 : index
    %c0_0 = arith.constant 0 : index
    %c0_1 = arith.constant 0 : index
    %0 = vector.load %arg1[%c0, %c0_0, %c0_1] : memref<1x324x32xf32, #tpu.memory_space<vmem>>, vector<1x324x32xf32>
    %1 = vector.shape_cast %0 : vector<1x324x32xf32> to vector<324x32xf32>
    %c0_2 = arith.constant 0 : index
    %c0_3 = arith.constant 0 : index
    %2 = vector.load %arg2[%c0_2, %c0_3] : memref<324x1xf32, #tpu.memory_space<vmem>>, vector<324x1xf32>
    %cst = arith.constant dense<0.000000e+00> : vector<32xf32>
    %3 = vector.multi_reduction <add>, %1, %cst [0] : vector<324x32xf32> to vector<32xf32>
    %4 = vector.shape_cast %3 : vector<32xf32> to vector<1x32xf32>
    %5 = arith.mulf %1, %1 : vector<324x32xf32>
    %cst_4 = arith.constant dense<0.000000e+00> : vector<32xf32>
    %6 = vector.multi_reduction <add>, %5, %cst_4 [0] : vector<324x32xf32> to vector<32xf32>
    %7 = vector.shape_cast %6 : vector<32xf32> to vector<1x32xf32>
    %8 = tpu.concatenate %4, %7 in 0 : vector<1x32xf32>, vector<1x32xf32> -> vector<2x32xf32>
    %c0_5 = arith.constant 0 : index
    %c0_6 = arith.constant 0 : index
    %9 = vector.load %arg3[%c0_5, %c0_6] : memref<32x32xf32, #tpu.memory_space<vmem>>, vector<32x32xf32>
    %cst_7 = arith.constant dense<0.000000e+00> : vector<2x32xf32>
    %10 = tpu.matmul %8, %9, %cst_7 {dimension_numbers = #tpu.dot_dimension_numbers<[1], [0], [0], [1], [0, 0, 1, 1], [], []>} : vector<2x32xf32>, vector<32x32xf32>, vector<2x32xf32> -> vector<2x32xf32>
    %11 = vector.extract_strided_slice %10 {offsets = [0, 0], sizes = [1, 32], strides = [1, 1]} : vector<2x32xf32> to vector<1x32xf32>
    %cst_8 = arith.constant 0.001953125 : f32
    %12 = vector.broadcast %cst_8 : f32 to vector<1x32xf32>
    %13 = arith.mulf %11, %12 : vector<1x32xf32>
    %14 = vector.extract_strided_slice %10 {offsets = [1, 0], sizes = [1, 32], strides = [1, 1]} : vector<2x32xf32> to vector<1x32xf32>
    %cst_9 = arith.constant 0.001953125 : f32
    %15 = vector.broadcast %cst_9 : f32 to vector<1x32xf32>
    %16 = arith.mulf %14, %15 : vector<1x32xf32>
    %17 = arith.mulf %13, %13 : vector<1x32xf32>
    %18 = arith.subf %16, %17 : vector<1x32xf32>
    %cst_10 = arith.constant 0.000000e+00 : f32
    %19 = vector.broadcast %cst_10 : f32 to vector<1x32xf32>
    %20 = arith.maximumf %18, %19 : vector<1x32xf32>
    %cst_11 = arith.constant 9.99999974E-6 : f32
    %21 = vector.broadcast %cst_11 : f32 to vector<1x32xf32>
    %22 = arith.addf %20, %21 : vector<1x32xf32>
    %23 = math.rsqrt %22 : vector<1x32xf32>
    %c0_12 = arith.constant 0 : index
    %c0_13 = arith.constant 0 : index
    %24 = vector.load %arg4[%c0_12, %c0_13] : memref<1x32xf32, #tpu.memory_space<vmem>>, vector<1x32xf32>
    %25 = arith.mulf %23, %24 : vector<1x32xf32>
    %26 = vector.broadcast %13 : vector<1x32xf32> to vector<324x32xf32>
    %27 = arith.subf %1, %26 : vector<324x32xf32>
    %28 = vector.broadcast %25 : vector<1x32xf32> to vector<324x32xf32>
    %29 = arith.mulf %27, %28 : vector<324x32xf32>
    %c0_14 = arith.constant 0 : index
    %c0_15 = arith.constant 0 : index
    %30 = vector.load %arg5[%c0_14, %c0_15] : memref<1x32xf32, #tpu.memory_space<vmem>>, vector<1x32xf32>
    %31 = vector.broadcast %30 : vector<1x32xf32> to vector<324x32xf32>
    %32 = arith.addf %29, %31 : vector<324x32xf32>
    %33 = vector.broadcast %2 : vector<324x1xf32> to vector<324x32xf32>
    %34 = arith.mulf %32, %33 : vector<324x32xf32>
    %cst_16 = arith.constant 0.000000e+00 : f32
    %35 = vector.broadcast %cst_16 : f32 to vector<286x32xf32>
    %36 = vector.extract_strided_slice %34 {offsets = [0, 0], sizes = [286, 32], strides = [1, 1]} : vector<324x32xf32> to vector<286x32xf32>
    %37 = arith.truncf %36 : vector<286x32xf32> to vector<286x32xbf16>
    %c0_17 = arith.constant 0 : index
    %c0_18 = arith.constant 0 : index
    %c0_19 = arith.constant 0 : index
    %38 = vector.load %arg6[%c0_17, %c0_18, %c0_19] : memref<9x32x32xbf16, #tpu.memory_space<vmem>>, vector<1x32x32xbf16>
    %39 = vector.shape_cast %38 : vector<1x32x32xbf16> to vector<32x32xbf16>
    %cst_20 = arith.constant dense<0.000000e+00> : vector<286x32xf32>
    %40 = tpu.matmul %37, %39, %cst_20 {dimension_numbers = #tpu.dot_dimension_numbers<[1], [0], [0], [1], [0, 0, 1, 1], [], []>} : vector<286x32xbf16>, vector<32x32xbf16>, vector<286x32xf32> -> vector<286x32xf32>
    %41 = arith.addf %35, %40 : vector<286x32xf32>
    %42 = vector.extract_strided_slice %34 {offsets = [1, 0], sizes = [286, 32], strides = [1, 1]} : vector<324x32xf32> to vector<286x32xf32>
    %43 = arith.truncf %42 : vector<286x32xf32> to vector<286x32xbf16>
    %c1 = arith.constant 1 : index
    %c0_21 = arith.constant 0 : index
    %c0_22 = arith.constant 0 : index
    %44 = vector.load %arg6[%c1, %c0_21, %c0_22] : memref<9x32x32xbf16, #tpu.memory_space<vmem>>, vector<1x32x32xbf16>
    %45 = vector.shape_cast %44 : vector<1x32x32xbf16> to vector<32x32xbf16>
    %cst_23 = arith.constant dense<0.000000e+00> : vector<286x32xf32>
    %46 = tpu.matmul %43, %45, %cst_23 {dimension_numbers = #tpu.dot_dimension_numbers<[1], [0], [0], [1], [0, 0, 1, 1], [], []>} : vector<286x32xbf16>, vector<32x32xbf16>, vector<286x32xf32> -> vector<286x32xf32>
    %47 = arith.addf %41, %46 : vector<286x32xf32>
    %48 = vector.extract_strided_slice %34 {offsets = [2, 0], sizes = [286, 32], strides = [1, 1]} : vector<324x32xf32> to vector<286x32xf32>
    %49 = arith.truncf %48 : vector<286x32xf32> to vector<286x32xbf16>
    %c2 = arith.constant 2 : index
    %c0_24 = arith.constant 0 : index
    %c0_25 = arith.constant 0 : index
    %50 = vector.load %arg6[%c2, %c0_24, %c0_25] : memref<9x32x32xbf16, #tpu.memory_space<vmem>>, vector<1x32x32xbf16>
    %51 = vector.shape_cast %50 : vector<1x32x32xbf16> to vector<32x32xbf16>
    %cst_26 = arith.constant dense<0.000000e+00> : vector<286x32xf32>
    %52 = tpu.matmul %49, %51, %cst_26 {dimension_numbers = #tpu.dot_dimension_numbers<[1], [0], [0], [1], [0, 0, 1, 1], [], []>} : vector<286x32xbf16>, vector<32x32xbf16>, vector<286x32xf32> -> vector<286x32xf32>
    %53 = arith.addf %47, %52 : vector<286x32xf32>
    %54 = vector.extract_strided_slice %34 {offsets = [18, 0], sizes = [286, 32], strides = [1, 1]} : vector<324x32xf32> to vector<286x32xf32>
    %55 = arith.truncf %54 : vector<286x32xf32> to vector<286x32xbf16>
    %c3 = arith.constant 3 : index
    %c0_27 = arith.constant 0 : index
    %c0_28 = arith.constant 0 : index
    %56 = vector.load %arg6[%c3, %c0_27, %c0_28] : memref<9x32x32xbf16, #tpu.memory_space<vmem>>, vector<1x32x32xbf16>
    %57 = vector.shape_cast %56 : vector<1x32x32xbf16> to vector<32x32xbf16>
    %cst_29 = arith.constant dense<0.000000e+00> : vector<286x32xf32>
    %58 = tpu.matmul %55, %57, %cst_29 {dimension_numbers = #tpu.dot_dimension_numbers<[1], [0], [0], [1], [0, 0, 1, 1], [], []>} : vector<286x32xbf16>, vector<32x32xbf16>, vector<286x32xf32> -> vector<286x32xf32>
    %59 = arith.addf %53, %58 : vector<286x32xf32>
    %60 = vector.extract_strided_slice %34 {offsets = [19, 0], sizes = [286, 32], strides = [1, 1]} : vector<324x32xf32> to vector<286x32xf32>
    %61 = arith.truncf %60 : vector<286x32xf32> to vector<286x32xbf16>
    %c4 = arith.constant 4 : index
    %c0_30 = arith.constant 0 : index
    %c0_31 = arith.constant 0 : index
    %62 = vector.load %arg6[%c4, %c0_30, %c0_31] : memref<9x32x32xbf16, #tpu.memory_space<vmem>>, vector<1x32x32xbf16>
    %63 = vector.shape_cast %62 : vector<1x32x32xbf16> to vector<32x32xbf16>
    %cst_32 = arith.constant dense<0.000000e+00> : vector<286x32xf32>
    %64 = tpu.matmul %61, %63, %cst_32 {dimension_numbers = #tpu.dot_dimension_numbers<[1], [0], [0], [1], [0, 0, 1, 1], [], []>} : vector<286x32xbf16>, vector<32x32xbf16>, vector<286x32xf32> -> vector<286x32xf32>
    %65 = arith.addf %59, %64 : vector<286x32xf32>
    %66 = vector.extract_strided_slice %34 {offsets = [20, 0], sizes = [286, 32], strides = [1, 1]} : vector<324x32xf32> to vector<286x32xf32>
    %67 = arith.truncf %66 : vector<286x32xf32> to vector<286x32xbf16>
    %c5 = arith.constant 5 : index
    %c0_33 = arith.constant 0 : index
    %c0_34 = arith.constant 0 : index
    %68 = vector.load %arg6[%c5, %c0_33, %c0_34] : memref<9x32x32xbf16, #tpu.memory_space<vmem>>, vector<1x32x32xbf16>
    %69 = vector.shape_cast %68 : vector<1x32x32xbf16> to vector<32x32xbf16>
    %cst_35 = arith.constant dense<0.000000e+00> : vector<286x32xf32>
    %70 = tpu.matmul %67, %69, %cst_35 {dimension_numbers = #tpu.dot_dimension_numbers<[1], [0], [0], [1], [0, 0, 1, 1], [], []>} : vector<286x32xbf16>, vector<32x32xbf16>, vector<286x32xf32> -> vector<286x32xf32>
    %71 = arith.addf %65, %70 : vector<286x32xf32>
    %72 = vector.extract_strided_slice %34 {offsets = [36, 0], sizes = [286, 32], strides = [1, 1]} : vector<324x32xf32> to vector<286x32xf32>
    %73 = arith.truncf %72 : vector<286x32xf32> to vector<286x32xbf16>
    %c6 = arith.constant 6 : index
    %c0_36 = arith.constant 0 : index
    %c0_37 = arith.constant 0 : index
    %74 = vector.load %arg6[%c6, %c0_36, %c0_37] : memref<9x32x32xbf16, #tpu.memory_space<vmem>>, vector<1x32x32xbf16>
    %75 = vector.shape_cast %74 : vector<1x32x32xbf16> to vector<32x32xbf16>
    %cst_38 = arith.constant dense<0.000000e+00> : vector<286x32xf32>
    %76 = tpu.matmul %73, %75, %cst_38 {dimension_numbers = #tpu.dot_dimension_numbers<[1], [0], [0], [1], [0, 0, 1, 1], [], []>} : vector<286x32xbf16>, vector<32x32xbf16>, vector<286x32xf32> -> vector<286x32xf32>
    %77 = arith.addf %71, %76 : vector<286x32xf32>
    %78 = vector.extract_strided_slice %34 {offsets = [37, 0], sizes = [286, 32], strides = [1, 1]} : vector<324x32xf32> to vector<286x32xf32>
    %79 = arith.truncf %78 : vector<286x32xf32> to vector<286x32xbf16>
    %c7 = arith.constant 7 : index
    %c0_39 = arith.constant 0 : index
    %c0_40 = arith.constant 0 : index
    %80 = vector.load %arg6[%c7, %c0_39, %c0_40] : memref<9x32x32xbf16, #tpu.memory_space<vmem>>, vector<1x32x32xbf16>
    %81 = vector.shape_cast %80 : vector<1x32x32xbf16> to vector<32x32xbf16>
    %cst_41 = arith.constant dense<0.000000e+00> : vector<286x32xf32>
    %82 = tpu.matmul %79, %81, %cst_41 {dimension_numbers = #tpu.dot_dimension_numbers<[1], [0], [0], [1], [0, 0, 1, 1], [], []>} : vector<286x32xbf16>, vector<32x32xbf16>, vector<286x32xf32> -> vector<286x32xf32>
    %83 = arith.addf %77, %82 : vector<286x32xf32>
    %84 = vector.extract_strided_slice %34 {offsets = [38, 0], sizes = [286, 32], strides = [1, 1]} : vector<324x32xf32> to vector<286x32xf32>
    %85 = arith.truncf %84 : vector<286x32xf32> to vector<286x32xbf16>
    %c8 = arith.constant 8 : index
    %c0_42 = arith.constant 0 : index
    %c0_43 = arith.constant 0 : index
    %86 = vector.load %arg6[%c8, %c0_42, %c0_43] : memref<9x32x32xbf16, #tpu.memory_space<vmem>>, vector<1x32x32xbf16>
    %87 = vector.shape_cast %86 : vector<1x32x32xbf16> to vector<32x32xbf16>
    %cst_44 = arith.constant dense<0.000000e+00> : vector<286x32xf32>
    %88 = tpu.matmul %85, %87, %cst_44 {dimension_numbers = #tpu.dot_dimension_numbers<[1], [0], [0], [1], [0, 0, 1, 1], [], []>} : vector<286x32xbf16>, vector<32x32xbf16>, vector<286x32xf32> -> vector<286x32xf32>
    %89 = arith.addf %83, %88 : vector<286x32xf32>
    %c0_45 = arith.constant 0 : index
    %c0_46 = arith.constant 0 : index
    %90 = vector.load %arg7[%c0_45, %c0_46] : memref<1x32xf32, #tpu.memory_space<vmem>>, vector<1x32xf32>
    %91 = vector.broadcast %90 : vector<1x32xf32> to vector<286x32xf32>
    %92 = arith.addf %89, %91 : vector<286x32xf32>
    %93 = arith.negf %92 : vector<286x32xf32>
    %94 = math.exp %93 : vector<286x32xf32>
    %cst_47 = arith.constant 1.000000e+00 : f32
    %95 = vector.broadcast %cst_47 : f32 to vector<286x32xf32>
    %96 = arith.addf %95, %94 : vector<286x32xf32>
    %97 = arith.divf %95, %96 : vector<286x32xf32>
    %98 = arith.mulf %92, %97 : vector<286x32xf32>
    %99 = vector.extract_strided_slice %2 {offsets = [19, 0], sizes = [286, 1], strides = [1, 1]} : vector<324x1xf32> to vector<286x1xf32>
    %100 = vector.broadcast %99 : vector<286x1xf32> to vector<286x32xf32>
    %101 = arith.mulf %98, %100 : vector<286x32xf32>
    %cst_48 = arith.constant 0.000000e+00 : f32
    %102 = vector.broadcast %cst_48 : f32 to vector<19x32xf32>
    %c0_49 = arith.constant 0 : index
    %c0_50 = arith.constant 0 : index
    %c0_51 = arith.constant 0 : index
    %103 = vector.load %arg8[%c0_49, %c0_50, %c0_51] : memref<1x324x32xf32, #tpu.memory_space<vmem>>, vector<1x19x32xf32>
    %104 = vector.shape_cast %103 : vector<1x19x32xf32> to vector<19x32xf32>
    %105 = vector.shape_cast %102 : vector<19x32xf32> to vector<1x19x32xf32>
    tpu.vector_store %arg8[%c0_49, %c0_50, %c0_51], %105 {strides = array<i32>} : memref<1x324x32xf32, #tpu.memory_space<vmem>>, vector<1x19x32xf32>,
    %c0_52 = arith.constant 0 : index
    %c19 = arith.constant 19 : index
    %c0_53 = arith.constant 0 : index
    %106 = vector.load %arg8[%c0_52, %c19, %c0_53] : memref<1x324x32xf32, #tpu.memory_space<vmem>>, vector<1x286x32xf32>
    %107 = vector.shape_cast %106 : vector<1x286x32xf32> to vector<286x32xf32>
    %108 = vector.shape_cast %101 : vector<286x32xf32> to vector<1x286x32xf32>
    tpu.vector_store %arg8[%c0_52, %c19, %c0_53], %108 {strides = array<i32>} : memref<1x324x32xf32, #tpu.memory_space<vmem>>, vector<1x286x32xf32>,
    %cst_54 = arith.constant 0.000000e+00 : f32
    %109 = vector.broadcast %cst_54 : f32 to vector<19x32xf32>
    %c0_55 = arith.constant 0 : index
    %c305 = arith.constant 305 : index
    %c0_56 = arith.constant 0 : index
    %110 = vector.load %arg8[%c0_55, %c305, %c0_56] : memref<1x324x32xf32, #tpu.memory_space<vmem>>, vector<1x19x32xf32>
    %111 = vector.shape_cast %110 : vector<1x19x32xf32> to vector<19x32xf32>
    %112 = vector.shape_cast %109 : vector<19x32xf32> to vector<1x19x32xf32>
    tpu.vector_store %arg8[%c0_55, %c305, %c0_56], %112 {strides = array<i32>} : memref<1x324x32xf32, #tpu.memory_space<vmem>>, vector<1x19x32xf32>,
    return
  }
  func.func @transform_0(%arg0: i32) -> (i32, i32, i32) {
    %c0_i32 = arith.constant 0 : i32
    %c0_i32_0 = arith.constant 0 : i32
    %c0_i32_1 = arith.constant 0 : i32
    return %arg0, %c0_i32, %c0_i32_0 : i32, i32, i32
  }
  func.func @transform_1(%arg0: i32) -> (i32, i32) {
    %c0_i32 = arith.constant 0 : i32
    %c0_i32_0 = arith.constant 0 : i32
    %c0_i32_1 = arith.constant 0 : i32
    return %c0_i32, %c0_i32_0 : i32, i32
  }
  func.func @transform_2(%arg0: i32) -> (i32, i32) {
    %c0_i32 = arith.constant 0 : i32
    %c0_i32_0 = arith.constant 0 : i32
    %c0_i32_1 = arith.constant 0 : i32
    return %c0_i32, %c0_i32_0 : i32, i32
  }
  func.func @transform_3(%arg0: i32) -> (i32, i32) {
    %c0_i32 = arith.constant 0 : i32
    %c0_i32_0 = arith.constant 0 : i32
    %c0_i32_1 = arith.constant 0 : i32
    return %c0_i32, %c0_i32_0 : i32, i32
  }
  func.func @transform_4(%arg0: i32) -> (i32, i32) {
    %c0_i32 = arith.constant 0 : i32
    %c0_i32_0 = arith.constant 0 : i32
    %c0_i32_1 = arith.constant 0 : i32
    return %c0_i32, %c0_i32_0 : i32, i32
  }
  func.func @transform_5(%arg0: i32) -> (i32, i32, i32) {
    %c0_i32 = arith.constant 0 : i32
    %c0_i32_0 = arith.constant 0 : i32
    %c0_i32_1 = arith.constant 0 : i32
    %c0_i32_2 = arith.constant 0 : i32
    return %c0_i32, %c0_i32_0, %c0_i32_1 : i32, i32, i32
  }
  func.func @transform_6(%arg0: i32) -> (i32, i32) {
    %c0_i32 = arith.constant 0 : i32
    %c0_i32_0 = arith.constant 0 : i32
    %c0_i32_1 = arith.constant 0 : i32
    return %c0_i32, %c0_i32_0 : i32, i32
  }
  func.func @transform_7(%arg0: i32) -> (i32, i32, i32) {
    %c0_i32 = arith.constant 0 : i32
    %c0_i32_0 = arith.constant 0 : i32
    %c0_i32_1 = arith.constant 0 : i32
    return %arg0, %c0_i32, %c0_i32_0 : i32, i32, i32
  }
}

</mosaic_0001>

<llo_original>
// kernel: up_block_forward.3
$region0: #{up_block_forward.3}
  #allocation0 [shape = 'u32[]', space=smem, size = 0x4, offset = 0x4, fixed_abs, tag = 'smem constant byte address 0x4 - core index']
  #allocation1 [shape = 'u32[144,128]{1,0:T(1,128)}', space=vmem, size = 0x12000, scoped, tag = 'internal scratch']
  %s0 = inlined_call_operand.vmem [shape: f32[2,100,32], index: 0, kind: input, shape index: {}]
  %s1 = inlined_call_operand.vmem [shape: bf16[16,32,32], index: 1, kind: input, shape index: {}]
  %s2 = inlined_call_operand.vmem [shape: f32[1,128], index: 2, kind: input, shape index: {}]
  %s3 = inlined_call_operand.vmem [shape: f32[2,64,128], index: 3, kind: output, shape index: {}]
  %s4 = sld [smem:[#allocation0]]
  $region45: #{up_block_forward.3} parent=0
    _
  %s6 = ssub.s32 1, %s4
  %s7 = scalar_select 0, %s6, %s4
  loop: start=0, step=1, limit=4
  $region2: #{up_block_forward.3} parent=0 // loop_pre_header
    _
  $region3: #{up_block_forward.3} parent=0 // loop_header
    %s9 = sphi 0, %s13
    %p10 = scmp.ge.s32.totalorder %s9, 4
    %s19 = sphi 0, %s21
    %s22 = sphi 0, %s19
    %s23 = sphi 0, %s22
    %s39 = sphi 0, %s23
    %s43 = sphi 0, %s43
    %s45 = sphi 0, %s43
    %s46 = sphi 0, %s45
    %s60 = sphi 0, %s46
    %s64 = sphi 0, %s64
    %s66 = sphi 0, %s64
    %s67 = sphi 0, %s66
    %s81 = sphi 0, %s67
    %s87 = sphi 0, %s89
    %s90 = sphi 0, %s87
    %s91 = sphi 0, %s90
    %s107 = sphi 0, %s91
  $region4: #{up_block_forward.3} parent=0 // loop_header_branch
    %12 = sbr.rel (%p10) target = $region8
  $region5: #{up_block_forward.3} parent=0 // loop_body
    %s14 = ssub.s32 %s9, 1
    %s15 = ssub.s32 %s9, 2
    %s16 = sadd.s32 %s9, 1
    %s17 = ssub.s32 %s9, %s16
    %p18 = scmp.eq.s32.totalorder %s17, 0
    %s20 = sadd.s32 %s19, 1
    %s21 = scalar_select %p18, %s19, %s20
    %p24 = pneg %p18
    %p25 = scmp.eq.s32.totalorder %s9, 1
    %p26 = por %p24, %p25
    %p27 = scmp.ne.s32.totalorder %s19, %s22
    %p28 = scmp.eq.s32.totalorder %s9, 0
    %p29 = por %p27, %p28
    %p30 = scmp.ne.s32.totalorder %s19, %s22
    %p31 = scmp.eq.s32.totalorder %s14, 1
    %p32 = por %p30, %p31
    %p33 = scmp.ne.s32.totalorder %s22, %s23
    %p34 = scmp.eq.s32.totalorder %s14, 0
    %p35 = por %p33, %p34
    %p36 = scmp.ne.s32.totalorder %s22, %s23
    %p37 = scmp.eq.s32.totalorder %s15, 1
    %p38 = por %p36, %p37
    %p40 = scmp.ne.s32.totalorder %s23, %s39
    %p41 = scmp.eq.s32.totalorder %s15, 0
    %p42 = por %p40, %p41
    %s44 = sadd.s32 %s43, 1
    %p47 = scmp.eq.s32.totalorder %s9, 1
    %p48 = scmp.ne.s32.totalorder %s43, %s45
    %p49 = scmp.eq.s32.totalorder %s9, 0
    %p50 = por %p48, %p49
    %p51 = scmp.ne.s32.totalorder %s43, %s45
    %p52 = scmp.eq.s32.totalorder %s14, 1
    %p53 = por %p51, %p52
    %p54 = scmp.ne.s32.totalorder %s45, %s46
    %p55 = scmp.eq.s32.totalorder %s14, 0
    %p56 = por %p54, %p55
    %p57 = scmp.ne.s32.totalorder %s45, %s46
    %p58 = scmp.eq.s32.totalorder %s15, 1
    %p59 = por %p57, %p58
    %p61 = scmp.ne.s32.totalorder %s46, %s60
    %p62 = scmp.eq.s32.totalorder %s15, 0
    %p63 = por %p61, %p62
    %s65 = sadd.s32 %s64, 1
    %p68 = scmp.eq.s32.totalorder %s9, 1
    %p69 = scmp.ne.s32.totalorder %s64, %s66
    %p70 = scmp.eq.s32.totalorder %s9, 0
    %p71 = por %p69, %p70
    %p72 = scmp.ne.s32.totalorder %s64, %s66
    %p73 = scmp.eq.s32.totalorder %s14, 1
    %p74 = por %p72, %p73
    %p75 = scmp.ne.s32.totalorder %s66, %s67
    %p76 = scmp.eq.s32.totalorder %s14, 0
    %p77 = por %p75, %p76
    %p78 = scmp.ne.s32.totalorder %s66, %s67
    %p79 = scmp.eq.s32.totalorder %s15, 1
    %p80 = por %p78, %p79
    %p82 = scmp.ne.s32.totalorder %s67, %s81
    %p83 = scmp.eq.s32.totalorder %s15, 0
    %p84 = por %p82, %p83
    %s85 = ssub.s32 %s9, %s16
    %p86 = scmp.eq.s32.totalorder %s85, 0
    %s88 = sadd.s32 %s87, 1
    %s89 = scalar_select %p86, %s87, %s88
    %p92 = pneg %p86
    %p93 = scmp.eq.s32.totalorder %s9, 1
    %p94 = por %p92, %p93
    %p95 = scmp.ne.s32.totalorder %s87, %s90
    %p96 = scmp.eq.s32.totalorder %s9, 0
    %p97 = por %p95, %p96
    %p98 = scmp.ne.s32.totalorder %s87, %s90
    %p99 = scmp.eq.s32.totalorder %s14, 1
    %p100 = por %p98, %p99
    %p101 = scmp.ne.s32.totalorder %s90, %s91
    %p102 = scmp.eq.s32.totalorder %s14, 0
    %p103 = por %p101, %p102
    %p104 = scmp.ne.s32.totalorder %s90, %s91
    %p105 = scmp.eq.s32.totalorder %s15, 1
    %p106 = por %p104, %p105
    %p108 = scmp.ne.s32.totalorder %s91, %s107
    %p109 = scmp.eq.s32.totalorder %s15, 0
    %p110 = por %p108, %p109
    %p111 = scmp.le.s32.totalorder 1, %s9
    %p112 = scmp.lt.s32.totalorder %s9, 3
    %p113 = pnand %p111, %p112
    %p114 = pneg %p113
    // Predicated region
    $region9: #{up_block_forward.3} parent=5 // pred_check
      _
    $region10: #{up_block_forward.3} parent=5 // pred_check_branch
      %116 = sbr.rel (%p113) target = $region12
    $region11: #{up_block_forward.3} parent=5 // pred_region
      %s117 = ssub.s32 %s9, 1
      // Predicated region
      $region13: #{up_block_forward.3} parent=11 // pred_check
        %p118 = pneg %p56
      $region14: #{up_block_forward.3} parent=11 // pred_check_branch
        %120 = sbr.rel (%p118) target = $region16
      $region15: #{up_block_forward.3} parent=11 // pred_region
        _
      $region16: #{up_block_forward.3} parent=11 // pred_fallthru
        _
      // Predicated region
      $region17: #{up_block_forward.3} parent=11 // pred_check
        %p121 = pneg %p77
      $region18: #{up_block_forward.3} parent=11 // pred_check_branch
        %123 = sbr.rel (%p121) target = $region20
      $region19: #{up_block_forward.3} parent=11 // pred_region
        _
      $region20: #{up_block_forward.3} parent=11 // pred_fallthru
        _
    $region12: #{up_block_forward.3} parent=5 // pred_fallthru
      _
    %p124 = scmp.lt.s32.totalorder %s9, 2
    // Predicated region
    $region21: #{up_block_forward.3} parent=5 // pred_check
      %p125 = pneg %p124
    $region22: #{up_block_forward.3} parent=5 // pred_check_branch
      %127 = sbr.rel (%p125) target = $region24
    $region23: #{up_block_forward.3} parent=5 // pred_region
      // Predicated region
      $region25: #{up_block_forward.3} parent=23 // pred_check
        %p128 = pneg %p29
      $region26: #{up_block_forward.3} parent=23 // pred_check_branch
        %130 = sbr.rel (%p128) target = $region28
      $region27: #{up_block_forward.3} parent=23 // pred_region
        %p131 = scmp.lt.s32.totalorder %s9, 1
        %s132 = scalar_select %p131, %s9, 1
        %s133 = smul.addr %s132, 13
        %s134 = smul.addr %s133, 8
        %s135 = scalar_lea.vmem %s0, %s134
      $region28: #{up_block_forward.3} parent=23 // pred_fallthru
        _
    $region24: #{up_block_forward.3} parent=5 // pred_fallthru
      _
    %p136 = scmp.le.s32.totalorder 1, %s9
    %p137 = scmp.lt.s32.totalorder %s9, 3
    %p138 = pnand %p136, %p137
    %p139 = pneg %p138
    // Predicated region
    $region29: #{up_block_forward.3} parent=5 // pred_check
      _
    $region30: #{up_block_forward.3} parent=5 // pred_check_branch
      %141 = sbr.rel (%p138) target = $region32
    $region31: #{up_block_forward.3} parent=5 // pred_region
      %s142 = ssub.s32 %s9, 1
      %p143 = scmp.lt.s32.totalorder %s14, 1
      %s144 = scalar_select %p143, %s14, 1
      %s145 = smul.addr %s144, 13
      %s146 = smul.addr %s145, 8
      %s147 = scalar_lea.vmem %s0, %s146
      %p148 = pneg %p35
      %p149 = pneg %p32
      %p150 = pneg %p56
      %p151 = pneg %p53
      %p152 = pneg %p77
      %p153 = pneg %p74
      %p154 = pneg %p103
      %p155 = pneg %p100
      %p156 = scmp.lt.s32.totalorder %s14, 1
      %s157 = scalar_select %p156, %s14, 1
      %s158 = smul.addr %s157, 8
      %s159 = smul.addr %s158, 8
      %s160 = scalar_lea.vmem %s3, %s159
      %p161 = scmp.lt.s32.totalorder %s14, 1
      %s162 = scalar_select %p161, %s14, 1
      %s163 = smul.addr %s162, 13
      %s164 = smul.addr %s163, 8
      %s165 = scalar_lea.vmem %s0, %s164
      %p166 = scmp.lt.s32.totalorder %s14, 1
      %s167 = scalar_select %p166, %s14, 1
      %s168 = smul.addr %s167, 8
      %s169 = smul.addr %s168, 8
      %s170 = scalar_lea.vmem %s3, %s169
      %v172 = vld [vmem:[%s165] sm:$0xff]
      %v173 = vld [vmem:[%s165 + $0x8] sm:$0xff]
      %v174 = vld [vmem:[%s165 + $0x10] sm:$0xff]
      %v175 = vld [vmem:[%s165 + $0x18] sm:$0xff]
      %v176 = vld [vmem:[%s165 + $0x20] sm:$0xff]
      %v177 = vld [vmem:[%s165 + $0x28] sm:$0xff]
      %v178 = vld [vmem:[%s165 + $0x30] sm:$0xff]
      %v179 = vld [vmem:[%s165 + $0x38] sm:$0xff]
      %v180 = vld [vmem:[%s165 + $0x40] sm:$0xff]
      %v181 = vld [vmem:[%s165 + $0x48] sm:$0xff]
      %v182 = vld [vmem:[%s165 + $0x50] sm:$0xff]
      %v183 = vld [vmem:[%s165 + $0x58] sm:$0xff]
      %v184 = vld [vmem:[%s165 + $0x60] sm:$0xf]
      %v185 = vpack.c.bf16 %v173, %v172
      %v186 = vpack.c.bf16 %v175, %v174
      %v187 = vpack.c.bf16 %v177, %v176
      %v188 = vpack.c.bf16 %v179, %v178
      %v189 = vpack.c.bf16 %v181, %v180
      %v190 = vld [vmem:[%s1] sm:$0xf]
      %v191 = vld [vmem:[%s1 + $0x4] sm:$0xf]
      %v192 = vld [vmem:[%s1 + $0x8] sm:$0xf]
      %v193 = vld [vmem:[%s1 + $0xc] sm:$0xf]
      %s194 = scalar_lea.vmem %s1, 16
      %v195 = vld [vmem:[%s194] sm:$0xf]
      %v196 = vld [vmem:[%s194 + $0x4] sm:$0xf]
      %v197 = vld [vmem:[%s194 + $0x8] sm:$0xf]
      %v198 = vld [vmem:[%s194 + $0xc] sm:$0xf]
      %vm199 = vsmask.f32 7424
      %v201 = vshrl.u32 %v185, 16
      %v203 = vshll.u32 %v185, 16
      %v205 = vrot.slane %v203, 1
      %v206 = vor.u32 %v201, %v205
      %v208 = vshll.u32 %v186, 16
      %v210 = vrot.slane %v208, 1
      %v211 = vsel %vm199, %v206, %v210
      %v212 = vshrl.u32 %v186, 16
      %v214 = vor.u32 %v212, %v210
      %v216 = vshll.u32 %v187, 16
      %v218 = vrot.slane %v216, 1
      %v219 = vsel %vm199, %v214, %v218
      %v220 = vshrl.u32 %v187, 16
      %v222 = vor.u32 %v220, %v218
      %v224 = vshll.u32 %v188, 16
      %v226 = vrot.slane %v224, 1
      %v227 = vsel %vm199, %v222, %v226
      %v228 = vshrl.u32 %v188, 16
      %v230 = vor.u32 %v228, %v226
      %v232 = vshll.u32 %v189, 16
      %v234 = vrot.slane %v232, 1
      %v235 = vsel %vm199, %v230, %v234
      %v236 = vshrl.u32 %v189, 16
      %v238 = vor.u32 %v236, %v234
      %v243 = vunpack.c.l.b16 %v195
      %v244 = vunpack.c.l.b16 %v196
      %v245 = vunpack.c.l.b16 %v197
      %v246 = vunpack.c.l.b16 %v198
      %v247 = vpack.c.b16 %v244, %v243
      %v248 = vpack.c.b16 %v246, %v245
      %vm251 = vcmask 261120
      %v253 = vsel %vm251, %v211, 0
      %v256 = vsel %vm251, %v219, 0
      %v259 = vsel %vm251, %v227, 0
      %v262 = vsel %vm251, %v235, 0
      %v265 = vsel %vm251, %v238, 0
      %267 = vmatprep.subr.bf16.mxu0 0
      %268 = vmatpush1.bf16.msra.mxu0 %v247
      %269 = vmatprep.subr.bf16.mxu0 0
      %270 = vmatpush1.bf16.msra.mxu0 %v248
      %271 = vmatprep.subr.bf16.mxu0 0
      %272 = vmatpush1.bf16.msra.mxu0 0
      %273 = vmatprep.subr.bf16.mxu0 0
      %274 = vmatpush1.bf16.msra.mxu0 0
      %275 = vmatprep.subr.bf16.mxu0 0
      %276 = vmatpush1.bf16.msra.mxu0 0
      %277 = vmatprep.subr.bf16.mxu0 0
      %278 = vmatpush1.bf16.msra.mxu0 0
      %279 = vmatprep.subr.bf16.mxu0 0
      %280 = vmatpush1.bf16.msra.mxu0 0
      %281 = vmatprep.subr.bf16.mxu0 0
      %282 = vmatpush1.bf16.msra.mxu0 0
      %283 = vmatprep.subr.bf16.mxu0 0
      %284 = vmatpush1.bf16.msra.mxu0 0
      %285 = vmatprep.subr.bf16.mxu0 0
      %286 = vmatpush1.bf16.msra.mxu0 0
      %287 = vmatprep.subr.bf16.mxu0 0
      %288 = vmatpush1.bf16.msra.mxu0 0
      %289 = vmatprep.subr.bf16.mxu0 0
      %290 = vmatpush1.bf16.msra.mxu0 0
      %291 = vmatprep.subr.bf16.mxu0 0
      %292 = vmatpush1.bf16.msra.mxu0 0
      %293 = vmatprep.subr.bf16.mxu0 0
      %294 = vmatpush1.bf16.msra.mxu0 0
      %295 = vmatprep.subr.bf16.mxu0 0
      %296 = vmatpush1.bf16.msra.mxu0 0
      %297 = vmatprep.subr.bf16.mxu0 0
      %298 = vmatpush1.bf16.msra.mxu0 0
      %299 = vmatprep.mubr.bf16.mxu0 0
      %300 = vmatmul.mubr.bf16.gmra.mrb[0].mxu0 %v253
      %v301 = vpop.f32.mrb[0].mxu0
      %v302 = vadd.f32 0.0, %v301
      %v303 = vpop.f32.mrb[0].mxu0
      %v304 = vpop.f32.mrb[0].mxu0
      %v305 = vadd.f32 0.0, %v304
      %v306 = vpop.f32.mrb[0].mxu0
      %307 = vmatprep.mubr.bf16.mxu0 0
      %308 = vmatmul.mubr.bf16.gmra.mrb[0].mxu0 %v256
      %v309 = vpop.f32.mrb[0].mxu0
      %v310 = vadd.f32 0.0, %v309
      %v311 = vpop.f32.mrb[0].mxu0
      %v312 = vpop.f32.mrb[0].mxu0
      %v313 = vadd.f32 0.0, %v312
      %v314 = vpop.f32.mrb[0].mxu0
      %315 = vmatprep.mubr.bf16.mxu0 0
      %316 = vmatmul.mubr.bf16.gmra.mrb[0].mxu0 %v259
      %v317 = vpop.f32.mrb[0].mxu0
      %v318 = vadd.f32 0.0, %v317
      %v319 = vpop.f32.mrb[0].mxu0
      %v320 = vpop.f32.mrb[0].mxu0
      %v321 = vadd.f32 0.0, %v320
      %v322 = vpop.f32.mrb[0].mxu0
      %323 = vmatprep.mubr.bf16.mxu0 0
      %324 = vmatmul.mubr.bf16.gmra.mrb[0].mxu0 %v262
      %v325 = vpop.f32.mrb[0].mxu0
      %v326 = vadd.f32 0.0, %v325
      %v327 = vpop.f32.mrb[0].mxu0
      %v328 = vpop.f32.mrb[0].mxu0
      %v329 = vadd.f32 0.0, %v328
      %v330 = vpop.f32.mrb[0].mxu0
      %331 = vmatprep.mubr.bf16.mxu0 0
      %332 = vmatmul.mubr.bf16.gmra.mrb[0].mxu0 %v265
      %v333 = vpop.f32.mrb[0].mxu0
      %v334 = vadd.f32 0.0, %v333
      %v335 = vpop.f32.mrb[0].mxu0
      %v336 = vpop.f32.mrb[0].mxu0
      %v337 = vadd.f32 0.0, %v336
      %v338 = vpop.f32.mrb[0].mxu0
      %339 = vdwg.mxu0
      %v344 = vunpack.c.l.b16 %v190
      %v345 = vunpack.c.l.b16 %v191
      %v346 = vunpack.c.l.b16 %v192
      %v347 = vunpack.c.l.b16 %v193
      %v348 = vpack.c.b16 %v345, %v344
      %v349 = vpack.c.b16 %v347, %v346
      %v352 = vsel %vm251, %v185, 0
      %v354 = vsel %vm251, %v186, 0
      %v356 = vsel %vm251, %v187, 0
      %v358 = vsel %vm251, %v188, 0
      %v360 = vsel %vm251, %v189, 0
      %362 = vmatprep.subr.bf16.mxu0 0
      %363 = vmatpush1.bf16.msra.mxu0 %v348
      %364 = vmatprep.subr.bf16.mxu0 0
      %365 = vmatpush1.bf16.msra.mxu0 %v349
      %366 = vmatprep.subr.bf16.mxu0 0
      %367 = vmatpush1.bf16.msra.mxu0 0
      %368 = vmatprep.subr.bf16.mxu0 0
      %369 = vmatpush1.bf16.msra.mxu0 0
      %370 = vmatprep.subr.bf16.mxu0 0
      %371 = vmatpush1.bf16.msra.mxu0 0
      %372 = vmatprep.subr.bf16.mxu0 0
      %373 = vmatpush1.bf16.msra.mxu0 0
      %374 = vmatprep.subr.bf16.mxu0 0
      %375 = vmatpush1.bf16.msra.mxu0 0
      %376 = vmatprep.subr.bf16.mxu0 0
      %377 = vmatpush1.bf16.msra.mxu0 0
      %378 = vmatprep.subr.bf16.mxu0 0
      %379 = vmatpush1.bf16.msra.mxu0 0
      %380 = vmatprep.subr.bf16.mxu0 0
      %381 = vmatpush1.bf16.msra.mxu0 0
      %382 = vmatprep.subr.bf16.mxu0 0
      %383 = vmatpush1.bf16.msra.mxu0 0
      %384 = vmatprep.subr.bf16.mxu0 0
      %385 = vmatpush1.bf16.msra.mxu0 0
      %386 = vmatprep.subr.bf16.mxu0 0
      %387 = vmatpush1.bf16.msra.mxu0 0
      %388 = vmatprep.subr.bf16.mxu0 0
      %389 = vmatpush1.bf16.msra.mxu0 0
      %390 = vmatprep.subr.bf16.mxu0 0
      %391 = vmatpush1.bf16.msra.mxu0 0
      %392 = vmatprep.subr.bf16.mxu0 0
      %393 = vmatpush1.bf16.msra.mxu0 0
      %394 = vmatprep.mubr.bf16.mxu0 0
      %395 = vmatmul.mubr.bf16.gmra.mrb[0].mxu0 %v352
      %v396 = vpop.f32.mrb[0].mxu0
      %v397 = vadd.f32 %v302, %v396
      %v398 = vpop.f32.mrb[0].mxu0
      %v399 = vpop.f32.mrb[0].mxu0
      %v400 = vadd.f32 %v305, %v399
      %v401 = vpop.f32.mrb[0].mxu0
      %402 = vmatprep.mubr.bf16.mxu0 0
      %403 = vmatmul.mubr.bf16.gmra.mrb[0].mxu0 %v354
      %v404 = vpop.f32.mrb[0].mxu0
      %v405 = vadd.f32 %v310, %v404
      %v406 = vpop.f32.mrb[0].mxu0
      %v407 = vpop.f32.mrb[0].mxu0
      %v408 = vadd.f32 %v313, %v407
      %v409 = vpop.f32.mrb[0].mxu0
      %410 = vmatprep.mubr.bf16.mxu0 0
      %411 = vmatmul.mubr.bf16.gmra.mrb[0].mxu0 %v356
      %v412 = vpop.f32.mrb[0].mxu0
      %v413 = vadd.f32 %v318, %v412
      %v414 = vpop.f32.mrb[0].mxu0
      %v415 = vpop.f32.mrb[0].mxu0
      %v416 = vadd.f32 %v321, %v415
      %v417 = vpop.f32.mrb[0].mxu0
      %418 = vmatprep.mubr.bf16.mxu0 0
      %419 = vmatmul.mubr.bf16.gmra.mrb[0].mxu0 %v358
      %v420 = vpop.f32.mrb[0].mxu0
      %v421 = vadd.f32 %v326, %v420
      %v422 = vpop.f32.mrb[0].mxu0
      %v423 = vpop.f32.mrb[0].mxu0
      %v424 = vadd.f32 %v329, %v423
      %v425 = vpop.f32.mrb[0].mxu0
      %426 = vmatprep.mubr.bf16.mxu0 0
      %427 = vmatmul.mubr.bf16.gmra.mrb[0].mxu0 %v360
      %v428 = vpop.f32.mrb[0].mxu0
      %v429 = vadd.f32 %v334, %v428
      %v430 = vpop.f32.mrb[0].mxu0
      %v431 = vpop.f32.mrb[0].mxu0
      %v432 = vadd.f32 %v337, %v431
      %v433 = vpop.f32.mrb[0].mxu0
      %434 = vdwg.mxu0
      %v435 = vpack.c.bf16 %v174, %v173
      %v436 = vpack.c.bf16 %v176, %v175
      %v437 = vpack.c.bf16 %v178, %v177
      %v438 = vpack.c.bf16 %v180, %v179
      %v439 = vpack.c.bf16 %v182, %v181
      %s440 = scalar_lea.vmem %s1, 32
      %v441 = vld [vmem:[%s440] sm:$0xf]
      %v442 = vld [vmem:[%s440 + $0x4] sm:$0xf]
      %v443 = vld [vmem:[%s440 + $0x8] sm:$0xf]
      %v444 = vld [vmem:[%s440 + $0xc] sm:$0xf]
      %vm450 = vcmask 1046528
      %v451 = vrot.slane %v435, 1
      %v452 = vrot.slane %v436, 1
      %v453 = vsel %vm450, %v451, %v452
      %v454 = vrot.slane %v437, 1
      %v455 = vsel %vm450, %v452, %v454
      %v456 = vrot.slane %v438, 1
      %v457 = vsel %vm450, %v454, %v456
      %v458 = vrot.slane %v439, 1
      %v459 = vsel %vm450, %v456, %v458
      %v464 = vunpack.c.l.b16 %v441
      %v465 = vunpack.c.l.b16 %v442
      %v466 = vunpack.c.l.b16 %v443
      %v467 = vunpack.c.l.b16 %v444
      %v468 = vpack.c.b16 %v465, %v464
      %v469 = vpack.c.b16 %v467, %v466
      %v473 = vsel %vm251, %v453, 0
      %v476 = vsel %vm251, %v455, 0
      %v479 = vsel %vm251, %v457, 0
      %v482 = vsel %vm251, %v459, 0
      %v485 = vsel %vm251, %v458, 0
      %487 = vmatprep.subr.bf16.mxu0 0
      %488 = vmatpush1.bf16.msra.mxu0 %v468
      %489 = vmatprep.subr.bf16.mxu0 0
      %490 = vmatpush1.bf16.msra.mxu0 %v469
      %491 = vmatprep.subr.bf16.mxu0 0
      %492 = vmatpush1.bf16.msra.mxu0 0
      %493 = vmatprep.subr.bf16.mxu0 0
      %494 = vmatpush1.bf16.msra.mxu0 0
      %495 = vmatprep.subr.bf16.mxu0 0
      %496 = vmatpush1.bf16.msra.mxu0 0
      %497 = vmatprep.subr.bf16.mxu0 0
      %498 = vmatpush1.bf16.msra.mxu0 0
      %499 = vmatprep.subr.bf16.mxu0 0
      %500 = vmatpush1.bf16.msra.mxu0 0
      %501 = vmatprep.subr.bf16.mxu0 0
      %502 = vmatpush1.bf16.msra.mxu0 0
      %503 = vmatprep.subr.bf16.mxu0 0
      %504 = vmatpush1.bf16.msra.mxu0 0
      %505 = vmatprep.subr.bf16.mxu0 0
      %506 = vmatpush1.bf16.msra.mxu0 0
      %507 = vmatprep.subr.bf16.mxu0 0
      %508 = vmatpush1.bf16.msra.mxu0 0
      %509 = vmatprep.subr.bf16.mxu0 0
      %510 = vmatpush1.bf16.msra.mxu0 0
      %511 = vmatprep.subr.bf16.mxu0 0
      %512 = vmatpush1.bf16.msra.mxu0 0
      %513 = vmatprep.subr.bf16.mxu0 0
      %514 = vmatpush1.bf16.msra.mxu0 0
      %515 = vmatprep.subr.bf16.mxu0 0
      %516 = vmatpush1.bf16.msra.mxu0 0
      %517 = vmatprep.subr.bf16.mxu0 0
      %518 = vmatpush1.bf16.msra.mxu0 0
      %519 = vmatprep.mubr.bf16.mxu0 0
      %520 = vmatmul.mubr.bf16.gmra.mrb[0].mxu0 %v473
      %v521 = vpop.f32.mrb[0].mxu0
      %v522 = vadd.f32 0.0, %v521
      %v523 = vpop.f32.mrb[0].mxu0
      %v524 = vpop.f32.mrb[0].mxu0
      %v525 = vadd.f32 0.0, %v524
      %v526 = vpop.f32.mrb[0].mxu0
      %527 = vmatprep.mubr.bf16.mxu0 0
      %528 = vmatmul.mubr.bf16.gmra.mrb[0].mxu0 %v476
      %v529 = vpop.f32.mrb[0].mxu0
      %v530 = vadd.f32 0.0, %v529
      %v531 = vpop.f32.mrb[0].mxu0
      %v532 = vpop.f32.mrb[0].mxu0
      %v533 = vadd.f32 0.0, %v532
      %v534 = vpop.f32.mrb[0].mxu0
      %535 = vmatprep.mubr.bf16.mxu0 0
      %536 = vmatmul.mubr.bf16.gmra.mrb[0].mxu0 %v479
      %v537 = vpop.f32.mrb[0].mxu0
      %v538 = vadd.f32 0.0, %v537
      %v539 = vpop.f32.mrb[0].mxu0
      %v540 = vpop.f32.mrb[0].mxu0
      %v541 = vadd.f32 0.0, %v540
      %v542 = vpop.f32.mrb[0].mxu0
      %543 = vmatprep.mubr.bf16.mxu0 0
      %544 = vmatmul.mubr.bf16.gmra.mrb[0].mxu0 %v482
      %v545 = vpop.f32.mrb[0].mxu0
      %v546 = vadd.f32 0.0, %v545
      %v547 = vpop.f32.mrb[0].mxu0
      %v548 = vpop.f32.mrb[0].mxu0
      %v549 = vadd.f32 0.0, %v548
      %v550 = vpop.f32.mrb[0].mxu0
      %551 = vmatprep.mubr.bf16.mxu0 0
      %552 = vmatmul.mubr.bf16.gmra.mrb[0].mxu0 %v485
      %v553 = vpop.f32.mrb[0].mxu0
      %v554 = vadd.f32 0.0, %v553
      %v555 = vpop.f32.mrb[0].mxu0
      %v556 = vpop.f32.mrb[0].mxu0
      %v557 = vadd.f32 0.0, %v556
      %v558 = vpop.f32.mrb[0].mxu0
      %559 = vdwg.mxu0
      %v560 = vadd.f32 %v397, %v522
      %v561 = vadd.f32 %v400, %v525
      %v562 = vadd.f32 %v405, %v530
      %v563 = vadd.f32 %v408, %v533
      %v564 = vadd.f32 %v413, %v538
      %v565 = vadd.f32 %v416, %v541
      %v566 = vadd.f32 %v421, %v546
      %v567 = vadd.f32 %v424, %v549
      %v568 = vadd.f32 %v429, %v554
      %v569 = vadd.f32 %v432, %v557
      %v570 = vpack.c.bf16 %v183, %v183
      %s571 = scalar_lea.vmem %s1, 48
      %v572 = vld [vmem:[%s571] sm:$0xf]
      %v573 = vld [vmem:[%s571 + $0x4] sm:$0xf]
      %v574 = vld [vmem:[%s571 + $0x8] sm:$0xf]
      %v575 = vld [vmem:[%s571 + $0xc] sm:$0xf]
      %vm576 = vsmask.f32 6400
      %v578 = vshrl.u32 %v435, 16
      %v580 = vrot.slane %v578, 1
      %v581 = vshll.u32 %v435, 16
      %v583 = vrot.slane %v581, 2
      %v584 = vor.u32 %v580, %v583
      %v586 = vshrl.u32 %v436, 16
      %v588 = vrot.slane %v586, 1
      %v589 = vshll.u32 %v436, 16
      %v591 = vrot.slane %v589, 2
      %v592 = vor.u32 %v588, %v591
      %v593 = vsel %vm576, %v584, %v592
      %v595 = vshrl.u32 %v437, 16
      %v597 = vrot.slane %v595, 1
      %v598 = vshll.u32 %v437, 16
      %v600 = vrot.slane %v598, 2
      %v601 = vor.u32 %v597, %v600
      %v602 = vsel %vm576, %v592, %v601
      %v604 = vshrl.u32 %v438, 16
      %v606 = vrot.slane %v604, 1
      %v607 = vshll.u32 %v438, 16
      %v609 = vrot.slane %v607, 2
      %v610 = vor.u32 %v606, %v609
      %v611 = vsel %vm576, %v601, %v610
      %v613 = vshrl.u32 %v439, 16
      %v615 = vrot.slane %v613, 1
      %v616 = vshll.u32 %v439, 16
      %v618 = vrot.slane %v616, 2
      %v619 = vor.u32 %v615, %v618
      %v620 = vsel %vm576, %v610, %v619
      %v622 = vshll.u32 %v570, 16
      %v624 = vrot.slane %v622, 2
      %v625 = vsel %vm576, %v619, %v624
      %v630 = vunpack.c.l.b16 %v572
      %v631 = vunpack.c.l.b16 %v573
      %v632 = vunpack.c.l.b16 %v574
      %v633 = vunpack.c.l.b16 %v575
      %v634 = vpack.c.b16 %v631, %v630
      %v635 = vpack.c.b16 %v633, %v632
      %v639 = vsel %vm251, %v593, 0
      %v642 = vsel %vm251, %v602, 0
      %v645 = vsel %vm251, %v611, 0
      %v648 = vsel %vm251, %v620, 0
      %v651 = vsel %vm251, %v625, 0
      %653 = vmatprep.subr.bf16.mxu0 0
      %654 = vmatpush1.bf16.msra.mxu0 %v634
      %655 = vmatprep.subr.bf16.mxu0 0
      %656 = vmatpush1.bf16.msra.mxu0 %v635
      %657 = vmatprep.subr.bf16.mxu0 0
      %658 = vmatpush1.bf16.msra.mxu0 0
      %659 = vmatprep.subr.bf16.mxu0 0
      %660 = vmatpush1.bf16.msra.mxu0 0
      %661 = vmatprep.subr.bf16.mxu0 0
      %662 = vmatpush1.bf16.msra.mxu0 0
      %663 = vmatprep.subr.bf16.mxu0 0
      %664 = vmatpush1.bf16.msra.mxu0 0
      %665 = vmatprep.subr.bf16.mxu0 0
      %666 = vmatpush1.bf16.msra.mxu0 0
      %667 = vmatprep.subr.bf16.mxu0 0
      %668 = vmatpush1.bf16.msra.mxu0 0
      %669 = vmatprep.subr.bf16.mxu0 0
      %670 = vmatpush1.bf16.msra.mxu0 0
      %671 = vmatprep.subr.bf16.mxu0 0
      %672 = vmatpush1.bf16.msra.mxu0 0
      %673 = vmatprep.subr.bf16.mxu0 0
      %674 = vmatpush1.bf16.msra.mxu0 0
      %675 = vmatprep.subr.bf16.mxu0 0
      %676 = vmatpush1.bf16.msra.mxu0 0
      %677 = vmatprep.subr.bf16.mxu0 0
      %678 = vmatpush1.bf16.msra.mxu0 0
      %679 = vmatprep.subr.bf16.mxu0 0
      %680 = vmatpush1.bf16.msra.mxu0 0
      %681 = vmatprep.subr.bf16.mxu0 0
      %682 = vmatpush1.bf16.msra.mxu0 0
      %683 = vmatprep.subr.bf16.mxu0 0
      %684 = vmatpush1.bf16.msra.mxu0 0
      %685 = vmatprep.mubr.bf16.mxu0 0
      %686 = vmatmul.mubr.bf16.gmra.mrb[0].mxu0 %v639
      %v687 = vpop.f32.mrb[0].mxu0
      %v688 = vadd.f32 0.0, %v687
      %v689 = vpop.f32.mrb[0].mxu0
      %v690 = vpop.f32.mrb[0].mxu0
      %v691 = vadd.f32 0.0, %v690
      %v692 = vpop.f32.mrb[0].mxu0
      %693 = vmatprep.mubr.bf16.mxu0 0
      %694 = vmatmul.mubr.bf16.gmra.mrb[0].mxu0 %v642
      %v695 = vpop.f32.mrb[0].mxu0
      %v696 = vadd.f32 0.0, %v695
      %v697 = vpop.f32.mrb[0].mxu0
      %v698 = vpop.f32.mrb[0].mxu0
      %v699 = vadd.f32 0.0, %v698
      %v700 = vpop.f32.mrb[0].mxu0
      %701 = vmatprep.mubr.bf16.mxu0 0
      %702 = vmatmul.mubr.bf16.gmra.mrb[0].mxu0 %v645
      %v703 = vpop.f32.mrb[0].mxu0
      %v704 = vadd.f32 0.0, %v703
      %v705 = vpop.f32.mrb[0].mxu0
      %v706 = vpop.f32.mrb[0].mxu0
      %v707 = vadd.f32 0.0, %v706
      %v708 = vpop.f32.mrb[0].mxu0
      %709 = vmatprep.mubr.bf16.mxu0 0
      %710 = vmatmul.mubr.bf16.gmra.mrb[0].mxu0 %v648
      %v711 = vpop.f32.mrb[0].mxu0
      %v712 = vadd.f32 0.0, %v711
      %v713 = vpop.f32.mrb[0].mxu0
      %v714 = vpop.f32.mrb[0].mxu0
      %v715 = vadd.f32 0.0, %v714
      %v716 = vpop.f32.mrb[0].mxu0
      %717 = vmatprep.mubr.bf16.mxu0 0
      %718 = vmatmul.mubr.bf16.gmra.mrb[0].mxu0 %v651
      %v719 = vpop.f32.mrb[0].mxu0
      %v720 = vadd.f32 0.0, %v719
      %v721 = vpop.f32.mrb[0].mxu0
      %v722 = vpop.f32.mrb[0].mxu0
      %v723 = vadd.f32 0.0, %v722
      %v724 = vpop.f32.mrb[0].mxu0
      %725 = vdwg.mxu0
      %v726 = vadd.f32 %v560, %v688
      %v727 = vadd.f32 %v561, %v691
      %v728 = vadd.f32 %v562, %v696
      %v729 = vadd.f32 %v563, %v699
      %v730 = vadd.f32 %v564, %v704
      %v731 = vadd.f32 %v565, %v707
      %v732 = vadd.f32 %v566, %v712
      %v733 = vadd.f32 %v567, %v715
      %v734 = vadd.f32 %v568, %v720
      %v735 = vadd.f32 %v569, %v723
      %s736 = scalar_lea.vmem %s1, 64
      %v737 = vld [vmem:[%s736] sm:$0xf]
      %v738 = vld [vmem:[%s736 + $0x4] sm:$0xf]
      %v739 = vld [vmem:[%s736 + $0x8] sm:$0xf]
      %v740 = vld [vmem:[%s736 + $0xc] sm:$0xf]
      %s741 = scalar_lea.vmem %s1, 80
      %v742 = vld [vmem:[%s741] sm:$0xf]
      %v743 = vld [vmem:[%s741 + $0x4] sm:$0xf]
      %v744 = vld [vmem:[%s741 + $0x8] sm:$0xf]
      %v745 = vld [vmem:[%s741 + $0xc] sm:$0xf]
      %v751 = vrot.slane %v185, 1
      %v752 = vrot.slane %v186, 1
      %v753 = vsel %vm450, %v751, %v752
      %v754 = vrot.slane %v187, 1
      %v755 = vsel %vm450, %v752, %v754
      %v756 = vrot.slane %v188, 1
      %v757 = vsel %vm450, %v754, %v756
      %v758 = vrot.slane %v189, 1
      %v759 = vsel %vm450, %v756, %v758
      %v764 = vunpack.c.l.b16 %v742
      %v765 = vunpack.c.l.b16 %v743
      %v766 = vunpack.c.l.b16 %v744
      %v767 = vunpack.c.l.b16 %v745
      %v768 = vpack.c.b16 %v765, %v764
      %v769 = vpack.c.b16 %v767, %v766
      %v773 = vsel %vm251, %v753, 0
      %v776 = vsel %vm251, %v755, 0
      %v779 = vsel %vm251, %v757, 0
      %v782 = vsel %vm251, %v759, 0
      %v785 = vsel %vm251, %v758, 0
      %787 = vmatprep.subr.bf16.mxu0 0
      %788 = vmatpush1.bf16.msra.mxu0 %v768
      %789 = vmatprep.subr.bf16.mxu0 0
      %790 = vmatpush1.bf16.msra.mxu0 %v769
      %791 = vmatprep.subr.bf16.mxu0 0
      %792 = vmatpush1.bf16.msra.mxu0 0
      %793 = vmatprep.subr.bf16.mxu0 0
      %794 = vmatpush1.bf16.msra.mxu0 0
      %795 = vmatprep.subr.bf16.mxu0 0
      %796 = vmatpush1.bf16.msra.mxu0 0
      %797 = vmatprep.subr.bf16.mxu0 0
      %798 = vmatpush1.bf16.msra.mxu0 0
      %799 = vmatprep.subr.bf16.mxu0 0
      %800 = vmatpush1.bf16.msra.mxu0 0
      %801 = vmatprep.subr.bf16.mxu0 0
      %802 = vmatpush1.bf16.msra.mxu0 0
      %803 = vmatprep.subr.bf16.mxu0 0
      %804 = vmatpush1.bf16.msra.mxu0 0
      %805 = vmatprep.subr.bf16.mxu0 0
      %806 = vmatpush1.bf16.msra.mxu0 0
      %807 = vmatprep.subr.bf16.mxu0 0
      %808 = vmatpush1.bf16.msra.mxu0 0
      %809 = vmatprep.subr.bf16.mxu0 0
      %810 = vmatpush1.bf16.msra.mxu0 0
      %811 = vmatprep.subr.bf16.mxu0 0
      %812 = vmatpush1.bf16.msra.mxu0 0
      %813 = vmatprep.subr.bf16.mxu0 0
      %814 = vmatpush1.bf16.msra.mxu0 0
      %815 = vmatprep.subr.bf16.mxu0 0
      %816 = vmatpush1.bf16.msra.mxu0 0
      %817 = vmatprep.subr.bf16.mxu0 0
      %818 = vmatpush1.bf16.msra.mxu0 0
      %819 = vmatprep.mubr.bf16.mxu0 0
      %820 = vmatmul.mubr.bf16.gmra.mrb[0].mxu0 %v773
      %v821 = vpop.f32.mrb[0].mxu0
      %v822 = vadd.f32 0.0, %v821
      %v823 = vpop.f32.mrb[0].mxu0
      %v824 = vpop.f32.mrb[0].mxu0
      %v825 = vadd.f32 0.0, %v824
      %v826 = vpop.f32.mrb[0].mxu0
      %827 = vmatprep.mubr.bf16.mxu0 0
      %828 = vmatmul.mubr.bf16.gmra.mrb[0].mxu0 %v776
      %v829 = vpop.f32.mrb[0].mxu0
      %v830 = vadd.f32 0.0, %v829
      %v831 = vpop.f32.mrb[0].mxu0
      %v832 = vpop.f32.mrb[0].mxu0
      %v833 = vadd.f32 0.0, %v832
      %v834 = vpop.f32.mrb[0].mxu0
      %835 = vmatprep.mubr.bf16.mxu0 0
      %836 = vmatmul.mubr.bf16.gmra.mrb[0].mxu0 %v779
      %v837 = vpop.f32.mrb[0].mxu0
      %v838 = vadd.f32 0.0, %v837
      %v839 = vpop.f32.mrb[0].mxu0
      %v840 = vpop.f32.mrb[0].mxu0
      %v841 = vadd.f32 0.0, %v840
      %v842 = vpop.f32.mrb[0].mxu0
      %843 = vmatprep.mubr.bf16.mxu0 0
      %844 = vmatmul.mubr.bf16.gmra.mrb[0].mxu0 %v782
      %v845 = vpop.f32.mrb[0].mxu0
      %v846 = vadd.f32 0.0, %v845
      %v847 = vpop.f32.mrb[0].mxu0
      %v848 = vpop.f32.mrb[0].mxu0
      %v849 = vadd.f32 0.0, %v848
      %v850 = vpop.f32.mrb[0].mxu0
      %851 = vmatprep.mubr.bf16.mxu0 0
      %852 = vmatmul.mubr.bf16.gmra.mrb[0].mxu0 %v785
      %v853 = vpop.f32.mrb[0].mxu0
      %v854 = vadd.f32 0.0, %v853
      %v855 = vpop.f32.mrb[0].mxu0
      %v856 = vpop.f32.mrb[0].mxu0
      %v857 = vadd.f32 0.0, %v856
      %v858 = vpop.f32.mrb[0].mxu0
      %859 = vdwg.mxu0
      %v864 = vunpack.c.l.b16 %v737
      %v865 = vunpack.c.l.b16 %v738
      %v866 = vunpack.c.l.b16 %v739
      %v867 = vunpack.c.l.b16 %v740
      %v868 = vpack.c.b16 %v865, %v864
      %v869 = vpack.c.b16 %v867, %v866
      %872 = vmatprep.subr.bf16.mxu0 0
      %873 = vmatpush1.bf16.msra.mxu0 %v868
      %874 = vmatprep.subr.bf16.mxu0 0
      %875 = vmatpush1.bf16.msra.mxu0 %v869
      %876 = vmatprep.subr.bf16.mxu0 0
      %877 = vmatpush1.bf16.msra.mxu0 0
      %878 = vmatprep.subr.bf16.mxu0 0
      %879 = vmatpush1.bf16.msra.mxu0 0
      %880 = vmatprep.subr.bf16.mxu0 0
      %881 = vmatpush1.bf16.msra.mxu0 0
      %882 = vmatprep.subr.bf16.mxu0 0
      %883 = vmatpush1.bf16.msra.mxu0 0
      %884 = vmatprep.subr.bf16.mxu0 0
      %885 = vmatpush1.bf16.msra.mxu0 0
      %886 = vmatprep.subr.bf16.mxu0 0
      %887 = vmatpush1.bf16.msra.mxu0 0
      %888 = vmatprep.subr.bf16.mxu0 0
      %889 = vmatpush1.bf16.msra.mxu0 0
      %890 = vmatprep.subr.bf16.mxu0 0
      %891 = vmatpush1.bf16.msra.mxu0 0
      %892 = vmatprep.subr.bf16.mxu0 0
      %893 = vmatpush1.bf16.msra.mxu0 0
      %894 = vmatprep.subr.bf16.mxu0 0
      %895 = vmatpush1.bf16.msra.mxu0 0
      %896 = vmatprep.subr.bf16.mxu0 0
      %897 = vmatpush1.bf16.msra.mxu0 0
      %898 = vmatprep.subr.bf16.mxu0 0
      %899 = vmatpush1.bf16.msra.mxu0 0
      %900 = vmatprep.subr.bf16.mxu0 0
      %901 = vmatpush1.bf16.msra.mxu0 0
      %902 = vmatprep.subr.bf16.mxu0 0
      %903 = vmatpush1.bf16.msra.mxu0 0
      %904 = vmatprep.mubr.bf16.mxu0 0
      %905 = vmatmul.mubr.bf16.gmra.mrb[0].mxu0 %v253
      %v906 = vpop.f32.mrb[0].mxu0
      %v907 = vadd.f32 %v822, %v906
      %v908 = vpop.f32.mrb[0].mxu0
      %v909 = vpop.f32.mrb[0].mxu0
      %v910 = vadd.f32 %v825, %v909
      %v911 = vpop.f32.mrb[0].mxu0
      %912 = vmatprep.mubr.bf16.mxu0 0
      %913 = vmatmul.mubr.bf16.gmra.mrb[0].mxu0 %v256
      %v914 = vpop.f32.mrb[0].mxu0
      %v915 = vadd.f32 %v830, %v914
      %v916 = vpop.f32.mrb[0].mxu0
      %v917 = vpop.f32.mrb[0].mxu0
      %v918 = vadd.f32 %v833, %v917
      %v919 = vpop.f32.mrb[0].mxu0
      %920 = vmatprep.mubr.bf16.mxu0 0
      %921 = vmatmul.mubr.bf16.gmra.mrb[0].mxu0 %v259
      %v922 = vpop.f32.mrb[0].mxu0
      %v923 = vadd.f32 %v838, %v922
      %v924 = vpop.f32.mrb[0].mxu0
      %v925 = vpop.f32.mrb[0].mxu0
      %v926 = vadd.f32 %v841, %v925
      %v927 = vpop.f32.mrb[0].mxu0
      %928 = vmatprep.mubr.bf16.mxu0 0
      %929 = vmatmul.mubr.bf16.gmra.mrb[0].mxu0 %v262
      %v930 = vpop.f32.mrb[0].mxu0
      %v931 = vadd.f32 %v846, %v930
      %v932 = vpop.f32.mrb[0].mxu0
      %v933 = vpop.f32.mrb[0].mxu0
      %v934 = vadd.f32 %v849, %v933
      %v935 = vpop.f32.mrb[0].mxu0
      %936 = vmatprep.mubr.bf16.mxu0 0
      %937 = vmatmul.mubr.bf16.gmra.mrb[0].mxu0 %v265
      %v938 = vpop.f32.mrb[0].mxu0
      %v939 = vadd.f32 %v854, %v938
      %v940 = vpop.f32.mrb[0].mxu0
      %v941 = vpop.f32.mrb[0].mxu0
      %v942 = vadd.f32 %v857, %v941
      %v943 = vpop.f32.mrb[0].mxu0
      %944 = vdwg.mxu0
      %s945 = scalar_lea.vmem %s1, 96
      %v946 = vld [vmem:[%s945] sm:$0xf]
      %v947 = vld [vmem:[%s945 + $0x4] sm:$0xf]
      %v948 = vld [vmem:[%s945 + $0x8] sm:$0xf]
      %v949 = vld [vmem:[%s945 + $0xc] sm:$0xf]
      %v954 = vunpack.c.l.b16 %v946
      %v955 = vunpack.c.l.b16 %v947
      %v956 = vunpack.c.l.b16 %v948
      %v957 = vunpack.c.l.b16 %v949
      %v958 = vpack.c.b16 %v955, %v954
      %v959 = vpack.c.b16 %v957, %v956
      %962 = vmatprep.subr.bf16.mxu0 0
      %963 = vmatpush1.bf16.msra.mxu0 %v958
      %964 = vmatprep.subr.bf16.mxu0 0
      %965 = vmatpush1.bf16.msra.mxu0 %v959
      %966 = vmatprep.subr.bf16.mxu0 0
      %967 = vmatpush1.bf16.msra.mxu0 0
      %968 = vmatprep.subr.bf16.mxu0 0
      %969 = vmatpush1.bf16.msra.mxu0 0
      %970 = vmatprep.subr.bf16.mxu0 0
      %971 = vmatpush1.bf16.msra.mxu0 0
      %972 = vmatprep.subr.bf16.mxu0 0
      %973 = vmatpush1.bf16.msra.mxu0 0
      %974 = vmatprep.subr.bf16.mxu0 0
      %975 = vmatpush1.bf16.msra.mxu0 0
      %976 = vmatprep.subr.bf16.mxu0 0
      %977 = vmatpush1.bf16.msra.mxu0 0
      %978 = vmatprep.subr.bf16.mxu0 0
      %979 = vmatpush1.bf16.msra.mxu0 0
      %980 = vmatprep.subr.bf16.mxu0 0
      %981 = vmatpush1.bf16.msra.mxu0 0
      %982 = vmatprep.subr.bf16.mxu0 0
      %983 = vmatpush1.bf16.msra.mxu0 0
      %984 = vmatprep.subr.bf16.mxu0 0
      %985 = vmatpush1.bf16.msra.mxu0 0
      %986 = vmatprep.subr.bf16.mxu0 0
      %987 = vmatpush1.bf16.msra.mxu0 0
      %988 = vmatprep.subr.bf16.mxu0 0
      %989 = vmatpush1.bf16.msra.mxu0 0
      %990 = vmatprep.subr.bf16.mxu0 0
      %991 = vmatpush1.bf16.msra.mxu0 0
      %992 = vmatprep.subr.bf16.mxu0 0
      %993 = vmatpush1.bf16.msra.mxu0 0
      %994 = vmatprep.mubr.bf16.mxu0 0
      %995 = vmatmul.mubr.bf16.gmra.mrb[0].mxu0 %v639
      %v996 = vpop.f32.mrb[0].mxu0
      %v997 = vadd.f32 0.0, %v996
      %v998 = vpop.f32.mrb[0].mxu0
      %v999 = vpop.f32.mrb[0].mxu0
      %v1000 = vadd.f32 0.0, %v999
      %v1001 = vpop.f32.mrb[0].mxu0
      %1002 = vmatprep.mubr.bf16.mxu0 0
      %1003 = vmatmul.mubr.bf16.gmra.mrb[0].mxu0 %v642
      %v1004 = vpop.f32.mrb[0].mxu0
      %v1005 = vadd.f32 0.0, %v1004
      %v1006 = vpop.f32.mrb[0].mxu0
      %v1007 = vpop.f32.mrb[0].mxu0
      %v1008 = vadd.f32 0.0, %v1007
      %v1009 = vpop.f32.mrb[0].mxu0
      %1010 = vmatprep.mubr.bf16.mxu0 0
      %1011 = vmatmul.mubr.bf16.gmra.mrb[0].mxu0 %v645
      %v1012 = vpop.f32.mrb[0].mxu0
      %v1013 = vadd.f32 0.0, %v1012
      %v1014 = vpop.f32.mrb[0].mxu0
      %v1015 = vpop.f32.mrb[0].mxu0
      %v1016 = vadd.f32 0.0, %v1015
      %v1017 = vpop.f32.mrb[0].mxu0
      %1018 = vmatprep.mubr.bf16.mxu0 0
      %1019 = vmatmul.mubr.bf16.gmra.mrb[0].mxu0 %v648
      %v1020 = vpop.f32.mrb[0].mxu0
      %v1021 = vadd.f32 0.0, %v1020
      %v1022 = vpop.f32.mrb[0].mxu0
      %v1023 = vpop.f32.mrb[0].mxu0
      %v1024 = vadd.f32 0.0, %v1023
      %v1025 = vpop.f32.mrb[0].mxu0
      %1026 = vmatprep.mubr.bf16.mxu0 0
      %1027 = vmatmul.mubr.bf16.gmra.mrb[0].mxu0 %v651
      %v1028 = vpop.f32.mrb[0].mxu0
      %v1029 = vadd.f32 0.0, %v1028
      %v1030 = vpop.f32.mrb[0].mxu0
      %v1031 = vpop.f32.mrb[0].mxu0
      %v1032 = vadd.f32 0.0, %v1031
      %v1033 = vpop.f32.mrb[0].mxu0
      %1034 = vdwg.mxu0
      %v1035 = vadd.f32 %v907, %v997
      %v1036 = vadd.f32 %v910, %v1000
      %v1037 = vadd.f32 %v915, %v1005
      %v1038 = vadd.f32 %v918, %v1008
      %v1039 = vadd.f32 %v923, %v1013
      %v1040 = vadd.f32 %v926, %v1016
      %v1041 = vadd.f32 %v931, %v1021
      %v1042 = vadd.f32 %v934, %v1024
      %v1043 = vadd.f32 %v939, %v1029
      %v1044 = vadd.f32 %v942, %v1032
      %s1045 = scalar_lea.vmem %s1, 112
      %v1046 = vld [vmem:[%s1045] sm:$0xf]
      %v1047 = vld [vmem:[%s1045 + $0x4] sm:$0xf]
      %v1048 = vld [vmem:[%s1045 + $0x8] sm:$0xf]
      %v1049 = vld [vmem:[%s1045 + $0xc] sm:$0xf]
      %vm1051 = vcmask 1045504
      %v1052 = vrot.slane %v435, 2
      %v1053 = vrot.slane %v436, 2
      %v1054 = vsel %vm1051, %v1052, %v1053
      %v1055 = vrot.slane %v437, 2
      %v1056 = vsel %vm1051, %v1053, %v1055
      %v1057 = vrot.slane %v438, 2
      %v1058 = vsel %vm1051, %v1055, %v1057
      %v1059 = vrot.slane %v439, 2
      %v1060 = vsel %vm1051, %v1057, %v1059
      %v1061 = vrot.slane %v570, 2
      %v1062 = vsel %vm1051, %v1059, %v1061
      %v1067 = vunpack.c.l.b16 %v1046
      %v1068 = vunpack.c.l.b16 %v1047
      %v1069 = vunpack.c.l.b16 %v1048
      %v1070 = vunpack.c.l.b16 %v1049
      %v1071 = vpack.c.b16 %v1068, %v1067
      %v1072 = vpack.c.b16 %v1070, %v1069
      %v1076 = vsel %vm251, %v1054, 0
      %v1079 = vsel %vm251, %v1056, 0
      %v1082 = vsel %vm251, %v1058, 0
      %v1085 = vsel %vm251, %v1060, 0
      %v1088 = vsel %vm251, %v1062, 0
      %1090 = vmatprep.subr.bf16.mxu0 0
      %1091 = vmatpush1.bf16.msra.mxu0 %v1071
      %1092 = vmatprep.subr.bf16.mxu0 0
      %1093 = vmatpush1.bf16.msra.mxu0 %v1072
      %1094 = vmatprep.subr.bf16.mxu0 0
      %1095 = vmatpush1.bf16.msra.mxu0 0
      %1096 = vmatprep.subr.bf16.mxu0 0
      %1097 = vmatpush1.bf16.msra.mxu0 0
      %1098 = vmatprep.subr.bf16.mxu0 0
      %1099 = vmatpush1.bf16.msra.mxu0 0
      %1100 = vmatprep.subr.bf16.mxu0 0
      %1101 = vmatpush1.bf16.msra.mxu0 0
      %1102 = vmatprep.subr.bf16.mxu0 0
      %1103 = vmatpush1.bf16.msra.mxu0 0
      %1104 = vmatprep.subr.bf16.mxu0 0
      %1105 = vmatpush1.bf16.msra.mxu0 0
      %1106 = vmatprep.subr.bf16.mxu0 0
      %1107 = vmatpush1.bf16.msra.mxu0 0
      %1108 = vmatprep.subr.bf16.mxu0 0
      %1109 = vmatpush1.bf16.msra.mxu0 0
      %1110 = vmatprep.subr.bf16.mxu0 0
      %1111 = vmatpush1.bf16.msra.mxu0 0
      %1112 = vmatprep.subr.bf16.mxu0 0
      %1113 = vmatpush1.bf16.msra.mxu0 0
      %1114 = vmatprep.subr.bf16.mxu0 0
      %1115 = vmatpush1.bf16.msra.mxu0 0
      %1116 = vmatprep.subr.bf16.mxu0 0
      %1117 = vmatpush1.bf16.msra.mxu0 0
      %1118 = vmatprep.subr.bf16.mxu0 0
      %1119 = vmatpush1.bf16.msra.mxu0 0
      %1120 = vmatprep.subr.bf16.mxu0 0
      %1121 = vmatpush1.bf16.msra.mxu0 0
      %1122 = vmatprep.mubr.bf16.mxu0 0
      %1123 = vmatmul.mubr.bf16.gmra.mrb[0].mxu0 %v1076
      %v1124 = vpop.f32.mrb[0].mxu0
      %v1125 = vadd.f32 0.0, %v1124
      %v1126 = vpop.f32.mrb[0].mxu0
      %v1127 = vpop.f32.mrb[0].mxu0
      %v1128 = vadd.f32 0.0, %v1127
      %v1129 = vpop.f32.mrb[0].mxu0
      %1130 = vmatprep.mubr.bf16.mxu0 0
      %1131 = vmatmul.mubr.bf16.gmra.mrb[0].mxu0 %v1079
      %v1132 = vpop.f32.mrb[0].mxu0
      %v1133 = vadd.f32 0.0, %v1132
      %v1134 = vpop.f32.mrb[0].mxu0
      %v1135 = vpop.f32.mrb[0].mxu0
      %v1136 = vadd.f32 0.0, %v1135
      %v1137 = vpop.f32.mrb[0].mxu0
      %1138 = vmatprep.mubr.bf16.mxu0 0
      %1139 = vmatmul.mubr.bf16.gmra.mrb[0].mxu0 %v1082
      %v1140 = vpop.f32.mrb[0].mxu0
      %v1141 = vadd.f32 0.0, %v1140
      %v1142 = vpop.f32.mrb[0].mxu0
      %v1143 = vpop.f32.mrb[0].mxu0
      %v1144 = vadd.f32 0.0, %v1143
      %v1145 = vpop.f32.mrb[0].mxu0
      %1146 = vmatprep.mubr.bf16.mxu0 0
      %1147 = vmatmul.mubr.bf16.gmra.mrb[0].mxu0 %v1085
      %v1148 = vpop.f32.mrb[0].mxu0
      %v1149 = vadd.f32 0.0, %v1148
      %v1150 = vpop.f32.mrb[0].mxu0
      %v1151 = vpop.f32.mrb[0].mxu0
      %v1152 = vadd.f32 0.0, %v1151
      %v1153 = vpop.f32.mrb[0].mxu0
      %1154 = vmatprep.mubr.bf16.mxu0 0
      %1155 = vmatmul.mubr.bf16.gmra.mrb[0].mxu0 %v1088
      %v1156 = vpop.f32.mrb[0].mxu0
      %v1157 = vadd.f32 0.0, %v1156
      %v1158 = vpop.f32.mrb[0].mxu0
      %v1159 = vpop.f32.mrb[0].mxu0
      %v1160 = vadd.f32 0.0, %v1159
      %v1161 = vpop.f32.mrb[0].mxu0
      %1162 = vdwg.mxu0
      %v1163 = vadd.f32 %v1035, %v1125
      %v1164 = vadd.f32 %v1036, %v1128
      %v1165 = vadd.f32 %v1037, %v1133
      %v1166 = vadd.f32 %v1038, %v1136
      %v1167 = vadd.f32 %v1039, %v1141
      %v1168 = vadd.f32 %v1040, %v1144
      %v1169 = vadd.f32 %v1041, %v1149
      %v1170 = vadd.f32 %v1042, %v1152
      %v1171 = vadd.f32 %v1043, %v1157
      %v1172 = vadd.f32 %v1044, %v1160
      %s1173 = scalar_lea.vmem %s1, 128
      %v1174 = vld [vmem:[%s1173] sm:$0xf]
      %v1175 = vld [vmem:[%s1173 + $0x4] sm:$0xf]
      %v1176 = vld [vmem:[%s1173 + $0x8] sm:$0xf]
      %v1177 = vld [vmem:[%s1173 + $0xc] sm:$0xf]
      %s1178 = scalar_lea.vmem %s1, 144
      %v1179 = vld [vmem:[%s1178] sm:$0xf]
      %v1180 = vld [vmem:[%s1178 + $0x4] sm:$0xf]
      %v1181 = vld [vmem:[%s1178 + $0x8] sm:$0xf]
      %v1182 = vld [vmem:[%s1178 + $0xc] sm:$0xf]
      %v1187 = vunpack.c.l.b16 %v1179
      %v1188 = vunpack.c.l.b16 %v1180
      %v1189 = vunpack.c.l.b16 %v1181
      %v1190 = vunpack.c.l.b16 %v1182
      %v1191 = vpack.c.b16 %v1188, %v1187
      %v1192 = vpack.c.b16 %v1190, %v1189
      %1195 = vmatprep.subr.bf16.mxu0 0
      %1196 = vmatpush1.bf16.msra.mxu0 %v1191
      %1197 = vmatprep.subr.bf16.mxu0 0
      %1198 = vmatpush1.bf16.msra.mxu0 %v1192
      %1199 = vmatprep.subr.bf16.mxu0 0
      %1200 = vmatpush1.bf16.msra.mxu0 0
      %1201 = vmatprep.subr.bf16.mxu0 0
      %1202 = vmatpush1.bf16.msra.mxu0 0
      %1203 = vmatprep.subr.bf16.mxu0 0
      %1204 = vmatpush1.bf16.msra.mxu0 0
      %1205 = vmatprep.subr.bf16.mxu0 0
      %1206 = vmatpush1.bf16.msra.mxu0 0
      %1207 = vmatprep.subr.bf16.mxu0 0
      %1208 = vmatpush1.bf16.msra.mxu0 0
      %1209 = vmatprep.subr.bf16.mxu0 0
      %1210 = vmatpush1.bf16.msra.mxu0 0
      %1211 = vmatprep.subr.bf16.mxu0 0
      %1212 = vmatpush1.bf16.msra.mxu0 0
      %1213 = vmatprep.subr.bf16.mxu0 0
      %1214 = vmatpush1.bf16.msra.mxu0 0
      %1215 = vmatprep.subr.bf16.mxu0 0
      %1216 = vmatpush1.bf16.msra.mxu0 0
      %1217 = vmatprep.subr.bf16.mxu0 0
      %1218 = vmatpush1.bf16.msra.mxu0 0
      %1219 = vmatprep.subr.bf16.mxu0 0
      %1220 = vmatpush1.bf16.msra.mxu0 0
      %1221 = vmatprep.subr.bf16.mxu0 0
      %1222 = vmatpush1.bf16.msra.mxu0 0
      %1223 = vmatprep.subr.bf16.mxu0 0
      %1224 = vmatpush1.bf16.msra.mxu0 0
      %1225 = vmatprep.subr.bf16.mxu0 0
      %1226 = vmatpush1.bf16.msra.mxu0 0
      %1227 = vmatprep.mubr.bf16.mxu0 0
      %1228 = vmatmul.mubr.bf16.gmra.mrb[0].mxu0 %v639
      %v1229 = vpop.f32.mrb[0].mxu0
      %v1230 = vadd.f32 0.0, %v1229
      %v1231 = vpop.f32.mrb[0].mxu0
      %v1232 = vpop.f32.mrb[0].mxu0
      %v1233 = vadd.f32 0.0, %v1232
      %v1234 = vpop.f32.mrb[0].mxu0
      %1235 = vmatprep.mubr.bf16.mxu0 0
      %1236 = vmatmul.mubr.bf16.gmra.mrb[0].mxu0 %v642
      %v1237 = vpop.f32.mrb[0].mxu0
      %v1238 = vadd.f32 0.0, %v1237
      %v1239 = vpop.f32.mrb[0].mxu0
      %v1240 = vpop.f32.mrb[0].mxu0
      %v1241 = vadd.f32 0.0, %v1240
      %v1242 = vpop.f32.mrb[0].mxu0
      %1243 = vmatprep.mubr.bf16.mxu0 0
      %1244 = vmatmul.mubr.bf16.gmra.mrb[0].mxu0 %v645
      %v1245 = vpop.f32.mrb[0].mxu0
      %v1246 = vadd.f32 0.0, %v1245
      %v1247 = vpop.f32.mrb[0].mxu0
      %v1248 = vpop.f32.mrb[0].mxu0
      %v1249 = vadd.f32 0.0, %v1248
      %v1250 = vpop.f32.mrb[0].mxu0
      %1251 = vmatprep.mubr.bf16.mxu0 0
      %1252 = vmatmul.mubr.bf16.gmra.mrb[0].mxu0 %v648
      %v1253 = vpop.f32.mrb[0].mxu0
      %v1254 = vadd.f32 0.0, %v1253
      %v1255 = vpop.f32.mrb[0].mxu0
      %v1256 = vpop.f32.mrb[0].mxu0
      %v1257 = vadd.f32 0.0, %v1256
      %v1258 = vpop.f32.mrb[0].mxu0
      %1259 = vmatprep.mubr.bf16.mxu0 0
      %1260 = vmatmul.mubr.bf16.gmra.mrb[0].mxu0 %v651
      %v1261 = vpop.f32.mrb[0].mxu0
      %v1262 = vadd.f32 0.0, %v1261
      %v1263 = vpop.f32.mrb[0].mxu0
      %v1264 = vpop.f32.mrb[0].mxu0
      %v1265 = vadd.f32 0.0, %v1264
      %v1266 = vpop.f32.mrb[0].mxu0
      %1267 = vdwg.mxu0
      %v1272 = vunpack.c.l.b16 %v1174
      %v1273 = vunpack.c.l.b16 %v1175
      %v1274 = vunpack.c.l.b16 %v1176
      %v1275 = vunpack.c.l.b16 %v1177
      %v1276 = vpack.c.b16 %v1273, %v1272
      %v1277 = vpack.c.b16 %v1275, %v1274
      %1280 = vmatprep.subr.bf16.mxu0 0
      %1281 = vmatpush1.bf16.msra.mxu0 %v1276
      %1282 = vmatprep.subr.bf16.mxu0 0
      %1283 = vmatpush1.bf16.msra.mxu0 %v1277
      %1284 = vmatprep.subr.bf16.mxu0 0
      %1285 = vmatpush1.bf16.msra.mxu0 0
      %1286 = vmatprep.subr.bf16.mxu0 0
      %1287 = vmatpush1.bf16.msra.mxu0 0
      %1288 = vmatprep.subr.bf16.mxu0 0
      %1289 = vmatpush1.bf16.msra.mxu0 0
      %1290 = vmatprep.subr.bf16.mxu0 0
      %1291 = vmatpush1.bf16.msra.mxu0 0
      %1292 = vmatprep.subr.bf16.mxu0 0
      %1293 = vmatpush1.bf16.msra.mxu0 0
      %1294 = vmatprep.subr.bf16.mxu0 0
      %1295 = vmatpush1.bf16.msra.mxu0 0
      %1296 = vmatprep.subr.bf16.mxu0 0
      %1297 = vmatpush1.bf16.msra.mxu0 0
      %1298 = vmatprep.subr.bf16.mxu0 0
      %1299 = vmatpush1.bf16.msra.mxu0 0
      %1300 = vmatprep.subr.bf16.mxu0 0
      %1301 = vmatpush1.bf16.msra.mxu0 0
      %1302 = vmatprep.subr.bf16.mxu0 0
      %1303 = vmatpush1.bf16.msra.mxu0 0
      %1304 = vmatprep.subr.bf16.mxu0 0
      %1305 = vmatpush1.bf16.msra.mxu0 0
      %1306 = vmatprep.subr.bf16.mxu0 0
      %1307 = vmatpush1.bf16.msra.mxu0 0
      %1308 = vmatprep.subr.bf16.mxu0 0
      %1309 = vmatpush1.bf16.msra.mxu0 0
      %1310 = vmatprep.subr.bf16.mxu0 0
      %1311 = vmatpush1.bf16.msra.mxu0 0
      %1312 = vmatprep.mubr.bf16.mxu0 0
      %1313 = vmatmul.mubr.bf16.gmra.mrb[0].mxu0 %v473
      %v1314 = vpop.f32.mrb[0].mxu0
      %v1315 = vadd.f32 %v1230, %v1314
      %v1316 = vpop.f32.mrb[0].mxu0
      %v1317 = vpop.f32.mrb[0].mxu0
      %v1318 = vadd.f32 %v1233, %v1317
      %v1319 = vpop.f32.mrb[0].mxu0
      %1320 = vmatprep.mubr.bf16.mxu0 0
      %1321 = vmatmul.mubr.bf16.gmra.mrb[0].mxu0 %v476
      %v1322 = vpop.f32.mrb[0].mxu0
      %v1323 = vadd.f32 %v1238, %v1322
      %v1324 = vpop.f32.mrb[0].mxu0
      %v1325 = vpop.f32.mrb[0].mxu0
      %v1326 = vadd.f32 %v1241, %v1325
      %v1327 = vpop.f32.mrb[0].mxu0
      %1328 = vmatprep.mubr.bf16.mxu0 0
      %1329 = vmatmul.mubr.bf16.gmra.mrb[0].mxu0 %v479
      %v1330 = vpop.f32.mrb[0].mxu0
      %v1331 = vadd.f32 %v1246, %v1330
      %v1332 = vpop.f32.mrb[0].mxu0
      %v1333 = vpop.f32.mrb[0].mxu0
      %v1334 = vadd.f32 %v1249, %v1333
      %v1335 = vpop.f32.mrb[0].mxu0
      %1336 = vmatprep.mubr.bf16.mxu0 0
      %1337 = vmatmul.mubr.bf16.gmra.mrb[0].mxu0 %v482
      %v1338 = vpop.f32.mrb[0].mxu0
      %v1339 = vadd.f32 %v1254, %v1338
      %v1340 = vpop.f32.mrb[0].mxu0
      %v1341 = vpop.f32.mrb[0].mxu0
      %v1342 = vadd.f32 %v1257, %v1341
      %v1343 = vpop.f32.mrb[0].mxu0
      %1344 = vmatprep.mubr.bf16.mxu0 0
      %1345 = vmatmul.mubr.bf16.gmra.mrb[0].mxu0 %v485
      %v1346 = vpop.f32.mrb[0].mxu0
      %v1347 = vadd.f32 %v1262, %v1346
      %v1348 = vpop.f32.mrb[0].mxu0
      %v1349 = vpop.f32.mrb[0].mxu0
      %v1350 = vadd.f32 %v1265, %v1349
      %v1351 = vpop.f32.mrb[0].mxu0
      %1352 = vdwg.mxu0
      %v1353 = vpack.c.bf16 %v183, %v182
      %v1354 = vpack.c.bf16 %v184, %v184
      %s1355 = scalar_lea.vmem %s1, 160
      %v1356 = vld [vmem:[%s1355] sm:$0xf]
      %v1357 = vld [vmem:[%s1355 + $0x4] sm:$0xf]
      %v1358 = vld [vmem:[%s1355 + $0x8] sm:$0xf]
      %v1359 = vld [vmem:[%s1355 + $0xc] sm:$0xf]
      %v1362 = vrot.slane %v186, 2
      %v1363 = vrot.slane %v187, 2
      %v1364 = vsel %vm1051, %v1362, %v1363
      %v1365 = vrot.slane %v188, 2
      %v1366 = vsel %vm1051, %v1363, %v1365
      %v1367 = vrot.slane %v189, 2
      %v1368 = vsel %vm1051, %v1365, %v1367
      %v1369 = vrot.slane %v1353, 2
      %v1370 = vsel %vm1051, %v1367, %v1369
      %v1371 = vrot.slane %v1354, 2
      %v1372 = vsel %vm1051, %v1369, %v1371
      %v1377 = vunpack.c.l.b16 %v1356
      %v1378 = vunpack.c.l.b16 %v1357
      %v1379 = vunpack.c.l.b16 %v1358
      %v1380 = vunpack.c.l.b16 %v1359
      %v1381 = vpack.c.b16 %v1378, %v1377
      %v1382 = vpack.c.b16 %v1380, %v1379
      %v1386 = vsel %vm251, %v1364, 0
      %v1389 = vsel %vm251, %v1366, 0
      %v1392 = vsel %vm251, %v1368, 0
      %v1395 = vsel %vm251, %v1370, 0
      %v1398 = vsel %vm251, %v1372, 0
      %1400 = vmatprep.subr.bf16.mxu0 0
      %1401 = vmatpush1.bf16.msra.mxu0 %v1381
      %1402 = vmatprep.subr.bf16.mxu0 0
      %1403 = vmatpush1.bf16.msra.mxu0 %v1382
      %1404 = vmatprep.subr.bf16.mxu0 0
      %1405 = vmatpush1.bf16.msra.mxu0 0
      %1406 = vmatprep.subr.bf16.mxu0 0
      %1407 = vmatpush1.bf16.msra.mxu0 0
      %1408 = vmatprep.subr.bf16.mxu0 0
      %1409 = vmatpush1.bf16.msra.mxu0 0
      %1410 = vmatprep.subr.bf16.mxu0 0
      %1411 = vmatpush1.bf16.msra.mxu0 0
      %1412 = vmatprep.subr.bf16.mxu0 0
      %1413 = vmatpush1.bf16.msra.mxu0 0
      %1414 = vmatprep.subr.bf16.mxu0 0
      %1415 = vmatpush1.bf16.msra.mxu0 0
      %1416 = vmatprep.subr.bf16.mxu0 0
      %1417 = vmatpush1.bf16.msra.mxu0 0
      %1418 = vmatprep.subr.bf16.mxu0 0
      %1419 = vmatpush1.bf16.msra.mxu0 0
      %1420 = vmatprep.subr.bf16.mxu0 0
      %1421 = vmatpush1.bf16.msra.mxu0 0
      %1422 = vmatprep.subr.bf16.mxu0 0
      %1423 = vmatpush1.bf16.msra.mxu0 0
      %1424 = vmatprep.subr.bf16.mxu0 0
      %1425 = vmatpush1.bf16.msra.mxu0 0
      %1426 = vmatprep.subr.bf16.mxu0 0
      %1427 = vmatpush1.bf16.msra.mxu0 0
      %1428 = vmatprep.subr.bf16.mxu0 0
      %1429 = vmatpush1.bf16.msra.mxu0 0
      %1430 = vmatprep.subr.bf16.mxu0 0
      %1431 = vmatpush1.bf16.msra.mxu0 0
      %1432 = vmatprep.mubr.bf16.mxu0 0
      %1433 = vmatmul.mubr.bf16.gmra.mrb[0].mxu0 %v1386
      %v1434 = vpop.f32.mrb[0].mxu0
      %v1435 = vadd.f32 0.0, %v1434
      %v1436 = vpop.f32.mrb[0].mxu0
      %v1437 = vpop.f32.mrb[0].mxu0
      %v1438 = vadd.f32 0.0, %v1437
      %v1439 = vpop.f32.mrb[0].mxu0
      %1440 = vmatprep.mubr.bf16.mxu0 0
      %1441 = vmatmul.mubr.bf16.gmra.mrb[0].mxu0 %v1389
      %v1442 = vpop.f32.mrb[0].mxu0
      %v1443 = vadd.f32 0.0, %v1442
      %v1444 = vpop.f32.mrb[0].mxu0
      %v1445 = vpop.f32.mrb[0].mxu0
      %v1446 = vadd.f32 0.0, %v1445
      %v1447 = vpop.f32.mrb[0].mxu0
      %1448 = vmatprep.mubr.bf16.mxu0 0
      %1449 = vmatmul.mubr.bf16.gmra.mrb[0].mxu0 %v1392
      %v1450 = vpop.f32.mrb[0].mxu0
      %v1451 = vadd.f32 0.0, %v1450
      %v1452 = vpop.f32.mrb[0].mxu0
      %v1453 = vpop.f32.mrb[0].mxu0
      %v1454 = vadd.f32 0.0, %v1453
      %v1455 = vpop.f32.mrb[0].mxu0
      %1456 = vmatprep.mubr.bf16.mxu0 0
      %1457 = vmatmul.mubr.bf16.gmra.mrb[0].mxu0 %v1395
      %v1458 = vpop.f32.mrb[0].mxu0
      %v1459 = vadd.f32 0.0, %v1458
      %v1460 = vpop.f32.mrb[0].mxu0
      %v1461 = vpop.f32.mrb[0].mxu0
      %v1462 = vadd.f32 0.0, %v1461
      %v1463 = vpop.f32.mrb[0].mxu0
      %1464 = vmatprep.mubr.bf16.mxu0 0
      %1465 = vmatmul.mubr.bf16.gmra.mrb[0].mxu0 %v1398
      %v1466 = vpop.f32.mrb[0].mxu0
      %v1467 = vadd.f32 0.0, %v1466
      %v1468 = vpop.f32.mrb[0].mxu0
      %v1469 = vpop.f32.mrb[0].mxu0
      %v1470 = vadd.f32 0.0, %v1469
      %v1471 = vpop.f32.mrb[0].mxu0
      %1472 = vdwg.mxu0
      %v1473 = vadd.f32 %v1315, %v1435
      %v1474 = vadd.f32 %v1318, %v1438
      %v1475 = vadd.f32 %v1323, %v1443
      %v1476 = vadd.f32 %v1326, %v1446
      %v1477 = vadd.f32 %v1331, %v1451
      %v1478 = vadd.f32 %v1334, %v1454
      %v1479 = vadd.f32 %v1339, %v1459
      %v1480 = vadd.f32 %v1342, %v1462
      %v1481 = vadd.f32 %v1347, %v1467
      %v1482 = vadd.f32 %v1350, %v1470
      %s1483 = scalar_lea.vmem %s1, 176
      %v1484 = vld [vmem:[%s1483] sm:$0xf]
      %v1485 = vld [vmem:[%s1483 + $0x4] sm:$0xf]
      %v1486 = vld [vmem:[%s1483 + $0x8] sm:$0xf]
      %v1487 = vld [vmem:[%s1483 + $0xc] sm:$0xf]
      %vm1488 = vsmask.f32 5376
      %v1489 = vrot.slane %v212, 2
      %v1490 = vrot.slane %v208, 3
      %v1491 = vor.u32 %v1489, %v1490
      %v1492 = vrot.slane %v220, 2
      %v1493 = vrot.slane %v216, 3
      %v1494 = vor.u32 %v1492, %v1493
      %v1495 = vsel %vm1488, %v1491, %v1494
      %v1496 = vrot.slane %v228, 2
      %v1497 = vrot.slane %v224, 3
      %v1498 = vor.u32 %v1496, %v1497
      %v1499 = vsel %vm1488, %v1494, %v1498
      %v1500 = vrot.slane %v236, 2
      %v1501 = vrot.slane %v232, 3
      %v1502 = vor.u32 %v1500, %v1501
      %v1503 = vsel %vm1488, %v1498, %v1502
      %v1505 = vshrl.u32 %v1353, 16
      %v1507 = vrot.slane %v1505, 2
      %v1508 = vshll.u32 %v1353, 16
      %v1510 = vrot.slane %v1508, 3
      %v1511 = vor.u32 %v1507, %v1510
      %v1512 = vsel %vm1488, %v1502, %v1511
      %v1514 = vshrl.u32 %v1354, 16
      %v1516 = vrot.slane %v1514, 2
      %v1517 = vshll.u32 %v1354, 16
      %v1519 = vrot.slane %v1517, 3
      %v1520 = vor.u32 %v1516, %v1519
      %v1521 = vsel %vm1488, %v1511, %v1520
      %v1526 = vunpack.c.l.b16 %v1484
      %v1527 = vunpack.c.l.b16 %v1485
      %v1528 = vunpack.c.l.b16 %v1486
      %v1529 = vunpack.c.l.b16 %v1487
      %v1530 = vpack.c.b16 %v1527, %v1526
      %v1531 = vpack.c.b16 %v1529, %v1528
      %v1535 = vsel %vm251, %v1495, 0
      %v1538 = vsel %vm251, %v1499, 0
      %v1541 = vsel %vm251, %v1503, 0
      %v1544 = vsel %vm251, %v1512, 0
      %v1547 = vsel %vm251, %v1521, 0
      %1549 = vmatprep.subr.bf16.mxu0 0
      %1550 = vmatpush1.bf16.msra.mxu0 %v1530
      %1551 = vmatprep.subr.bf16.mxu0 0
      %1552 = vmatpush1.bf16.msra.mxu0 %v1531
      %1553 = vmatprep.subr.bf16.mxu0 0
      %1554 = vmatpush1.bf16.msra.mxu0 0
      %1555 = vmatprep.subr.bf16.mxu0 0
      %1556 = vmatpush1.bf16.msra.mxu0 0
      %1557 = vmatprep.subr.bf16.mxu0 0
      %1558 = vmatpush1.bf16.msra.mxu0 0
      %1559 = vmatprep.subr.bf16.mxu0 0
      %1560 = vmatpush1.bf16.msra.mxu0 0
      %1561 = vmatprep.subr.bf16.mxu0 0
      %1562 = vmatpush1.bf16.msra.mxu0 0
      %1563 = vmatprep.subr.bf16.mxu0 0
      %1564 = vmatpush1.bf16.msra.mxu0 0
      %1565 = vmatprep.subr.bf16.mxu0 0
      %1566 = vmatpush1.bf16.msra.mxu0 0
      %1567 = vmatprep.subr.bf16.mxu0 0
      %1568 = vmatpush1.bf16.msra.mxu0 0
      %1569 = vmatprep.subr.bf16.mxu0 0
      %1570 = vmatpush1.bf16.msra.mxu0 0
      %1571 = vmatprep.subr.bf16.mxu0 0
      %1572 = vmatpush1.bf16.msra.mxu0 0
      %1573 = vmatprep.subr.bf16.mxu0 0
      %1574 = vmatpush1.bf16.msra.mxu0 0
      %1575 = vmatprep.subr.bf16.mxu0 0
      %1576 = vmatpush1.bf16.msra.mxu0 0
      %1577 = vmatprep.subr.bf16.mxu0 0
      %1578 = vmatpush1.bf16.msra.mxu0 0
      %1579 = vmatprep.subr.bf16.mxu0 0
      %1580 = vmatpush1.bf16.msra.mxu0 0
      %1581 = vmatprep.mubr.bf16.mxu0 0
      %1582 = vmatmul.mubr.bf16.gmra.mrb[0].mxu0 %v1535
      %v1583 = vpop.f32.mrb[0].mxu0
      %v1584 = vadd.f32 0.0, %v1583
      %v1585 = vpop.f32.mrb[0].mxu0
      %v1586 = vpop.f32.mrb[0].mxu0
      %v1587 = vadd.f32 0.0, %v1586
      %v1588 = vpop.f32.mrb[0].mxu0
      %1589 = vmatprep.mubr.bf16.mxu0 0
      %1590 = vmatmul.mubr.bf16.gmra.mrb[0].mxu0 %v1538
      %v1591 = vpop.f32.mrb[0].mxu0
      %v1592 = vadd.f32 0.0, %v1591
      %v1593 = vpop.f32.mrb[0].mxu0
      %v1594 = vpop.f32.mrb[0].mxu0
      %v1595 = vadd.f32 0.0, %v1594
      %v1596 = vpop.f32.mrb[0].mxu0
      %1597 = vmatprep.mubr.bf16.mxu0 0
      %1598 = vmatmul.mubr.bf16.gmra.mrb[0].mxu0 %v1541
      %v1599 = vpop.f32.mrb[0].mxu0
      %v1600 = vadd.f32 0.0, %v1599
      %v1601 = vpop.f32.mrb[0].mxu0
      %v1602 = vpop.f32.mrb[0].mxu0
      %v1603 = vadd.f32 0.0, %v1602
      %v1604 = vpop.f32.mrb[0].mxu0
      %1605 = vmatprep.mubr.bf16.mxu0 0
      %1606 = vmatmul.mubr.bf16.gmra.mrb[0].mxu0 %v1544
      %v1607 = vpop.f32.mrb[0].mxu0
      %v1608 = vadd.f32 0.0, %v1607
      %v1609 = vpop.f32.mrb[0].mxu0
      %v1610 = vpop.f32.mrb[0].mxu0
      %v1611 = vadd.f32 0.0, %v1610
      %v1612 = vpop.f32.mrb[0].mxu0
      %1613 = vmatprep.mubr.bf16.mxu0 0
      %1614 = vmatmul.mubr.bf16.gmra.mrb[0].mxu0 %v1547
      %v1615 = vpop.f32.mrb[0].mxu0
      %v1616 = vadd.f32 0.0, %v1615
      %v1617 = vpop.f32.mrb[0].mxu0
      %v1618 = vpop.f32.mrb[0].mxu0
      %v1619 = vadd.f32 0.0, %v1618
      %v1620 = vpop.f32.mrb[0].mxu0
      %1621 = vdwg.mxu0
      %v1622 = vadd.f32 %v1473, %v1584
      %v1623 = vadd.f32 %v1474, %v1587
      %v1624 = vadd.f32 %v1475, %v1592
      %v1625 = vadd.f32 %v1476, %v1595
      %v1626 = vadd.f32 %v1477, %v1600
      %v1627 = vadd.f32 %v1478, %v1603
      %v1628 = vadd.f32 %v1479, %v1608
      %v1629 = vadd.f32 %v1480, %v1611
      %v1630 = vadd.f32 %v1481, %v1616
      %v1631 = vadd.f32 %v1482, %v1619
      %s1632 = scalar_lea.vmem %s1, 192
      %v1633 = vld [vmem:[%s1632] sm:$0xf]
      %v1634 = vld [vmem:[%s1632 + $0x4] sm:$0xf]
      %v1635 = vld [vmem:[%s1632 + $0x8] sm:$0xf]
      %v1636 = vld [vmem:[%s1632 + $0xc] sm:$0xf]
      %s1637 = scalar_lea.vmem %s1, 208
      %v1638 = vld [vmem:[%s1637] sm:$0xf]
      %v1639 = vld [vmem:[%s1637 + $0x4] sm:$0xf]
      %v1640 = vld [vmem:[%s1637 + $0x8] sm:$0xf]
      %v1641 = vld [vmem:[%s1637 + $0xc] sm:$0xf]
      %v1646 = vunpack.c.l.b16 %v1638
      %v1647 = vunpack.c.l.b16 %v1639
      %v1648 = vunpack.c.l.b16 %v1640
      %v1649 = vunpack.c.l.b16 %v1641
      %v1650 = vpack.c.b16 %v1647, %v1646
      %v1651 = vpack.c.b16 %v1649, %v1648
      %1654 = vmatprep.subr.bf16.mxu0 0
      %1655 = vmatpush1.bf16.msra.mxu0 %v1650
      %1656 = vmatprep.subr.bf16.mxu0 0
      %1657 = vmatpush1.bf16.msra.mxu0 %v1651
      %1658 = vmatprep.subr.bf16.mxu0 0
      %1659 = vmatpush1.bf16.msra.mxu0 0
      %1660 = vmatprep.subr.bf16.mxu0 0
      %1661 = vmatpush1.bf16.msra.mxu0 0
      %1662 = vmatprep.subr.bf16.mxu0 0
      %1663 = vmatpush1.bf16.msra.mxu0 0
      %1664 = vmatprep.subr.bf16.mxu0 0
      %1665 = vmatpush1.bf16.msra.mxu0 0
      %1666 = vmatprep.subr.bf16.mxu0 0
      %1667 = vmatpush1.bf16.msra.mxu0 0
      %1668 = vmatprep.subr.bf16.mxu0 0
      %1669 = vmatpush1.bf16.msra.mxu0 0
      %1670 = vmatprep.subr.bf16.mxu0 0
      %1671 = vmatpush1.bf16.msra.mxu0 0
      %1672 = vmatprep.subr.bf16.mxu0 0
      %1673 = vmatpush1.bf16.msra.mxu0 0
      %1674 = vmatprep.subr.bf16.mxu0 0
      %1675 = vmatpush1.bf16.msra.mxu0 0
      %1676 = vmatprep.subr.bf16.mxu0 0
      %1677 = vmatpush1.bf16.msra.mxu0 0
      %1678 = vmatprep.subr.bf16.mxu0 0
      %1679 = vmatpush1.bf16.msra.mxu0 0
      %1680 = vmatprep.subr.bf16.mxu0 0
      %1681 = vmatpush1.bf16.msra.mxu0 0
      %1682 = vmatprep.subr.bf16.mxu0 0
      %1683 = vmatpush1.bf16.msra.mxu0 0
      %1684 = vmatprep.subr.bf16.mxu0 0
      %1685 = vmatpush1.bf16.msra.mxu0 0
      %1686 = vmatprep.mubr.bf16.mxu0 0
      %1687 = vmatmul.mubr.bf16.gmra.mrb[0].mxu0 %v1076
      %v1688 = vpop.f32.mrb[0].mxu0
      %v1689 = vadd.f32 0.0, %v1688
      %v1690 = vpop.f32.mrb[0].mxu0
      %v1691 = vpop.f32.mrb[0].mxu0
      %v1692 = vadd.f32 0.0, %v1691
      %v1693 = vpop.f32.mrb[0].mxu0
      %1694 = vmatprep.mubr.bf16.mxu0 0
      %1695 = vmatmul.mubr.bf16.gmra.mrb[0].mxu0 %v1079
      %v1696 = vpop.f32.mrb[0].mxu0
      %v1697 = vadd.f32 0.0, %v1696
      %v1698 = vpop.f32.mrb[0].mxu0
      %v1699 = vpop.f32.mrb[0].mxu0
      %v1700 = vadd.f32 0.0, %v1699
      %v1701 = vpop.f32.mrb[0].mxu0
      %1702 = vmatprep.mubr.bf16.mxu0 0
      %1703 = vmatmul.mubr.bf16.gmra.mrb[0].mxu0 %v1082
      %v1704 = vpop.f32.mrb[0].mxu0
      %v1705 = vadd.f32 0.0, %v1704
      %v1706 = vpop.f32.mrb[0].mxu0
      %v1707 = vpop.f32.mrb[0].mxu0
      %v1708 = vadd.f32 0.0, %v1707
      %v1709 = vpop.f32.mrb[0].mxu0
      %1710 = vmatprep.mubr.bf16.mxu0 0
      %1711 = vmatmul.mubr.bf16.gmra.mrb[0].mxu0 %v1085
      %v1712 = vpop.f32.mrb[0].mxu0
      %v1713 = vadd.f32 0.0, %v1712
      %v1714 = vpop.f32.mrb[0].mxu0
      %v1715 = vpop.f32.mrb[0].mxu0
      %v1716 = vadd.f32 0.0, %v1715
      %v1717 = vpop.f32.mrb[0].mxu0
      %1718 = vmatprep.mubr.bf16.mxu0 0
      %1719 = vmatmul.mubr.bf16.gmra.mrb[0].mxu0 %v1088
      %v1720 = vpop.f32.mrb[0].mxu0
      %v1721 = vadd.f32 0.0, %v1720
      %v1722 = vpop.f32.mrb[0].mxu0
      %v1723 = vpop.f32.mrb[0].mxu0
      %v1724 = vadd.f32 0.0, %v1723
      %v1725 = vpop.f32.mrb[0].mxu0
      %1726 = vdwg.mxu0
      %v1731 = vunpack.c.l.b16 %v1633
      %v1732 = vunpack.c.l.b16 %v1634
      %v1733 = vunpack.c.l.b16 %v1635
      %v1734 = vunpack.c.l.b16 %v1636
      %v1735 = vpack.c.b16 %v1732, %v1731
      %v1736 = vpack.c.b16 %v1734, %v1733
      %1739 = vmatprep.subr.bf16.mxu0 0
      %1740 = vmatpush1.bf16.msra.mxu0 %v1735
      %1741 = vmatprep.subr.bf16.mxu0 0
      %1742 = vmatpush1.bf16.msra.mxu0 %v1736
      %1743 = vmatprep.subr.bf16.mxu0 0
      %1744 = vmatpush1.bf16.msra.mxu0 0
      %1745 = vmatprep.subr.bf16.mxu0 0
      %1746 = vmatpush1.bf16.msra.mxu0 0
      %1747 = vmatprep.subr.bf16.mxu0 0
      %1748 = vmatpush1.bf16.msra.mxu0 0
      %1749 = vmatprep.subr.bf16.mxu0 0
      %1750 = vmatpush1.bf16.msra.mxu0 0
      %1751 = vmatprep.subr.bf16.mxu0 0
      %1752 = vmatpush1.bf16.msra.mxu0 0
      %1753 = vmatprep.subr.bf16.mxu0 0
      %1754 = vmatpush1.bf16.msra.mxu0 0
      %1755 = vmatprep.subr.bf16.mxu0 0
      %1756 = vmatpush1.bf16.msra.mxu0 0
      %1757 = vmatprep.subr.bf16.mxu0 0
      %1758 = vmatpush1.bf16.msra.mxu0 0
      %1759 = vmatprep.subr.bf16.mxu0 0
      %1760 = vmatpush1.bf16.msra.mxu0 0
      %1761 = vmatprep.subr.bf16.mxu0 0
      %1762 = vmatpush1.bf16.msra.mxu0 0
      %1763 = vmatprep.subr.bf16.mxu0 0
      %1764 = vmatpush1.bf16.msra.mxu0 0
      %1765 = vmatprep.subr.bf16.mxu0 0
      %1766 = vmatpush1.bf16.msra.mxu0 0
      %1767 = vmatprep.subr.bf16.mxu0 0
      %1768 = vmatpush1.bf16.msra.mxu0 0
      %1769 = vmatprep.subr.bf16.mxu0 0
      %1770 = vmatpush1.bf16.msra.mxu0 0
      %1771 = vmatprep.mubr.bf16.mxu0 0
      %1772 = vmatmul.mubr.bf16.gmra.mrb[0].mxu0 %v639
      %v1773 = vpop.f32.mrb[0].mxu0
      %v1774 = vadd.f32 %v1689, %v1773
      %v1775 = vpop.f32.mrb[0].mxu0
      %v1776 = vpop.f32.mrb[0].mxu0
      %v1777 = vadd.f32 %v1692, %v1776
      %v1778 = vpop.f32.mrb[0].mxu0
      %1779 = vmatprep.mubr.bf16.mxu0 0
      %1780 = vmatmul.mubr.bf16.gmra.mrb[0].mxu0 %v642
      %v1781 = vpop.f32.mrb[0].mxu0
      %v1782 = vadd.f32 %v1697, %v1781
      %v1783 = vpop.f32.mrb[0].mxu0
      %v1784 = vpop.f32.mrb[0].mxu0
      %v1785 = vadd.f32 %v1700, %v1784
      %v1786 = vpop.f32.mrb[0].mxu0
      %1787 = vmatprep.mubr.bf16.mxu0 0
      %1788 = vmatmul.mubr.bf16.gmra.mrb[0].mxu0 %v645
      %v1789 = vpop.f32.mrb[0].mxu0
      %v1790 = vadd.f32 %v1705, %v1789
      %v1791 = vpop.f32.mrb[0].mxu0
      %v1792 = vpop.f32.mrb[0].mxu0
      %v1793 = vadd.f32 %v1708, %v1792
      %v1794 = vpop.f32.mrb[0].mxu0
      %1795 = vmatprep.mubr.bf16.mxu0 0
      %1796 = vmatmul.mubr.bf16.gmra.mrb[0].mxu0 %v648
      %v1797 = vpop.f32.mrb[0].mxu0
      %v1798 = vadd.f32 %v1713, %v1797
      %v1799 = vpop.f32.mrb[0].mxu0
      %v1800 = vpop.f32.mrb[0].mxu0
      %v1801 = vadd.f32 %v1716, %v1800
      %v1802 = vpop.f32.mrb[0].mxu0
      %1803 = vmatprep.mubr.bf16.mxu0 0
      %1804 = vmatmul.mubr.bf16.gmra.mrb[0].mxu0 %v651
      %v1805 = vpop.f32.mrb[0].mxu0
      %v1806 = vadd.f32 %v1721, %v1805
      %v1807 = vpop.f32.mrb[0].mxu0
      %v1808 = vpop.f32.mrb[0].mxu0
      %v1809 = vadd.f32 %v1724, %v1808
      %v1810 = vpop.f32.mrb[0].mxu0
      %1811 = vdwg.mxu0
      %s1812 = scalar_lea.vmem %s1, 224
      %v1813 = vld [vmem:[%s1812] sm:$0xf]
      %v1814 = vld [vmem:[%s1812 + $0x4] sm:$0xf]
      %v1815 = vld [vmem:[%s1812 + $0x8] sm:$0xf]
      %v1816 = vld [vmem:[%s1812 + $0xc] sm:$0xf]
      %v1821 = vunpack.c.l.b16 %v1813
      %v1822 = vunpack.c.l.b16 %v1814
      %v1823 = vunpack.c.l.b16 %v1815
      %v1824 = vunpack.c.l.b16 %v1816
      %v1825 = vpack.c.b16 %v1822, %v1821
      %v1826 = vpack.c.b16 %v1824, %v1823
      %1829 = vmatprep.subr.bf16.mxu0 0
      %1830 = vmatpush1.bf16.msra.mxu0 %v1825
      %1831 = vmatprep.subr.bf16.mxu0 0
      %1832 = vmatpush1.bf16.msra.mxu0 %v1826
      %1833 = vmatprep.subr.bf16.mxu0 0
      %1834 = vmatpush1.bf16.msra.mxu0 0
      %1835 = vmatprep.subr.bf16.mxu0 0
      %1836 = vmatpush1.bf16.msra.mxu0 0
      %1837 = vmatprep.subr.bf16.mxu0 0
      %1838 = vmatpush1.bf16.msra.mxu0 0
      %1839 = vmatprep.subr.bf16.mxu0 0
      %1840 = vmatpush1.bf16.msra.mxu0 0
      %1841 = vmatprep.subr.bf16.mxu0 0
      %1842 = vmatpush1.bf16.msra.mxu0 0
      %1843 = vmatprep.subr.bf16.mxu0 0
      %1844 = vmatpush1.bf16.msra.mxu0 0
      %1845 = vmatprep.subr.bf16.mxu0 0
      %1846 = vmatpush1.bf16.msra.mxu0 0
      %1847 = vmatprep.subr.bf16.mxu0 0
      %1848 = vmatpush1.bf16.msra.mxu0 0
      %1849 = vmatprep.subr.bf16.mxu0 0
      %1850 = vmatpush1.bf16.msra.mxu0 0
      %1851 = vmatprep.subr.bf16.mxu0 0
      %1852 = vmatpush1.bf16.msra.mxu0 0
      %1853 = vmatprep.subr.bf16.mxu0 0
      %1854 = vmatpush1.bf16.msra.mxu0 0
      %1855 = vmatprep.subr.bf16.mxu0 0
      %1856 = vmatpush1.bf16.msra.mxu0 0
      %1857 = vmatprep.subr.bf16.mxu0 0
      %1858 = vmatpush1.bf16.msra.mxu0 0
      %1859 = vmatprep.subr.bf16.mxu0 0
      %1860 = vmatpush1.bf16.msra.mxu0 0
      %1861 = vmatprep.mubr.bf16.mxu0 0
      %1862 = vmatmul.mubr.bf16.gmra.mrb[0].mxu0 %v1535
      %v1863 = vpop.f32.mrb[0].mxu0
      %v1864 = vadd.f32 0.0, %v1863
      %v1865 = vpop.f32.mrb[0].mxu0
      %v1866 = vpop.f32.mrb[0].mxu0
      %v1867 = vadd.f32 0.0, %v1866
      %v1868 = vpop.f32.mrb[0].mxu0
      %1869 = vmatprep.mubr.bf16.mxu0 0
      %1870 = vmatmul.mubr.bf16.gmra.mrb[0].mxu0 %v1538
      %v1871 = vpop.f32.mrb[0].mxu0
      %v1872 = vadd.f32 0.0, %v1871
      %v1873 = vpop.f32.mrb[0].mxu0
      %v1874 = vpop.f32.mrb[0].mxu0
      %v1875 = vadd.f32 0.0, %v1874
      %v1876 = vpop.f32.mrb[0].mxu0
      %1877 = vmatprep.mubr.bf16.mxu0 0
      %1878 = vmatmul.mubr.bf16.gmra.mrb[0].mxu0 %v1541
      %v1879 = vpop.f32.mrb[0].mxu0
      %v1880 = vadd.f32 0.0, %v1879
      %v1881 = vpop.f32.mrb[0].mxu0
      %v1882 = vpop.f32.mrb[0].mxu0
      %v1883 = vadd.f32 0.0, %v1882
      %v1884 = vpop.f32.mrb[0].mxu0
      %1885 = vmatprep.mubr.bf16.mxu0 0
      %1886 = vmatmul.mubr.bf16.gmra.mrb[0].mxu0 %v1544
      %v1887 = vpop.f32.mrb[0].mxu0
      %v1888 = vadd.f32 0.0, %v1887
      %v1889 = vpop.f32.mrb[0].mxu0
      %v1890 = vpop.f32.mrb[0].mxu0
      %v1891 = vadd.f32 0.0, %v1890
      %v1892 = vpop.f32.mrb[0].mxu0
      %1893 = vmatprep.mubr.bf16.mxu0 0
      %1894 = vmatmul.mubr.bf16.gmra.mrb[0].mxu0 %v1547
      %v1895 = vpop.f32.mrb[0].mxu0
      %v1896 = vadd.f32 0.0, %v1895
      %v1897 = vpop.f32.mrb[0].mxu0
      %v1898 = vpop.f32.mrb[0].mxu0
      %v1899 = vadd.f32 0.0, %v1898
      %v1900 = vpop.f32.mrb[0].mxu0
      %1901 = vdwg.mxu0
      %v1902 = vadd.f32 %v1774, %v1864
      %v1903 = vadd.f32 %v1777, %v1867
      %v1904 = vadd.f32 %v1782, %v1872
      %v1905 = vadd.f32 %v1785, %v1875
      %v1906 = vadd.f32 %v1790, %v1880
      %v1907 = vadd.f32 %v1793, %v1883
      %v1908 = vadd.f32 %v1798, %v1888
      %v1909 = vadd.f32 %v1801, %v1891
      %v1910 = vadd.f32 %v1806, %v1896
      %v1911 = vadd.f32 %v1809, %v1899
      %s1912 = scalar_lea.vmem %s1, 240
      %v1913 = vld [vmem:[%s1912] sm:$0xf]
      %v1914 = vld [vmem:[%s1912 + $0x4] sm:$0xf]
      %v1915 = vld [vmem:[%s1912 + $0x8] sm:$0xf]
      %v1916 = vld [vmem:[%s1912 + $0xc] sm:$0xf]
      %vm1917 = vcmask 1044480
      %v1918 = vrot.slane %v186, 3
      %v1919 = vrot.slane %v187, 3
      %v1920 = vsel %vm1917, %v1918, %v1919
      %v1921 = vrot.slane %v188, 3
      %v1922 = vsel %vm1917, %v1919, %v1921
      %v1923 = vrot.slane %v189, 3
      %v1924 = vsel %vm1917, %v1921, %v1923
      %v1925 = vrot.slane %v1353, 3
      %v1926 = vsel %vm1917, %v1923, %v1925
      %v1927 = vrot.slane %v1354, 3
      %v1928 = vsel %vm1917, %v1925, %v1927
      %v1933 = vunpack.c.l.b16 %v1913
      %v1934 = vunpack.c.l.b16 %v1914
      %v1935 = vunpack.c.l.b16 %v1915
      %v1936 = vunpack.c.l.b16 %v1916
      %v1937 = vpack.c.b16 %v1934, %v1933
      %v1938 = vpack.c.b16 %v1936, %v1935
      %v1942 = vsel %vm251, %v1920, 0
      %v1945 = vsel %vm251, %v1922, 0
      %v1948 = vsel %vm251, %v1924, 0
      %v1951 = vsel %vm251, %v1926, 0
      %v1954 = vsel %vm251, %v1928, 0
      %1956 = vmatprep.subr.bf16.mxu0 0
      %1957 = vmatpush1.bf16.msra.mxu0 %v1937
      %1958 = vmatprep.subr.bf16.mxu0 0
      %1959 = vmatpush1.bf16.msra.mxu0 %v1938
      %1960 = vmatprep.subr.bf16.mxu0 0
      %1961 = vmatpush1.bf16.msra.mxu0 0
      %1962 = vmatprep.subr.bf16.mxu0 0
      %1963 = vmatpush1.bf16.msra.mxu0 0
      %1964 = vmatprep.subr.bf16.mxu0 0
      %1965 = vmatpush1.bf16.msra.mxu0 0
      %1966 = vmatprep.subr.bf16.mxu0 0
      %1967 = vmatpush1.bf16.msra.mxu0 0
      %1968 = vmatprep.subr.bf16.mxu0 0
      %1969 = vmatpush1.bf16.msra.mxu0 0
      %1970 = vmatprep.subr.bf16.mxu0 0
      %1971 = vmatpush1.bf16.msra.mxu0 0
      %1972 = vmatprep.subr.bf16.mxu0 0
      %1973 = vmatpush1.bf16.msra.mxu0 0
      %1974 = vmatprep.subr.bf16.mxu0 0
      %1975 = vmatpush1.bf16.msra.mxu0 0
      %1976 = vmatprep.subr.bf16.mxu0 0
      %1977 = vmatpush1.bf16.msra.mxu0 0
      %1978 = vmatprep.subr.bf16.mxu0 0
      %1979 = vmatpush1.bf16.msra.mxu0 0
      %1980 = vmatprep.subr.bf16.mxu0 0
      %1981 = vmatpush1.bf16.msra.mxu0 0
      %1982 = vmatprep.subr.bf16.mxu0 0
      %1983 = vmatpush1.bf16.msra.mxu0 0
      %1984 = vmatprep.subr.bf16.mxu0 0
      %1985 = vmatpush1.bf16.msra.mxu0 0
      %1986 = vmatprep.subr.bf16.mxu0 0
      %1987 = vmatpush1.bf16.msra.mxu0 0
      %1988 = vmatprep.mubr.bf16.mxu0 0
      %1989 = vmatmul.mubr.bf16.gmra.mrb[0].mxu0 %v1942
      %v1990 = vpop.f32.mrb[0].mxu0
      %v1991 = vadd.f32 0.0, %v1990
      %v1992 = vpop.f32.mrb[0].mxu0
      %v1993 = vpop.f32.mrb[0].mxu0
      %v1994 = vadd.f32 0.0, %v1993
      %v1995 = vpop.f32.mrb[0].mxu0
      %1996 = vmatprep.mubr.bf16.mxu0 0
      %1997 = vmatmul.mubr.bf16.gmra.mrb[0].mxu0 %v1945
      %v1998 = vpop.f32.mrb[0].mxu0
      %v1999 = vadd.f32 0.0, %v1998
      %v2000 = vpop.f32.mrb[0].mxu0
      %v2001 = vpop.f32.mrb[0].mxu0
      %v2002 = vadd.f32 0.0, %v2001
      %v2003 = vpop.f32.mrb[0].mxu0
      %2004 = vmatprep.mubr.bf16.mxu0 0
      %2005 = vmatmul.mubr.bf16.gmra.mrb[0].mxu0 %v1948
      %v2006 = vpop.f32.mrb[0].mxu0
      %v2007 = vadd.f32 0.0, %v2006
      %v2008 = vpop.f32.mrb[0].mxu0
      %v2009 = vpop.f32.mrb[0].mxu0
      %v2010 = vadd.f32 0.0, %v2009
      %v2011 = vpop.f32.mrb[0].mxu0
      %2012 = vmatprep.mubr.bf16.mxu0 0
      %2013 = vmatmul.mubr.bf16.gmra.mrb[0].mxu0 %v1951
      %v2014 = vpop.f32.mrb[0].mxu0
      %v2015 = vadd.f32 0.0, %v2014
      %v2016 = vpop.f32.mrb[0].mxu0
      %v2017 = vpop.f32.mrb[0].mxu0
      %v2018 = vadd.f32 0.0, %v2017
      %v2019 = vpop.f32.mrb[0].mxu0
      %2020 = vmatprep.mubr.bf16.mxu0 0
      %2021 = vmatmul.mubr.bf16.gmra.mrb[0].mxu0 %v1954
      %v2022 = vpop.f32.mrb[0].mxu0
      %v2023 = vadd.f32 0.0, %v2022
      %v2024 = vpop.f32.mrb[0].mxu0
      %v2025 = vpop.f32.mrb[0].mxu0
      %v2026 = vadd.f32 0.0, %v2025
      %v2027 = vpop.f32.mrb[0].mxu0
      %2028 = vdwg.mxu0
      %v2029 = vadd.f32 %v1902, %v1991
      %v2030 = vadd.f32 %v1903, %v1994
      %v2031 = vadd.f32 %v1904, %v1999
      %v2032 = vadd.f32 %v1905, %v2002
      %v2033 = vadd.f32 %v1906, %v2007
      %v2034 = vadd.f32 %v1907, %v2010
      %v2035 = vadd.f32 %v1908, %v2015
      %v2036 = vadd.f32 %v1909, %v2018
      %v2037 = vadd.f32 %v1910, %v2023
      %v2038 = vadd.f32 %v1911, %v2026
      %2049 = vrot.lane.b32.xlu0 %v1163, 32
      %v2050 = vpop.permute.xlu0 %2049
      %2051 = vrot.lane.b32.xlu0 %v1164, 32
      %v2052 = vpop.permute.xlu0 %2051
      %2053 = vrot.lane.b32.xlu0 %v1165, 32
      %v2054 = vpop.permute.xlu0 %2053
      %2055 = vrot.lane.b32.xlu0 %v1166, 32
      %v2056 = vpop.permute.xlu0 %2055
      %2057 = vrot.lane.b32.xlu0 %v1167, 32
      %v2058 = vpop.permute.xlu0 %2057
      %2059 = vrot.lane.b32.xlu0 %v1168, 32
      %v2060 = vpop.permute.xlu0 %2059
      %2061 = vrot.lane.b32.xlu0 %v1169, 32
      %v2062 = vpop.permute.xlu0 %2061
      %2063 = vrot.lane.b32.xlu0 %v1170, 32
      %v2064 = vpop.permute.xlu0 %2063
      %2065 = vrot.lane.b32.xlu0 %v1171, 32
      %v2066 = vpop.permute.xlu0 %2065
      %2067 = vrot.lane.b32.xlu0 %v1172, 32
      %v2068 = vpop.permute.xlu0 %2067
      %2089 = vrot.lane.b32.xlu0 %v1622, 64
      %v2090 = vpop.permute.xlu0 %2089
      %2091 = vrot.lane.b32.xlu0 %v1623, 64
      %v2092 = vpop.permute.xlu0 %2091
      %2093 = vrot.lane.b32.xlu0 %v1624, 64
      %v2094 = vpop.permute.xlu0 %2093
      %2095 = vrot.lane.b32.xlu0 %v1625, 64
      %v2096 = vpop.permute.xlu0 %2095
      %2097 = vrot.lane.b32.xlu0 %v1626, 64
      %v2098 = vpop.permute.xlu0 %2097
      %2099 = vrot.lane.b32.xlu0 %v1627, 64
      %v2100 = vpop.permute.xlu0 %2099
      %2101 = vrot.lane.b32.xlu0 %v1628, 64
      %v2102 = vpop.permute.xlu0 %2101
      %2103 = vrot.lane.b32.xlu0 %v1629, 64
      %v2104 = vpop.permute.xlu0 %2103
      %2105 = vrot.lane.b32.xlu0 %v1630, 64
      %v2106 = vpop.permute.xlu0 %2105
      %2107 = vrot.lane.b32.xlu0 %v1631, 64
      %v2108 = vpop.permute.xlu0 %2107
      %2129 = vrot.lane.b32.xlu0 %v2029, 96
      %v2130 = vpop.permute.xlu0 %2129
      %2131 = vrot.lane.b32.xlu0 %v2030, 96
      %v2132 = vpop.permute.xlu0 %2131
      %2133 = vrot.lane.b32.xlu0 %v2031, 96
      %v2134 = vpop.permute.xlu0 %2133
      %2135 = vrot.lane.b32.xlu0 %v2032, 96
      %v2136 = vpop.permute.xlu0 %2135
      %2137 = vrot.lane.b32.xlu0 %v2033, 96
      %v2138 = vpop.permute.xlu0 %2137
      %2139 = vrot.lane.b32.xlu0 %v2034, 96
      %v2140 = vpop.permute.xlu0 %2139
      %2141 = vrot.lane.b32.xlu0 %v2035, 96
      %v2142 = vpop.permute.xlu0 %2141
      %2143 = vrot.lane.b32.xlu0 %v2036, 96
      %v2144 = vpop.permute.xlu0 %2143
      %2145 = vrot.lane.b32.xlu0 %v2037, 96
      %v2146 = vpop.permute.xlu0 %2145
      %2147 = vrot.lane.b32.xlu0 %v2038, 96
      %v2148 = vpop.permute.xlu0 %2147
      %v2159 = vsel %vm251, %v726, %v2050
      %v2160 = vsel %vm251, %v727, %v2052
      %v2161 = vsel %vm251, %v728, %v2054
      %v2162 = vsel %vm251, %v729, %v2056
      %v2163 = vsel %vm251, %v730, %v2058
      %v2164 = vsel %vm251, %v731, %v2060
      %v2165 = vsel %vm251, %v732, %v2062
      %v2166 = vsel %vm251, %v733, %v2064
      %v2167 = vsel %vm251, %v734, %v2066
      %v2168 = vsel %vm251, %v735, %v2068
      %vm2169 = vcmask 523264
      %v2170 = vsel %vm2169, %v2159, %v2090
      %v2171 = vsel %vm2169, %v2160, %v2092
      %v2172 = vsel %vm2169, %v2161, %v2094
      %v2173 = vsel %vm2169, %v2162, %v2096
      %v2174 = vsel %vm2169, %v2163, %v2098
      %v2175 = vsel %vm2169, %v2164, %v2100
      %v2176 = vsel %vm2169, %v2165, %v2102
      %v2177 = vsel %vm2169, %v2166, %v2104
      %v2178 = vsel %vm2169, %v2167, %v2106
      %v2179 = vsel %vm2169, %v2168, %v2108
      %vm2180 = vcmask 785408
      %v2181 = vsel %vm2180, %v2170, %v2130
      %v2182 = vsel %vm2180, %v2171, %v2132
      %v2183 = vsel %vm2180, %v2172, %v2134
      %v2184 = vsel %vm2180, %v2173, %v2136
      %v2185 = vsel %vm2180, %v2174, %v2138
      %v2186 = vsel %vm2180, %v2175, %v2140
      %v2187 = vsel %vm2180, %v2176, %v2142
      %v2188 = vsel %vm2180, %v2177, %v2144
      %v2189 = vsel %vm2180, %v2178, %v2146
      %v2190 = vsel %vm2180, %v2179, %v2148
      %v2191 = vld [vmem:[%s2] sm:$0x1]
      %v2193 = vlaneseq
      %v2194 = vshrl.u32 %v2193, 7
      %v2195 = vsub.s32 0, %v2194
      %v2196 = vrot.slane %v2191, %v2195
      %v2198 = vadd.f32 %v2181, %v2196
      %v2199 = vadd.f32 %v2182, %v2196
      %v2200 = vadd.f32 %v2183, %v2196
      %v2201 = vadd.f32 %v2184, %v2196
      %v2202 = vadd.f32 %v2185, %v2196
      %v2203 = vadd.f32 %v2186, %v2196
      %v2204 = vadd.f32 %v2187, %v2196
      %v2205 = vadd.f32 %v2188, %v2196
      %v2206 = vadd.f32 %v2189, %v2196
      %v2207 = vadd.f32 %v2190, %v2196
      %2208 = vst [vmem:[%s170] sm:$0xff] %v2198
      %2209 = vst [vmem:[%s170 + $0x6] sm:$0xfc] %v2199
      %2210 = vst [vmem:[%s170 + $0xe] sm:$0x3] %v2200
      %2211 = vst [vmem:[%s170 + $0xc] sm:$0xf0] %v2200
      %2212 = vst [vmem:[%s170 + $0x14] sm:$0xf] %v2201
      %2213 = vst [vmem:[%s170 + $0x12] sm:$0xc0] %v2201
      %2214 = vst [vmem:[%s170 + $0x1a] sm:$0x3f] %v2202
      %2215 = vst [vmem:[%s170 + $0x20] sm:$0xff] %v2203
      %2216 = vst [vmem:[%s170 + $0x26] sm:$0xfc] %v2204
      %2217 = vst [vmem:[%s170 + $0x2e] sm:$0x3] %v2205
      %2218 = vst [vmem:[%s170 + $0x2c] sm:$0xf0] %v2205
      %2219 = vst [vmem:[%s170 + $0x34] sm:$0xf] %v2206
      %2220 = vst [vmem:[%s170 + $0x32] sm:$0xc0] %v2206
      %2221 = vst [vmem:[%s170 + $0x3a] sm:$0x3f] %v2207
      %p2222 = scmp.lt.s32.totalorder %s14, 1
      %s2223 = scalar_select %p2222, %s14, 1
      %s2224 = smul.addr %s2223, 8
      %s2225 = smul.addr %s2224, 8
      %s2226 = scalar_lea.vmem %s3, %s2225
      // Predicated region
      $region33: #{up_block_forward.3} parent=31 // pred_check
        %p2227 = pneg %p100
      $region34: #{up_block_forward.3} parent=31 // pred_check_branch
        %2229 = sbr.rel (%p2227) target = $region36
      $region35: #{up_block_forward.3} parent=31 // pred_region
        _
      $region36: #{up_block_forward.3} parent=31 // pred_fallthru
        _
    $region32: #{up_block_forward.3} parent=5 // pred_fallthru
      _
    %p2230 = scmp.le.s32.totalorder 2, %s9
    // Predicated region
    $region37: #{up_block_forward.3} parent=5 // pred_check
      %p2231 = pneg %p2230
    $region38: #{up_block_forward.3} parent=5 // pred_check_branch
      %2233 = sbr.rel (%p2231) target = $region40
    $region39: #{up_block_forward.3} parent=5 // pred_region
      %s2234 = ssub.s32 %s9, 2
      // Predicated region
      $region41: #{up_block_forward.3} parent=39 // pred_check
        %p2235 = pneg %p106
      $region42: #{up_block_forward.3} parent=39 // pred_check_branch
        %2237 = sbr.rel (%p2235) target = $region44
      $region43: #{up_block_forward.3} parent=39 // pred_region
        %p2238 = scmp.lt.s32.totalorder %s15, 1
        %s2239 = scalar_select %p2238, %s15, 1
        %s2240 = smul.addr %s2239, 8
        %s2241 = smul.addr %s2240, 8
        %s2242 = scalar_lea.vmem %s3, %s2241
      $region44: #{up_block_forward.3} parent=39 // pred_fallthru
        _
    $region40: #{up_block_forward.3} parent=5 // pred_fallthru
      _
  $region6: #{up_block_forward.3} parent=0 // loop_footer
    %s13 = sadd.s32 1, %s9
  $region7: #{up_block_forward.3} parent=0 // loop_footer_branch
    %8 = sbr.rel target = $region3
  $region8: #{up_block_forward.3} parent=0 // loop_exit
    _

// kernel: up_block_forward.5
$region0: #{up_block_forward.5}
  #allocation0 [shape = 'u32[]', space=smem, size = 0x4, offset = 0x4, fixed_abs, tag = 'smem constant byte address 0x4 - core index']
  #allocation1 [shape = 'u32[144,128]{1,0:T(1,128)}', space=vmem, size = 0x12000, scoped, tag = 'internal scratch']
  %s0 = inlined_call_operand.vmem [shape: f32[2,324,32], index: 0, kind: input, shape index: {}]
  %s1 = inlined_call_operand.vmem [shape: f32[324,1], index: 1, kind: input, shape index: {}]
  %s2 = inlined_call_operand.vmem [shape: f32[32,32], index: 2, kind: input, shape index: {}]
  %s3 = inlined_call_operand.vmem [shape: f32[1,32], index: 3, kind: input, shape index: {}]
  %s4 = inlined_call_operand.vmem [shape: f32[1,32], index: 4, kind: input, shape index: {}]
  %s5 = inlined_call_operand.vmem [shape: bf16[9,32,32], index: 5, kind: input, shape index: {}]
  %s6 = inlined_call_operand.vmem [shape: f32[1,32], index: 6, kind: input, shape index: {}]
  %s7 = inlined_call_operand.vmem [shape: f32[2,324,32], index: 7, kind: output, shape index: {}]
  %s8 = sld [smem:[#allocation0]]
  $region61: #{up_block_forward.5} parent=0
    _
  %s10 = ssub.s32 1, %s8
  %s11 = scalar_select 0, %s10, %s8
  loop: start=0, step=1, limit=4
  $region2: #{up_block_forward.5} parent=0 // loop_pre_header
    _
  $region3: #{up_block_forward.5} parent=0 // loop_header
    %s13 = sphi 0, %s17
    %p14 = scmp.ge.s32.totalorder %s13, 4
    %s23 = sphi 0, %s25
    %s26 = sphi 0, %s23
    %s27 = sphi 0, %s26
    %s43 = sphi 0, %s27
    %s47 = sphi 0, %s47
    %s49 = sphi 0, %s47
    %s50 = sphi 0, %s49
    %s64 = sphi 0, %s50
    %s68 = sphi 0, %s68
    %s70 = sphi 0, %s68
    %s71 = sphi 0, %s70
    %s85 = sphi 0, %s71
    %s89 = sphi 0, %s89
    %s91 = sphi 0, %s89
    %s92 = sphi 0, %s91
    %s106 = sphi 0, %s92
    %s110 = sphi 0, %s110
    %s112 = sphi 0, %s110
    %s113 = sphi 0, %s112
    %s127 = sphi 0, %s113
    %s131 = sphi 0, %s131
    %s133 = sphi 0, %s131
    %s134 = sphi 0, %s133
    %s148 = sphi 0, %s134
    %s152 = sphi 0, %s152
    %s154 = sphi 0, %s152
    %s155 = sphi 0, %s154
    %s169 = sphi 0, %s155
    %s175 = sphi 0, %s177
    %s178 = sphi 0, %s175
    %s179 = sphi 0, %s178
    %s195 = sphi 0, %s179
  $region4: #{up_block_forward.5} parent=0 // loop_header_branch
    %16 = sbr.rel (%p14) target = $region8
  $region5: #{up_block_forward.5} parent=0 // loop_body
    %s18 = ssub.s32 %s13, 1
    %s19 = ssub.s32 %s13, 2
    %s20 = sadd.s32 %s13, 1
    %s21 = ssub.s32 %s13, %s20
    %p22 = scmp.eq.s32.totalorder %s21, 0
    %s24 = sadd.s32 %s23, 1
    %s25 = scalar_select %p22, %s23, %s24
    %p28 = pneg %p22
    %p29 = scmp.eq.s32.totalorder %s13, 1
    %p30 = por %p28, %p29
    %p31 = scmp.ne.s32.totalorder %s23, %s26
    %p32 = scmp.eq.s32.totalorder %s13, 0
    %p33 = por %p31, %p32
    %p34 = scmp.ne.s32.totalorder %s23, %s26
    %p35 = scmp.eq.s32.totalorder %s18, 1
    %p36 = por %p34, %p35
    %p37 = scmp.ne.s32.totalorder %s26, %s27
    %p38 = scmp.eq.s32.totalorder %s18, 0
    %p39 = por %p37, %p38
    %p40 = scmp.ne.s32.totalorder %s26, %s27
    %p41 = scmp.eq.s32.totalorder %s19, 1
    %p42 = por %p40, %p41
    %p44 = scmp.ne.s32.totalorder %s27, %s43
    %p45 = scmp.eq.s32.totalorder %s19, 0
    %p46 = por %p44, %p45
    %s48 = sadd.s32 %s47, 1
    %p51 = scmp.eq.s32.totalorder %s13, 1
    %p52 = scmp.ne.s32.totalorder %s47, %s49
    %p53 = scmp.eq.s32.totalorder %s13, 0
    %p54 = por %p52, %p53
    %p55 = scmp.ne.s32.totalorder %s47, %s49
    %p56 = scmp.eq.s32.totalorder %s18, 1
    %p57 = por %p55, %p56
    %p58 = scmp.ne.s32.totalorder %s49, %s50
    %p59 = scmp.eq.s32.totalorder %s18, 0
    %p60 = por %p58, %p59
    %p61 = scmp.ne.s32.totalorder %s49, %s50
    %p62 = scmp.eq.s32.totalorder %s19, 1
    %p63 = por %p61, %p62
    %p65 = scmp.ne.s32.totalorder %s50, %s64
    %p66 = scmp.eq.s32.totalorder %s19, 0
    %p67 = por %p65, %p66
    %s69 = sadd.s32 %s68, 1
    %p72 = scmp.eq.s32.totalorder %s13, 1
    %p73 = scmp.ne.s32.totalorder %s68, %s70
    %p74 = scmp.eq.s32.totalorder %s13, 0
    %p75 = por %p73, %p74
    %p76 = scmp.ne.s32.totalorder %s68, %s70
    %p77 = scmp.eq.s32.totalorder %s18, 1
    %p78 = por %p76, %p77
    %p79 = scmp.ne.s32.totalorder %s70, %s71
    %p80 = scmp.eq.s32.totalorder %s18, 0
    %p81 = por %p79, %p80
    %p82 = scmp.ne.s32.totalorder %s70, %s71
    %p83 = scmp.eq.s32.totalorder %s19, 1
    %p84 = por %p82, %p83
    %p86 = scmp.ne.s32.totalorder %s71, %s85
    %p87 = scmp.eq.s32.totalorder %s19, 0
    %p88 = por %p86, %p87
    %s90 = sadd.s32 %s89, 1
    %p93 = scmp.eq.s32.totalorder %s13, 1
    %p94 = scmp.ne.s32.totalorder %s89, %s91
    %p95 = scmp.eq.s32.totalorder %s13, 0
    %p96 = por %p94, %p95
    %p97 = scmp.ne.s32.totalorder %s89, %s91
    %p98 = scmp.eq.s32.totalorder %s18, 1
    %p99 = por %p97, %p98
    %p100 = scmp.ne.s32.totalorder %s91, %s92
    %p101 = scmp.eq.s32.totalorder %s18, 0
    %p102 = por %p100, %p101
    %p103 = scmp.ne.s32.totalorder %s91, %s92
    %p104 = scmp.eq.s32.totalorder %s19, 1
    %p105 = por %p103, %p104
    %p107 = scmp.ne.s32.totalorder %s92, %s106
    %p108 = scmp.eq.s32.totalorder %s19, 0
    %p109 = por %p107, %p108
    %s111 = sadd.s32 %s110, 1
    %p114 = scmp.eq.s32.totalorder %s13, 1
    %p115 = scmp.ne.s32.totalorder %s110, %s112
    %p116 = scmp.eq.s32.totalorder %s13, 0
    %p117 = por %p115, %p116
    %p118 = scmp.ne.s32.totalorder %s110, %s112
    %p119 = scmp.eq.s32.totalorder %s18, 1
    %p120 = por %p118, %p119
    %p121 = scmp.ne.s32.totalorder %s112, %s113
    %p122 = scmp.eq.s32.totalorder %s18, 0
    %p123 = por %p121, %p122
    %p124 = scmp.ne.s32.totalorder %s112, %s113
    %p125 = scmp.eq.s32.totalorder %s19, 1
    %p126 = por %p124, %p125
    %p128 = scmp.ne.s32.totalorder %s113, %s127
    %p129 = scmp.eq.s32.totalorder %s19, 0
    %p130 = por %p128, %p129
    %s132 = sadd.s32 %s131, 1
    %p135 = scmp.eq.s32.totalorder %s13, 1
    %p136 = scmp.ne.s32.totalorder %s131, %s133
    %p137 = scmp.eq.s32.totalorder %s13, 0
    %p138 = por %p136, %p137
    %p139 = scmp.ne.s32.totalorder %s131, %s133
    %p140 = scmp.eq.s32.totalorder %s18, 1
    %p141 = por %p139, %p140
    %p142 = scmp.ne.s32.totalorder %s133, %s134
    %p143 = scmp.eq.s32.totalorder %s18, 0
    %p144 = por %p142, %p143
    %p145 = scmp.ne.s32.totalorder %s133, %s134
    %p146 = scmp.eq.s32.totalorder %s19, 1
    %p147 = por %p145, %p146
    %p149 = scmp.ne.s32.totalorder %s134, %s148
    %p150 = scmp.eq.s32.totalorder %s19, 0
    %p151 = por %p149, %p150
    %s153 = sadd.s32 %s152, 1
    %p156 = scmp.eq.s32.totalorder %s13, 1
    %p157 = scmp.ne.s32.totalorder %s152, %s154
    %p158 = scmp.eq.s32.totalorder %s13, 0
    %p159 = por %p157, %p158
    %p160 = scmp.ne.s32.totalorder %s152, %s154
    %p161 = scmp.eq.s32.totalorder %s18, 1
    %p162 = por %p160, %p161
    %p163 = scmp.ne.s32.totalorder %s154, %s155
    %p164 = scmp.eq.s32.totalorder %s18, 0
    %p165 = por %p163, %p164
    %p166 = scmp.ne.s32.totalorder %s154, %s155
    %p167 = scmp.eq.s32.totalorder %s19, 1
    %p168 = por %p166, %p167
    %p170 = scmp.ne.s32.totalorder %s155, %s169
    %p171 = scmp.eq.s32.totalorder %s19, 0
    %p172 = por %p170, %p171
    %s173 = ssub.s32 %s13, %s20
    %p174 = scmp.eq.s32.totalorder %s173, 0
    %s176 = sadd.s32 %s175, 1
    %s177 = scalar_select %p174, %s175, %s176
    %p180 = pneg %p174
    %p181 = scmp.eq.s32.totalorder %s13, 1
    %p182 = por %p180, %p181
    %p183 = scmp.ne.s32.totalorder %s175, %s178
    %p184 = scmp.eq.s32.totalorder %s13, 0
    %p185 = por %p183, %p184
    %p186 = scmp.ne.s32.totalorder %s175, %s178
    %p187 = scmp.eq.s32.totalorder %s18, 1
    %p188 = por %p186, %p187
    %p189 = scmp.ne.s32.totalorder %s178, %s179
    %p190 = scmp.eq.s32.totalorder %s18, 0
    %p191 = por %p189, %p190
    %p192 = scmp.ne.s32.totalorder %s178, %s179
    %p193 = scmp.eq.s32.totalorder %s19, 1
    %p194 = por %p192, %p193
    %p196 = scmp.ne.s32.totalorder %s179, %s195
    %p197 = scmp.eq.s32.totalorder %s19, 0
    %p198 = por %p196, %p197
    %p199 = scmp.le.s32.totalorder 1, %s13
    %p200 = scmp.lt.s32.totalorder %s13, 3
    %p201 = pnand %p199, %p200
    %p202 = pneg %p201
    // Predicated region
    $region9: #{up_block_forward.5} parent=5 // pred_check
      _
    $region10: #{up_block_forward.5} parent=5 // pred_check_branch
      %204 = sbr.rel (%p201) target = $region12
    $region11: #{up_block_forward.5} parent=5 // pred_region
      %s205 = ssub.s32 %s13, 1
      // Predicated region
      $region13: #{up_block_forward.5} parent=11 // pred_check
        %p206 = pneg %p60
      $region14: #{up_block_forward.5} parent=11 // pred_check_branch
        %208 = sbr.rel (%p206) target = $region16
      $region15: #{up_block_forward.5} parent=11 // pred_region
        _
      $region16: #{up_block_forward.5} parent=11 // pred_fallthru
        _
      // Predicated region
      $region17: #{up_block_forward.5} parent=11 // pred_check
        %p209 = pneg %p81
      $region18: #{up_block_forward.5} parent=11 // pred_check_branch
        %211 = sbr.rel (%p209) target = $region20
      $region19: #{up_block_forward.5} parent=11 // pred_region
        _
      $region20: #{up_block_forward.5} parent=11 // pred_fallthru
        _
      // Predicated region
      $region21: #{up_block_forward.5} parent=11 // pred_check
        %p212 = pneg %p102
      $region22: #{up_block_forward.5} parent=11 // pred_check_branch
        %214 = sbr.rel (%p212) target = $region24
      $region23: #{up_block_forward.5} parent=11 // pred_region
        _
      $region24: #{up_block_forward.5} parent=11 // pred_fallthru
        _
      // Predicated region
      $region25: #{up_block_forward.5} parent=11 // pred_check
        %p215 = pneg %p123
      $region26: #{up_block_forward.5} parent=11 // pred_check_branch
        %217 = sbr.rel (%p215) target = $region28
      $region27: #{up_block_forward.5} parent=11 // pred_region
        _
      $region28: #{up_block_forward.5} parent=11 // pred_fallthru
        _
      // Predicated region
      $region29: #{up_block_forward.5} parent=11 // pred_check
        %p218 = pneg %p144
      $region30: #{up_block_forward.5} parent=11 // pred_check_branch
        %220 = sbr.rel (%p218) target = $region32
      $region31: #{up_block_forward.5} parent=11 // pred_region
        _
      $region32: #{up_block_forward.5} parent=11 // pred_fallthru
        _
      // Predicated region
      $region33: #{up_block_forward.5} parent=11 // pred_check
        %p221 = pneg %p165
      $region34: #{up_block_forward.5} parent=11 // pred_check_branch
        %223 = sbr.rel (%p221) target = $region36
      $region35: #{up_block_forward.5} parent=11 // pred_region
        _
      $region36: #{up_block_forward.5} parent=11 // pred_fallthru
        _
    $region12: #{up_block_forward.5} parent=5 // pred_fallthru
      _
    %p224 = scmp.lt.s32.totalorder %s13, 2
    // Predicated region
    $region37: #{up_block_forward.5} parent=5 // pred_check
      %p225 = pneg %p224
    $region38: #{up_block_forward.5} parent=5 // pred_check_branch
      %227 = sbr.rel (%p225) target = $region40
    $region39: #{up_block_forward.5} parent=5 // pred_region
      // Predicated region
      $region41: #{up_block_forward.5} parent=39 // pred_check
        %p228 = pneg %p33
      $region42: #{up_block_forward.5} parent=39 // pred_check_branch
        %230 = sbr.rel (%p228) target = $region44
      $region43: #{up_block_forward.5} parent=39 // pred_region
        %p231 = scmp.lt.s32.totalorder %s13, 1
        %s232 = scalar_select %p231, %s13, 1
        %s233 = smul.addr %s232, 41
        %s234 = smul.addr %s233, 8
        %s235 = scalar_lea.vmem %s0, %s234
      $region44: #{up_block_forward.5} parent=39 // pred_fallthru
        _
    $region40: #{up_block_forward.5} parent=5 // pred_fallthru
      _
    %p236 = scmp.le.s32.totalorder 1, %s13
    %p237 = scmp.lt.s32.totalorder %s13, 3
    %p238 = pnand %p236, %p237
    %p239 = pneg %p238
    // Predicated region
    $region45: #{up_block_forward.5} parent=5 // pred_check
      _
    $region46: #{up_block_forward.5} parent=5 // pred_check_branch
      %241 = sbr.rel (%p238) target = $region48
    $region47: #{up_block_forward.5} parent=5 // pred_region
      %s242 = ssub.s32 %s13, 1
      %p243 = scmp.lt.s32.totalorder %s18, 1
      %s244 = scalar_select %p243, %s18, 1
      %s245 = smul.addr %s244, 41
      %s246 = smul.addr %s245, 8
      %s247 = scalar_lea.vmem %s0, %s246
      %p248 = pneg %p39
      %p249 = pneg %p36
      %p250 = pneg %p60
      %p251 = pneg %p57
      %p252 = pneg %p81
      %p253 = pneg %p78
      %p254 = pneg %p102
      %p255 = pneg %p99
      %p256 = pneg %p123
      %p257 = pneg %p120
      %p258 = pneg %p144
      %p259 = pneg %p141
      %p260 = pneg %p165
      %p261 = pneg %p162
      %p262 = pneg %p191
      %p263 = pneg %p188
      %p264 = scmp.lt.s32.totalorder %s18, 1
      %s265 = scalar_select %p264, %s18, 1
      %s266 = smul.addr %s265, 41
      %s267 = smul.addr %s266, 8
      %s268 = scalar_lea.vmem %s7, %s267
      %p269 = scmp.lt.s32.totalorder %s18, 1
      %s270 = scalar_select %p269, %s18, 1
      %s271 = smul.addr %s270, 41
      %s272 = smul.addr %s271, 8
      %s273 = scalar_lea.vmem %s0, %s272
      %p274 = scmp.lt.s32.totalorder %s18, 1
      %s275 = scalar_select %p274, %s18, 1
      %s276 = smul.addr %s275, 41
      %s277 = smul.addr %s276, 8
      %s278 = scalar_lea.vmem %s7, %s277
      %v280 = vld [vmem:[%s273] sm:$0xff]
      %v281 = vld [vmem:[%s273 + $0x8] sm:$0xff]
      %v282 = vld [vmem:[%s273 + $0x10] sm:$0xff]
      %v283 = vld [vmem:[%s273 + $0x18] sm:$0xff]
      %v284 = vld [vmem:[%s273 + $0x20] sm:$0xff]
      %v285 = vld [vmem:[%s273 + $0x28] sm:$0xff]
      %v286 = vld [vmem:[%s273 + $0x30] sm:$0xff]
      %v287 = vld [vmem:[%s273 + $0x38] sm:$0xff]
      %v288 = vld [vmem:[%s273 + $0x40] sm:$0xff]
      %v289 = vld [vmem:[%s273 + $0x48] sm:$0xff]
      %v290 = vld [vmem:[%s273 + $0x50] sm:$0xff]
      %v291 = vld [vmem:[%s273 + $0x58] sm:$0xff]
      %v292 = vld [vmem:[%s273 + $0x60] sm:$0xff]
      %v293 = vld [vmem:[%s273 + $0x68] sm:$0xff]
      %v294 = vld [vmem:[%s273 + $0x70] sm:$0xff]
      %v295 = vld [vmem:[%s273 + $0x78] sm:$0xff]
      %v296 = vld [vmem:[%s273 + $0x80] sm:$0xff]
      %v297 = vld [vmem:[%s273 + $0x88] sm:$0xff]
      %v298 = vld [vmem:[%s273 + $0x90] sm:$0xff]
      %v299 = vld [vmem:[%s273 + $0x98] sm:$0xff]
      %v300 = vld [vmem:[%s273 + $0xa0] sm:$0xff]
      %v301 = vld [vmem:[%s273 + $0xa8] sm:$0xff]
      %v302 = vld [vmem:[%s273 + $0xb0] sm:$0xff]
      %v303 = vld [vmem:[%s273 + $0xb8] sm:$0xff]
      %v304 = vld [vmem:[%s273 + $0xc0] sm:$0xff]
      %v305 = vld [vmem:[%s273 + $0xc8] sm:$0xff]
      %v306 = vld [vmem:[%s273 + $0xd0] sm:$0xff]
      %v307 = vld [vmem:[%s273 + $0xd8] sm:$0xff]
      %v308 = vld [vmem:[%s273 + $0xe0] sm:$0xff]
      %v309 = vld [vmem:[%s273 + $0xe8] sm:$0xff]
      %v310 = vld [vmem:[%s273 + $0xf0] sm:$0xff]
      %v311 = vld [vmem:[%s273 + $0xf8] sm:$0xff]
      %v312 = vld [vmem:[%s273 + $0x100] sm:$0xff]
      %v313 = vld [vmem:[%s273 + $0x108] sm:$0xff]
      %v314 = vld [vmem:[%s273 + $0x110] sm:$0xff]
      %v315 = vld [vmem:[%s273 + $0x118] sm:$0xff]
      %v316 = vld [vmem:[%s273 + $0x120] sm:$0xff]
      %v317 = vld [vmem:[%s273 + $0x128] sm:$0xff]
      %v318 = vld [vmem:[%s273 + $0x130] sm:$0xff]
      %v319 = vld [vmem:[%s273 + $0x138] sm:$0xff]
      %v320 = vld [vmem:[%s273 + $0x140] sm:$0xf]
      %v321 = vld [vmem:[%s1] sm:$0xff]
      %v322 = vld [vmem:[%s1 + $0x8] sm:$0xff]
      %v323 = vld [vmem:[%s1 + $0x10] sm:$0xff]
      %v324 = vld [vmem:[%s1 + $0x18] sm:$0xff]
      %v325 = vld [vmem:[%s1 + $0x20] sm:$0xff]
      %v326 = vld [vmem:[%s1 + $0x28] sm:$0xff]
      %v327 = vld [vmem:[%s1 + $0x30] sm:$0xff]
      %v328 = vld [vmem:[%s1 + $0x38] sm:$0xff]
      %v329 = vld [vmem:[%s1 + $0x40] sm:$0xff]
      %v330 = vld [vmem:[%s1 + $0x48] sm:$0xff]
      %v331 = vld [vmem:[%s1 + $0x50] sm:$0xff]
      %v332 = vld [vmem:[%s1 + $0x58] sm:$0xff]
      %v333 = vld [vmem:[%s1 + $0x60] sm:$0xff]
      %v334 = vld [vmem:[%s1 + $0x68] sm:$0xff]
      %v335 = vld [vmem:[%s1 + $0x70] sm:$0xff]
      %v336 = vld [vmem:[%s1 + $0x78] sm:$0xff]
      %v337 = vld [vmem:[%s1 + $0x80] sm:$0xff]
      %v338 = vld [vmem:[%s1 + $0x88] sm:$0xff]
      %v339 = vld [vmem:[%s1 + $0x90] sm:$0xff]
      %v340 = vld [vmem:[%s1 + $0x98] sm:$0xff]
      %v341 = vld [vmem:[%s1 + $0xa0] sm:$0xff]
      %v342 = vld [vmem:[%s1 + $0xa8] sm:$0xff]
      %v343 = vld [vmem:[%s1 + $0xb0] sm:$0xff]
      %v344 = vld [vmem:[%s1 + $0xb8] sm:$0xff]
      %v345 = vld [vmem:[%s1 + $0xc0] sm:$0xff]
      %v346 = vld [vmem:[%s1 + $0xc8] sm:$0xff]
      %v347 = vld [vmem:[%s1 + $0xd0] sm:$0xff]
      %v348 = vld [vmem:[%s1 + $0xd8] sm:$0xff]
      %v349 = vld [vmem:[%s1 + $0xe0] sm:$0xff]
      %v350 = vld [vmem:[%s1 + $0xe8] sm:$0xff]
      %v351 = vld [vmem:[%s1 + $0xf0] sm:$0xff]
      %v352 = vld [vmem:[%s1 + $0xf8] sm:$0xff]
      %v353 = vld [vmem:[%s1 + $0x100] sm:$0xff]
      %v354 = vld [vmem:[%s1 + $0x108] sm:$0xff]
      %v355 = vld [vmem:[%s1 + $0x110] sm:$0xff]
      %v356 = vld [vmem:[%s1 + $0x118] sm:$0xff]
      %v357 = vld [vmem:[%s1 + $0x120] sm:$0xff]
      %v358 = vld [vmem:[%s1 + $0x128] sm:$0xff]
      %v359 = vld [vmem:[%s1 + $0x130] sm:$0xff]
      %v360 = vld [vmem:[%s1 + $0x138] sm:$0xff]
      %v361 = vld [vmem:[%s1 + $0x140] sm:$0xf]
      %vm362 = vcmask 261120
      %v363 = vsel %vm362, %v280, 0.0
      %v364 = vsel %vm362, %v281, 0.0
      %v365 = vadd.f32 %v363, %v364
      %v366 = vsel %vm362, %v282, 0.0
      %v367 = vadd.f32 %v365, %v366
      %v368 = vsel %vm362, %v283, 0.0
      %v369 = vadd.f32 %v367, %v368
      %v370 = vsel %vm362, %v284, 0.0
      %v371 = vadd.f32 %v369, %v370
      %v372 = vsel %vm362, %v285, 0.0
      %v373 = vadd.f32 %v371, %v372
      %v374 = vsel %vm362, %v286, 0.0
      %v375 = vadd.f32 %v373, %v374
      %v376 = vsel %vm362, %v287, 0.0
      %v377 = vadd.f32 %v375, %v376
      %v378 = vsel %vm362, %v288, 0.0
      %v379 = vadd.f32 %v377, %v378
      %v380 = vsel %vm362, %v289, 0.0
      %v381 = vadd.f32 %v379, %v380
      %v382 = vsel %vm362, %v290, 0.0
      %v383 = vadd.f32 %v381, %v382
      %v384 = vsel %vm362, %v291, 0.0
      %v385 = vadd.f32 %v383, %v384
      %v386 = vsel %vm362, %v292, 0.0
      %v387 = vadd.f32 %v385, %v386
      %v388 = vsel %vm362, %v293, 0.0
      %v389 = vadd.f32 %v387, %v388
      %v390 = vsel %vm362, %v294, 0.0
      %v391 = vadd.f32 %v389, %v390
      %v392 = vsel %vm362, %v295, 0.0
      %v393 = vadd.f32 %v391, %v392
      %v394 = vsel %vm362, %v296, 0.0
      %v395 = vadd.f32 %v393, %v394
      %v396 = vsel %vm362, %v297, 0.0
      %v397 = vadd.f32 %v395, %v396
      %v398 = vsel %vm362, %v298, 0.0
      %v399 = vadd.f32 %v397, %v398
      %v400 = vsel %vm362, %v299, 0.0
      %v401 = vadd.f32 %v399, %v400
      %v402 = vsel %vm362, %v300, 0.0
      %v403 = vadd.f32 %v401, %v402
      %v404 = vsel %vm362, %v301, 0.0
      %v405 = vadd.f32 %v403, %v404
      %v406 = vsel %vm362, %v302, 0.0
      %v407 = vadd.f32 %v405, %v406
      %v408 = vsel %vm362, %v303, 0.0
      %v409 = vadd.f32 %v407, %v408
      %v410 = vsel %vm362, %v304, 0.0
      %v411 = vadd.f32 %v409, %v410
      %v412 = vsel %vm362, %v305, 0.0
      %v413 = vadd.f32 %v411, %v412
      %v414 = vsel %vm362, %v306, 0.0
      %v415 = vadd.f32 %v413, %v414
      %v416 = vsel %vm362, %v307, 0.0
      %v417 = vadd.f32 %v415, %v416
      %v418 = vsel %vm362, %v308, 0.0
      %v419 = vadd.f32 %v417, %v418
      %v420 = vsel %vm362, %v309, 0.0
      %v421 = vadd.f32 %v419, %v420
      %v422 = vsel %vm362, %v310, 0.0
      %v423 = vadd.f32 %v421, %v422
      %v424 = vsel %vm362, %v311, 0.0
      %v425 = vadd.f32 %v423, %v424
      %v426 = vsel %vm362, %v312, 0.0
      %v427 = vadd.f32 %v425, %v426
      %v428 = vsel %vm362, %v313, 0.0
      %v429 = vadd.f32 %v427, %v428
      %v430 = vsel %vm362, %v314, 0.0
      %v431 = vadd.f32 %v429, %v430
      %v432 = vsel %vm362, %v315, 0.0
      %v433 = vadd.f32 %v431, %v432
      %v434 = vsel %vm362, %v316, 0.0
      %v435 = vadd.f32 %v433, %v434
      %v436 = vsel %vm362, %v317, 0.0
      %v437 = vadd.f32 %v435, %v436
      %v438 = vsel %vm362, %v318, 0.0
      %v439 = vadd.f32 %v437, %v438
      %v440 = vsel %vm362, %v319, 0.0
      %v441 = vadd.f32 %v439, %v440
      %vm442 = vcmask 257024
      %v443 = vsel %vm442, %v320, 0.0
      %v444 = vadd.f32 %v441, %v443
      %v445 = vrot.slane %v444, 4
      %v446 = vadd.f32 %v444, %v445
      %v447 = vrot.slane %v446, 2
      %v448 = vadd.f32 %v446, %v447
      %v449 = vrot.slane %v448, 1
      %v450 = vadd.f32 %v448, %v449
      %v451 = vmul.f32 %v280, %v280
      %v452 = vmul.f32 %v281, %v281
      %v453 = vmul.f32 %v282, %v282
      %v454 = vmul.f32 %v283, %v283
      %v455 = vmul.f32 %v284, %v284
      %v456 = vmul.f32 %v285, %v285
      %v457 = vmul.f32 %v286, %v286
      %v458 = vmul.f32 %v287, %v287
      %v459 = vmul.f32 %v288, %v288
      %v460 = vmul.f32 %v289, %v289
      %v461 = vmul.f32 %v290, %v290
      %v462 = vmul.f32 %v291, %v291
      %v463 = vmul.f32 %v292, %v292
      %v464 = vmul.f32 %v293, %v293
      %v465 = vmul.f32 %v294, %v294
      %v466 = vmul.f32 %v295, %v295
      %v467 = vmul.f32 %v296, %v296
      %v468 = vmul.f32 %v297, %v297
      %v469 = vmul.f32 %v298, %v298
      %v470 = vmul.f32 %v299, %v299
      %v471 = vmul.f32 %v300, %v300
      %v472 = vmul.f32 %v301, %v301
      %v473 = vmul.f32 %v302, %v302
      %v474 = vmul.f32 %v303, %v303
      %v475 = vmul.f32 %v304, %v304
      %v476 = vmul.f32 %v305, %v305
      %v477 = vmul.f32 %v306, %v306
      %v478 = vmul.f32 %v307, %v307
      %v479 = vmul.f32 %v308, %v308
      %v480 = vmul.f32 %v309, %v309
      %v481 = vmul.f32 %v310, %v310
      %v482 = vmul.f32 %v311, %v311
      %v483 = vmul.f32 %v312, %v312
      %v484 = vmul.f32 %v313, %v313
      %v485 = vmul.f32 %v314, %v314
      %v486 = vmul.f32 %v315, %v315
      %v487 = vmul.f32 %v316, %v316
      %v488 = vmul.f32 %v317, %v317
      %v489 = vmul.f32 %v318, %v318
      %v490 = vmul.f32 %v319, %v319
      %v491 = vmul.f32 %v320, %v320
      %v492 = vsel %vm362, %v451, 0.0
      %v493 = vsel %vm362, %v452, 0.0
      %v494 = vadd.f32 %v492, %v493
      %v495 = vsel %vm362, %v453, 0.0
      %v496 = vadd.f32 %v494, %v495
      %v497 = vsel %vm362, %v454, 0.0
      %v498 = vadd.f32 %v496, %v497
      %v499 = vsel %vm362, %v455, 0.0
      %v500 = vadd.f32 %v498, %v499
      %v501 = vsel %vm362, %v456, 0.0
      %v502 = vadd.f32 %v500, %v501
      %v503 = vsel %vm362, %v457, 0.0
      %v504 = vadd.f32 %v502, %v503
      %v505 = vsel %vm362, %v458, 0.0
      %v506 = vadd.f32 %v504, %v505
      %v507 = vsel %vm362, %v459, 0.0
      %v508 = vadd.f32 %v506, %v507
      %v509 = vsel %vm362, %v460, 0.0
      %v510 = vadd.f32 %v508, %v509
      %v511 = vsel %vm362, %v461, 0.0
      %v512 = vadd.f32 %v510, %v511
      %v513 = vsel %vm362, %v462, 0.0
      %v514 = vadd.f32 %v512, %v513
      %v515 = vsel %vm362, %v463, 0.0
      %v516 = vadd.f32 %v514, %v515
      %v517 = vsel %vm362, %v464, 0.0
      %v518 = vadd.f32 %v516, %v517
      %v519 = vsel %vm362, %v465, 0.0
      %v520 = vadd.f32 %v518, %v519
      %v521 = vsel %vm362, %v466, 0.0
      %v522 = vadd.f32 %v520, %v521
      %v523 = vsel %vm362, %v467, 0.0
      %v524 = vadd.f32 %v522, %v523
      %v525 = vsel %vm362, %v468, 0.0
      %v526 = vadd.f32 %v524, %v525
      %v527 = vsel %vm362, %v469, 0.0
      %v528 = vadd.f32 %v526, %v527
      %v529 = vsel %vm362, %v470, 0.0
      %v530 = vadd.f32 %v528, %v529
      %v531 = vsel %vm362, %v471, 0.0
      %v532 = vadd.f32 %v530, %v531
      %v533 = vsel %vm362, %v472, 0.0
      %v534 = vadd.f32 %v532, %v533
      %v535 = vsel %vm362, %v473, 0.0
      %v536 = vadd.f32 %v534, %v535
      %v537 = vsel %vm362, %v474, 0.0
      %v538 = vadd.f32 %v536, %v537
      %v539 = vsel %vm362, %v475, 0.0
      %v540 = vadd.f32 %v538, %v539
      %v541 = vsel %vm362, %v476, 0.0
      %v542 = vadd.f32 %v540, %v541
      %v543 = vsel %vm362, %v477, 0.0
      %v544 = vadd.f32 %v542, %v543
      %v545 = vsel %vm362, %v478, 0.0
      %v546 = vadd.f32 %v544, %v545
      %v547 = vsel %vm362, %v479, 0.0
      %v548 = vadd.f32 %v546, %v547
      %v549 = vsel %vm362, %v480, 0.0
      %v550 = vadd.f32 %v548, %v549
      %v551 = vsel %vm362, %v481, 0.0
      %v552 = vadd.f32 %v550, %v551
      %v553 = vsel %vm362, %v482, 0.0
      %v554 = vadd.f32 %v552, %v553
      %v555 = vsel %vm362, %v483, 0.0
      %v556 = vadd.f32 %v554, %v555
      %v557 = vsel %vm362, %v484, 0.0
      %v558 = vadd.f32 %v556, %v557
      %v559 = vsel %vm362, %v485, 0.0
      %v560 = vadd.f32 %v558, %v559
      %v561 = vsel %vm362, %v486, 0.0
      %v562 = vadd.f32 %v560, %v561
      %v563 = vsel %vm362, %v487, 0.0
      %v564 = vadd.f32 %v562, %v563
      %v565 = vsel %vm362, %v488, 0.0
      %v566 = vadd.f32 %v564, %v565
      %v567 = vsel %vm362, %v489, 0.0
      %v568 = vadd.f32 %v566, %v567
      %v569 = vsel %vm362, %v490, 0.0
      %v570 = vadd.f32 %v568, %v569
      %v571 = vsel %vm442, %v491, 0.0
      %v572 = vadd.f32 %v570, %v571
      %v573 = vrot.slane %v572, 4
      %v574 = vadd.f32 %v572, %v573
      %v575 = vrot.slane %v574, 2
      %v576 = vadd.f32 %v574, %v575
      %v577 = vrot.slane %v576, 1
      %v578 = vadd.f32 %v576, %v577
      %vm579 = vcmask 1040384
      %v580 = vsel %vm579, %v450, %v578
      %v581 = vld [vmem:[%s2] sm:$0xff]
      %v582 = vld [vmem:[%s2 + $0x8] sm:$0xff]
      %v583 = vld [vmem:[%s2 + $0x10] sm:$0xff]
      %v584 = vld [vmem:[%s2 + $0x18] sm:$0xff]
      %v586 = vsel %vm362, %v580, 0
      %588 = vmatprep.subr.mxu0 0.0
      %589 = vmatpush1.msra.mxu0 %v581
      %590 = vmatprep.subr.mxu0 0.0
      %591 = vmatpush1.msra.mxu0 %v582
      %592 = vmatprep.subr.mxu0 0.0
      %593 = vmatpush1.msra.mxu0 %v583
      %594 = vmatprep.subr.mxu0 0.0
      %595 = vmatpush1.msra.mxu0 %v584
      %596 = vmatprep.subr.mxu0 0.0
      %597 = vmatpush1.msra.mxu0 0.0
      %598 = vmatprep.subr.mxu0 0.0
      %599 = vmatpush1.msra.mxu0 0.0
      %600 = vmatprep.subr.mxu0 0.0
      %601 = vmatpush1.msra.mxu0 0.0
      %602 = vmatprep.subr.mxu0 0.0
      %603 = vmatpush1.msra.mxu0 0.0
      %604 = vmatprep.subr.mxu0 0.0
      %605 = vmatpush1.msra.mxu0 0.0
      %606 = vmatprep.subr.mxu0 0.0
      %607 = vmatpush1.msra.mxu0 0.0
      %608 = vmatprep.subr.mxu0 0.0
      %609 = vmatpush1.msra.mxu0 0.0
      %610 = vmatprep.subr.mxu0 0.0
      %611 = vmatpush1.msra.mxu0 0.0
      %612 = vmatprep.subr.mxu0 0.0
      %613 = vmatpush1.msra.mxu0 0.0
      %614 = vmatprep.subr.mxu0 0.0
      %615 = vmatpush1.msra.mxu0 0.0
      %616 = vmatprep.subr.mxu0 0.0
      %617 = vmatpush1.msra.mxu0 0.0
      %618 = vmatprep.subr.mxu0 0.0
      %619 = vmatpush1.msra.mxu0 0.0
      %620 = vmatprep.subr.mxu0 0.0
      %621 = vmatpush1.msra.mxu0 0.0
      %622 = vmatprep.subr.mxu0 0.0
      %623 = vmatpush1.msra.mxu0 0.0
      %624 = vmatprep.subr.mxu0 0.0
      %625 = vmatpush1.msra.mxu0 0.0
      %626 = vmatprep.subr.mxu0 0.0
      %627 = vmatpush1.msra.mxu0 0.0
      %628 = vmatprep.subr.mxu0 0.0
      %629 = vmatpush1.msra.mxu0 0.0
      %630 = vmatprep.subr.mxu0 0.0
      %631 = vmatpush1.msra.mxu0 0.0
      %632 = vmatprep.subr.mxu0 0.0
      %633 = vmatpush1.msra.mxu0 0.0
      %634 = vmatprep.subr.mxu0 0.0
      %635 = vmatpush1.msra.mxu0 0.0
      %636 = vmatprep.subr.mxu0 0.0
      %637 = vmatpush1.msra.mxu0 0.0
      %638 = vmatprep.subr.mxu0 0.0
      %639 = vmatpush1.msra.mxu0 0.0
      %640 = vmatprep.subr.mxu0 0.0
      %641 = vmatpush1.msra.mxu0 0.0
      %642 = vmatprep.subr.mxu0 0.0
      %643 = vmatpush1.msra.mxu0 0.0
      %644 = vmatprep.subr.mxu0 0.0
      %645 = vmatpush1.msra.mxu0 0.0
      %646 = vmatprep.subr.mxu0 0.0
      %647 = vmatpush1.msra.mxu0 0.0
      %648 = vmatprep.subr.mxu0 0.0
      %649 = vmatpush1.msra.mxu0 0.0
      %650 = vmatprep.subr.mxu0 0.0
      %651 = vmatpush1.msra.mxu0 0.0
      %652 = vmatprep.mubr.f32.mxu0 0.0
      %653 = vmatmul.mubr.f32.gmra.mrb[0].mxu0 %v586
      %v654 = vpop.f32.mrb[0].mxu0
      %v655 = vadd.f32 0.0, %v654
      %v656 = vpop.f32.mrb[0].mxu0
      %657 = vdwg.mxu0
      %v658 = vmul.f32 %v655, 0.001953125
      %v659 = vmul.f32 %v658, %v658
      %v661 = vrot.slane %v659, 7
      %v663 = vsub.f32 %v658, %v661
      %v664 = vmax.f32 %v663, 0.0
      %v665 = vadd.f32 %v664, 1e-05
      %v666 = vrsqrt.pop %v665
      %v667 = vld [vmem:[%s3] sm:$0x1]
      %v669 = vlaneseq
      %v670 = vshrl.u32 %v669, 7
      %v671 = vsub.s32 0, %v670
      %v672 = vrot.slane %v667, %v671
      %v674 = vmul.f32 %v666, %v672
      %v675 = vlaneseq
      %v676 = vshrl.u32 %v675, 7
      %v677 = vsub.s32 0, %v676
      %v678 = vrot.slane %v658, %v677
      %v679 = vsub.f32 %v280, %v678
      %v680 = vsub.f32 %v281, %v678
      %v681 = vsub.f32 %v282, %v678
      %v682 = vsub.f32 %v283, %v678
      %v683 = vsub.f32 %v284, %v678
      %v684 = vsub.f32 %v285, %v678
      %v685 = vsub.f32 %v286, %v678
      %v686 = vsub.f32 %v287, %v678
      %v687 = vsub.f32 %v288, %v678
      %v688 = vsub.f32 %v289, %v678
      %v689 = vsub.f32 %v290, %v678
      %v690 = vsub.f32 %v291, %v678
      %v691 = vsub.f32 %v292, %v678
      %v692 = vsub.f32 %v293, %v678
      %v693 = vsub.f32 %v294, %v678
      %v694 = vsub.f32 %v295, %v678
      %v695 = vsub.f32 %v296, %v678
      %v696 = vsub.f32 %v297, %v678
      %v697 = vsub.f32 %v298, %v678
      %v698 = vsub.f32 %v299, %v678
      %v699 = vsub.f32 %v300, %v678
      %v700 = vsub.f32 %v301, %v678
      %v701 = vsub.f32 %v302, %v678
      %v702 = vsub.f32 %v303, %v678
      %v703 = vsub.f32 %v304, %v678
      %v704 = vsub.f32 %v305, %v678
      %v705 = vsub.f32 %v306, %v678
      %v706 = vsub.f32 %v307, %v678
      %v707 = vsub.f32 %v308, %v678
      %v708 = vsub.f32 %v309, %v678
      %v709 = vsub.f32 %v310, %v678
      %v710 = vsub.f32 %v311, %v678
      %v711 = vsub.f32 %v312, %v678
      %v712 = vsub.f32 %v313, %v678
      %v713 = vsub.f32 %v314, %v678
      %v714 = vsub.f32 %v315, %v678
      %v715 = vsub.f32 %v316, %v678
      %v716 = vsub.f32 %v317, %v678
      %v717 = vsub.f32 %v318, %v678
      %v718 = vsub.f32 %v319, %v678
      %v719 = vsub.f32 %v320, %v678
      %v720 = vlaneseq
      %v721 = vshrl.u32 %v720, 7
      %v722 = vsub.s32 1, %v721
      %v723 = vrot.slane %v674, %v722
      %v724 = vmul.f32 %v679, %v723
      %v725 = vmul.f32 %v680, %v723
      %v726 = vmul.f32 %v681, %v723
      %v727 = vmul.f32 %v682, %v723
      %v728 = vmul.f32 %v683, %v723
      %v729 = vmul.f32 %v684, %v723
      %v730 = vmul.f32 %v685, %v723
      %v731 = vmul.f32 %v686, %v723
      %v732 = vmul.f32 %v687, %v723
      %v733 = vmul.f32 %v688, %v723
      %v734 = vmul.f32 %v689, %v723
      %v735 = vmul.f32 %v690, %v723
      %v736 = vmul.f32 %v691, %v723
      %v737 = vmul.f32 %v692, %v723
      %v738 = vmul.f32 %v693, %v723
      %v739 = vmul.f32 %v694, %v723
      %v740 = vmul.f32 %v695, %v723
      %v741 = vmul.f32 %v696, %v723
      %v742 = vmul.f32 %v697, %v723
      %v743 = vmul.f32 %v698, %v723
      %v744 = vmul.f32 %v699, %v723
      %v745 = vmul.f32 %v700, %v723
      %v746 = vmul.f32 %v701, %v723
      %v747 = vmul.f32 %v702, %v723
      %v748 = vmul.f32 %v703, %v723
      %v749 = vmul.f32 %v704, %v723
      %v750 = vmul.f32 %v705, %v723
      %v751 = vmul.f32 %v706, %v723
      %v752 = vmul.f32 %v707, %v723
      %v753 = vmul.f32 %v708, %v723
      %v754 = vmul.f32 %v709, %v723
      %v755 = vmul.f32 %v710, %v723
      %v756 = vmul.f32 %v711, %v723
      %v757 = vmul.f32 %v712, %v723
      %v758 = vmul.f32 %v713, %v723
      %v759 = vmul.f32 %v714, %v723
      %v760 = vmul.f32 %v715, %v723
      %v761 = vmul.f32 %v716, %v723
      %v762 = vmul.f32 %v717, %v723
      %v763 = vmul.f32 %v718, %v723
      %v764 = vmul.f32 %v719, %v723
      %v765 = vld [vmem:[%s4] sm:$0x1]
      %v767 = vlaneseq
      %v768 = vshrl.u32 %v767, 7
      %v769 = vsub.s32 0, %v768
      %v770 = vrot.slane %v765, %v769
      %v772 = vadd.f32 %v724, %v770
      %v773 = vadd.f32 %v725, %v770
      %v774 = vadd.f32 %v726, %v770
      %v775 = vadd.f32 %v727, %v770
      %v776 = vadd.f32 %v728, %v770
      %v777 = vadd.f32 %v729, %v770
      %v778 = vadd.f32 %v730, %v770
      %v779 = vadd.f32 %v731, %v770
      %v780 = vadd.f32 %v732, %v770
      %v781 = vadd.f32 %v733, %v770
      %v782 = vadd.f32 %v734, %v770
      %v783 = vadd.f32 %v735, %v770
      %v784 = vadd.f32 %v736, %v770
      %v785 = vadd.f32 %v737, %v770
      %v786 = vadd.f32 %v738, %v770
      %v787 = vadd.f32 %v739, %v770
      %v788 = vadd.f32 %v740, %v770
      %v789 = vadd.f32 %v741, %v770
      %v790 = vadd.f32 %v742, %v770
      %v791 = vadd.f32 %v743, %v770
      %v792 = vadd.f32 %v744, %v770
      %v793 = vadd.f32 %v745, %v770
      %v794 = vadd.f32 %v746, %v770
      %v795 = vadd.f32 %v747, %v770
      %v796 = vadd.f32 %v748, %v770
      %v797 = vadd.f32 %v749, %v770
      %v798 = vadd.f32 %v750, %v770
      %v799 = vadd.f32 %v751, %v770
      %v800 = vadd.f32 %v752, %v770
      %v801 = vadd.f32 %v753, %v770
      %v802 = vadd.f32 %v754, %v770
      %v803 = vadd.f32 %v755, %v770
      %v804 = vadd.f32 %v756, %v770
      %v805 = vadd.f32 %v757, %v770
      %v806 = vadd.f32 %v758, %v770
      %v807 = vadd.f32 %v759, %v770
      %v808 = vadd.f32 %v760, %v770
      %v809 = vadd.f32 %v761, %v770
      %v810 = vadd.f32 %v762, %v770
      %v811 = vadd.f32 %v763, %v770
      %v812 = vadd.f32 %v764, %v770
      %814 = vset.pattern.permute.xlu0 0
      %815 = vperm.xlu0 %814, %v321
      %v816 = vpop.permute.xlu0 %815
      %819 = vset.pattern.permute.xlu0 0
      %820 = vperm.xlu0 %819, %v322
      %v821 = vpop.permute.xlu0 %820
      %824 = vset.pattern.permute.xlu0 0
      %825 = vperm.xlu0 %824, %v323
      %v826 = vpop.permute.xlu0 %825
      %829 = vset.pattern.permute.xlu0 0
      %830 = vperm.xlu0 %829, %v324
      %v831 = vpop.permute.xlu0 %830
      %834 = vset.pattern.permute.xlu0 0
      %835 = vperm.xlu0 %834, %v325
      %v836 = vpop.permute.xlu0 %835
      %839 = vset.pattern.permute.xlu0 0
      %840 = vperm.xlu0 %839, %v326
      %v841 = vpop.permute.xlu0 %840
      %844 = vset.pattern.permute.xlu0 0
      %845 = vperm.xlu0 %844, %v327
      %v846 = vpop.permute.xlu0 %845
      %849 = vset.pattern.permute.xlu0 0
      %850 = vperm.xlu0 %849, %v328
      %v851 = vpop.permute.xlu0 %850
      %854 = vset.pattern.permute.xlu0 0
      %855 = vperm.xlu0 %854, %v329
      %v856 = vpop.permute.xlu0 %855
      %859 = vset.pattern.permute.xlu0 0
      %860 = vperm.xlu0 %859, %v330
      %v861 = vpop.permute.xlu0 %860
      %864 = vset.pattern.permute.xlu0 0
      %865 = vperm.xlu0 %864, %v331
      %v866 = vpop.permute.xlu0 %865
      %869 = vset.pattern.permute.xlu0 0
      %870 = vperm.xlu0 %869, %v332
      %v871 = vpop.permute.xlu0 %870
      %874 = vset.pattern.permute.xlu0 0
      %875 = vperm.xlu0 %874, %v333
      %v876 = vpop.permute.xlu0 %875
      %879 = vset.pattern.permute.xlu0 0
      %880 = vperm.xlu0 %879, %v334
      %v881 = vpop.permute.xlu0 %880
      %884 = vset.pattern.permute.xlu0 0
      %885 = vperm.xlu0 %884, %v335
      %v886 = vpop.permute.xlu0 %885
      %889 = vset.pattern.permute.xlu0 0
      %890 = vperm.xlu0 %889, %v336
      %v891 = vpop.permute.xlu0 %890
      %894 = vset.pattern.permute.xlu0 0
      %895 = vperm.xlu0 %894, %v337
      %v896 = vpop.permute.xlu0 %895
      %899 = vset.pattern.permute.xlu0 0
      %900 = vperm.xlu0 %899, %v338
      %v901 = vpop.permute.xlu0 %900
      %904 = vset.pattern.permute.xlu0 0
      %905 = vperm.xlu0 %904, %v339
      %v906 = vpop.permute.xlu0 %905
      %909 = vset.pattern.permute.xlu0 0
      %910 = vperm.xlu0 %909, %v340
      %v911 = vpop.permute.xlu0 %910
      %914 = vset.pattern.permute.xlu0 0
      %915 = vperm.xlu0 %914, %v341
      %v916 = vpop.permute.xlu0 %915
      %919 = vset.pattern.permute.xlu0 0
      %920 = vperm.xlu0 %919, %v342
      %v921 = vpop.permute.xlu0 %920
      %924 = vset.pattern.permute.xlu0 0
      %925 = vperm.xlu0 %924, %v343
      %v926 = vpop.permute.xlu0 %925
      %929 = vset.pattern.permute.xlu0 0
      %930 = vperm.xlu0 %929, %v344
      %v931 = vpop.permute.xlu0 %930
      %934 = vset.pattern.permute.xlu0 0
      %935 = vperm.xlu0 %934, %v345
      %v936 = vpop.permute.xlu0 %935
      %939 = vset.pattern.permute.xlu0 0
      %940 = vperm.xlu0 %939, %v346
      %v941 = vpop.permute.xlu0 %940
      %944 = vset.pattern.permute.xlu0 0
      %945 = vperm.xlu0 %944, %v347
      %v946 = vpop.permute.xlu0 %945
      %949 = vset.pattern.permute.xlu0 0
      %950 = vperm.xlu0 %949, %v348
      %v951 = vpop.permute.xlu0 %950
      %954 = vset.pattern.permute.xlu0 0
      %955 = vperm.xlu0 %954, %v349
      %v956 = vpop.permute.xlu0 %955
      %959 = vset.pattern.permute.xlu0 0
      %960 = vperm.xlu0 %959, %v350
      %v961 = vpop.permute.xlu0 %960
      %964 = vset.pattern.permute.xlu0 0
      %965 = vperm.xlu0 %964, %v351
      %v966 = vpop.permute.xlu0 %965
      %969 = vset.pattern.permute.xlu0 0
      %970 = vperm.xlu0 %969, %v352
      %v971 = vpop.permute.xlu0 %970
      %974 = vset.pattern.permute.xlu0 0
      %975 = vperm.xlu0 %974, %v353
      %v976 = vpop.permute.xlu0 %975
      %979 = vset.pattern.permute.xlu0 0
      %980 = vperm.xlu0 %979, %v354
      %v981 = vpop.permute.xlu0 %980
      %984 = vset.pattern.permute.xlu0 0
      %985 = vperm.xlu0 %984, %v355
      %v986 = vpop.permute.xlu0 %985
      %989 = vset.pattern.permute.xlu0 0
      %990 = vperm.xlu0 %989, %v356
      %v991 = vpop.permute.xlu0 %990
      %994 = vset.pattern.permute.xlu0 0
      %995 = vperm.xlu0 %994, %v357
      %v996 = vpop.permute.xlu0 %995
      %999 = vset.pattern.permute.xlu0 0
      %1000 = vperm.xlu0 %999, %v358
      %v1001 = vpop.permute.xlu0 %1000
      %1004 = vset.pattern.permute.xlu0 0
      %1005 = vperm.xlu0 %1004, %v359
      %v1006 = vpop.permute.xlu0 %1005
      %1009 = vset.pattern.permute.xlu0 0
      %1010 = vperm.xlu0 %1009, %v360
      %v1011 = vpop.permute.xlu0 %1010
      %1014 = vset.pattern.permute.xlu0 0
      %1015 = vperm.xlu0 %1014, %v361
      %v1016 = vpop.permute.xlu0 %1015
      %v1018 = vmul.f32 %v772, %v816
      %v1019 = vmul.f32 %v773, %v821
      %v1020 = vmul.f32 %v774, %v826
      %v1021 = vmul.f32 %v775, %v831
      %v1022 = vmul.f32 %v776, %v836
      %v1023 = vmul.f32 %v777, %v841
      %v1024 = vmul.f32 %v778, %v846
      %v1025 = vmul.f32 %v779, %v851
      %v1026 = vmul.f32 %v780, %v856
      %v1027 = vmul.f32 %v781, %v861
      %v1028 = vmul.f32 %v782, %v866
      %v1029 = vmul.f32 %v783, %v871
      %v1030 = vmul.f32 %v784, %v876
      %v1031 = vmul.f32 %v785, %v881
      %v1032 = vmul.f32 %v786, %v886
      %v1033 = vmul.f32 %v787, %v891
      %v1034 = vmul.f32 %v788, %v896
      %v1035 = vmul.f32 %v789, %v901
      %v1036 = vmul.f32 %v790, %v906
      %v1037 = vmul.f32 %v791, %v911
      %v1038 = vmul.f32 %v792, %v916
      %v1039 = vmul.f32 %v793, %v921
      %v1040 = vmul.f32 %v794, %v926
      %v1041 = vmul.f32 %v795, %v931
      %v1042 = vmul.f32 %v796, %v936
      %v1043 = vmul.f32 %v797, %v941
      %v1044 = vmul.f32 %v798, %v946
      %v1045 = vmul.f32 %v799, %v951
      %v1046 = vmul.f32 %v800, %v956
      %v1047 = vmul.f32 %v801, %v961
      %v1048 = vmul.f32 %v802, %v966
      %v1049 = vmul.f32 %v803, %v971
      %v1050 = vmul.f32 %v804, %v976
      %v1051 = vmul.f32 %v805, %v981
      %v1052 = vmul.f32 %v806, %v986
      %v1053 = vmul.f32 %v807, %v991
      %v1054 = vmul.f32 %v808, %v996
      %v1055 = vmul.f32 %v809, %v1001
      %v1056 = vmul.f32 %v810, %v1006
      %v1057 = vmul.f32 %v811, %v1011
      %v1058 = vmul.f32 %v812, %v1016
      %v1059 = vpack.c.bf16 %v1019, %v1018
      %v1060 = vpack.c.bf16 %v1021, %v1020
      %v1061 = vpack.c.bf16 %v1023, %v1022
      %v1062 = vpack.c.bf16 %v1025, %v1024
      %v1063 = vpack.c.bf16 %v1027, %v1026
      %v1064 = vpack.c.bf16 %v1029, %v1028
      %v1065 = vpack.c.bf16 %v1031, %v1030
      %v1066 = vpack.c.bf16 %v1033, %v1032
      %v1067 = vpack.c.bf16 %v1035, %v1034
      %v1068 = vpack.c.bf16 %v1037, %v1036
      %v1069 = vpack.c.bf16 %v1039, %v1038
      %v1070 = vpack.c.bf16 %v1041, %v1040
      %v1071 = vpack.c.bf16 %v1043, %v1042
      %v1072 = vpack.c.bf16 %v1045, %v1044
      %v1073 = vpack.c.bf16 %v1047, %v1046
      %v1074 = vpack.c.bf16 %v1049, %v1048
      %v1075 = vpack.c.bf16 %v1051, %v1050
      %v1076 = vpack.c.bf16 %v1053, %v1052
      %v1077 = vld [vmem:[%s5] sm:$0xf]
      %v1078 = vld [vmem:[%s5 + $0x4] sm:$0xf]
      %v1079 = vld [vmem:[%s5 + $0x8] sm:$0xf]
      %v1080 = vld [vmem:[%s5 + $0xc] sm:$0xf]
      %s1081 = scalar_lea.vmem %s5, 16
      %v1082 = vld [vmem:[%s1081] sm:$0xf]
      %v1083 = vld [vmem:[%s1081 + $0x4] sm:$0xf]
      %v1084 = vld [vmem:[%s1081 + $0x8] sm:$0xf]
      %v1085 = vld [vmem:[%s1081 + $0xc] sm:$0xf]
      %vm1086 = vsmask.f32 7424
      %v1088 = vshrl.u32 %v1059, 16
      %v1090 = vshll.u32 %v1059, 16
      %v1092 = vrot.slane %v1090, 1
      %v1093 = vor.u32 %v1088, %v1092
      %v1095 = vshll.u32 %v1060, 16
      %v1097 = vrot.slane %v1095, 1
      %v1098 = vsel %vm1086, %v1093, %v1097
      %v1099 = vshrl.u32 %v1060, 16
      %v1101 = vor.u32 %v1099, %v1097
      %v1103 = vshll.u32 %v1061, 16
      %v1105 = vrot.slane %v1103, 1
      %v1106 = vsel %vm1086, %v1101, %v1105
      %v1107 = vshrl.u32 %v1061, 16
      %v1109 = vor.u32 %v1107, %v1105
      %v1111 = vshll.u32 %v1062, 16
      %v1113 = vrot.slane %v1111, 1
      %v1114 = vsel %vm1086, %v1109, %v1113
      %v1115 = vshrl.u32 %v1062, 16
      %v1117 = vor.u32 %v1115, %v1113
      %v1119 = vshll.u32 %v1063, 16
      %v1121 = vrot.slane %v1119, 1
      %v1122 = vsel %vm1086, %v1117, %v1121
      %v1123 = vshrl.u32 %v1063, 16
      %v1125 = vor.u32 %v1123, %v1121
      %v1127 = vshll.u32 %v1064, 16
      %v1129 = vrot.slane %v1127, 1
      %v1130 = vsel %vm1086, %v1125, %v1129
      %v1131 = vshrl.u32 %v1064, 16
      %v1133 = vor.u32 %v1131, %v1129
      %v1135 = vshll.u32 %v1065, 16
      %v1137 = vrot.slane %v1135, 1
      %v1138 = vsel %vm1086, %v1133, %v1137
      %v1139 = vshrl.u32 %v1065, 16
      %v1141 = vor.u32 %v1139, %v1137
      %v1143 = vshll.u32 %v1066, 16
      %v1145 = vrot.slane %v1143, 1
      %v1146 = vsel %vm1086, %v1141, %v1145
      %v1147 = vshrl.u32 %v1066, 16
      %v1149 = vor.u32 %v1147, %v1145
      %v1151 = vshll.u32 %v1067, 16
      %v1153 = vrot.slane %v1151, 1
      %v1154 = vsel %vm1086, %v1149, %v1153
      %v1155 = vshrl.u32 %v1067, 16
      %v1157 = vor.u32 %v1155, %v1153
      %v1159 = vshll.u32 %v1068, 16
      %v1161 = vrot.slane %v1159, 1
      %v1162 = vsel %vm1086, %v1157, %v1161
      %v1163 = vshrl.u32 %v1068, 16
      %v1165 = vor.u32 %v1163, %v1161
      %v1167 = vshll.u32 %v1069, 16
      %v1169 = vrot.slane %v1167, 1
      %v1170 = vsel %vm1086, %v1165, %v1169
      %v1171 = vshrl.u32 %v1069, 16
      %v1173 = vor.u32 %v1171, %v1169
      %v1175 = vshll.u32 %v1070, 16
      %v1177 = vrot.slane %v1175, 1
      %v1178 = vsel %vm1086, %v1173, %v1177
      %v1179 = vshrl.u32 %v1070, 16
      %v1181 = vor.u32 %v1179, %v1177
      %v1183 = vshll.u32 %v1071, 16
      %v1185 = vrot.slane %v1183, 1
      %v1186 = vsel %vm1086, %v1181, %v1185
      %v1187 = vshrl.u32 %v1071, 16
      %v1189 = vor.u32 %v1187, %v1185
      %v1191 = vshll.u32 %v1072, 16
      %v1193 = vrot.slane %v1191, 1
      %v1194 = vsel %vm1086, %v1189, %v1193
      %v1195 = vshrl.u32 %v1072, 16
      %v1197 = vor.u32 %v1195, %v1193
      %v1199 = vshll.u32 %v1073, 16
      %v1201 = vrot.slane %v1199, 1
      %v1202 = vsel %vm1086, %v1197, %v1201
      %v1203 = vshrl.u32 %v1073, 16
      %v1205 = vor.u32 %v1203, %v1201
      %v1207 = vshll.u32 %v1074, 16
      %v1209 = vrot.slane %v1207, 1
      %v1210 = vsel %vm1086, %v1205, %v1209
      %v1211 = vshrl.u32 %v1074, 16
      %v1213 = vor.u32 %v1211, %v1209
      %v1215 = vshll.u32 %v1075, 16
      %v1217 = vrot.slane %v1215, 1
      %v1218 = vsel %vm1086, %v1213, %v1217
      %v1219 = vshrl.u32 %v1075, 16
      %v1221 = vor.u32 %v1219, %v1217
      %v1223 = vshll.u32 %v1076, 16
      %v1225 = vrot.slane %v1223, 1
      %v1226 = vsel %vm1086, %v1221, %v1225
      %v1227 = vshrl.u32 %v1076, 16
      %v1229 = vor.u32 %v1227, %v1225
      %v1234 = vunpack.c.l.b16 %v1082
      %v1235 = vunpack.c.l.b16 %v1083
      %v1236 = vunpack.c.l.b16 %v1084
      %v1237 = vunpack.c.l.b16 %v1085
      %v1238 = vpack.c.b16 %v1235, %v1234
      %v1239 = vpack.c.b16 %v1237, %v1236
      %v1243 = vsel %vm362, %v1098, 0
      %v1246 = vsel %vm362, %v1106, 0
      %v1249 = vsel %vm362, %v1114, 0
      %v1252 = vsel %vm362, %v1122, 0
      %v1255 = vsel %vm362, %v1130, 0
      %v1258 = vsel %vm362, %v1138, 0
      %v1261 = vsel %vm362, %v1146, 0
      %v1264 = vsel %vm362, %v1154, 0
      %v1267 = vsel %vm362, %v1162, 0
      %v1270 = vsel %vm362, %v1170, 0
      %v1273 = vsel %vm362, %v1178, 0
      %v1276 = vsel %vm362, %v1186, 0
      %v1279 = vsel %vm362, %v1194, 0
      %v1282 = vsel %vm362, %v1202, 0
      %v1285 = vsel %vm362, %v1210, 0
      %v1288 = vsel %vm362, %v1218, 0
      %v1291 = vsel %vm362, %v1226, 0
      %v1294 = vsel %vm362, %v1229, 0
      %1296 = vmatprep.subr.bf16.mxu0 0
      %1297 = vmatpush1.bf16.msra.mxu0 %v1238
      %1298 = vmatprep.subr.bf16.mxu0 0
      %1299 = vmatpush1.bf16.msra.mxu0 %v1239
      %1300 = vmatprep.subr.bf16.mxu0 0
      %1301 = vmatpush1.bf16.msra.mxu0 0
      %1302 = vmatprep.subr.bf16.mxu0 0
      %1303 = vmatpush1.bf16.msra.mxu0 0
      %1304 = vmatprep.subr.bf16.mxu0 0
      %1305 = vmatpush1.bf16.msra.mxu0 0
      %1306 = vmatprep.subr.bf16.mxu0 0
      %1307 = vmatpush1.bf16.msra.mxu0 0
      %1308 = vmatprep.subr.bf16.mxu0 0
      %1309 = vmatpush1.bf16.msra.mxu0 0
      %1310 = vmatprep.subr.bf16.mxu0 0
      %1311 = vmatpush1.bf16.msra.mxu0 0
      %1312 = vmatprep.subr.bf16.mxu0 0
      %1313 = vmatpush1.bf16.msra.mxu0 0
      %1314 = vmatprep.subr.bf16.mxu0 0
      %1315 = vmatpush1.bf16.msra.mxu0 0
      %1316 = vmatprep.subr.bf16.mxu0 0
      %1317 = vmatpush1.bf16.msra.mxu0 0
      %1318 = vmatprep.subr.bf16.mxu0 0
      %1319 = vmatpush1.bf16.msra.mxu0 0
      %1320 = vmatprep.subr.bf16.mxu0 0
      %1321 = vmatpush1.bf16.msra.mxu0 0
      %1322 = vmatprep.subr.bf16.mxu0 0
      %1323 = vmatpush1.bf16.msra.mxu0 0
      %1324 = vmatprep.subr.bf16.mxu0 0
      %1325 = vmatpush1.bf16.msra.mxu0 0
      %1326 = vmatprep.subr.bf16.mxu0 0
      %1327 = vmatpush1.bf16.msra.mxu0 0
      %1328 = vmatprep.mubr.bf16.mxu0 0
      %1329 = vmatmul.mubr.bf16.gmra.mrb[0].mxu0 %v1243
      %v1330 = vpop.f32.mrb[0].mxu0
      %v1331 = vadd.f32 0.0, %v1330
      %v1332 = vpop.f32.mrb[0].mxu0
      %v1333 = vpop.f32.mrb[0].mxu0
      %v1334 = vadd.f32 0.0, %v1333
      %v1335 = vpop.f32.mrb[0].mxu0
      %1336 = vmatprep.mubr.bf16.mxu0 0
      %1337 = vmatmul.mubr.bf16.gmra.mrb[0].mxu0 %v1246
      %v1338 = vpop.f32.mrb[0].mxu0
      %v1339 = vadd.f32 0.0, %v1338
      %v1340 = vpop.f32.mrb[0].mxu0
      %v1341 = vpop.f32.mrb[0].mxu0
      %v1342 = vadd.f32 0.0, %v1341
      %v1343 = vpop.f32.mrb[0].mxu0
      %1344 = vmatprep.mubr.bf16.mxu0 0
      %1345 = vmatmul.mubr.bf16.gmra.mrb[0].mxu0 %v1249
      %v1346 = vpop.f32.mrb[0].mxu0
      %v1347 = vadd.f32 0.0, %v1346
      %v1348 = vpop.f32.mrb[0].mxu0
      %v1349 = vpop.f32.mrb[0].mxu0
      %v1350 = vadd.f32 0.0, %v1349
      %v1351 = vpop.f32.mrb[0].mxu0
      %1352 = vmatprep.mubr.bf16.mxu0 0
      %1353 = vmatmul.mubr.bf16.gmra.mrb[0].mxu0 %v1252
      %v1354 = vpop.f32.mrb[0].mxu0
      %v1355 = vadd.f32 0.0, %v1354
      %v1356 = vpop.f32.mrb[0].mxu0
      %v1357 = vpop.f32.mrb[0].mxu0
      %v1358 = vadd.f32 0.0, %v1357
      %v1359 = vpop.f32.mrb[0].mxu0
      %1360 = vmatprep.mubr.bf16.mxu0 0
      %1361 = vmatmul.mubr.bf16.gmra.mrb[0].mxu0 %v1255
      %v1362 = vpop.f32.mrb[0].mxu0
      %v1363 = vadd.f32 0.0, %v1362
      %v1364 = vpop.f32.mrb[0].mxu0
      %v1365 = vpop.f32.mrb[0].mxu0
      %v1366 = vadd.f32 0.0, %v1365
      %v1367 = vpop.f32.mrb[0].mxu0
      %1368 = vmatprep.mubr.bf16.mxu0 0
      %1369 = vmatmul.mubr.bf16.gmra.mrb[0].mxu0 %v1258
      %v1370 = vpop.f32.mrb[0].mxu0
      %v1371 = vadd.f32 0.0, %v1370
      %v1372 = vpop.f32.mrb[0].mxu0
      %v1373 = vpop.f32.mrb[0].mxu0
      %v1374 = vadd.f32 0.0, %v1373
      %v1375 = vpop.f32.mrb[0].mxu0
      %1376 = vmatprep.mubr.bf16.mxu0 0
      %1377 = vmatmul.mubr.bf16.gmra.mrb[0].mxu0 %v1261
      %v1378 = vpop.f32.mrb[0].mxu0
      %v1379 = vadd.f32 0.0, %v1378
      %v1380 = vpop.f32.mrb[0].mxu0
      %v1381 = vpop.f32.mrb[0].mxu0
      %v1382 = vadd.f32 0.0, %v1381
      %v1383 = vpop.f32.mrb[0].mxu0
      %1384 = vmatprep.mubr.bf16.mxu0 0
      %1385 = vmatmul.mubr.bf16.gmra.mrb[0].mxu0 %v1264
      %v1386 = vpop.f32.mrb[0].mxu0
      %v1387 = vadd.f32 0.0, %v1386
      %v1388 = vpop.f32.mrb[0].mxu0
      %v1389 = vpop.f32.mrb[0].mxu0
      %v1390 = vadd.f32 0.0, %v1389
      %v1391 = vpop.f32.mrb[0].mxu0
      %1392 = vmatprep.mubr.bf16.mxu0 0
      %1393 = vmatmul.mubr.bf16.gmra.mrb[0].mxu0 %v1267
      %v1394 = vpop.f32.mrb[0].mxu0
      %v1395 = vadd.f32 0.0, %v1394
      %v1396 = vpop.f32.mrb[0].mxu0
      %v1397 = vpop.f32.mrb[0].mxu0
      %v1398 = vadd.f32 0.0, %v1397
      %v1399 = vpop.f32.mrb[0].mxu0
      %1400 = vmatprep.mubr.bf16.mxu0 0
      %1401 = vmatmul.mubr.bf16.gmra.mrb[0].mxu0 %v1270
      %v1402 = vpop.f32.mrb[0].mxu0
      %v1403 = vadd.f32 0.0, %v1402
      %v1404 = vpop.f32.mrb[0].mxu0
      %v1405 = vpop.f32.mrb[0].mxu0
      %v1406 = vadd.f32 0.0, %v1405
      %v1407 = vpop.f32.mrb[0].mxu0
      %1408 = vmatprep.mubr.bf16.mxu0 0
      %1409 = vmatmul.mubr.bf16.gmra.mrb[0].mxu0 %v1273
      %v1410 = vpop.f32.mrb[0].mxu0
      %v1411 = vadd.f32 0.0, %v1410
      %v1412 = vpop.f32.mrb[0].mxu0
      %v1413 = vpop.f32.mrb[0].mxu0
      %v1414 = vadd.f32 0.0, %v1413
      %v1415 = vpop.f32.mrb[0].mxu0
      %1416 = vmatprep.mubr.bf16.mxu0 0
      %1417 = vmatmul.mubr.bf16.gmra.mrb[0].mxu0 %v1276
      %v1418 = vpop.f32.mrb[0].mxu0
      %v1419 = vadd.f32 0.0, %v1418
      %v1420 = vpop.f32.mrb[0].mxu0
      %v1421 = vpop.f32.mrb[0].mxu0
      %v1422 = vadd.f32 0.0, %v1421
      %v1423 = vpop.f32.mrb[0].mxu0
      %1424 = vmatprep.mubr.bf16.mxu0 0
      %1425 = vmatmul.mubr.bf16.gmra.mrb[0].mxu0 %v1279
      %v1426 = vpop.f32.mrb[0].mxu0
      %v1427 = vadd.f32 0.0, %v1426
      %v1428 = vpop.f32.mrb[0].mxu0
      %v1429 = vpop.f32.mrb[0].mxu0
      %v1430 = vadd.f32 0.0, %v1429
      %v1431 = vpop.f32.mrb[0].mxu0
      %1432 = vmatprep.mubr.bf16.mxu0 0
      %1433 = vmatmul.mubr.bf16.gmra.mrb[0].mxu0 %v1282
      %v1434 = vpop.f32.mrb[0].mxu0
      %v1435 = vadd.f32 0.0, %v1434
      %v1436 = vpop.f32.mrb[0].mxu0
      %v1437 = vpop.f32.mrb[0].mxu0
      %v1438 = vadd.f32 0.0, %v1437
      %v1439 = vpop.f32.mrb[0].mxu0
      %1440 = vmatprep.mubr.bf16.mxu0 0
      %1441 = vmatmul.mubr.bf16.gmra.mrb[0].mxu0 %v1285
      %v1442 = vpop.f32.mrb[0].mxu0
      %v1443 = vadd.f32 0.0, %v1442
      %v1444 = vpop.f32.mrb[0].mxu0
      %v1445 = vpop.f32.mrb[0].mxu0
      %v1446 = vadd.f32 0.0, %v1445
      %v1447 = vpop.f32.mrb[0].mxu0
      %1448 = vmatprep.mubr.bf16.mxu0 0
      %1449 = vmatmul.mubr.bf16.gmra.mrb[0].mxu0 %v1288
      %v1450 = vpop.f32.mrb[0].mxu0
      %v1451 = vadd.f32 0.0, %v1450
      %v1452 = vpop.f32.mrb[0].mxu0
      %v1453 = vpop.f32.mrb[0].mxu0
      %v1454 = vadd.f32 0.0, %v1453
      %v1455 = vpop.f32.mrb[0].mxu0
      %1456 = vmatprep.mubr.bf16.mxu0 0
      %1457 = vmatmul.mubr.bf16.gmra.mrb[0].mxu0 %v1291
      %v1458 = vpop.f32.mrb[0].mxu0
      %v1459 = vadd.f32 0.0, %v1458
      %v1460 = vpop.f32.mrb[0].mxu0
      %v1461 = vpop.f32.mrb[0].mxu0
      %v1462 = vadd.f32 0.0, %v1461
      %v1463 = vpop.f32.mrb[0].mxu0
      %1464 = vmatprep.mubr.bf16.mxu0 0
      %1465 = vmatmul.mubr.bf16.gmra.mrb[0].mxu0 %v1294
      %v1466 = vpop.f32.mrb[0].mxu0
      %v1467 = vadd.f32 0.0, %v1466
      %v1468 = vpop.f32.mrb[0].mxu0
      %v1469 = vpop.f32.mrb[0].mxu0
      %v1470 = vadd.f32 0.0, %v1469
      %v1471 = vpop.f32.mrb[0].mxu0
      %1472 = vdwg.mxu0
      %v1477 = vunpack.c.l.b16 %v1077
      %v1478 = vunpack.c.l.b16 %v1078
      %v1479 = vunpack.c.l.b16 %v1079
      %v1480 = vunpack.c.l.b16 %v1080
      %v1481 = vpack.c.b16 %v1478, %v1477
      %v1482 = vpack.c.b16 %v1480, %v1479
      %v1485 = vsel %vm362, %v1059, 0
      %v1487 = vsel %vm362, %v1060, 0
      %v1489 = vsel %vm362, %v1061, 0
      %v1491 = vsel %vm362, %v1062, 0
      %v1493 = vsel %vm362, %v1063, 0
      %v1495 = vsel %vm362, %v1064, 0
      %v1497 = vsel %vm362, %v1065, 0
      %v1499 = vsel %vm362, %v1066, 0
      %v1501 = vsel %vm362, %v1067, 0
      %v1503 = vsel %vm362, %v1068, 0
      %v1505 = vsel %vm362, %v1069, 0
      %v1507 = vsel %vm362, %v1070, 0
      %v1509 = vsel %vm362, %v1071, 0
      %v1511 = vsel %vm362, %v1072, 0
      %v1513 = vsel %vm362, %v1073, 0
      %v1515 = vsel %vm362, %v1074, 0
      %v1517 = vsel %vm362, %v1075, 0
      %v1519 = vsel %vm362, %v1076, 0
      %1521 = vmatprep.subr.bf16.mxu0 0
      %1522 = vmatpush1.bf16.msra.mxu0 %v1481
      %1523 = vmatprep.subr.bf16.mxu0 0
      %1524 = vmatpush1.bf16.msra.mxu0 %v1482
      %1525 = vmatprep.subr.bf16.mxu0 0
      %1526 = vmatpush1.bf16.msra.mxu0 0
      %1527 = vmatprep.subr.bf16.mxu0 0
      %1528 = vmatpush1.bf16.msra.mxu0 0
      %1529 = vmatprep.subr.bf16.mxu0 0
      %1530 = vmatpush1.bf16.msra.mxu0 0
      %1531 = vmatprep.subr.bf16.mxu0 0
      %1532 = vmatpush1.bf16.msra.mxu0 0
      %1533 = vmatprep.subr.bf16.mxu0 0
      %1534 = vmatpush1.bf16.msra.mxu0 0
      %1535 = vmatprep.subr.bf16.mxu0 0
      %1536 = vmatpush1.bf16.msra.mxu0 0
      %1537 = vmatprep.subr.bf16.mxu0 0
      %1538 = vmatpush1.bf16.msra.mxu0 0
      %1539 = vmatprep.subr.bf16.mxu0 0
      %1540 = vmatpush1.bf16.msra.mxu0 0
      %1541 = vmatprep.subr.bf16.mxu0 0
      %1542 = vmatpush1.bf16.msra.mxu0 0
      %1543 = vmatprep.subr.bf16.mxu0 0
      %1544 = vmatpush1.bf16.msra.mxu0 0
      %1545 = vmatprep.subr.bf16.mxu0 0
      %1546 = vmatpush1.bf16.msra.mxu0 0
      %1547 = vmatprep.subr.bf16.mxu0 0
      %1548 = vmatpush1.bf16.msra.mxu0 0
      %1549 = vmatprep.subr.bf16.mxu0 0
      %1550 = vmatpush1.bf16.msra.mxu0 0
      %1551 = vmatprep.subr.bf16.mxu0 0
      %1552 = vmatpush1.bf16.msra.mxu0 0
      %1553 = vmatprep.mubr.bf16.mxu0 0
      %1554 = vmatmul.mubr.bf16.gmra.mrb[0].mxu0 %v1485
      %v1555 = vpop.f32.mrb[0].mxu0
      %v1556 = vadd.f32 %v1331, %v1555
      %v1557 = vpop.f32.mrb[0].mxu0
      %v1558 = vpop.f32.mrb[0].mxu0
      %v1559 = vadd.f32 %v1334, %v1558
      %v1560 = vpop.f32.mrb[0].mxu0
      %1561 = vmatprep.mubr.bf16.mxu0 0
      %1562 = vmatmul.mubr.bf16.gmra.mrb[0].mxu0 %v1487
      %v1563 = vpop.f32.mrb[0].mxu0
      %v1564 = vadd.f32 %v1339, %v1563
      %v1565 = vpop.f32.mrb[0].mxu0
      %v1566 = vpop.f32.mrb[0].mxu0
      %v1567 = vadd.f32 %v1342, %v1566
      %v1568 = vpop.f32.mrb[0].mxu0
      %1569 = vmatprep.mubr.bf16.mxu0 0
      %1570 = vmatmul.mubr.bf16.gmra.mrb[0].mxu0 %v1489
      %v1571 = vpop.f32.mrb[0].mxu0
      %v1572 = vadd.f32 %v1347, %v1571
      %v1573 = vpop.f32.mrb[0].mxu0
      %v1574 = vpop.f32.mrb[0].mxu0
      %v1575 = vadd.f32 %v1350, %v1574
      %v1576 = vpop.f32.mrb[0].mxu0
      %1577 = vmatprep.mubr.bf16.mxu0 0
      %1578 = vmatmul.mubr.bf16.gmra.mrb[0].mxu0 %v1491
      %v1579 = vpop.f32.mrb[0].mxu0
      %v1580 = vadd.f32 %v1355, %v1579
      %v1581 = vpop.f32.mrb[0].mxu0
      %v1582 = vpop.f32.mrb[0].mxu0
      %v1583 = vadd.f32 %v1358, %v1582
      %v1584 = vpop.f32.mrb[0].mxu0
      %1585 = vmatprep.mubr.bf16.mxu0 0
      %1586 = vmatmul.mubr.bf16.gmra.mrb[0].mxu0 %v1493
      %v1587 = vpop.f32.mrb[0].mxu0
      %v1588 = vadd.f32 %v1363, %v1587
      %v1589 = vpop.f32.mrb[0].mxu0
      %v1590 = vpop.f32.mrb[0].mxu0
      %v1591 = vadd.f32 %v1366, %v1590
      %v1592 = vpop.f32.mrb[0].mxu0
      %1593 = vmatprep.mubr.bf16.mxu0 0
      %1594 = vmatmul.mubr.bf16.gmra.mrb[0].mxu0 %v1495
      %v1595 = vpop.f32.mrb[0].mxu0
      %v1596 = vadd.f32 %v1371, %v1595
      %v1597 = vpop.f32.mrb[0].mxu0
      %v1598 = vpop.f32.mrb[0].mxu0
      %v1599 = vadd.f32 %v1374, %v1598
      %v1600 = vpop.f32.mrb[0].mxu0
      %1601 = vmatprep.mubr.bf16.mxu0 0
      %1602 = vmatmul.mubr.bf16.gmra.mrb[0].mxu0 %v1497
      %v1603 = vpop.f32.mrb[0].mxu0
      %v1604 = vadd.f32 %v1379, %v1603
      %v1605 = vpop.f32.mrb[0].mxu0
      %v1606 = vpop.f32.mrb[0].mxu0
      %v1607 = vadd.f32 %v1382, %v1606
      %v1608 = vpop.f32.mrb[0].mxu0
      %1609 = vmatprep.mubr.bf16.mxu0 0
      %1610 = vmatmul.mubr.bf16.gmra.mrb[0].mxu0 %v1499
      %v1611 = vpop.f32.mrb[0].mxu0
      %v1612 = vadd.f32 %v1387, %v1611
      %v1613 = vpop.f32.mrb[0].mxu0
      %v1614 = vpop.f32.mrb[0].mxu0
      %v1615 = vadd.f32 %v1390, %v1614
      %v1616 = vpop.f32.mrb[0].mxu0
      %1617 = vmatprep.mubr.bf16.mxu0 0
      %1618 = vmatmul.mubr.bf16.gmra.mrb[0].mxu0 %v1501
      %v1619 = vpop.f32.mrb[0].mxu0
      %v1620 = vadd.f32 %v1395, %v1619
      %v1621 = vpop.f32.mrb[0].mxu0
      %v1622 = vpop.f32.mrb[0].mxu0
      %v1623 = vadd.f32 %v1398, %v1622
      %v1624 = vpop.f32.mrb[0].mxu0
      %1625 = vmatprep.mubr.bf16.mxu0 0
      %1626 = vmatmul.mubr.bf16.gmra.mrb[0].mxu0 %v1503
      %v1627 = vpop.f32.mrb[0].mxu0
      %v1628 = vadd.f32 %v1403, %v1627
      %v1629 = vpop.f32.mrb[0].mxu0
      %v1630 = vpop.f32.mrb[0].mxu0
      %v1631 = vadd.f32 %v1406, %v1630
      %v1632 = vpop.f32.mrb[0].mxu0
      %1633 = vmatprep.mubr.bf16.mxu0 0
      %1634 = vmatmul.mubr.bf16.gmra.mrb[0].mxu0 %v1505
      %v1635 = vpop.f32.mrb[0].mxu0
      %v1636 = vadd.f32 %v1411, %v1635
      %v1637 = vpop.f32.mrb[0].mxu0
      %v1638 = vpop.f32.mrb[0].mxu0
      %v1639 = vadd.f32 %v1414, %v1638
      %v1640 = vpop.f32.mrb[0].mxu0
      %1641 = vmatprep.mubr.bf16.mxu0 0
      %1642 = vmatmul.mubr.bf16.gmra.mrb[0].mxu0 %v1507
      %v1643 = vpop.f32.mrb[0].mxu0
      %v1644 = vadd.f32 %v1419, %v1643
      %v1645 = vpop.f32.mrb[0].mxu0
      %v1646 = vpop.f32.mrb[0].mxu0
      %v1647 = vadd.f32 %v1422, %v1646
      %v1648 = vpop.f32.mrb[0].mxu0
      %1649 = vmatprep.mubr.bf16.mxu0 0
      %1650 = vmatmul.mubr.bf16.gmra.mrb[0].mxu0 %v1509
      %v1651 = vpop.f32.mrb[0].mxu0
      %v1652 = vadd.f32 %v1427, %v1651
      %v1653 = vpop.f32.mrb[0].mxu0
      %v1654 = vpop.f32.mrb[0].mxu0
      %v1655 = vadd.f32 %v1430, %v1654
      %v1656 = vpop.f32.mrb[0].mxu0
      %1657 = vmatprep.mubr.bf16.mxu0 0
      %1658 = vmatmul.mubr.bf16.gmra.mrb[0].mxu0 %v1511
      %v1659 = vpop.f32.mrb[0].mxu0
      %v1660 = vadd.f32 %v1435, %v1659
      %v1661 = vpop.f32.mrb[0].mxu0
      %v1662 = vpop.f32.mrb[0].mxu0
      %v1663 = vadd.f32 %v1438, %v1662
      %v1664 = vpop.f32.mrb[0].mxu0
      %1665 = vmatprep.mubr.bf16.mxu0 0
      %1666 = vmatmul.mubr.bf16.gmra.mrb[0].mxu0 %v1513
      %v1667 = vpop.f32.mrb[0].mxu0
      %v1668 = vadd.f32 %v1443, %v1667
      %v1669 = vpop.f32.mrb[0].mxu0
      %v1670 = vpop.f32.mrb[0].mxu0
      %v1671 = vadd.f32 %v1446, %v1670
      %v1672 = vpop.f32.mrb[0].mxu0
      %1673 = vmatprep.mubr.bf16.mxu0 0
      %1674 = vmatmul.mubr.bf16.gmra.mrb[0].mxu0 %v1515
      %v1675 = vpop.f32.mrb[0].mxu0
      %v1676 = vadd.f32 %v1451, %v1675
      %v1677 = vpop.f32.mrb[0].mxu0
      %v1678 = vpop.f32.mrb[0].mxu0
      %v1679 = vadd.f32 %v1454, %v1678
      %v1680 = vpop.f32.mrb[0].mxu0
      %1681 = vmatprep.mubr.bf16.mxu0 0
      %1682 = vmatmul.mubr.bf16.gmra.mrb[0].mxu0 %v1517
      %v1683 = vpop.f32.mrb[0].mxu0
      %v1684 = vadd.f32 %v1459, %v1683
      %v1685 = vpop.f32.mrb[0].mxu0
      %v1686 = vpop.f32.mrb[0].mxu0
      %v1687 = vadd.f32 %v1462, %v1686
      %v1688 = vpop.f32.mrb[0].mxu0
      %1689 = vmatprep.mubr.bf16.mxu0 0
      %1690 = vmatmul.mubr.bf16.gmra.mrb[0].mxu0 %v1519
      %v1691 = vpop.f32.mrb[0].mxu0
      %v1692 = vadd.f32 %v1467, %v1691
      %v1693 = vpop.f32.mrb[0].mxu0
      %v1694 = vpop.f32.mrb[0].mxu0
      %v1695 = vadd.f32 %v1470, %v1694
      %v1696 = vpop.f32.mrb[0].mxu0
      %1697 = vdwg.mxu0
      %s1698 = scalar_lea.vmem %s5, 32
      %v1699 = vld [vmem:[%s1698] sm:$0xf]
      %v1700 = vld [vmem:[%s1698 + $0x4] sm:$0xf]
      %v1701 = vld [vmem:[%s1698 + $0x8] sm:$0xf]
      %v1702 = vld [vmem:[%s1698 + $0xc] sm:$0xf]
      %vm1721 = vcmask 1046528
      %v1722 = vrot.slane %v1059, 1
      %v1723 = vrot.slane %v1060, 1
      %v1724 = vsel %vm1721, %v1722, %v1723
      %v1725 = vrot.slane %v1061, 1
      %v1726 = vsel %vm1721, %v1723, %v1725
      %v1727 = vrot.slane %v1062, 1
      %v1728 = vsel %vm1721, %v1725, %v1727
      %v1729 = vrot.slane %v1063, 1
      %v1730 = vsel %vm1721, %v1727, %v1729
      %v1731 = vrot.slane %v1064, 1
      %v1732 = vsel %vm1721, %v1729, %v1731
      %v1733 = vrot.slane %v1065, 1
      %v1734 = vsel %vm1721, %v1731, %v1733
      %v1735 = vrot.slane %v1066, 1
      %v1736 = vsel %vm1721, %v1733, %v1735
      %v1737 = vrot.slane %v1067, 1
      %v1738 = vsel %vm1721, %v1735, %v1737
      %v1739 = vrot.slane %v1068, 1
      %v1740 = vsel %vm1721, %v1737, %v1739
      %v1741 = vrot.slane %v1069, 1
      %v1742 = vsel %vm1721, %v1739, %v1741
      %v1743 = vrot.slane %v1070, 1
      %v1744 = vsel %vm1721, %v1741, %v1743
      %v1745 = vrot.slane %v1071, 1
      %v1746 = vsel %vm1721, %v1743, %v1745
      %v1747 = vrot.slane %v1072, 1
      %v1748 = vsel %vm1721, %v1745, %v1747
      %v1749 = vrot.slane %v1073, 1
      %v1750 = vsel %vm1721, %v1747, %v1749
      %v1751 = vrot.slane %v1074, 1
      %v1752 = vsel %vm1721, %v1749, %v1751
      %v1753 = vrot.slane %v1075, 1
      %v1754 = vsel %vm1721, %v1751, %v1753
      %v1755 = vrot.slane %v1076, 1
      %v1756 = vsel %vm1721, %v1753, %v1755
      %v1761 = vunpack.c.l.b16 %v1699
      %v1762 = vunpack.c.l.b16 %v1700
      %v1763 = vunpack.c.l.b16 %v1701
      %v1764 = vunpack.c.l.b16 %v1702
      %v1765 = vpack.c.b16 %v1762, %v1761
      %v1766 = vpack.c.b16 %v1764, %v1763
      %v1770 = vsel %vm362, %v1724, 0
      %v1773 = vsel %vm362, %v1726, 0
      %v1776 = vsel %vm362, %v1728, 0
      %v1779 = vsel %vm362, %v1730, 0
      %v1782 = vsel %vm362, %v1732, 0
      %v1785 = vsel %vm362, %v1734, 0
      %v1788 = vsel %vm362, %v1736, 0
      %v1791 = vsel %vm362, %v1738, 0
      %v1794 = vsel %vm362, %v1740, 0
      %v1797 = vsel %vm362, %v1742, 0
      %v1800 = vsel %vm362, %v1744, 0
      %v1803 = vsel %vm362, %v1746, 0
      %v1806 = vsel %vm362, %v1748, 0
      %v1809 = vsel %vm362, %v1750, 0
      %v1812 = vsel %vm362, %v1752, 0
      %v1815 = vsel %vm362, %v1754, 0
      %v1818 = vsel %vm362, %v1756, 0
      %v1821 = vsel %vm362, %v1755, 0
      %1823 = vmatprep.subr.bf16.mxu0 0
      %1824 = vmatpush1.bf16.msra.mxu0 %v1765
      %1825 = vmatprep.subr.bf16.mxu0 0
      %1826 = vmatpush1.bf16.msra.mxu0 %v1766
      %1827 = vmatprep.subr.bf16.mxu0 0
      %1828 = vmatpush1.bf16.msra.mxu0 0
      %1829 = vmatprep.subr.bf16.mxu0 0
      %1830 = vmatpush1.bf16.msra.mxu0 0
      %1831 = vmatprep.subr.bf16.mxu0 0
      %1832 = vmatpush1.bf16.msra.mxu0 0
      %1833 = vmatprep.subr.bf16.mxu0 0
      %1834 = vmatpush1.bf16.msra.mxu0 0
      %1835 = vmatprep.subr.bf16.mxu0 0
      %1836 = vmatpush1.bf16.msra.mxu0 0
      %1837 = vmatprep.subr.bf16.mxu0 0
      %1838 = vmatpush1.bf16.msra.mxu0 0
      %1839 = vmatprep.subr.bf16.mxu0 0
      %1840 = vmatpush1.bf16.msra.mxu0 0
      %1841 = vmatprep.subr.bf16.mxu0 0
      %1842 = vmatpush1.bf16.msra.mxu0 0
      %1843 = vmatprep.subr.bf16.mxu0 0
      %1844 = vmatpush1.bf16.msra.mxu0 0
      %1845 = vmatprep.subr.bf16.mxu0 0
      %1846 = vmatpush1.bf16.msra.mxu0 0
      %1847 = vmatprep.subr.bf16.mxu0 0
      %1848 = vmatpush1.bf16.msra.mxu0 0
      %1849 = vmatprep.subr.bf16.mxu0 0
      %1850 = vmatpush1.bf16.msra.mxu0 0
      %1851 = vmatprep.subr.bf16.mxu0 0
      %1852 = vmatpush1.bf16.msra.mxu0 0
      %1853 = vmatprep.subr.bf16.mxu0 0
      %1854 = vmatpush1.bf16.msra.mxu0 0
      %1855 = vmatprep.mubr.bf16.mxu0 0
      %1856 = vmatmul.mubr.bf16.gmra.mrb[0].mxu0 %v1770
      %v1857 = vpop.f32.mrb[0].mxu0
      %v1858 = vadd.f32 0.0, %v1857
      %v1859 = vpop.f32.mrb[0].mxu0
      %v1860 = vpop.f32.mrb[0].mxu0
      %v1861 = vadd.f32 0.0, %v1860
      %v1862 = vpop.f32.mrb[0].mxu0
      %1863 = vmatprep.mubr.bf16.mxu0 0
      %1864 = vmatmul.mubr.bf16.gmra.mrb[0].mxu0 %v1773
      %v1865 = vpop.f32.mrb[0].mxu0
      %v1866 = vadd.f32 0.0, %v1865
      %v1867 = vpop.f32.mrb[0].mxu0
      %v1868 = vpop.f32.mrb[0].mxu0
      %v1869 = vadd.f32 0.0, %v1868
      %v1870 = vpop.f32.mrb[0].mxu0
      %1871 = vmatprep.mubr.bf16.mxu0 0
      %1872 = vmatmul.mubr.bf16.gmra.mrb[0].mxu0 %v1776
      %v1873 = vpop.f32.mrb[0].mxu0
      %v1874 = vadd.f32 0.0, %v1873
      %v1875 = vpop.f32.mrb[0].mxu0
      %v1876 = vpop.f32.mrb[0].mxu0
      %v1877 = vadd.f32 0.0, %v1876
      %v1878 = vpop.f32.mrb[0].mxu0
      %1879 = vmatprep.mubr.bf16.mxu0 0
      %1880 = vmatmul.mubr.bf16.gmra.mrb[0].mxu0 %v1779
      %v1881 = vpop.f32.mrb[0].mxu0
      %v1882 = vadd.f32 0.0, %v1881
      %v1883 = vpop.f32.mrb[0].mxu0
      %v1884 = vpop.f32.mrb[0].mxu0
      %v1885 = vadd.f32 0.0, %v1884
      %v1886 = vpop.f32.mrb[0].mxu0
      %1887 = vmatprep.mubr.bf16.mxu0 0
      %1888 = vmatmul.mubr.bf16.gmra.mrb[0].mxu0 %v1782
      %v1889 = vpop.f32.mrb[0].mxu0
      %v1890 = vadd.f32 0.0, %v1889
      %v1891 = vpop.f32.mrb[0].mxu0
      %v1892 = vpop.f32.mrb[0].mxu0
      %v1893 = vadd.f32 0.0, %v1892
      %v1894 = vpop.f32.mrb[0].mxu0
      %1895 = vmatprep.mubr.bf16.mxu0 0
      %1896 = vmatmul.mubr.bf16.gmra.mrb[0].mxu0 %v1785
      %v1897 = vpop.f32.mrb[0].mxu0
      %v1898 = vadd.f32 0.0, %v1897
      %v1899 = vpop.f32.mrb[0].mxu0
      %v1900 = vpop.f32.mrb[0].mxu0
      %v1901 = vadd.f32 0.0, %v1900
      %v1902 = vpop.f32.mrb[0].mxu0
      %1903 = vmatprep.mubr.bf16.mxu0 0
      %1904 = vmatmul.mubr.bf16.gmra.mrb[0].mxu0 %v1788
      %v1905 = vpop.f32.mrb[0].mxu0
      %v1906 = vadd.f32 0.0, %v1905
      %v1907 = vpop.f32.mrb[0].mxu0
      %v1908 = vpop.f32.mrb[0].mxu0
      %v1909 = vadd.f32 0.0, %v1908
      %v1910 = vpop.f32.mrb[0].mxu0
      %1911 = vmatprep.mubr.bf16.mxu0 0
      %1912 = vmatmul.mubr.bf16.gmra.mrb[0].mxu0 %v1791
      %v1913 = vpop.f32.mrb[0].mxu0
      %v1914 = vadd.f32 0.0, %v1913
      %v1915 = vpop.f32.mrb[0].mxu0
      %v1916 = vpop.f32.mrb[0].mxu0
      %v1917 = vadd.f32 0.0, %v1916
      %v1918 = vpop.f32.mrb[0].mxu0
      %1919 = vmatprep.mubr.bf16.mxu0 0
      %1920 = vmatmul.mubr.bf16.gmra.mrb[0].mxu0 %v1794
      %v1921 = vpop.f32.mrb[0].mxu0
      %v1922 = vadd.f32 0.0, %v1921
      %v1923 = vpop.f32.mrb[0].mxu0
      %v1924 = vpop.f32.mrb[0].mxu0
      %v1925 = vadd.f32 0.0, %v1924
      %v1926 = vpop.f32.mrb[0].mxu0
      %1927 = vmatprep.mubr.bf16.mxu0 0
      %1928 = vmatmul.mubr.bf16.gmra.mrb[0].mxu0 %v1797
      %v1929 = vpop.f32.mrb[0].mxu0
      %v1930 = vadd.f32 0.0, %v1929
      %v1931 = vpop.f32.mrb[0].mxu0
      %v1932 = vpop.f32.mrb[0].mxu0
      %v1933 = vadd.f32 0.0, %v1932
      %v1934 = vpop.f32.mrb[0].mxu0
      %1935 = vmatprep.mubr.bf16.mxu0 0
      %1936 = vmatmul.mubr.bf16.gmra.mrb[0].mxu0 %v1800
      %v1937 = vpop.f32.mrb[0].mxu0
      %v1938 = vadd.f32 0.0, %v1937
      %v1939 = vpop.f32.mrb[0].mxu0
      %v1940 = vpop.f32.mrb[0].mxu0
      %v1941 = vadd.f32 0.0, %v1940
      %v1942 = vpop.f32.mrb[0].mxu0
      %1943 = vmatprep.mubr.bf16.mxu0 0
      %1944 = vmatmul.mubr.bf16.gmra.mrb[0].mxu0 %v1803
      %v1945 = vpop.f32.mrb[0].mxu0
      %v1946 = vadd.f32 0.0, %v1945
      %v1947 = vpop.f32.mrb[0].mxu0
      %v1948 = vpop.f32.mrb[0].mxu0
      %v1949 = vadd.f32 0.0, %v1948
      %v1950 = vpop.f32.mrb[0].mxu0
      %1951 = vmatprep.mubr.bf16.mxu0 0
      %1952 = vmatmul.mubr.bf16.gmra.mrb[0].mxu0 %v1806
      %v1953 = vpop.f32.mrb[0].mxu0
      %v1954 = vadd.f32 0.0, %v1953
      %v1955 = vpop.f32.mrb[0].mxu0
      %v1956 = vpop.f32.mrb[0].mxu0
      %v1957 = vadd.f32 0.0, %v1956
      %v1958 = vpop.f32.mrb[0].mxu0
      %1959 = vmatprep.mubr.bf16.mxu0 0
      %1960 = vmatmul.mubr.bf16.gmra.mrb[0].mxu0 %v1809
      %v1961 = vpop.f32.mrb[0].mxu0
      %v1962 = vadd.f32 0.0, %v1961
      %v1963 = vpop.f32.mrb[0].mxu0
      %v1964 = vpop.f32.mrb[0].mxu0
      %v1965 = vadd.f32 0.0, %v1964
      %v1966 = vpop.f32.mrb[0].mxu0
      %1967 = vmatprep.mubr.bf16.mxu0 0
      %1968 = vmatmul.mubr.bf16.gmra.mrb[0].mxu0 %v1812
      %v1969 = vpop.f32.mrb[0].mxu0
      %v1970 = vadd.f32 0.0, %v1969
      %v1971 = vpop.f32.mrb[0].mxu0
      %v1972 = vpop.f32.mrb[0].mxu0
      %v1973 = vadd.f32 0.0, %v1972
      %v1974 = vpop.f32.mrb[0].mxu0
      %1975 = vmatprep.mubr.bf16.mxu0 0
      %1976 = vmatmul.mubr.bf16.gmra.mrb[0].mxu0 %v1815
      %v1977 = vpop.f32.mrb[0].mxu0
      %v1978 = vadd.f32 0.0, %v1977
      %v1979 = vpop.f32.mrb[0].mxu0
      %v1980 = vpop.f32.mrb[0].mxu0
      %v1981 = vadd.f32 0.0, %v1980
      %v1982 = vpop.f32.mrb[0].mxu0
      %1983 = vmatprep.mubr.bf16.mxu0 0
      %1984 = vmatmul.mubr.bf16.gmra.mrb[0].mxu0 %v1818
      %v1985 = vpop.f32.mrb[0].mxu0
      %v1986 = vadd.f32 0.0, %v1985
      %v1987 = vpop.f32.mrb[0].mxu0
      %v1988 = vpop.f32.mrb[0].mxu0
      %v1989 = vadd.f32 0.0, %v1988
      %v1990 = vpop.f32.mrb[0].mxu0
      %1991 = vmatprep.mubr.bf16.mxu0 0
      %1992 = vmatmul.mubr.bf16.gmra.mrb[0].mxu0 %v1821
      %v1993 = vpop.f32.mrb[0].mxu0
      %v1994 = vadd.f32 0.0, %v1993
      %v1995 = vpop.f32.mrb[0].mxu0
      %v1996 = vpop.f32.mrb[0].mxu0
      %v1997 = vadd.f32 0.0, %v1996
      %v1998 = vpop.f32.mrb[0].mxu0
      %1999 = vdwg.mxu0
      %v2000 = vadd.f32 %v1556, %v1858
      %v2001 = vadd.f32 %v1559, %v1861
      %v2002 = vadd.f32 %v1564, %v1866
      %v2003 = vadd.f32 %v1567, %v1869
      %v2004 = vadd.f32 %v1572, %v1874
      %v2005 = vadd.f32 %v1575, %v1877
      %v2006 = vadd.f32 %v1580, %v1882
      %v2007 = vadd.f32 %v1583, %v1885
      %v2008 = vadd.f32 %v1588, %v1890
      %v2009 = vadd.f32 %v1591, %v1893
      %v2010 = vadd.f32 %v1596, %v1898
      %v2011 = vadd.f32 %v1599, %v1901
      %v2012 = vadd.f32 %v1604, %v1906
      %v2013 = vadd.f32 %v1607, %v1909
      %v2014 = vadd.f32 %v1612, %v1914
      %v2015 = vadd.f32 %v1615, %v1917
      %v2016 = vadd.f32 %v1620, %v1922
      %v2017 = vadd.f32 %v1623, %v1925
      %v2018 = vadd.f32 %v1628, %v1930
      %v2019 = vadd.f32 %v1631, %v1933
      %v2020 = vadd.f32 %v1636, %v1938
      %v2021 = vadd.f32 %v1639, %v1941
      %v2022 = vadd.f32 %v1644, %v1946
      %v2023 = vadd.f32 %v1647, %v1949
      %v2024 = vadd.f32 %v1652, %v1954
      %v2025 = vadd.f32 %v1655, %v1957
      %v2026 = vadd.f32 %v1660, %v1962
      %v2027 = vadd.f32 %v1663, %v1965
      %v2028 = vadd.f32 %v1668, %v1970
      %v2029 = vadd.f32 %v1671, %v1973
      %v2030 = vadd.f32 %v1676, %v1978
      %v2031 = vadd.f32 %v1679, %v1981
      %v2032 = vadd.f32 %v1684, %v1986
      %v2033 = vadd.f32 %v1687, %v1989
      %v2034 = vadd.f32 %v1692, %v1994
      %v2035 = vadd.f32 %v1695, %v1997
      %v2036 = vpack.c.bf16 %v1055, %v1054
      %s2037 = scalar_lea.vmem %s5, 48
      %v2038 = vld [vmem:[%s2037] sm:$0xf]
      %v2039 = vld [vmem:[%s2037 + $0x4] sm:$0xf]
      %v2040 = vld [vmem:[%s2037 + $0x8] sm:$0xf]
      %v2041 = vld [vmem:[%s2037 + $0xc] sm:$0xf]
      %v2043 = vrot.slane %v2036, 1
      %v2044 = vsel %vm1721, %v1755, %v2043
      %v2049 = vunpack.c.l.b16 %v2038
      %v2050 = vunpack.c.l.b16 %v2039
      %v2051 = vunpack.c.l.b16 %v2040
      %v2052 = vunpack.c.l.b16 %v2041
      %v2053 = vpack.c.b16 %v2050, %v2049
      %v2054 = vpack.c.b16 %v2052, %v2051
      %v2058 = vsel %vm362, %v2044, 0
      %v2061 = vsel %vm362, %v2043, 0
      %2063 = vmatprep.subr.bf16.mxu0 0
      %2064 = vmatpush1.bf16.msra.mxu0 %v2053
      %2065 = vmatprep.subr.bf16.mxu0 0
      %2066 = vmatpush1.bf16.msra.mxu0 %v2054
      %2067 = vmatprep.subr.bf16.mxu0 0
      %2068 = vmatpush1.bf16.msra.mxu0 0
      %2069 = vmatprep.subr.bf16.mxu0 0
      %2070 = vmatpush1.bf16.msra.mxu0 0
      %2071 = vmatprep.subr.bf16.mxu0 0
      %2072 = vmatpush1.bf16.msra.mxu0 0
      %2073 = vmatprep.subr.bf16.mxu0 0
      %2074 = vmatpush1.bf16.msra.mxu0 0
      %2075 = vmatprep.subr.bf16.mxu0 0
      %2076 = vmatpush1.bf16.msra.mxu0 0
      %2077 = vmatprep.subr.bf16.mxu0 0
      %2078 = vmatpush1.bf16.msra.mxu0 0
      %2079 = vmatprep.subr.bf16.mxu0 0
      %2080 = vmatpush1.bf16.msra.mxu0 0
      %2081 = vmatprep.subr.bf16.mxu0 0
      %2082 = vmatpush1.bf16.msra.mxu0 0
      %2083 = vmatprep.subr.bf16.mxu0 0
      %2084 = vmatpush1.bf16.msra.mxu0 0
      %2085 = vmatprep.subr.bf16.mxu0 0
      %2086 = vmatpush1.bf16.msra.mxu0 0
      %2087 = vmatprep.subr.bf16.mxu0 0
      %2088 = vmatpush1.bf16.msra.mxu0 0
      %2089 = vmatprep.subr.bf16.mxu0 0
      %2090 = vmatpush1.bf16.msra.mxu0 0
      %2091 = vmatprep.subr.bf16.mxu0 0
      %2092 = vmatpush1.bf16.msra.mxu0 0
      %2093 = vmatprep.subr.bf16.mxu0 0
      %2094 = vmatpush1.bf16.msra.mxu0 0
      %2095 = vmatprep.mubr.bf16.mxu0 0
      %2096 = vmatmul.mubr.bf16.gmra.mrb[0].mxu0 %v1773
      %v2097 = vpop.f32.mrb[0].mxu0
      %v2098 = vadd.f32 0.0, %v2097
      %v2099 = vpop.f32.mrb[0].mxu0
      %v2100 = vpop.f32.mrb[0].mxu0
      %v2101 = vadd.f32 0.0, %v2100
      %v2102 = vpop.f32.mrb[0].mxu0
      %2103 = vmatprep.mubr.bf16.mxu0 0
      %2104 = vmatmul.mubr.bf16.gmra.mrb[0].mxu0 %v1776
      %v2105 = vpop.f32.mrb[0].mxu0
      %v2106 = vadd.f32 0.0, %v2105
      %v2107 = vpop.f32.mrb[0].mxu0
      %v2108 = vpop.f32.mrb[0].mxu0
      %v2109 = vadd.f32 0.0, %v2108
      %v2110 = vpop.f32.mrb[0].mxu0
      %2111 = vmatprep.mubr.bf16.mxu0 0
      %2112 = vmatmul.mubr.bf16.gmra.mrb[0].mxu0 %v1779
      %v2113 = vpop.f32.mrb[0].mxu0
      %v2114 = vadd.f32 0.0, %v2113
      %v2115 = vpop.f32.mrb[0].mxu0
      %v2116 = vpop.f32.mrb[0].mxu0
      %v2117 = vadd.f32 0.0, %v2116
      %v2118 = vpop.f32.mrb[0].mxu0
      %2119 = vmatprep.mubr.bf16.mxu0 0
      %2120 = vmatmul.mubr.bf16.gmra.mrb[0].mxu0 %v1782
      %v2121 = vpop.f32.mrb[0].mxu0
      %v2122 = vadd.f32 0.0, %v2121
      %v2123 = vpop.f32.mrb[0].mxu0
      %v2124 = vpop.f32.mrb[0].mxu0
      %v2125 = vadd.f32 0.0, %v2124
      %v2126 = vpop.f32.mrb[0].mxu0
      %2127 = vmatprep.mubr.bf16.mxu0 0
      %2128 = vmatmul.mubr.bf16.gmra.mrb[0].mxu0 %v1785
      %v2129 = vpop.f32.mrb[0].mxu0
      %v2130 = vadd.f32 0.0, %v2129
      %v2131 = vpop.f32.mrb[0].mxu0
      %v2132 = vpop.f32.mrb[0].mxu0
      %v2133 = vadd.f32 0.0, %v2132
      %v2134 = vpop.f32.mrb[0].mxu0
      %2135 = vmatprep.mubr.bf16.mxu0 0
      %2136 = vmatmul.mubr.bf16.gmra.mrb[0].mxu0 %v1788
      %v2137 = vpop.f32.mrb[0].mxu0
      %v2138 = vadd.f32 0.0, %v2137
      %v2139 = vpop.f32.mrb[0].mxu0
      %v2140 = vpop.f32.mrb[0].mxu0
      %v2141 = vadd.f32 0.0, %v2140
      %v2142 = vpop.f32.mrb[0].mxu0
      %2143 = vmatprep.mubr.bf16.mxu0 0
      %2144 = vmatmul.mubr.bf16.gmra.mrb[0].mxu0 %v1791
      %v2145 = vpop.f32.mrb[0].mxu0
      %v2146 = vadd.f32 0.0, %v2145
      %v2147 = vpop.f32.mrb[0].mxu0
      %v2148 = vpop.f32.mrb[0].mxu0
      %v2149 = vadd.f32 0.0, %v2148
      %v2150 = vpop.f32.mrb[0].mxu0
      %2151 = vmatprep.mubr.bf16.mxu0 0
      %2152 = vmatmul.mubr.bf16.gmra.mrb[0].mxu0 %v1794
      %v2153 = vpop.f32.mrb[0].mxu0
      %v2154 = vadd.f32 0.0, %v2153
      %v2155 = vpop.f32.mrb[0].mxu0
      %v2156 = vpop.f32.mrb[0].mxu0
      %v2157 = vadd.f32 0.0, %v2156
      %v2158 = vpop.f32.mrb[0].mxu0
      %2159 = vmatprep.mubr.bf16.mxu0 0
      %2160 = vmatmul.mubr.bf16.gmra.mrb[0].mxu0 %v1797
      %v2161 = vpop.f32.mrb[0].mxu0
      %v2162 = vadd.f32 0.0, %v2161
      %v2163 = vpop.f32.mrb[0].mxu0
      %v2164 = vpop.f32.mrb[0].mxu0
      %v2165 = vadd.f32 0.0, %v2164
      %v2166 = vpop.f32.mrb[0].mxu0
      %2167 = vmatprep.mubr.bf16.mxu0 0
      %2168 = vmatmul.mubr.bf16.gmra.mrb[0].mxu0 %v1800
      %v2169 = vpop.f32.mrb[0].mxu0
      %v2170 = vadd.f32 0.0, %v2169
      %v2171 = vpop.f32.mrb[0].mxu0
      %v2172 = vpop.f32.mrb[0].mxu0
      %v2173 = vadd.f32 0.0, %v2172
      %v2174 = vpop.f32.mrb[0].mxu0
      %2175 = vmatprep.mubr.bf16.mxu0 0
      %2176 = vmatmul.mubr.bf16.gmra.mrb[0].mxu0 %v1803
      %v2177 = vpop.f32.mrb[0].mxu0
      %v2178 = vadd.f32 0.0, %v2177
      %v2179 = vpop.f32.mrb[0].mxu0
      %v2180 = vpop.f32.mrb[0].mxu0
      %v2181 = vadd.f32 0.0, %v2180
      %v2182 = vpop.f32.mrb[0].mxu0
      %2183 = vmatprep.mubr.bf16.mxu0 0
      %2184 = vmatmul.mubr.bf16.gmra.mrb[0].mxu0 %v1806
      %v2185 = vpop.f32.mrb[0].mxu0
      %v2186 = vadd.f32 0.0, %v2185
      %v2187 = vpop.f32.mrb[0].mxu0
      %v2188 = vpop.f32.mrb[0].mxu0
      %v2189 = vadd.f32 0.0, %v2188
      %v2190 = vpop.f32.mrb[0].mxu0
      %2191 = vmatprep.mubr.bf16.mxu0 0
      %2192 = vmatmul.mubr.bf16.gmra.mrb[0].mxu0 %v1809
      %v2193 = vpop.f32.mrb[0].mxu0
      %v2194 = vadd.f32 0.0, %v2193
      %v2195 = vpop.f32.mrb[0].mxu0
      %v2196 = vpop.f32.mrb[0].mxu0
      %v2197 = vadd.f32 0.0, %v2196
      %v2198 = vpop.f32.mrb[0].mxu0
      %2199 = vmatprep.mubr.bf16.mxu0 0
      %2200 = vmatmul.mubr.bf16.gmra.mrb[0].mxu0 %v1812
      %v2201 = vpop.f32.mrb[0].mxu0
      %v2202 = vadd.f32 0.0, %v2201
      %v2203 = vpop.f32.mrb[0].mxu0
      %v2204 = vpop.f32.mrb[0].mxu0
      %v2205 = vadd.f32 0.0, %v2204
      %v2206 = vpop.f32.mrb[0].mxu0
      %2207 = vmatprep.mubr.bf16.mxu0 0
      %2208 = vmatmul.mubr.bf16.gmra.mrb[0].mxu0 %v1815
      %v2209 = vpop.f32.mrb[0].mxu0
      %v2210 = vadd.f32 0.0, %v2209
      %v2211 = vpop.f32.mrb[0].mxu0
      %v2212 = vpop.f32.mrb[0].mxu0
      %v2213 = vadd.f32 0.0, %v2212
      %v2214 = vpop.f32.mrb[0].mxu0
      %2215 = vmatprep.mubr.bf16.mxu0 0
      %2216 = vmatmul.mubr.bf16.gmra.mrb[0].mxu0 %v1818
      %v2217 = vpop.f32.mrb[0].mxu0
      %v2218 = vadd.f32 0.0, %v2217
      %v2219 = vpop.f32.mrb[0].mxu0
      %v2220 = vpop.f32.mrb[0].mxu0
      %v2221 = vadd.f32 0.0, %v2220
      %v2222 = vpop.f32.mrb[0].mxu0
      %2223 = vmatprep.mubr.bf16.mxu0 0
      %2224 = vmatmul.mubr.bf16.gmra.mrb[0].mxu0 %v2058
      %v2225 = vpop.f32.mrb[0].mxu0
      %v2226 = vadd.f32 0.0, %v2225
      %v2227 = vpop.f32.mrb[0].mxu0
      %v2228 = vpop.f32.mrb[0].mxu0
      %v2229 = vadd.f32 0.0, %v2228
      %v2230 = vpop.f32.mrb[0].mxu0
      %2231 = vmatprep.mubr.bf16.mxu0 0
      %2232 = vmatmul.mubr.bf16.gmra.mrb[0].mxu0 %v2061
      %v2233 = vpop.f32.mrb[0].mxu0
      %v2234 = vadd.f32 0.0, %v2233
      %v2235 = vpop.f32.mrb[0].mxu0
      %v2236 = vpop.f32.mrb[0].mxu0
      %v2237 = vadd.f32 0.0, %v2236
      %v2238 = vpop.f32.mrb[0].mxu0
      %2239 = vdwg.mxu0
      %v2240 = vadd.f32 %v2000, %v2098
      %v2241 = vadd.f32 %v2001, %v2101
      %v2242 = vadd.f32 %v2002, %v2106
      %v2243 = vadd.f32 %v2003, %v2109
      %v2244 = vadd.f32 %v2004, %v2114
      %v2245 = vadd.f32 %v2005, %v2117
      %v2246 = vadd.f32 %v2006, %v2122
      %v2247 = vadd.f32 %v2007, %v2125
      %v2248 = vadd.f32 %v2008, %v2130
      %v2249 = vadd.f32 %v2009, %v2133
      %v2250 = vadd.f32 %v2010, %v2138
      %v2251 = vadd.f32 %v2011, %v2141
      %v2252 = vadd.f32 %v2012, %v2146
      %v2253 = vadd.f32 %v2013, %v2149
      %v2254 = vadd.f32 %v2014, %v2154
      %v2255 = vadd.f32 %v2015, %v2157
      %v2256 = vadd.f32 %v2016, %v2162
      %v2257 = vadd.f32 %v2017, %v2165
      %v2258 = vadd.f32 %v2018, %v2170
      %v2259 = vadd.f32 %v2019, %v2173
      %v2260 = vadd.f32 %v2020, %v2178
      %v2261 = vadd.f32 %v2021, %v2181
      %v2262 = vadd.f32 %v2022, %v2186
      %v2263 = vadd.f32 %v2023, %v2189
      %v2264 = vadd.f32 %v2024, %v2194
      %v2265 = vadd.f32 %v2025, %v2197
      %v2266 = vadd.f32 %v2026, %v2202
      %v2267 = vadd.f32 %v2027, %v2205
      %v2268 = vadd.f32 %v2028, %v2210
      %v2269 = vadd.f32 %v2029, %v2213
      %v2270 = vadd.f32 %v2030, %v2218
      %v2271 = vadd.f32 %v2031, %v2221
      %v2272 = vadd.f32 %v2032, %v2226
      %v2273 = vadd.f32 %v2033, %v2229
      %v2274 = vadd.f32 %v2034, %v2234
      %v2275 = vadd.f32 %v2035, %v2237
      %v2276 = vpack.c.bf16 %v1056, %v1056
      %s2277 = scalar_lea.vmem %s5, 64
      %v2278 = vld [vmem:[%s2277] sm:$0xf]
      %v2279 = vld [vmem:[%s2277 + $0x4] sm:$0xf]
      %v2280 = vld [vmem:[%s2277 + $0x8] sm:$0xf]
      %v2281 = vld [vmem:[%s2277 + $0xc] sm:$0xf]
      %vm2282 = vsmask.f32 6400
      %v2283 = vrot.slane %v1099, 1
      %v2284 = vrot.slane %v1095, 2
      %v2285 = vor.u32 %v2283, %v2284
      %v2286 = vrot.slane %v1107, 1
      %v2287 = vrot.slane %v1103, 2
      %v2288 = vor.u32 %v2286, %v2287
      %v2289 = vsel %vm2282, %v2285, %v2288
      %v2290 = vrot.slane %v1115, 1
      %v2291 = vrot.slane %v1111, 2
      %v2292 = vor.u32 %v2290, %v2291
      %v2293 = vsel %vm2282, %v2288, %v2292
      %v2294 = vrot.slane %v1123, 1
      %v2295 = vrot.slane %v1119, 2
      %v2296 = vor.u32 %v2294, %v2295
      %v2297 = vsel %vm2282, %v2292, %v2296
      %v2298 = vrot.slane %v1131, 1
      %v2299 = vrot.slane %v1127, 2
      %v2300 = vor.u32 %v2298, %v2299
      %v2301 = vsel %vm2282, %v2296, %v2300
      %v2302 = vrot.slane %v1139, 1
      %v2303 = vrot.slane %v1135, 2
      %v2304 = vor.u32 %v2302, %v2303
      %v2305 = vsel %vm2282, %v2300, %v2304
      %v2306 = vrot.slane %v1147, 1
      %v2307 = vrot.slane %v1143, 2
      %v2308 = vor.u32 %v2306, %v2307
      %v2309 = vsel %vm2282, %v2304, %v2308
      %v2310 = vrot.slane %v1155, 1
      %v2311 = vrot.slane %v1151, 2
      %v2312 = vor.u32 %v2310, %v2311
      %v2313 = vsel %vm2282, %v2308, %v2312
      %v2314 = vrot.slane %v1163, 1
      %v2315 = vrot.slane %v1159, 2
      %v2316 = vor.u32 %v2314, %v2315
      %v2317 = vsel %vm2282, %v2312, %v2316
      %v2318 = vrot.slane %v1171, 1
      %v2319 = vrot.slane %v1167, 2
      %v2320 = vor.u32 %v2318, %v2319
      %v2321 = vsel %vm2282, %v2316, %v2320
      %v2322 = vrot.slane %v1179, 1
      %v2323 = vrot.slane %v1175, 2
      %v2324 = vor.u32 %v2322, %v2323
      %v2325 = vsel %vm2282, %v2320, %v2324
      %v2326 = vrot.slane %v1187, 1
      %v2327 = vrot.slane %v1183, 2
      %v2328 = vor.u32 %v2326, %v2327
      %v2329 = vsel %vm2282, %v2324, %v2328
      %v2330 = vrot.slane %v1195, 1
      %v2331 = vrot.slane %v1191, 2
      %v2332 = vor.u32 %v2330, %v2331
      %v2333 = vsel %vm2282, %v2328, %v2332
      %v2334 = vrot.slane %v1203, 1
      %v2335 = vrot.slane %v1199, 2
      %v2336 = vor.u32 %v2334, %v2335
      %v2337 = vsel %vm2282, %v2332, %v2336
      %v2338 = vrot.slane %v1211, 1
      %v2339 = vrot.slane %v1207, 2
      %v2340 = vor.u32 %v2338, %v2339
      %v2341 = vsel %vm2282, %v2336, %v2340
      %v2342 = vrot.slane %v1219, 1
      %v2343 = vrot.slane %v1215, 2
      %v2344 = vor.u32 %v2342, %v2343
      %v2345 = vsel %vm2282, %v2340, %v2344
      %v2346 = vrot.slane %v1227, 1
      %v2347 = vrot.slane %v1223, 2
      %v2348 = vor.u32 %v2346, %v2347
      %v2349 = vsel %vm2282, %v2344, %v2348
      %v2351 = vshrl.u32 %v2036, 16
      %v2353 = vrot.slane %v2351, 1
      %v2354 = vshll.u32 %v2036, 16
      %v2356 = vrot.slane %v2354, 2
      %v2357 = vor.u32 %v2353, %v2356
      %v2358 = vsel %vm2282, %v2348, %v2357
      %v2360 = vshll.u32 %v2276, 16
      %v2362 = vrot.slane %v2360, 2
      %v2363 = vsel %vm2282, %v2357, %v2362
      %v2368 = vunpack.c.l.b16 %v2278
      %v2369 = vunpack.c.l.b16 %v2279
      %v2370 = vunpack.c.l.b16 %v2280
      %v2371 = vunpack.c.l.b16 %v2281
      %v2372 = vpack.c.b16 %v2369, %v2368
      %v2373 = vpack.c.b16 %v2371, %v2370
      %v2377 = vsel %vm362, %v2289, 0
      %v2380 = vsel %vm362, %v2293, 0
      %v2383 = vsel %vm362, %v2297, 0
      %v2386 = vsel %vm362, %v2301, 0
      %v2389 = vsel %vm362, %v2305, 0
      %v2392 = vsel %vm362, %v2309, 0
      %v2395 = vsel %vm362, %v2313, 0
      %v2398 = vsel %vm362, %v2317, 0
      %v2401 = vsel %vm362, %v2321, 0
      %v2404 = vsel %vm362, %v2325, 0
      %v2407 = vsel %vm362, %v2329, 0
      %v2410 = vsel %vm362, %v2333, 0
      %v2413 = vsel %vm362, %v2337, 0
      %v2416 = vsel %vm362, %v2341, 0
      %v2419 = vsel %vm362, %v2345, 0
      %v2422 = vsel %vm362, %v2349, 0
      %v2425 = vsel %vm362, %v2358, 0
      %v2428 = vsel %vm362, %v2363, 0
      %2430 = vmatprep.subr.bf16.mxu0 0
      %2431 = vmatpush1.bf16.msra.mxu0 %v2372
      %2432 = vmatprep.subr.bf16.mxu0 0
      %2433 = vmatpush1.bf16.msra.mxu0 %v2373
      %2434 = vmatprep.subr.bf16.mxu0 0
      %2435 = vmatpush1.bf16.msra.mxu0 0
      %2436 = vmatprep.subr.bf16.mxu0 0
      %2437 = vmatpush1.bf16.msra.mxu0 0
      %2438 = vmatprep.subr.bf16.mxu0 0
      %2439 = vmatpush1.bf16.msra.mxu0 0
      %2440 = vmatprep.subr.bf16.mxu0 0
      %2441 = vmatpush1.bf16.msra.mxu0 0
      %2442 = vmatprep.subr.bf16.mxu0 0
      %2443 = vmatpush1.bf16.msra.mxu0 0
      %2444 = vmatprep.subr.bf16.mxu0 0
      %2445 = vmatpush1.bf16.msra.mxu0 0
      %2446 = vmatprep.subr.bf16.mxu0 0
      %2447 = vmatpush1.bf16.msra.mxu0 0
      %2448 = vmatprep.subr.bf16.mxu0 0
      %2449 = vmatpush1.bf16.msra.mxu0 0
      %2450 = vmatprep.subr.bf16.mxu0 0
      %2451 = vmatpush1.bf16.msra.mxu0 0
      %2452 = vmatprep.subr.bf16.mxu0 0
      %2453 = vmatpush1.bf16.msra.mxu0 0
      %2454 = vmatprep.subr.bf16.mxu0 0
      %2455 = vmatpush1.bf16.msra.mxu0 0
      %2456 = vmatprep.subr.bf16.mxu0 0
      %2457 = vmatpush1.bf16.msra.mxu0 0
      %2458 = vmatprep.subr.bf16.mxu0 0
      %2459 = vmatpush1.bf16.msra.mxu0 0
      %2460 = vmatprep.subr.bf16.mxu0 0
      %2461 = vmatpush1.bf16.msra.mxu0 0
      %2462 = vmatprep.mubr.bf16.mxu0 0
      %2463 = vmatmul.mubr.bf16.gmra.mrb[0].mxu0 %v2377
      %v2464 = vpop.f32.mrb[0].mxu0
      %v2465 = vadd.f32 0.0, %v2464
      %v2466 = vpop.f32.mrb[0].mxu0
      %v2467 = vpop.f32.mrb[0].mxu0
      %v2468 = vadd.f32 0.0, %v2467
      %v2469 = vpop.f32.mrb[0].mxu0
      %2470 = vmatprep.mubr.bf16.mxu0 0
      %2471 = vmatmul.mubr.bf16.gmra.mrb[0].mxu0 %v2380
      %v2472 = vpop.f32.mrb[0].mxu0
      %v2473 = vadd.f32 0.0, %v2472
      %v2474 = vpop.f32.mrb[0].mxu0
      %v2475 = vpop.f32.mrb[0].mxu0
      %v2476 = vadd.f32 0.0, %v2475
      %v2477 = vpop.f32.mrb[0].mxu0
      %2478 = vmatprep.mubr.bf16.mxu0 0
      %2479 = vmatmul.mubr.bf16.gmra.mrb[0].mxu0 %v2383
      %v2480 = vpop.f32.mrb[0].mxu0
      %v2481 = vadd.f32 0.0, %v2480
      %v2482 = vpop.f32.mrb[0].mxu0
      %v2483 = vpop.f32.mrb[0].mxu0
      %v2484 = vadd.f32 0.0, %v2483
      %v2485 = vpop.f32.mrb[0].mxu0
      %2486 = vmatprep.mubr.bf16.mxu0 0
      %2487 = vmatmul.mubr.bf16.gmra.mrb[0].mxu0 %v2386
      %v2488 = vpop.f32.mrb[0].mxu0
      %v2489 = vadd.f32 0.0, %v2488
      %v2490 = vpop.f32.mrb[0].mxu0
      %v2491 = vpop.f32.mrb[0].mxu0
      %v2492 = vadd.f32 0.0, %v2491
      %v2493 = vpop.f32.mrb[0].mxu0
      %2494 = vmatprep.mubr.bf16.mxu0 0
      %2495 = vmatmul.mubr.bf16.gmra.mrb[0].mxu0 %v2389
      %v2496 = vpop.f32.mrb[0].mxu0
      %v2497 = vadd.f32 0.0, %v2496
      %v2498 = vpop.f32.mrb[0].mxu0
      %v2499 = vpop.f32.mrb[0].mxu0
      %v2500 = vadd.f32 0.0, %v2499
      %v2501 = vpop.f32.mrb[0].mxu0
      %2502 = vmatprep.mubr.bf16.mxu0 0
      %2503 = vmatmul.mubr.bf16.gmra.mrb[0].mxu0 %v2392
      %v2504 = vpop.f32.mrb[0].mxu0
      %v2505 = vadd.f32 0.0, %v2504
      %v2506 = vpop.f32.mrb[0].mxu0
      %v2507 = vpop.f32.mrb[0].mxu0
      %v2508 = vadd.f32 0.0, %v2507
      %v2509 = vpop.f32.mrb[0].mxu0
      %2510 = vmatprep.mubr.bf16.mxu0 0
      %2511 = vmatmul.mubr.bf16.gmra.mrb[0].mxu0 %v2395
      %v2512 = vpop.f32.mrb[0].mxu0
      %v2513 = vadd.f32 0.0, %v2512
      %v2514 = vpop.f32.mrb[0].mxu0
      %v2515 = vpop.f32.mrb[0].mxu0
      %v2516 = vadd.f32 0.0, %v2515
      %v2517 = vpop.f32.mrb[0].mxu0
      %2518 = vmatprep.mubr.bf16.mxu0 0
      %2519 = vmatmul.mubr.bf16.gmra.mrb[0].mxu0 %v2398
      %v2520 = vpop.f32.mrb[0].mxu0
      %v2521 = vadd.f32 0.0, %v2520
      %v2522 = vpop.f32.mrb[0].mxu0
      %v2523 = vpop.f32.mrb[0].mxu0
      %v2524 = vadd.f32 0.0, %v2523
      %v2525 = vpop.f32.mrb[0].mxu0
      %2526 = vmatprep.mubr.bf16.mxu0 0
      %2527 = vmatmul.mubr.bf16.gmra.mrb[0].mxu0 %v2401
      %v2528 = vpop.f32.mrb[0].mxu0
      %v2529 = vadd.f32 0.0, %v2528
      %v2530 = vpop.f32.mrb[0].mxu0
      %v2531 = vpop.f32.mrb[0].mxu0
      %v2532 = vadd.f32 0.0, %v2531
      %v2533 = vpop.f32.mrb[0].mxu0
      %2534 = vmatprep.mubr.bf16.mxu0 0
      %2535 = vmatmul.mubr.bf16.gmra.mrb[0].mxu0 %v2404
      %v2536 = vpop.f32.mrb[0].mxu0
      %v2537 = vadd.f32 0.0, %v2536
      %v2538 = vpop.f32.mrb[0].mxu0
      %v2539 = vpop.f32.mrb[0].mxu0
      %v2540 = vadd.f32 0.0, %v2539
      %v2541 = vpop.f32.mrb[0].mxu0
      %2542 = vmatprep.mubr.bf16.mxu0 0
      %2543 = vmatmul.mubr.bf16.gmra.mrb[0].mxu0 %v2407
      %v2544 = vpop.f32.mrb[0].mxu0
      %v2545 = vadd.f32 0.0, %v2544
      %v2546 = vpop.f32.mrb[0].mxu0
      %v2547 = vpop.f32.mrb[0].mxu0
      %v2548 = vadd.f32 0.0, %v2547
      %v2549 = vpop.f32.mrb[0].mxu0
      %2550 = vmatprep.mubr.bf16.mxu0 0
      %2551 = vmatmul.mubr.bf16.gmra.mrb[0].mxu0 %v2410
      %v2552 = vpop.f32.mrb[0].mxu0
      %v2553 = vadd.f32 0.0, %v2552
      %v2554 = vpop.f32.mrb[0].mxu0
      %v2555 = vpop.f32.mrb[0].mxu0
      %v2556 = vadd.f32 0.0, %v2555
      %v2557 = vpop.f32.mrb[0].mxu0
      %2558 = vmatprep.mubr.bf16.mxu0 0
      %2559 = vmatmul.mubr.bf16.gmra.mrb[0].mxu0 %v2413
      %v2560 = vpop.f32.mrb[0].mxu0
      %v2561 = vadd.f32 0.0, %v2560
      %v2562 = vpop.f32.mrb[0].mxu0
      %v2563 = vpop.f32.mrb[0].mxu0
      %v2564 = vadd.f32 0.0, %v2563
      %v2565 = vpop.f32.mrb[0].mxu0
      %2566 = vmatprep.mubr.bf16.mxu0 0
      %2567 = vmatmul.mubr.bf16.gmra.mrb[0].mxu0 %v2416
      %v2568 = vpop.f32.mrb[0].mxu0
      %v2569 = vadd.f32 0.0, %v2568
      %v2570 = vpop.f32.mrb[0].mxu0
      %v2571 = vpop.f32.mrb[0].mxu0
      %v2572 = vadd.f32 0.0, %v2571
      %v2573 = vpop.f32.mrb[0].mxu0
      %2574 = vmatprep.mubr.bf16.mxu0 0
      %2575 = vmatmul.mubr.bf16.gmra.mrb[0].mxu0 %v2419
      %v2576 = vpop.f32.mrb[0].mxu0
      %v2577 = vadd.f32 0.0, %v2576
      %v2578 = vpop.f32.mrb[0].mxu0
      %v2579 = vpop.f32.mrb[0].mxu0
      %v2580 = vadd.f32 0.0, %v2579
      %v2581 = vpop.f32.mrb[0].mxu0
      %2582 = vmatprep.mubr.bf16.mxu0 0
      %2583 = vmatmul.mubr.bf16.gmra.mrb[0].mxu0 %v2422
      %v2584 = vpop.f32.mrb[0].mxu0
      %v2585 = vadd.f32 0.0, %v2584
      %v2586 = vpop.f32.mrb[0].mxu0
      %v2587 = vpop.f32.mrb[0].mxu0
      %v2588 = vadd.f32 0.0, %v2587
      %v2589 = vpop.f32.mrb[0].mxu0
      %2590 = vmatprep.mubr.bf16.mxu0 0
      %2591 = vmatmul.mubr.bf16.gmra.mrb[0].mxu0 %v2425
      %v2592 = vpop.f32.mrb[0].mxu0
      %v2593 = vadd.f32 0.0, %v2592
      %v2594 = vpop.f32.mrb[0].mxu0
      %v2595 = vpop.f32.mrb[0].mxu0
      %v2596 = vadd.f32 0.0, %v2595
      %v2597 = vpop.f32.mrb[0].mxu0
      %2598 = vmatprep.mubr.bf16.mxu0 0
      %2599 = vmatmul.mubr.bf16.gmra.mrb[0].mxu0 %v2428
      %v2600 = vpop.f32.mrb[0].mxu0
      %v2601 = vadd.f32 0.0, %v2600
      %v2602 = vpop.f32.mrb[0].mxu0
      %v2603 = vpop.f32.mrb[0].mxu0
      %v2604 = vadd.f32 0.0, %v2603
      %v2605 = vpop.f32.mrb[0].mxu0
      %2606 = vdwg.mxu0
      %v2607 = vadd.f32 %v2240, %v2465
      %v2608 = vadd.f32 %v2241, %v2468
      %v2609 = vadd.f32 %v2242, %v2473
      %v2610 = vadd.f32 %v2243, %v2476
      %v2611 = vadd.f32 %v2244, %v2481
      %v2612 = vadd.f32 %v2245, %v2484
      %v2613 = vadd.f32 %v2246, %v2489
      %v2614 = vadd.f32 %v2247, %v2492
      %v2615 = vadd.f32 %v2248, %v2497
      %v2616 = vadd.f32 %v2249, %v2500
      %v2617 = vadd.f32 %v2250, %v2505
      %v2618 = vadd.f32 %v2251, %v2508
      %v2619 = vadd.f32 %v2252, %v2513
      %v2620 = vadd.f32 %v2253, %v2516
      %v2621 = vadd.f32 %v2254, %v2521
      %v2622 = vadd.f32 %v2255, %v2524
      %v2623 = vadd.f32 %v2256, %v2529
      %v2624 = vadd.f32 %v2257, %v2532
      %v2625 = vadd.f32 %v2258, %v2537
      %v2626 = vadd.f32 %v2259, %v2540
      %v2627 = vadd.f32 %v2260, %v2545
      %v2628 = vadd.f32 %v2261, %v2548
      %v2629 = vadd.f32 %v2262, %v2553
      %v2630 = vadd.f32 %v2263, %v2556
      %v2631 = vadd.f32 %v2264, %v2561
      %v2632 = vadd.f32 %v2265, %v2564
      %v2633 = vadd.f32 %v2266, %v2569
      %v2634 = vadd.f32 %v2267, %v2572
      %v2635 = vadd.f32 %v2268, %v2577
      %v2636 = vadd.f32 %v2269, %v2580
      %v2637 = vadd.f32 %v2270, %v2585
      %v2638 = vadd.f32 %v2271, %v2588
      %v2639 = vadd.f32 %v2272, %v2593
      %v2640 = vadd.f32 %v2273, %v2596
      %v2641 = vadd.f32 %v2274, %v2601
      %v2642 = vadd.f32 %v2275, %v2604
      %s2643 = scalar_lea.vmem %s5, 80
      %v2644 = vld [vmem:[%s2643] sm:$0xf]
      %v2645 = vld [vmem:[%s2643 + $0x4] sm:$0xf]
      %v2646 = vld [vmem:[%s2643 + $0x8] sm:$0xf]
      %v2647 = vld [vmem:[%s2643 + $0xc] sm:$0xf]
      %vm2649 = vcmask 1045504
      %v2650 = vrot.slane %v1060, 2
      %v2651 = vrot.slane %v1061, 2
      %v2652 = vsel %vm2649, %v2650, %v2651
      %v2653 = vrot.slane %v1062, 2
      %v2654 = vsel %vm2649, %v2651, %v2653
      %v2655 = vrot.slane %v1063, 2
      %v2656 = vsel %vm2649, %v2653, %v2655
      %v2657 = vrot.slane %v1064, 2
      %v2658 = vsel %vm2649, %v2655, %v2657
      %v2659 = vrot.slane %v1065, 2
      %v2660 = vsel %vm2649, %v2657, %v2659
      %v2661 = vrot.slane %v1066, 2
      %v2662 = vsel %vm2649, %v2659, %v2661
      %v2663 = vrot.slane %v1067, 2
      %v2664 = vsel %vm2649, %v2661, %v2663
      %v2665 = vrot.slane %v1068, 2
      %v2666 = vsel %vm2649, %v2663, %v2665
      %v2667 = vrot.slane %v1069, 2
      %v2668 = vsel %vm2649, %v2665, %v2667
      %v2669 = vrot.slane %v1070, 2
      %v2670 = vsel %vm2649, %v2667, %v2669
      %v2671 = vrot.slane %v1071, 2
      %v2672 = vsel %vm2649, %v2669, %v2671
      %v2673 = vrot.slane %v1072, 2
      %v2674 = vsel %vm2649, %v2671, %v2673
      %v2675 = vrot.slane %v1073, 2
      %v2676 = vsel %vm2649, %v2673, %v2675
      %v2677 = vrot.slane %v1074, 2
      %v2678 = vsel %vm2649, %v2675, %v2677
      %v2679 = vrot.slane %v1075, 2
      %v2680 = vsel %vm2649, %v2677, %v2679
      %v2681 = vrot.slane %v1076, 2
      %v2682 = vsel %vm2649, %v2679, %v2681
      %v2683 = vrot.slane %v2036, 2
      %v2684 = vsel %vm2649, %v2681, %v2683
      %v2685 = vrot.slane %v2276, 2
      %v2686 = vsel %vm2649, %v2683, %v2685
      %v2691 = vunpack.c.l.b16 %v2644
      %v2692 = vunpack.c.l.b16 %v2645
      %v2693 = vunpack.c.l.b16 %v2646
      %v2694 = vunpack.c.l.b16 %v2647
      %v2695 = vpack.c.b16 %v2692, %v2691
      %v2696 = vpack.c.b16 %v2694, %v2693
      %v2700 = vsel %vm362, %v2652, 0
      %v2703 = vsel %vm362, %v2654, 0
      %v2706 = vsel %vm362, %v2656, 0
      %v2709 = vsel %vm362, %v2658, 0
      %v2712 = vsel %vm362, %v2660, 0
      %v2715 = vsel %vm362, %v2662, 0
      %v2718 = vsel %vm362, %v2664, 0
      %v2721 = vsel %vm362, %v2666, 0
      %v2724 = vsel %vm362, %v2668, 0
      %v2727 = vsel %vm362, %v2670, 0
      %v2730 = vsel %vm362, %v2672, 0
      %v2733 = vsel %vm362, %v2674, 0
      %v2736 = vsel %vm362, %v2676, 0
      %v2739 = vsel %vm362, %v2678, 0
      %v2742 = vsel %vm362, %v2680, 0
      %v2745 = vsel %vm362, %v2682, 0
      %v2748 = vsel %vm362, %v2684, 0
      %v2751 = vsel %vm362, %v2686, 0
      %2753 = vmatprep.subr.bf16.mxu0 0
      %2754 = vmatpush1.bf16.msra.mxu0 %v2695
      %2755 = vmatprep.subr.bf16.mxu0 0
      %2756 = vmatpush1.bf16.msra.mxu0 %v2696
      %2757 = vmatprep.subr.bf16.mxu0 0
      %2758 = vmatpush1.bf16.msra.mxu0 0
      %2759 = vmatprep.subr.bf16.mxu0 0
      %2760 = vmatpush1.bf16.msra.mxu0 0
      %2761 = vmatprep.subr.bf16.mxu0 0
      %2762 = vmatpush1.bf16.msra.mxu0 0
      %2763 = vmatprep.subr.bf16.mxu0 0
      %2764 = vmatpush1.bf16.msra.mxu0 0
      %2765 = vmatprep.subr.bf16.mxu0 0
      %2766 = vmatpush1.bf16.msra.mxu0 0
      %2767 = vmatprep.subr.bf16.mxu0 0
      %2768 = vmatpush1.bf16.msra.mxu0 0
      %2769 = vmatprep.subr.bf16.mxu0 0
      %2770 = vmatpush1.bf16.msra.mxu0 0
      %2771 = vmatprep.subr.bf16.mxu0 0
      %2772 = vmatpush1.bf16.msra.mxu0 0
      %2773 = vmatprep.subr.bf16.mxu0 0
      %2774 = vmatpush1.bf16.msra.mxu0 0
      %2775 = vmatprep.subr.bf16.mxu0 0
      %2776 = vmatpush1.bf16.msra.mxu0 0
      %2777 = vmatprep.subr.bf16.mxu0 0
      %2778 = vmatpush1.bf16.msra.mxu0 0
      %2779 = vmatprep.subr.bf16.mxu0 0
      %2780 = vmatpush1.bf16.msra.mxu0 0
      %2781 = vmatprep.subr.bf16.mxu0 0
      %2782 = vmatpush1.bf16.msra.mxu0 0
      %2783 = vmatprep.subr.bf16.mxu0 0
      %2784 = vmatpush1.bf16.msra.mxu0 0
      %2785 = vmatprep.mubr.bf16.mxu0 0
      %2786 = vmatmul.mubr.bf16.gmra.mrb[0].mxu0 %v2700
      %v2787 = vpop.f32.mrb[0].mxu0
      %v2788 = vadd.f32 0.0, %v2787
      %v2789 = vpop.f32.mrb[0].mxu0
      %v2790 = vpop.f32.mrb[0].mxu0
      %v2791 = vadd.f32 0.0, %v2790
      %v2792 = vpop.f32.mrb[0].mxu0
      %2793 = vmatprep.mubr.bf16.mxu0 0
      %2794 = vmatmul.mubr.bf16.gmra.mrb[0].mxu0 %v2703
      %v2795 = vpop.f32.mrb[0].mxu0
      %v2796 = vadd.f32 0.0, %v2795
      %v2797 = vpop.f32.mrb[0].mxu0
      %v2798 = vpop.f32.mrb[0].mxu0
      %v2799 = vadd.f32 0.0, %v2798
      %v2800 = vpop.f32.mrb[0].mxu0
      %2801 = vmatprep.mubr.bf16.mxu0 0
      %2802 = vmatmul.mubr.bf16.gmra.mrb[0].mxu0 %v2706
      %v2803 = vpop.f32.mrb[0].mxu0
      %v2804 = vadd.f32 0.0, %v2803
      %v2805 = vpop.f32.mrb[0].mxu0
      %v2806 = vpop.f32.mrb[0].mxu0
      %v2807 = vadd.f32 0.0, %v2806
      %v2808 = vpop.f32.mrb[0].mxu0
      %2809 = vmatprep.mubr.bf16.mxu0 0
      %2810 = vmatmul.mubr.bf16.gmra.mrb[0].mxu0 %v2709
      %v2811 = vpop.f32.mrb[0].mxu0
      %v2812 = vadd.f32 0.0, %v2811
      %v2813 = vpop.f32.mrb[0].mxu0
      %v2814 = vpop.f32.mrb[0].mxu0
      %v2815 = vadd.f32 0.0, %v2814
      %v2816 = vpop.f32.mrb[0].mxu0
      %2817 = vmatprep.mubr.bf16.mxu0 0
      %2818 = vmatmul.mubr.bf16.gmra.mrb[0].mxu0 %v2712
      %v2819 = vpop.f32.mrb[0].mxu0
      %v2820 = vadd.f32 0.0, %v2819
      %v2821 = vpop.f32.mrb[0].mxu0
      %v2822 = vpop.f32.mrb[0].mxu0
      %v2823 = vadd.f32 0.0, %v2822
      %v2824 = vpop.f32.mrb[0].mxu0
      %2825 = vmatprep.mubr.bf16.mxu0 0
      %2826 = vmatmul.mubr.bf16.gmra.mrb[0].mxu0 %v2715
      %v2827 = vpop.f32.mrb[0].mxu0
      %v2828 = vadd.f32 0.0, %v2827
      %v2829 = vpop.f32.mrb[0].mxu0
      %v2830 = vpop.f32.mrb[0].mxu0
      %v2831 = vadd.f32 0.0, %v2830
      %v2832 = vpop.f32.mrb[0].mxu0
      %2833 = vmatprep.mubr.bf16.mxu0 0
      %2834 = vmatmul.mubr.bf16.gmra.mrb[0].mxu0 %v2718
      %v2835 = vpop.f32.mrb[0].mxu0
      %v2836 = vadd.f32 0.0, %v2835
      %v2837 = vpop.f32.mrb[0].mxu0
      %v2838 = vpop.f32.mrb[0].mxu0
      %v2839 = vadd.f32 0.0, %v2838
      %v2840 = vpop.f32.mrb[0].mxu0
      %2841 = vmatprep.mubr.bf16.mxu0 0
      %2842 = vmatmul.mubr.bf16.gmra.mrb[0].mxu0 %v2721
      %v2843 = vpop.f32.mrb[0].mxu0
      %v2844 = vadd.f32 0.0, %v2843
      %v2845 = vpop.f32.mrb[0].mxu0
      %v2846 = vpop.f32.mrb[0].mxu0
      %v2847 = vadd.f32 0.0, %v2846
      %v2848 = vpop.f32.mrb[0].mxu0
      %2849 = vmatprep.mubr.bf16.mxu0 0
      %2850 = vmatmul.mubr.bf16.gmra.mrb[0].mxu0 %v2724
      %v2851 = vpop.f32.mrb[0].mxu0
      %v2852 = vadd.f32 0.0, %v2851
      %v2853 = vpop.f32.mrb[0].mxu0
      %v2854 = vpop.f32.mrb[0].mxu0
      %v2855 = vadd.f32 0.0, %v2854
      %v2856 = vpop.f32.mrb[0].mxu0
      %2857 = vmatprep.mubr.bf16.mxu0 0
      %2858 = vmatmul.mubr.bf16.gmra.mrb[0].mxu0 %v2727
      %v2859 = vpop.f32.mrb[0].mxu0
      %v2860 = vadd.f32 0.0, %v2859
      %v2861 = vpop.f32.mrb[0].mxu0
      %v2862 = vpop.f32.mrb[0].mxu0
      %v2863 = vadd.f32 0.0, %v2862
      %v2864 = vpop.f32.mrb[0].mxu0
      %2865 = vmatprep.mubr.bf16.mxu0 0
      %2866 = vmatmul.mubr.bf16.gmra.mrb[0].mxu0 %v2730
      %v2867 = vpop.f32.mrb[0].mxu0
      %v2868 = vadd.f32 0.0, %v2867
      %v2869 = vpop.f32.mrb[0].mxu0
      %v2870 = vpop.f32.mrb[0].mxu0
      %v2871 = vadd.f32 0.0, %v2870
      %v2872 = vpop.f32.mrb[0].mxu0
      %2873 = vmatprep.mubr.bf16.mxu0 0
      %2874 = vmatmul.mubr.bf16.gmra.mrb[0].mxu0 %v2733
      %v2875 = vpop.f32.mrb[0].mxu0
      %v2876 = vadd.f32 0.0, %v2875
      %v2877 = vpop.f32.mrb[0].mxu0
      %v2878 = vpop.f32.mrb[0].mxu0
      %v2879 = vadd.f32 0.0, %v2878
      %v2880 = vpop.f32.mrb[0].mxu0
      %2881 = vmatprep.mubr.bf16.mxu0 0
      %2882 = vmatmul.mubr.bf16.gmra.mrb[0].mxu0 %v2736
      %v2883 = vpop.f32.mrb[0].mxu0
      %v2884 = vadd.f32 0.0, %v2883
      %v2885 = vpop.f32.mrb[0].mxu0
      %v2886 = vpop.f32.mrb[0].mxu0
      %v2887 = vadd.f32 0.0, %v2886
      %v2888 = vpop.f32.mrb[0].mxu0
      %2889 = vmatprep.mubr.bf16.mxu0 0
      %2890 = vmatmul.mubr.bf16.gmra.mrb[0].mxu0 %v2739
      %v2891 = vpop.f32.mrb[0].mxu0
      %v2892 = vadd.f32 0.0, %v2891
      %v2893 = vpop.f32.mrb[0].mxu0
      %v2894 = vpop.f32.mrb[0].mxu0
      %v2895 = vadd.f32 0.0, %v2894
      %v2896 = vpop.f32.mrb[0].mxu0
      %2897 = vmatprep.mubr.bf16.mxu0 0
      %2898 = vmatmul.mubr.bf16.gmra.mrb[0].mxu0 %v2742
      %v2899 = vpop.f32.mrb[0].mxu0
      %v2900 = vadd.f32 0.0, %v2899
      %v2901 = vpop.f32.mrb[0].mxu0
      %v2902 = vpop.f32.mrb[0].mxu0
      %v2903 = vadd.f32 0.0, %v2902
      %v2904 = vpop.f32.mrb[0].mxu0
      %2905 = vmatprep.mubr.bf16.mxu0 0
      %2906 = vmatmul.mubr.bf16.gmra.mrb[0].mxu0 %v2745
      %v2907 = vpop.f32.mrb[0].mxu0
      %v2908 = vadd.f32 0.0, %v2907
      %v2909 = vpop.f32.mrb[0].mxu0
      %v2910 = vpop.f32.mrb[0].mxu0
      %v2911 = vadd.f32 0.0, %v2910
      %v2912 = vpop.f32.mrb[0].mxu0
      %2913 = vmatprep.mubr.bf16.mxu0 0
      %2914 = vmatmul.mubr.bf16.gmra.mrb[0].mxu0 %v2748
      %v2915 = vpop.f32.mrb[0].mxu0
      %v2916 = vadd.f32 0.0, %v2915
      %v2917 = vpop.f32.mrb[0].mxu0
      %v2918 = vpop.f32.mrb[0].mxu0
      %v2919 = vadd.f32 0.0, %v2918
      %v2920 = vpop.f32.mrb[0].mxu0
      %2921 = vmatprep.mubr.bf16.mxu0 0
      %2922 = vmatmul.mubr.bf16.gmra.mrb[0].mxu0 %v2751
      %v2923 = vpop.f32.mrb[0].mxu0
      %v2924 = vadd.f32 0.0, %v2923
      %v2925 = vpop.f32.mrb[0].mxu0
      %v2926 = vpop.f32.mrb[0].mxu0
      %v2927 = vadd.f32 0.0, %v2926
      %v2928 = vpop.f32.mrb[0].mxu0
      %2929 = vdwg.mxu0
      %v2930 = vadd.f32 %v2607, %v2788
      %v2931 = vadd.f32 %v2608, %v2791
      %v2932 = vadd.f32 %v2609, %v2796
      %v2933 = vadd.f32 %v2610, %v2799
      %v2934 = vadd.f32 %v2611, %v2804
      %v2935 = vadd.f32 %v2612, %v2807
      %v2936 = vadd.f32 %v2613, %v2812
      %v2937 = vadd.f32 %v2614, %v2815
      %v2938 = vadd.f32 %v2615, %v2820
      %v2939 = vadd.f32 %v2616, %v2823
      %v2940 = vadd.f32 %v2617, %v2828
      %v2941 = vadd.f32 %v2618, %v2831
      %v2942 = vadd.f32 %v2619, %v2836
      %v2943 = vadd.f32 %v2620, %v2839
      %v2944 = vadd.f32 %v2621, %v2844
      %v2945 = vadd.f32 %v2622, %v2847
      %v2946 = vadd.f32 %v2623, %v2852
      %v2947 = vadd.f32 %v2624, %v2855
      %v2948 = vadd.f32 %v2625, %v2860
      %v2949 = vadd.f32 %v2626, %v2863
      %v2950 = vadd.f32 %v2627, %v2868
      %v2951 = vadd.f32 %v2628, %v2871
      %v2952 = vadd.f32 %v2629, %v2876
      %v2953 = vadd.f32 %v2630, %v2879
      %v2954 = vadd.f32 %v2631, %v2884
      %v2955 = vadd.f32 %v2632, %v2887
      %v2956 = vadd.f32 %v2633, %v2892
      %v2957 = vadd.f32 %v2634, %v2895
      %v2958 = vadd.f32 %v2635, %v2900
      %v2959 = vadd.f32 %v2636, %v2903
      %v2960 = vadd.f32 %v2637, %v2908
      %v2961 = vadd.f32 %v2638, %v2911
      %v2962 = vadd.f32 %v2639, %v2916
      %v2963 = vadd.f32 %v2640, %v2919
      %v2964 = vadd.f32 %v2641, %v2924
      %v2965 = vadd.f32 %v2642, %v2927
      %v2966 = vpack.c.bf16 %v1057, %v1056
      %v2967 = vpack.c.bf16 %v1058, %v1058
      %s2968 = scalar_lea.vmem %s5, 96
      %v2969 = vld [vmem:[%s2968] sm:$0xf]
      %v2970 = vld [vmem:[%s2968 + $0x4] sm:$0xf]
      %v2971 = vld [vmem:[%s2968 + $0x8] sm:$0xf]
      %v2972 = vld [vmem:[%s2968 + $0xc] sm:$0xf]
      %v2975 = vrot.slane %v2966, 2
      %v2976 = vsel %vm2649, %v2683, %v2975
      %v2977 = vrot.slane %v2967, 2
      %v2978 = vsel %vm2649, %v2975, %v2977
      %v2983 = vunpack.c.l.b16 %v2969
      %v2984 = vunpack.c.l.b16 %v2970
      %v2985 = vunpack.c.l.b16 %v2971
      %v2986 = vunpack.c.l.b16 %v2972
      %v2987 = vpack.c.b16 %v2984, %v2983
      %v2988 = vpack.c.b16 %v2986, %v2985
      %v2992 = vsel %vm362, %v2976, 0
      %v2995 = vsel %vm362, %v2978, 0
      %2997 = vmatprep.subr.bf16.mxu0 0
      %2998 = vmatpush1.bf16.msra.mxu0 %v2987
      %2999 = vmatprep.subr.bf16.mxu0 0
      %3000 = vmatpush1.bf16.msra.mxu0 %v2988
      %3001 = vmatprep.subr.bf16.mxu0 0
      %3002 = vmatpush1.bf16.msra.mxu0 0
      %3003 = vmatprep.subr.bf16.mxu0 0
      %3004 = vmatpush1.bf16.msra.mxu0 0
      %3005 = vmatprep.subr.bf16.mxu0 0
      %3006 = vmatpush1.bf16.msra.mxu0 0
      %3007 = vmatprep.subr.bf16.mxu0 0
      %3008 = vmatpush1.bf16.msra.mxu0 0
      %3009 = vmatprep.subr.bf16.mxu0 0
      %3010 = vmatpush1.bf16.msra.mxu0 0
      %3011 = vmatprep.subr.bf16.mxu0 0
      %3012 = vmatpush1.bf16.msra.mxu0 0
      %3013 = vmatprep.subr.bf16.mxu0 0
      %3014 = vmatpush1.bf16.msra.mxu0 0
      %3015 = vmatprep.subr.bf16.mxu0 0
      %3016 = vmatpush1.bf16.msra.mxu0 0
      %3017 = vmatprep.subr.bf16.mxu0 0
      %3018 = vmatpush1.bf16.msra.mxu0 0
      %3019 = vmatprep.subr.bf16.mxu0 0
      %3020 = vmatpush1.bf16.msra.mxu0 0
      %3021 = vmatprep.subr.bf16.mxu0 0
      %3022 = vmatpush1.bf16.msra.mxu0 0
      %3023 = vmatprep.subr.bf16.mxu0 0
      %3024 = vmatpush1.bf16.msra.mxu0 0
      %3025 = vmatprep.subr.bf16.mxu0 0
      %3026 = vmatpush1.bf16.msra.mxu0 0
      %3027 = vmatprep.subr.bf16.mxu0 0
      %3028 = vmatpush1.bf16.msra.mxu0 0
      %3029 = vmatprep.mubr.bf16.mxu0 0
      %3030 = vmatmul.mubr.bf16.gmra.mrb[0].mxu0 %v2703
      %v3031 = vpop.f32.mrb[0].mxu0
      %v3032 = vadd.f32 0.0, %v3031
      %v3033 = vpop.f32.mrb[0].mxu0
      %v3034 = vpop.f32.mrb[0].mxu0
      %v3035 = vadd.f32 0.0, %v3034
      %v3036 = vpop.f32.mrb[0].mxu0
      %3037 = vmatprep.mubr.bf16.mxu0 0
      %3038 = vmatmul.mubr.bf16.gmra.mrb[0].mxu0 %v2706
      %v3039 = vpop.f32.mrb[0].mxu0
      %v3040 = vadd.f32 0.0, %v3039
      %v3041 = vpop.f32.mrb[0].mxu0
      %v3042 = vpop.f32.mrb[0].mxu0
      %v3043 = vadd.f32 0.0, %v3042
      %v3044 = vpop.f32.mrb[0].mxu0
      %3045 = vmatprep.mubr.bf16.mxu0 0
      %3046 = vmatmul.mubr.bf16.gmra.mrb[0].mxu0 %v2709
      %v3047 = vpop.f32.mrb[0].mxu0
      %v3048 = vadd.f32 0.0, %v3047
      %v3049 = vpop.f32.mrb[0].mxu0
      %v3050 = vpop.f32.mrb[0].mxu0
      %v3051 = vadd.f32 0.0, %v3050
      %v3052 = vpop.f32.mrb[0].mxu0
      %3053 = vmatprep.mubr.bf16.mxu0 0
      %3054 = vmatmul.mubr.bf16.gmra.mrb[0].mxu0 %v2712
      %v3055 = vpop.f32.mrb[0].mxu0
      %v3056 = vadd.f32 0.0, %v3055
      %v3057 = vpop.f32.mrb[0].mxu0
      %v3058 = vpop.f32.mrb[0].mxu0
      %v3059 = vadd.f32 0.0, %v3058
      %v3060 = vpop.f32.mrb[0].mxu0
      %3061 = vmatprep.mubr.bf16.mxu0 0
      %3062 = vmatmul.mubr.bf16.gmra.mrb[0].mxu0 %v2715
      %v3063 = vpop.f32.mrb[0].mxu0
      %v3064 = vadd.f32 0.0, %v3063
      %v3065 = vpop.f32.mrb[0].mxu0
      %v3066 = vpop.f32.mrb[0].mxu0
      %v3067 = vadd.f32 0.0, %v3066
      %v3068 = vpop.f32.mrb[0].mxu0
      %3069 = vmatprep.mubr.bf16.mxu0 0
      %3070 = vmatmul.mubr.bf16.gmra.mrb[0].mxu0 %v2718
      %v3071 = vpop.f32.mrb[0].mxu0
      %v3072 = vadd.f32 0.0, %v3071
      %v3073 = vpop.f32.mrb[0].mxu0
      %v3074 = vpop.f32.mrb[0].mxu0
      %v3075 = vadd.f32 0.0, %v3074
      %v3076 = vpop.f32.mrb[0].mxu0
      %3077 = vmatprep.mubr.bf16.mxu0 0
      %3078 = vmatmul.mubr.bf16.gmra.mrb[0].mxu0 %v2721
      %v3079 = vpop.f32.mrb[0].mxu0
      %v3080 = vadd.f32 0.0, %v3079
      %v3081 = vpop.f32.mrb[0].mxu0
      %v3082 = vpop.f32.mrb[0].mxu0
      %v3083 = vadd.f32 0.0, %v3082
      %v3084 = vpop.f32.mrb[0].mxu0
      %3085 = vmatprep.mubr.bf16.mxu0 0
      %3086 = vmatmul.mubr.bf16.gmra.mrb[0].mxu0 %v2724
      %v3087 = vpop.f32.mrb[0].mxu0
      %v3088 = vadd.f32 0.0, %v3087
      %v3089 = vpop.f32.mrb[0].mxu0
      %v3090 = vpop.f32.mrb[0].mxu0
      %v3091 = vadd.f32 0.0, %v3090
      %v3092 = vpop.f32.mrb[0].mxu0
      %3093 = vmatprep.mubr.bf16.mxu0 0
      %3094 = vmatmul.mubr.bf16.gmra.mrb[0].mxu0 %v2727
      %v3095 = vpop.f32.mrb[0].mxu0
      %v3096 = vadd.f32 0.0, %v3095
      %v3097 = vpop.f32.mrb[0].mxu0
      %v3098 = vpop.f32.mrb[0].mxu0
      %v3099 = vadd.f32 0.0, %v3098
      %v3100 = vpop.f32.mrb[0].mxu0
      %3101 = vmatprep.mubr.bf16.mxu0 0
      %3102 = vmatmul.mubr.bf16.gmra.mrb[0].mxu0 %v2730
      %v3103 = vpop.f32.mrb[0].mxu0
      %v3104 = vadd.f32 0.0, %v3103
      %v3105 = vpop.f32.mrb[0].mxu0
      %v3106 = vpop.f32.mrb[0].mxu0
      %v3107 = vadd.f32 0.0, %v3106
      %v3108 = vpop.f32.mrb[0].mxu0
      %3109 = vmatprep.mubr.bf16.mxu0 0
      %3110 = vmatmul.mubr.bf16.gmra.mrb[0].mxu0 %v2733
      %v3111 = vpop.f32.mrb[0].mxu0
      %v3112 = vadd.f32 0.0, %v3111
      %v3113 = vpop.f32.mrb[0].mxu0
      %v3114 = vpop.f32.mrb[0].mxu0
      %v3115 = vadd.f32 0.0, %v3114
      %v3116 = vpop.f32.mrb[0].mxu0
      %3117 = vmatprep.mubr.bf16.mxu0 0
      %3118 = vmatmul.mubr.bf16.gmra.mrb[0].mxu0 %v2736
      %v3119 = vpop.f32.mrb[0].mxu0
      %v3120 = vadd.f32 0.0, %v3119
      %v3121 = vpop.f32.mrb[0].mxu0
      %v3122 = vpop.f32.mrb[0].mxu0
      %v3123 = vadd.f32 0.0, %v3122
      %v3124 = vpop.f32.mrb[0].mxu0
      %3125 = vmatprep.mubr.bf16.mxu0 0
      %3126 = vmatmul.mubr.bf16.gmra.mrb[0].mxu0 %v2739
      %v3127 = vpop.f32.mrb[0].mxu0
      %v3128 = vadd.f32 0.0, %v3127
      %v3129 = vpop.f32.mrb[0].mxu0
      %v3130 = vpop.f32.mrb[0].mxu0
      %v3131 = vadd.f32 0.0, %v3130
      %v3132 = vpop.f32.mrb[0].mxu0
      %3133 = vmatprep.mubr.bf16.mxu0 0
      %3134 = vmatmul.mubr.bf16.gmra.mrb[0].mxu0 %v2742
      %v3135 = vpop.f32.mrb[0].mxu0
      %v3136 = vadd.f32 0.0, %v3135
      %v3137 = vpop.f32.mrb[0].mxu0
      %v3138 = vpop.f32.mrb[0].mxu0
      %v3139 = vadd.f32 0.0, %v3138
      %v3140 = vpop.f32.mrb[0].mxu0
      %3141 = vmatprep.mubr.bf16.mxu0 0
      %3142 = vmatmul.mubr.bf16.gmra.mrb[0].mxu0 %v2745
      %v3143 = vpop.f32.mrb[0].mxu0
      %v3144 = vadd.f32 0.0, %v3143
      %v3145 = vpop.f32.mrb[0].mxu0
      %v3146 = vpop.f32.mrb[0].mxu0
      %v3147 = vadd.f32 0.0, %v3146
      %v3148 = vpop.f32.mrb[0].mxu0
      %3149 = vmatprep.mubr.bf16.mxu0 0
      %3150 = vmatmul.mubr.bf16.gmra.mrb[0].mxu0 %v2748
      %v3151 = vpop.f32.mrb[0].mxu0
      %v3152 = vadd.f32 0.0, %v3151
      %v3153 = vpop.f32.mrb[0].mxu0
      %v3154 = vpop.f32.mrb[0].mxu0
      %v3155 = vadd.f32 0.0, %v3154
      %v3156 = vpop.f32.mrb[0].mxu0
      %3157 = vmatprep.mubr.bf16.mxu0 0
      %3158 = vmatmul.mubr.bf16.gmra.mrb[0].mxu0 %v2992
      %v3159 = vpop.f32.mrb[0].mxu0
      %v3160 = vadd.f32 0.0, %v3159
      %v3161 = vpop.f32.mrb[0].mxu0
      %v3162 = vpop.f32.mrb[0].mxu0
      %v3163 = vadd.f32 0.0, %v3162
      %v3164 = vpop.f32.mrb[0].mxu0
      %3165 = vmatprep.mubr.bf16.mxu0 0
      %3166 = vmatmul.mubr.bf16.gmra.mrb[0].mxu0 %v2995
      %v3167 = vpop.f32.mrb[0].mxu0
      %v3168 = vadd.f32 0.0, %v3167
      %v3169 = vpop.f32.mrb[0].mxu0
      %v3170 = vpop.f32.mrb[0].mxu0
      %v3171 = vadd.f32 0.0, %v3170
      %v3172 = vpop.f32.mrb[0].mxu0
      %3173 = vdwg.mxu0
      %v3174 = vadd.f32 %v2930, %v3032
      %v3175 = vadd.f32 %v2931, %v3035
      %v3176 = vadd.f32 %v2932, %v3040
      %v3177 = vadd.f32 %v2933, %v3043
      %v3178 = vadd.f32 %v2934, %v3048
      %v3179 = vadd.f32 %v2935, %v3051
      %v3180 = vadd.f32 %v2936, %v3056
      %v3181 = vadd.f32 %v2937, %v3059
      %v3182 = vadd.f32 %v2938, %v3064
      %v3183 = vadd.f32 %v2939, %v3067
      %v3184 = vadd.f32 %v2940, %v3072
      %v3185 = vadd.f32 %v2941, %v3075
      %v3186 = vadd.f32 %v2942, %v3080
      %v3187 = vadd.f32 %v2943, %v3083
      %v3188 = vadd.f32 %v2944, %v3088
      %v3189 = vadd.f32 %v2945, %v3091
      %v3190 = vadd.f32 %v2946, %v3096
      %v3191 = vadd.f32 %v2947, %v3099
      %v3192 = vadd.f32 %v2948, %v3104
      %v3193 = vadd.f32 %v2949, %v3107
      %v3194 = vadd.f32 %v2950, %v3112
      %v3195 = vadd.f32 %v2951, %v3115
      %v3196 = vadd.f32 %v2952, %v3120
      %v3197 = vadd.f32 %v2953, %v3123
      %v3198 = vadd.f32 %v2954, %v3128
      %v3199 = vadd.f32 %v2955, %v3131
      %v3200 = vadd.f32 %v2956, %v3136
      %v3201 = vadd.f32 %v2957, %v3139
      %v3202 = vadd.f32 %v2958, %v3144
      %v3203 = vadd.f32 %v2959, %v3147
      %v3204 = vadd.f32 %v2960, %v3152
      %v3205 = vadd.f32 %v2961, %v3155
      %v3206 = vadd.f32 %v2962, %v3160
      %v3207 = vadd.f32 %v2963, %v3163
      %v3208 = vadd.f32 %v2964, %v3168
      %v3209 = vadd.f32 %v2965, %v3171
      %s3210 = scalar_lea.vmem %s5, 112
      %v3211 = vld [vmem:[%s3210] sm:$0xf]
      %v3212 = vld [vmem:[%s3210 + $0x4] sm:$0xf]
      %v3213 = vld [vmem:[%s3210 + $0x8] sm:$0xf]
      %v3214 = vld [vmem:[%s3210 + $0xc] sm:$0xf]
      %vm3215 = vsmask.f32 5376
      %v3216 = vrot.slane %v1107, 2
      %v3217 = vrot.slane %v1103, 3
      %v3218 = vor.u32 %v3216, %v3217
      %v3219 = vrot.slane %v1115, 2
      %v3220 = vrot.slane %v1111, 3
      %v3221 = vor.u32 %v3219, %v3220
      %v3222 = vsel %vm3215, %v3218, %v3221
      %v3223 = vrot.slane %v1123, 2
      %v3224 = vrot.slane %v1119, 3
      %v3225 = vor.u32 %v3223, %v3224
      %v3226 = vsel %vm3215, %v3221, %v3225
      %v3227 = vrot.slane %v1131, 2
      %v3228 = vrot.slane %v1127, 3
      %v3229 = vor.u32 %v3227, %v3228
      %v3230 = vsel %vm3215, %v3225, %v3229
      %v3231 = vrot.slane %v1139, 2
      %v3232 = vrot.slane %v1135, 3
      %v3233 = vor.u32 %v3231, %v3232
      %v3234 = vsel %vm3215, %v3229, %v3233
      %v3235 = vrot.slane %v1147, 2
      %v3236 = vrot.slane %v1143, 3
      %v3237 = vor.u32 %v3235, %v3236
      %v3238 = vsel %vm3215, %v3233, %v3237
      %v3239 = vrot.slane %v1155, 2
      %v3240 = vrot.slane %v1151, 3
      %v3241 = vor.u32 %v3239, %v3240
      %v3242 = vsel %vm3215, %v3237, %v3241
      %v3243 = vrot.slane %v1163, 2
      %v3244 = vrot.slane %v1159, 3
      %v3245 = vor.u32 %v3243, %v3244
      %v3246 = vsel %vm3215, %v3241, %v3245
      %v3247 = vrot.slane %v1171, 2
      %v3248 = vrot.slane %v1167, 3
      %v3249 = vor.u32 %v3247, %v3248
      %v3250 = vsel %vm3215, %v3245, %v3249
      %v3251 = vrot.slane %v1179, 2
      %v3252 = vrot.slane %v1175, 3
      %v3253 = vor.u32 %v3251, %v3252
      %v3254 = vsel %vm3215, %v3249, %v3253
      %v3255 = vrot.slane %v1187, 2
      %v3256 = vrot.slane %v1183, 3
      %v3257 = vor.u32 %v3255, %v3256
      %v3258 = vsel %vm3215, %v3253, %v3257
      %v3259 = vrot.slane %v1195, 2
      %v3260 = vrot.slane %v1191, 3
      %v3261 = vor.u32 %v3259, %v3260
      %v3262 = vsel %vm3215, %v3257, %v3261
      %v3263 = vrot.slane %v1203, 2
      %v3264 = vrot.slane %v1199, 3
      %v3265 = vor.u32 %v3263, %v3264
      %v3266 = vsel %vm3215, %v3261, %v3265
      %v3267 = vrot.slane %v1211, 2
      %v3268 = vrot.slane %v1207, 3
      %v3269 = vor.u32 %v3267, %v3268
      %v3270 = vsel %vm3215, %v3265, %v3269
      %v3271 = vrot.slane %v1219, 2
      %v3272 = vrot.slane %v1215, 3
      %v3273 = vor.u32 %v3271, %v3272
      %v3274 = vsel %vm3215, %v3269, %v3273
      %v3275 = vrot.slane %v1227, 2
      %v3276 = vrot.slane %v1223, 3
      %v3277 = vor.u32 %v3275, %v3276
      %v3278 = vsel %vm3215, %v3273, %v3277
      %v3279 = vrot.slane %v2351, 2
      %v3280 = vrot.slane %v2354, 3
      %v3281 = vor.u32 %v3279, %v3280
      %v3282 = vsel %vm3215, %v3277, %v3281
      %v3284 = vshrl.u32 %v2966, 16
      %v3286 = vrot.slane %v3284, 2
      %v3287 = vshll.u32 %v2966, 16
      %v3289 = vrot.slane %v3287, 3
      %v3290 = vor.u32 %v3286, %v3289
      %v3291 = vsel %vm3215, %v3281, %v3290
      %v3293 = vshrl.u32 %v2967, 16
      %v3295 = vrot.slane %v3293, 2
      %v3296 = vshll.u32 %v2967, 16
      %v3298 = vrot.slane %v3296, 3
      %v3299 = vor.u32 %v3295, %v3298
      %v3300 = vsel %vm3215, %v3290, %v3299
      %v3305 = vunpack.c.l.b16 %v3211
      %v3306 = vunpack.c.l.b16 %v3212
      %v3307 = vunpack.c.l.b16 %v3213
      %v3308 = vunpack.c.l.b16 %v3214
      %v3309 = vpack.c.b16 %v3306, %v3305
      %v3310 = vpack.c.b16 %v3308, %v3307
      %v3314 = vsel %vm362, %v3222, 0
      %v3317 = vsel %vm362, %v3226, 0
      %v3320 = vsel %vm362, %v3230, 0
      %v3323 = vsel %vm362, %v3234, 0
      %v3326 = vsel %vm362, %v3238, 0
      %v3329 = vsel %vm362, %v3242, 0
      %v3332 = vsel %vm362, %v3246, 0
      %v3335 = vsel %vm362, %v3250, 0
      %v3338 = vsel %vm362, %v3254, 0
      %v3341 = vsel %vm362, %v3258, 0
      %v3344 = vsel %vm362, %v3262, 0
      %v3347 = vsel %vm362, %v3266, 0
      %v3350 = vsel %vm362, %v3270, 0
      %v3353 = vsel %vm362, %v3274, 0
      %v3356 = vsel %vm362, %v3278, 0
      %v3359 = vsel %vm362, %v3282, 0
      %v3362 = vsel %vm362, %v3291, 0
      %v3365 = vsel %vm362, %v3300, 0
      %3367 = vmatprep.subr.bf16.mxu0 0
      %3368 = vmatpush1.bf16.msra.mxu0 %v3309
      %3369 = vmatprep.subr.bf16.mxu0 0
      %3370 = vmatpush1.bf16.msra.mxu0 %v3310
      %3371 = vmatprep.subr.bf16.mxu0 0
      %3372 = vmatpush1.bf16.msra.mxu0 0
      %3373 = vmatprep.subr.bf16.mxu0 0
      %3374 = vmatpush1.bf16.msra.mxu0 0
      %3375 = vmatprep.subr.bf16.mxu0 0
      %3376 = vmatpush1.bf16.msra.mxu0 0
      %3377 = vmatprep.subr.bf16.mxu0 0
      %3378 = vmatpush1.bf16.msra.mxu0 0
      %3379 = vmatprep.subr.bf16.mxu0 0
      %3380 = vmatpush1.bf16.msra.mxu0 0
      %3381 = vmatprep.subr.bf16.mxu0 0
      %3382 = vmatpush1.bf16.msra.mxu0 0
      %3383 = vmatprep.subr.bf16.mxu0 0
      %3384 = vmatpush1.bf16.msra.mxu0 0
      %3385 = vmatprep.subr.bf16.mxu0 0
      %3386 = vmatpush1.bf16.msra.mxu0 0
      %3387 = vmatprep.subr.bf16.mxu0 0
      %3388 = vmatpush1.bf16.msra.mxu0 0
      %3389 = vmatprep.subr.bf16.mxu0 0
      %3390 = vmatpush1.bf16.msra.mxu0 0
      %3391 = vmatprep.subr.bf16.mxu0 0
      %3392 = vmatpush1.bf16.msra.mxu0 0
      %3393 = vmatprep.subr.bf16.mxu0 0
      %3394 = vmatpush1.bf16.msra.mxu0 0
      %3395 = vmatprep.subr.bf16.mxu0 0
      %3396 = vmatpush1.bf16.msra.mxu0 0
      %3397 = vmatprep.subr.bf16.mxu0 0
      %3398 = vmatpush1.bf16.msra.mxu0 0
      %3399 = vmatprep.mubr.bf16.mxu0 0
      %3400 = vmatmul.mubr.bf16.gmra.mrb[0].mxu0 %v3314
      %v3401 = vpop.f32.mrb[0].mxu0
      %v3402 = vadd.f32 0.0, %v3401
      %v3403 = vpop.f32.mrb[0].mxu0
      %v3404 = vpop.f32.mrb[0].mxu0
      %v3405 = vadd.f32 0.0, %v3404
      %v3406 = vpop.f32.mrb[0].mxu0
      %3407 = vmatprep.mubr.bf16.mxu0 0
      %3408 = vmatmul.mubr.bf16.gmra.mrb[0].mxu0 %v3317
      %v3409 = vpop.f32.mrb[0].mxu0
      %v3410 = vadd.f32 0.0, %v3409
      %v3411 = vpop.f32.mrb[0].mxu0
      %v3412 = vpop.f32.mrb[0].mxu0
      %v3413 = vadd.f32 0.0, %v3412
      %v3414 = vpop.f32.mrb[0].mxu0
      %3415 = vmatprep.mubr.bf16.mxu0 0
      %3416 = vmatmul.mubr.bf16.gmra.mrb[0].mxu0 %v3320
      %v3417 = vpop.f32.mrb[0].mxu0
      %v3418 = vadd.f32 0.0, %v3417
      %v3419 = vpop.f32.mrb[0].mxu0
      %v3420 = vpop.f32.mrb[0].mxu0
      %v3421 = vadd.f32 0.0, %v3420
      %v3422 = vpop.f32.mrb[0].mxu0
      %3423 = vmatprep.mubr.bf16.mxu0 0
      %3424 = vmatmul.mubr.bf16.gmra.mrb[0].mxu0 %v3323
      %v3425 = vpop.f32.mrb[0].mxu0
      %v3426 = vadd.f32 0.0, %v3425
      %v3427 = vpop.f32.mrb[0].mxu0
      %v3428 = vpop.f32.mrb[0].mxu0
      %v3429 = vadd.f32 0.0, %v3428
      %v3430 = vpop.f32.mrb[0].mxu0
      %3431 = vmatprep.mubr.bf16.mxu0 0
      %3432 = vmatmul.mubr.bf16.gmra.mrb[0].mxu0 %v3326
      %v3433 = vpop.f32.mrb[0].mxu0
      %v3434 = vadd.f32 0.0, %v3433
      %v3435 = vpop.f32.mrb[0].mxu0
      %v3436 = vpop.f32.mrb[0].mxu0
      %v3437 = vadd.f32 0.0, %v3436
      %v3438 = vpop.f32.mrb[0].mxu0
      %3439 = vmatprep.mubr.bf16.mxu0 0
      %3440 = vmatmul.mubr.bf16.gmra.mrb[0].mxu0 %v3329
      %v3441 = vpop.f32.mrb[0].mxu0
      %v3442 = vadd.f32 0.0, %v3441
      %v3443 = vpop.f32.mrb[0].mxu0
      %v3444 = vpop.f32.mrb[0].mxu0
      %v3445 = vadd.f32 0.0, %v3444
      %v3446 = vpop.f32.mrb[0].mxu0
      %3447 = vmatprep.mubr.bf16.mxu0 0
      %3448 = vmatmul.mubr.bf16.gmra.mrb[0].mxu0 %v3332
      %v3449 = vpop.f32.mrb[0].mxu0
      %v3450 = vadd.f32 0.0, %v3449
      %v3451 = vpop.f32.mrb[0].mxu0
      %v3452 = vpop.f32.mrb[0].mxu0
      %v3453 = vadd.f32 0.0, %v3452
      %v3454 = vpop.f32.mrb[0].mxu0
      %3455 = vmatprep.mubr.bf16.mxu0 0
      %3456 = vmatmul.mubr.bf16.gmra.mrb[0].mxu0 %v3335
      %v3457 = vpop.f32.mrb[0].mxu0
      %v3458 = vadd.f32 0.0, %v3457
      %v3459 = vpop.f32.mrb[0].mxu0
      %v3460 = vpop.f32.mrb[0].mxu0
      %v3461 = vadd.f32 0.0, %v3460
      %v3462 = vpop.f32.mrb[0].mxu0
      %3463 = vmatprep.mubr.bf16.mxu0 0
      %3464 = vmatmul.mubr.bf16.gmra.mrb[0].mxu0 %v3338
      %v3465 = vpop.f32.mrb[0].mxu0
      %v3466 = vadd.f32 0.0, %v3465
      %v3467 = vpop.f32.mrb[0].mxu0
      %v3468 = vpop.f32.mrb[0].mxu0
      %v3469 = vadd.f32 0.0, %v3468
      %v3470 = vpop.f32.mrb[0].mxu0
      %3471 = vmatprep.mubr.bf16.mxu0 0
      %3472 = vmatmul.mubr.bf16.gmra.mrb[0].mxu0 %v3341
      %v3473 = vpop.f32.mrb[0].mxu0
      %v3474 = vadd.f32 0.0, %v3473
      %v3475 = vpop.f32.mrb[0].mxu0
      %v3476 = vpop.f32.mrb[0].mxu0
      %v3477 = vadd.f32 0.0, %v3476
      %v3478 = vpop.f32.mrb[0].mxu0
      %3479 = vmatprep.mubr.bf16.mxu0 0
      %3480 = vmatmul.mubr.bf16.gmra.mrb[0].mxu0 %v3344
      %v3481 = vpop.f32.mrb[0].mxu0
      %v3482 = vadd.f32 0.0, %v3481
      %v3483 = vpop.f32.mrb[0].mxu0
      %v3484 = vpop.f32.mrb[0].mxu0
      %v3485 = vadd.f32 0.0, %v3484
      %v3486 = vpop.f32.mrb[0].mxu0
      %3487 = vmatprep.mubr.bf16.mxu0 0
      %3488 = vmatmul.mubr.bf16.gmra.mrb[0].mxu0 %v3347
      %v3489 = vpop.f32.mrb[0].mxu0
      %v3490 = vadd.f32 0.0, %v3489
      %v3491 = vpop.f32.mrb[0].mxu0
      %v3492 = vpop.f32.mrb[0].mxu0
      %v3493 = vadd.f32 0.0, %v3492
      %v3494 = vpop.f32.mrb[0].mxu0
      %3495 = vmatprep.mubr.bf16.mxu0 0
      %3496 = vmatmul.mubr.bf16.gmra.mrb[0].mxu0 %v3350
      %v3497 = vpop.f32.mrb[0].mxu0
      %v3498 = vadd.f32 0.0, %v3497
      %v3499 = vpop.f32.mrb[0].mxu0
      %v3500 = vpop.f32.mrb[0].mxu0
      %v3501 = vadd.f32 0.0, %v3500
      %v3502 = vpop.f32.mrb[0].mxu0
      %3503 = vmatprep.mubr.bf16.mxu0 0
      %3504 = vmatmul.mubr.bf16.gmra.mrb[0].mxu0 %v3353
      %v3505 = vpop.f32.mrb[0].mxu0
      %v3506 = vadd.f32 0.0, %v3505
      %v3507 = vpop.f32.mrb[0].mxu0
      %v3508 = vpop.f32.mrb[0].mxu0
      %v3509 = vadd.f32 0.0, %v3508
      %v3510 = vpop.f32.mrb[0].mxu0
      %3511 = vmatprep.mubr.bf16.mxu0 0
      %3512 = vmatmul.mubr.bf16.gmra.mrb[0].mxu0 %v3356
      %v3513 = vpop.f32.mrb[0].mxu0
      %v3514 = vadd.f32 0.0, %v3513
      %v3515 = vpop.f32.mrb[0].mxu0
      %v3516 = vpop.f32.mrb[0].mxu0
      %v3517 = vadd.f32 0.0, %v3516
      %v3518 = vpop.f32.mrb[0].mxu0
      %3519 = vmatprep.mubr.bf16.mxu0 0
      %3520 = vmatmul.mubr.bf16.gmra.mrb[0].mxu0 %v3359
      %v3521 = vpop.f32.mrb[0].mxu0
      %v3522 = vadd.f32 0.0, %v3521
      %v3523 = vpop.f32.mrb[0].mxu0
      %v3524 = vpop.f32.mrb[0].mxu0
      %v3525 = vadd.f32 0.0, %v3524
      %v3526 = vpop.f32.mrb[0].mxu0
      %3527 = vmatprep.mubr.bf16.mxu0 0
      %3528 = vmatmul.mubr.bf16.gmra.mrb[0].mxu0 %v3362
      %v3529 = vpop.f32.mrb[0].mxu0
      %v3530 = vadd.f32 0.0, %v3529
      %v3531 = vpop.f32.mrb[0].mxu0
      %v3532 = vpop.f32.mrb[0].mxu0
      %v3533 = vadd.f32 0.0, %v3532
      %v3534 = vpop.f32.mrb[0].mxu0
      %3535 = vmatprep.mubr.bf16.mxu0 0
      %3536 = vmatmul.mubr.bf16.gmra.mrb[0].mxu0 %v3365
      %v3537 = vpop.f32.mrb[0].mxu0
      %v3538 = vadd.f32 0.0, %v3537
      %v3539 = vpop.f32.mrb[0].mxu0
      %v3540 = vpop.f32.mrb[0].mxu0
      %v3541 = vadd.f32 0.0, %v3540
      %v3542 = vpop.f32.mrb[0].mxu0
      %3543 = vdwg.mxu0
      %v3544 = vadd.f32 %v3174, %v3402
      %v3545 = vadd.f32 %v3175, %v3405
      %v3546 = vadd.f32 %v3176, %v3410
      %v3547 = vadd.f32 %v3177, %v3413
      %v3548 = vadd.f32 %v3178, %v3418
      %v3549 = vadd.f32 %v3179, %v3421
      %v3550 = vadd.f32 %v3180, %v3426
      %v3551 = vadd.f32 %v3181, %v3429
      %v3552 = vadd.f32 %v3182, %v3434
      %v3553 = vadd.f32 %v3183, %v3437
      %v3554 = vadd.f32 %v3184, %v3442
      %v3555 = vadd.f32 %v3185, %v3445
      %v3556 = vadd.f32 %v3186, %v3450
      %v3557 = vadd.f32 %v3187, %v3453
      %v3558 = vadd.f32 %v3188, %v3458
      %v3559 = vadd.f32 %v3189, %v3461
      %v3560 = vadd.f32 %v3190, %v3466
      %v3561 = vadd.f32 %v3191, %v3469
      %v3562 = vadd.f32 %v3192, %v3474
      %v3563 = vadd.f32 %v3193, %v3477
      %v3564 = vadd.f32 %v3194, %v3482
      %v3565 = vadd.f32 %v3195, %v3485
      %v3566 = vadd.f32 %v3196, %v3490
      %v3567 = vadd.f32 %v3197, %v3493
      %v3568 = vadd.f32 %v3198, %v3498
      %v3569 = vadd.f32 %v3199, %v3501
      %v3570 = vadd.f32 %v3200, %v3506
      %v3571 = vadd.f32 %v3201, %v3509
      %v3572 = vadd.f32 %v3202, %v3514
      %v3573 = vadd.f32 %v3203, %v3517
      %v3574 = vadd.f32 %v3204, %v3522
      %v3575 = vadd.f32 %v3205, %v3525
      %v3576 = vadd.f32 %v3206, %v3530
      %v3577 = vadd.f32 %v3207, %v3533
      %v3578 = vadd.f32 %v3208, %v3538
      %v3579 = vadd.f32 %v3209, %v3541
      %s3580 = scalar_lea.vmem %s5, 128
      %v3581 = vld [vmem:[%s3580] sm:$0xf]
      %v3582 = vld [vmem:[%s3580 + $0x4] sm:$0xf]
      %v3583 = vld [vmem:[%s3580 + $0x8] sm:$0xf]
      %v3584 = vld [vmem:[%s3580 + $0xc] sm:$0xf]
      %vm3585 = vcmask 1044480
      %v3586 = vrot.slane %v1061, 3
      %v3587 = vrot.slane %v1062, 3
      %v3588 = vsel %vm3585, %v3586, %v3587
      %v3589 = vrot.slane %v1063, 3
      %v3590 = vsel %vm3585, %v3587, %v3589
      %v3591 = vrot.slane %v1064, 3
      %v3592 = vsel %vm3585, %v3589, %v3591
      %v3593 = vrot.slane %v1065, 3
      %v3594 = vsel %vm3585, %v3591, %v3593
      %v3595 = vrot.slane %v1066, 3
      %v3596 = vsel %vm3585, %v3593, %v3595
      %v3597 = vrot.slane %v1067, 3
      %v3598 = vsel %vm3585, %v3595, %v3597
      %v3599 = vrot.slane %v1068, 3
      %v3600 = vsel %vm3585, %v3597, %v3599
      %v3601 = vrot.slane %v1069, 3
      %v3602 = vsel %vm3585, %v3599, %v3601
      %v3603 = vrot.slane %v1070, 3
      %v3604 = vsel %vm3585, %v3601, %v3603
      %v3605 = vrot.slane %v1071, 3
      %v3606 = vsel %vm3585, %v3603, %v3605
      %v3607 = vrot.slane %v1072, 3
      %v3608 = vsel %vm3585, %v3605, %v3607
      %v3609 = vrot.slane %v1073, 3
      %v3610 = vsel %vm3585, %v3607, %v3609
      %v3611 = vrot.slane %v1074, 3
      %v3612 = vsel %vm3585, %v3609, %v3611
      %v3613 = vrot.slane %v1075, 3
      %v3614 = vsel %vm3585, %v3611, %v3613
      %v3615 = vrot.slane %v1076, 3
      %v3616 = vsel %vm3585, %v3613, %v3615
      %v3617 = vrot.slane %v2036, 3
      %v3618 = vsel %vm3585, %v3615, %v3617
      %v3619 = vrot.slane %v2966, 3
      %v3620 = vsel %vm3585, %v3617, %v3619
      %v3621 = vrot.slane %v2967, 3
      %v3622 = vsel %vm3585, %v3619, %v3621
      %v3627 = vunpack.c.l.b16 %v3581
      %v3628 = vunpack.c.l.b16 %v3582
      %v3629 = vunpack.c.l.b16 %v3583
      %v3630 = vunpack.c.l.b16 %v3584
      %v3631 = vpack.c.b16 %v3628, %v3627
      %v3632 = vpack.c.b16 %v3630, %v3629
      %v3636 = vsel %vm362, %v3588, 0
      %v3639 = vsel %vm362, %v3590, 0
      %v3642 = vsel %vm362, %v3592, 0
      %v3645 = vsel %vm362, %v3594, 0
      %v3648 = vsel %vm362, %v3596, 0
      %v3651 = vsel %vm362, %v3598, 0
      %v3654 = vsel %vm362, %v3600, 0
      %v3657 = vsel %vm362, %v3602, 0
      %v3660 = vsel %vm362, %v3604, 0
      %v3663 = vsel %vm362, %v3606, 0
      %v3666 = vsel %vm362, %v3608, 0
      %v3669 = vsel %vm362, %v3610, 0
      %v3672 = vsel %vm362, %v3612, 0
      %v3675 = vsel %vm362, %v3614, 0
      %v3678 = vsel %vm362, %v3616, 0
      %v3681 = vsel %vm362, %v3618, 0
      %v3684 = vsel %vm362, %v3620, 0
      %v3687 = vsel %vm362, %v3622, 0
      %3689 = vmatprep.subr.bf16.mxu0 0
      %3690 = vmatpush1.bf16.msra.mxu0 %v3631
      %3691 = vmatprep.subr.bf16.mxu0 0
      %3692 = vmatpush1.bf16.msra.mxu0 %v3632
      %3693 = vmatprep.subr.bf16.mxu0 0
      %3694 = vmatpush1.bf16.msra.mxu0 0
      %3695 = vmatprep.subr.bf16.mxu0 0
      %3696 = vmatpush1.bf16.msra.mxu0 0
      %3697 = vmatprep.subr.bf16.mxu0 0
      %3698 = vmatpush1.bf16.msra.mxu0 0
      %3699 = vmatprep.subr.bf16.mxu0 0
      %3700 = vmatpush1.bf16.msra.mxu0 0
      %3701 = vmatprep.subr.bf16.mxu0 0
      %3702 = vmatpush1.bf16.msra.mxu0 0
      %3703 = vmatprep.subr.bf16.mxu0 0
      %3704 = vmatpush1.bf16.msra.mxu0 0
      %3705 = vmatprep.subr.bf16.mxu0 0
      %3706 = vmatpush1.bf16.msra.mxu0 0
      %3707 = vmatprep.subr.bf16.mxu0 0
      %3708 = vmatpush1.bf16.msra.mxu0 0
      %3709 = vmatprep.subr.bf16.mxu0 0
      %3710 = vmatpush1.bf16.msra.mxu0 0
      %3711 = vmatprep.subr.bf16.mxu0 0
      %3712 = vmatpush1.bf16.msra.mxu0 0
      %3713 = vmatprep.subr.bf16.mxu0 0
      %3714 = vmatpush1.bf16.msra.mxu0 0
      %3715 = vmatprep.subr.bf16.mxu0 0
      %3716 = vmatpush1.bf16.msra.mxu0 0
      %3717 = vmatprep.subr.bf16.mxu0 0
      %3718 = vmatpush1.bf16.msra.mxu0 0
      %3719 = vmatprep.subr.bf16.mxu0 0
      %3720 = vmatpush1.bf16.msra.mxu0 0
      %3721 = vmatprep.mubr.bf16.mxu0 0
      %3722 = vmatmul.mubr.bf16.gmra.mrb[0].mxu0 %v3636
      %v3723 = vpop.f32.mrb[0].mxu0
      %v3724 = vadd.f32 0.0, %v3723
      %v3725 = vpop.f32.mrb[0].mxu0
      %v3726 = vpop.f32.mrb[0].mxu0
      %v3727 = vadd.f32 0.0, %v3726
      %v3728 = vpop.f32.mrb[0].mxu0
      %3729 = vmatprep.mubr.bf16.mxu0 0
      %3730 = vmatmul.mubr.bf16.gmra.mrb[0].mxu0 %v3639
      %v3731 = vpop.f32.mrb[0].mxu0
      %v3732 = vadd.f32 0.0, %v3731
      %v3733 = vpop.f32.mrb[0].mxu0
      %v3734 = vpop.f32.mrb[0].mxu0
      %v3735 = vadd.f32 0.0, %v3734
      %v3736 = vpop.f32.mrb[0].mxu0
      %3737 = vmatprep.mubr.bf16.mxu0 0
      %3738 = vmatmul.mubr.bf16.gmra.mrb[0].mxu0 %v3642
      %v3739 = vpop.f32.mrb[0].mxu0
      %v3740 = vadd.f32 0.0, %v3739
      %v3741 = vpop.f32.mrb[0].mxu0
      %v3742 = vpop.f32.mrb[0].mxu0
      %v3743 = vadd.f32 0.0, %v3742
      %v3744 = vpop.f32.mrb[0].mxu0
      %3745 = vmatprep.mubr.bf16.mxu0 0
      %3746 = vmatmul.mubr.bf16.gmra.mrb[0].mxu0 %v3645
      %v3747 = vpop.f32.mrb[0].mxu0
      %v3748 = vadd.f32 0.0, %v3747
      %v3749 = vpop.f32.mrb[0].mxu0
      %v3750 = vpop.f32.mrb[0].mxu0
      %v3751 = vadd.f32 0.0, %v3750
      %v3752 = vpop.f32.mrb[0].mxu0
      %3753 = vmatprep.mubr.bf16.mxu0 0
      %3754 = vmatmul.mubr.bf16.gmra.mrb[0].mxu0 %v3648
      %v3755 = vpop.f32.mrb[0].mxu0
      %v3756 = vadd.f32 0.0, %v3755
      %v3757 = vpop.f32.mrb[0].mxu0
      %v3758 = vpop.f32.mrb[0].mxu0
      %v3759 = vadd.f32 0.0, %v3758
      %v3760 = vpop.f32.mrb[0].mxu0
      %3761 = vmatprep.mubr.bf16.mxu0 0
      %3762 = vmatmul.mubr.bf16.gmra.mrb[0].mxu0 %v3651
      %v3763 = vpop.f32.mrb[0].mxu0
      %v3764 = vadd.f32 0.0, %v3763
      %v3765 = vpop.f32.mrb[0].mxu0
      %v3766 = vpop.f32.mrb[0].mxu0
      %v3767 = vadd.f32 0.0, %v3766
      %v3768 = vpop.f32.mrb[0].mxu0
      %3769 = vmatprep.mubr.bf16.mxu0 0
      %3770 = vmatmul.mubr.bf16.gmra.mrb[0].mxu0 %v3654
      %v3771 = vpop.f32.mrb[0].mxu0
      %v3772 = vadd.f32 0.0, %v3771
      %v3773 = vpop.f32.mrb[0].mxu0
      %v3774 = vpop.f32.mrb[0].mxu0
      %v3775 = vadd.f32 0.0, %v3774
      %v3776 = vpop.f32.mrb[0].mxu0
      %3777 = vmatprep.mubr.bf16.mxu0 0
      %3778 = vmatmul.mubr.bf16.gmra.mrb[0].mxu0 %v3657
      %v3779 = vpop.f32.mrb[0].mxu0
      %v3780 = vadd.f32 0.0, %v3779
      %v3781 = vpop.f32.mrb[0].mxu0
      %v3782 = vpop.f32.mrb[0].mxu0
      %v3783 = vadd.f32 0.0, %v3782
      %v3784 = vpop.f32.mrb[0].mxu0
      %3785 = vmatprep.mubr.bf16.mxu0 0
      %3786 = vmatmul.mubr.bf16.gmra.mrb[0].mxu0 %v3660
      %v3787 = vpop.f32.mrb[0].mxu0
      %v3788 = vadd.f32 0.0, %v3787
      %v3789 = vpop.f32.mrb[0].mxu0
      %v3790 = vpop.f32.mrb[0].mxu0
      %v3791 = vadd.f32 0.0, %v3790
      %v3792 = vpop.f32.mrb[0].mxu0
      %3793 = vmatprep.mubr.bf16.mxu0 0
      %3794 = vmatmul.mubr.bf16.gmra.mrb[0].mxu0 %v3663
      %v3795 = vpop.f32.mrb[0].mxu0
      %v3796 = vadd.f32 0.0, %v3795
      %v3797 = vpop.f32.mrb[0].mxu0
      %v3798 = vpop.f32.mrb[0].mxu0
      %v3799 = vadd.f32 0.0, %v3798
      %v3800 = vpop.f32.mrb[0].mxu0
      %3801 = vmatprep.mubr.bf16.mxu0 0
      %3802 = vmatmul.mubr.bf16.gmra.mrb[0].mxu0 %v3666
      %v3803 = vpop.f32.mrb[0].mxu0
      %v3804 = vadd.f32 0.0, %v3803
      %v3805 = vpop.f32.mrb[0].mxu0
      %v3806 = vpop.f32.mrb[0].mxu0
      %v3807 = vadd.f32 0.0, %v3806
      %v3808 = vpop.f32.mrb[0].mxu0
      %3809 = vmatprep.mubr.bf16.mxu0 0
      %3810 = vmatmul.mubr.bf16.gmra.mrb[0].mxu0 %v3669
      %v3811 = vpop.f32.mrb[0].mxu0
      %v3812 = vadd.f32 0.0, %v3811
      %v3813 = vpop.f32.mrb[0].mxu0
      %v3814 = vpop.f32.mrb[0].mxu0
      %v3815 = vadd.f32 0.0, %v3814
      %v3816 = vpop.f32.mrb[0].mxu0
      %3817 = vmatprep.mubr.bf16.mxu0 0
      %3818 = vmatmul.mubr.bf16.gmra.mrb[0].mxu0 %v3672
      %v3819 = vpop.f32.mrb[0].mxu0
      %v3820 = vadd.f32 0.0, %v3819
      %v3821 = vpop.f32.mrb[0].mxu0
      %v3822 = vpop.f32.mrb[0].mxu0
      %v3823 = vadd.f32 0.0, %v3822
      %v3824 = vpop.f32.mrb[0].mxu0
      %3825 = vmatprep.mubr.bf16.mxu0 0
      %3826 = vmatmul.mubr.bf16.gmra.mrb[0].mxu0 %v3675
      %v3827 = vpop.f32.mrb[0].mxu0
      %v3828 = vadd.f32 0.0, %v3827
      %v3829 = vpop.f32.mrb[0].mxu0
      %v3830 = vpop.f32.mrb[0].mxu0
      %v3831 = vadd.f32 0.0, %v3830
      %v3832 = vpop.f32.mrb[0].mxu0
      %3833 = vmatprep.mubr.bf16.mxu0 0
      %3834 = vmatmul.mubr.bf16.gmra.mrb[0].mxu0 %v3678
      %v3835 = vpop.f32.mrb[0].mxu0
      %v3836 = vadd.f32 0.0, %v3835
      %v3837 = vpop.f32.mrb[0].mxu0
      %v3838 = vpop.f32.mrb[0].mxu0
      %v3839 = vadd.f32 0.0, %v3838
      %v3840 = vpop.f32.mrb[0].mxu0
      %3841 = vmatprep.mubr.bf16.mxu0 0
      %3842 = vmatmul.mubr.bf16.gmra.mrb[0].mxu0 %v3681
      %v3843 = vpop.f32.mrb[0].mxu0
      %v3844 = vadd.f32 0.0, %v3843
      %v3845 = vpop.f32.mrb[0].mxu0
      %v3846 = vpop.f32.mrb[0].mxu0
      %v3847 = vadd.f32 0.0, %v3846
      %v3848 = vpop.f32.mrb[0].mxu0
      %3849 = vmatprep.mubr.bf16.mxu0 0
      %3850 = vmatmul.mubr.bf16.gmra.mrb[0].mxu0 %v3684
      %v3851 = vpop.f32.mrb[0].mxu0
      %v3852 = vadd.f32 0.0, %v3851
      %v3853 = vpop.f32.mrb[0].mxu0
      %v3854 = vpop.f32.mrb[0].mxu0
      %v3855 = vadd.f32 0.0, %v3854
      %v3856 = vpop.f32.mrb[0].mxu0
      %3857 = vmatprep.mubr.bf16.mxu0 0
      %3858 = vmatmul.mubr.bf16.gmra.mrb[0].mxu0 %v3687
      %v3859 = vpop.f32.mrb[0].mxu0
      %v3860 = vadd.f32 0.0, %v3859
      %v3861 = vpop.f32.mrb[0].mxu0
      %v3862 = vpop.f32.mrb[0].mxu0
      %v3863 = vadd.f32 0.0, %v3862
      %v3864 = vpop.f32.mrb[0].mxu0
      %3865 = vdwg.mxu0
      %v3866 = vadd.f32 %v3544, %v3724
      %v3867 = vadd.f32 %v3545, %v3727
      %v3868 = vadd.f32 %v3546, %v3732
      %v3869 = vadd.f32 %v3547, %v3735
      %v3870 = vadd.f32 %v3548, %v3740
      %v3871 = vadd.f32 %v3549, %v3743
      %v3872 = vadd.f32 %v3550, %v3748
      %v3873 = vadd.f32 %v3551, %v3751
      %v3874 = vadd.f32 %v3552, %v3756
      %v3875 = vadd.f32 %v3553, %v3759
      %v3876 = vadd.f32 %v3554, %v3764
      %v3877 = vadd.f32 %v3555, %v3767
      %v3878 = vadd.f32 %v3556, %v3772
      %v3879 = vadd.f32 %v3557, %v3775
      %v3880 = vadd.f32 %v3558, %v3780
      %v3881 = vadd.f32 %v3559, %v3783
      %v3882 = vadd.f32 %v3560, %v3788
      %v3883 = vadd.f32 %v3561, %v3791
      %v3884 = vadd.f32 %v3562, %v3796
      %v3885 = vadd.f32 %v3563, %v3799
      %v3886 = vadd.f32 %v3564, %v3804
      %v3887 = vadd.f32 %v3565, %v3807
      %v3888 = vadd.f32 %v3566, %v3812
      %v3889 = vadd.f32 %v3567, %v3815
      %v3890 = vadd.f32 %v3568, %v3820
      %v3891 = vadd.f32 %v3569, %v3823
      %v3892 = vadd.f32 %v3570, %v3828
      %v3893 = vadd.f32 %v3571, %v3831
      %v3894 = vadd.f32 %v3572, %v3836
      %v3895 = vadd.f32 %v3573, %v3839
      %v3896 = vadd.f32 %v3574, %v3844
      %v3897 = vadd.f32 %v3575, %v3847
      %v3898 = vadd.f32 %v3576, %v3852
      %v3899 = vadd.f32 %v3577, %v3855
      %v3900 = vadd.f32 %v3578, %v3860
      %v3901 = vadd.f32 %v3579, %v3863
      %v3902 = vld [vmem:[%s6] sm:$0x1]
      %v3904 = vlaneseq
      %v3905 = vshrl.u32 %v3904, 7
      %v3906 = vsub.s32 0, %v3905
      %v3907 = vrot.slane %v3902, %v3906
      %v3909 = vadd.f32 %v3866, %v3907
      %v3910 = vadd.f32 %v3867, %v3907
      %v3911 = vadd.f32 %v3868, %v3907
      %v3912 = vadd.f32 %v3869, %v3907
      %v3913 = vadd.f32 %v3870, %v3907
      %v3914 = vadd.f32 %v3871, %v3907
      %v3915 = vadd.f32 %v3872, %v3907
      %v3916 = vadd.f32 %v3873, %v3907
      %v3917 = vadd.f32 %v3874, %v3907
      %v3918 = vadd.f32 %v3875, %v3907
      %v3919 = vadd.f32 %v3876, %v3907
      %v3920 = vadd.f32 %v3877, %v3907
      %v3921 = vadd.f32 %v3878, %v3907
      %v3922 = vadd.f32 %v3879, %v3907
      %v3923 = vadd.f32 %v3880, %v3907
      %v3924 = vadd.f32 %v3881, %v3907
      %v3925 = vadd.f32 %v3882, %v3907
      %v3926 = vadd.f32 %v3883, %v3907
      %v3927 = vadd.f32 %v3884, %v3907
      %v3928 = vadd.f32 %v3885, %v3907
      %v3929 = vadd.f32 %v3886, %v3907
      %v3930 = vadd.f32 %v3887, %v3907
      %v3931 = vadd.f32 %v3888, %v3907
      %v3932 = vadd.f32 %v3889, %v3907
      %v3933 = vadd.f32 %v3890, %v3907
      %v3934 = vadd.f32 %v3891, %v3907
      %v3935 = vadd.f32 %v3892, %v3907
      %v3936 = vadd.f32 %v3893, %v3907
      %v3937 = vadd.f32 %v3894, %v3907
      %v3938 = vadd.f32 %v3895, %v3907
      %v3939 = vadd.f32 %v3896, %v3907
      %v3940 = vadd.f32 %v3897, %v3907
      %v3941 = vadd.f32 %v3898, %v3907
      %v3942 = vadd.f32 %v3899, %v3907
      %v3943 = vadd.f32 %v3900, %v3907
      %v3944 = vadd.f32 %v3901, %v3907
      %v3945 = vxor.u32 %v3909, 2147483648
      %v3946 = vxor.u32 %v3910, 2147483648
      %v3947 = vxor.u32 %v3911, 2147483648
      %v3948 = vxor.u32 %v3912, 2147483648
      %v3949 = vxor.u32 %v3913, 2147483648
      %v3950 = vxor.u32 %v3914, 2147483648
      %v3951 = vxor.u32 %v3915, 2147483648
      %v3952 = vxor.u32 %v3916, 2147483648
      %v3953 = vxor.u32 %v3917, 2147483648
      %v3954 = vxor.u32 %v3918, 2147483648
      %v3955 = vxor.u32 %v3919, 2147483648
      %v3956 = vxor.u32 %v3920, 2147483648
      %v3957 = vxor.u32 %v3921, 2147483648
      %v3958 = vxor.u32 %v3922, 2147483648
      %v3959 = vxor.u32 %v3923, 2147483648
      %v3960 = vxor.u32 %v3924, 2147483648
      %v3961 = vxor.u32 %v3925, 2147483648
      %v3962 = vxor.u32 %v3926, 2147483648
      %v3963 = vxor.u32 %v3927, 2147483648
      %v3964 = vxor.u32 %v3928, 2147483648
      %v3965 = vxor.u32 %v3929, 2147483648
      %v3966 = vxor.u32 %v3930, 2147483648
      %v3967 = vxor.u32 %v3931, 2147483648
      %v3968 = vxor.u32 %v3932, 2147483648
      %v3969 = vxor.u32 %v3933, 2147483648
      %v3970 = vxor.u32 %v3934, 2147483648
      %v3971 = vxor.u32 %v3935, 2147483648
      %v3972 = vxor.u32 %v3936, 2147483648
      %v3973 = vxor.u32 %v3937, 2147483648
      %v3974 = vxor.u32 %v3938, 2147483648
      %v3975 = vxor.u32 %v3939, 2147483648
      %v3976 = vxor.u32 %v3940, 2147483648
      %v3977 = vxor.u32 %v3941, 2147483648
      %v3978 = vxor.u32 %v3942, 2147483648
      %v3979 = vxor.u32 %v3943, 2147483648
      %v3980 = vxor.u32 %v3944, 2147483648
      %v3981 = vmul.f32 %v3945, 1.442695
      %v3982 = vpow.pop %v3981
      %v3983 = vmul.f32 %v3946, 1.442695
      %v3984 = vpow.pop %v3983
      %v3985 = vmul.f32 %v3947, 1.442695
      %v3986 = vpow.pop %v3985
      %v3987 = vmul.f32 %v3948, 1.442695
      %v3988 = vpow.pop %v3987
      %v3989 = vmul.f32 %v3949, 1.442695
      %v3990 = vpow.pop %v3989
      %v3991 = vmul.f32 %v3950, 1.442695
      %v3992 = vpow.pop %v3991
      %v3993 = vmul.f32 %v3951, 1.442695
      %v3994 = vpow.pop %v3993
      %v3995 = vmul.f32 %v3952, 1.442695
      %v3996 = vpow.pop %v3995
      %v3997 = vmul.f32 %v3953, 1.442695
      %v3998 = vpow.pop %v3997
      %v3999 = vmul.f32 %v3954, 1.442695
      %v4000 = vpow.pop %v3999
      %v4001 = vmul.f32 %v3955, 1.442695
      %v4002 = vpow.pop %v4001
      %v4003 = vmul.f32 %v3956, 1.442695
      %v4004 = vpow.pop %v4003
      %v4005 = vmul.f32 %v3957, 1.442695
      %v4006 = vpow.pop %v4005
      %v4007 = vmul.f32 %v3958, 1.442695
      %v4008 = vpow.pop %v4007
      %v4009 = vmul.f32 %v3959, 1.442695
      %v4010 = vpow.pop %v4009
      %v4011 = vmul.f32 %v3960, 1.442695
      %v4012 = vpow.pop %v4011
      %v4013 = vmul.f32 %v3961, 1.442695
      %v4014 = vpow.pop %v4013
      %v4015 = vmul.f32 %v3962, 1.442695
      %v4016 = vpow.pop %v4015
      %v4017 = vmul.f32 %v3963, 1.442695
      %v4018 = vpow.pop %v4017
      %v4019 = vmul.f32 %v3964, 1.442695
      %v4020 = vpow.pop %v4019
      %v4021 = vmul.f32 %v3965, 1.442695
      %v4022 = vpow.pop %v4021
      %v4023 = vmul.f32 %v3966, 1.442695
      %v4024 = vpow.pop %v4023
      %v4025 = vmul.f32 %v3967, 1.442695
      %v4026 = vpow.pop %v4025
      %v4027 = vmul.f32 %v3968, 1.442695
      %v4028 = vpow.pop %v4027
      %v4029 = vmul.f32 %v3969, 1.442695
      %v4030 = vpow.pop %v4029
      %v4031 = vmul.f32 %v3970, 1.442695
      %v4032 = vpow.pop %v4031
      %v4033 = vmul.f32 %v3971, 1.442695
      %v4034 = vpow.pop %v4033
      %v4035 = vmul.f32 %v3972, 1.442695
      %v4036 = vpow.pop %v4035
      %v4037 = vmul.f32 %v3973, 1.442695
      %v4038 = vpow.pop %v4037
      %v4039 = vmul.f32 %v3974, 1.442695
      %v4040 = vpow.pop %v4039
      %v4041 = vmul.f32 %v3975, 1.442695
      %v4042 = vpow.pop %v4041
      %v4043 = vmul.f32 %v3976, 1.442695
      %v4044 = vpow.pop %v4043
      %v4045 = vmul.f32 %v3977, 1.442695
      %v4046 = vpow.pop %v4045
      %v4047 = vmul.f32 %v3978, 1.442695
      %v4048 = vpow.pop %v4047
      %v4049 = vmul.f32 %v3979, 1.442695
      %v4050 = vpow.pop %v4049
      %v4051 = vmul.f32 %v3980, 1.442695
      %v4052 = vpow.pop %v4051
      %v4053 = vadd.f32 %v3982, 1.0
      %v4054 = vadd.f32 %v3984, 1.0
      %v4055 = vadd.f32 %v3986, 1.0
      %v4056 = vadd.f32 %v3988, 1.0
      %v4057 = vadd.f32 %v3990, 1.0
      %v4058 = vadd.f32 %v3992, 1.0
      %v4059 = vadd.f32 %v3994, 1.0
      %v4060 = vadd.f32 %v3996, 1.0
      %v4061 = vadd.f32 %v3998, 1.0
      %v4062 = vadd.f32 %v4000, 1.0
      %v4063 = vadd.f32 %v4002, 1.0
      %v4064 = vadd.f32 %v4004, 1.0
      %v4065 = vadd.f32 %v4006, 1.0
      %v4066 = vadd.f32 %v4008, 1.0
      %v4067 = vadd.f32 %v4010, 1.0
      %v4068 = vadd.f32 %v4012, 1.0
      %v4069 = vadd.f32 %v4014, 1.0
      %v4070 = vadd.f32 %v4016, 1.0
      %v4071 = vadd.f32 %v4018, 1.0
      %v4072 = vadd.f32 %v4020, 1.0
      %v4073 = vadd.f32 %v4022, 1.0
      %v4074 = vadd.f32 %v4024, 1.0
      %v4075 = vadd.f32 %v4026, 1.0
      %v4076 = vadd.f32 %v4028, 1.0
      %v4077 = vadd.f32 %v4030, 1.0
      %v4078 = vadd.f32 %v4032, 1.0
      %v4079 = vadd.f32 %v4034, 1.0
      %v4080 = vadd.f32 %v4036, 1.0
      %v4081 = vadd.f32 %v4038, 1.0
      %v4082 = vadd.f32 %v4040, 1.0
      %v4083 = vadd.f32 %v4042, 1.0
      %v4084 = vadd.f32 %v4044, 1.0
      %v4085 = vadd.f32 %v4046, 1.0
      %v4086 = vadd.f32 %v4048, 1.0
      %v4087 = vadd.f32 %v4050, 1.0
      %v4088 = vadd.f32 %v4052, 1.0
      %v4089 = vrcp.pop %v4053
      %v4090 = vmul.f32 1.0, %v4089
      %v4091 = vrcp.pop %v4054
      %v4092 = vmul.f32 1.0, %v4091
      %v4093 = vrcp.pop %v4055
      %v4094 = vmul.f32 1.0, %v4093
      %v4095 = vrcp.pop %v4056
      %v4096 = vmul.f32 1.0, %v4095
      %v4097 = vrcp.pop %v4057
      %v4098 = vmul.f32 1.0, %v4097
      %v4099 = vrcp.pop %v4058
      %v4100 = vmul.f32 1.0, %v4099
      %v4101 = vrcp.pop %v4059
      %v4102 = vmul.f32 1.0, %v4101
      %v4103 = vrcp.pop %v4060
      %v4104 = vmul.f32 1.0, %v4103
      %v4105 = vrcp.pop %v4061
      %v4106 = vmul.f32 1.0, %v4105
      %v4107 = vrcp.pop %v4062
      %v4108 = vmul.f32 1.0, %v4107
      %v4109 = vrcp.pop %v4063
      %v4110 = vmul.f32 1.0, %v4109
      %v4111 = vrcp.pop %v4064
      %v4112 = vmul.f32 1.0, %v4111
      %v4113 = vrcp.pop %v4065
      %v4114 = vmul.f32 1.0, %v4113
      %v4115 = vrcp.pop %v4066
      %v4116 = vmul.f32 1.0, %v4115
      %v4117 = vrcp.pop %v4067
      %v4118 = vmul.f32 1.0, %v4117
      %v4119 = vrcp.pop %v4068
      %v4120 = vmul.f32 1.0, %v4119
      %v4121 = vrcp.pop %v4069
      %v4122 = vmul.f32 1.0, %v4121
      %v4123 = vrcp.pop %v4070
      %v4124 = vmul.f32 1.0, %v4123
      %v4125 = vrcp.pop %v4071
      %v4126 = vmul.f32 1.0, %v4125
      %v4127 = vrcp.pop %v4072
      %v4128 = vmul.f32 1.0, %v4127
      %v4129 = vrcp.pop %v4073
      %v4130 = vmul.f32 1.0, %v4129
      %v4131 = vrcp.pop %v4074
      %v4132 = vmul.f32 1.0, %v4131
      %v4133 = vrcp.pop %v4075
      %v4134 = vmul.f32 1.0, %v4133
      %v4135 = vrcp.pop %v4076
      %v4136 = vmul.f32 1.0, %v4135
      %v4137 = vrcp.pop %v4077
      %v4138 = vmul.f32 1.0, %v4137
      %v4139 = vrcp.pop %v4078
      %v4140 = vmul.f32 1.0, %v4139
      %v4141 = vrcp.pop %v4079
      %v4142 = vmul.f32 1.0, %v4141
      %v4143 = vrcp.pop %v4080
      %v4144 = vmul.f32 1.0, %v4143
      %v4145 = vrcp.pop %v4081
      %v4146 = vmul.f32 1.0, %v4145
      %v4147 = vrcp.pop %v4082
      %v4148 = vmul.f32 1.0, %v4147
      %v4149 = vrcp.pop %v4083
      %v4150 = vmul.f32 1.0, %v4149
      %v4151 = vrcp.pop %v4084
      %v4152 = vmul.f32 1.0, %v4151
      %v4153 = vrcp.pop %v4085
      %v4154 = vmul.f32 1.0, %v4153
      %v4155 = vrcp.pop %v4086
      %v4156 = vmul.f32 1.0, %v4155
      %v4157 = vrcp.pop %v4087
      %v4158 = vmul.f32 1.0, %v4157
      %v4159 = vrcp.pop %v4088
      %v4160 = vmul.f32 1.0, %v4159
      %v4161 = vmul.f32 %v3909, %v4090
      %v4162 = vmul.f32 %v3910, %v4092
      %v4163 = vmul.f32 %v3911, %v4094
      %v4164 = vmul.f32 %v3912, %v4096
      %v4165 = vmul.f32 %v3913, %v4098
      %v4166 = vmul.f32 %v3914, %v4100
      %v4167 = vmul.f32 %v3915, %v4102
      %v4168 = vmul.f32 %v3916, %v4104
      %v4169 = vmul.f32 %v3917, %v4106
      %v4170 = vmul.f32 %v3918, %v4108
      %v4171 = vmul.f32 %v3919, %v4110
      %v4172 = vmul.f32 %v3920, %v4112
      %v4173 = vmul.f32 %v3921, %v4114
      %v4174 = vmul.f32 %v3922, %v4116
      %v4175 = vmul.f32 %v3923, %v4118
      %v4176 = vmul.f32 %v3924, %v4120
      %v4177 = vmul.f32 %v3925, %v4122
      %v4178 = vmul.f32 %v3926, %v4124
      %v4179 = vmul.f32 %v3927, %v4126
      %v4180 = vmul.f32 %v3928, %v4128
      %v4181 = vmul.f32 %v3929, %v4130
      %v4182 = vmul.f32 %v3930, %v4132
      %v4183 = vmul.f32 %v3931, %v4134
      %v4184 = vmul.f32 %v3932, %v4136
      %v4185 = vmul.f32 %v3933, %v4138
      %v4186 = vmul.f32 %v3934, %v4140
      %v4187 = vmul.f32 %v3935, %v4142
      %v4188 = vmul.f32 %v3936, %v4144
      %v4189 = vmul.f32 %v3937, %v4146
      %v4190 = vmul.f32 %v3938, %v4148
      %v4191 = vmul.f32 %v3939, %v4150
      %v4192 = vmul.f32 %v3940, %v4152
      %v4193 = vmul.f32 %v3941, %v4154
      %v4194 = vmul.f32 %v3942, %v4156
      %v4195 = vmul.f32 %v3943, %v4158
      %v4196 = vmul.f32 %v3944, %v4160
      %vm4197 = vcmask 1044480
      %v4198 = vrot.slane %v826, 3
      %v4199 = vrot.slane %v831, 3
      %v4200 = vsel %vm4197, %v4198, %v4199
      %v4201 = vrot.slane %v836, 3
      %v4202 = vsel %vm4197, %v4199, %v4201
      %v4203 = vrot.slane %v841, 3
      %v4204 = vsel %vm4197, %v4201, %v4203
      %v4205 = vrot.slane %v846, 3
      %v4206 = vsel %vm4197, %v4203, %v4205
      %v4207 = vrot.slane %v851, 3
      %v4208 = vsel %vm4197, %v4205, %v4207
      %v4209 = vrot.slane %v856, 3
      %v4210 = vsel %vm4197, %v4207, %v4209
      %v4211 = vrot.slane %v861, 3
      %v4212 = vsel %vm4197, %v4209, %v4211
      %v4213 = vrot.slane %v866, 3
      %v4214 = vsel %vm4197, %v4211, %v4213
      %v4215 = vrot.slane %v871, 3
      %v4216 = vsel %vm4197, %v4213, %v4215
      %v4217 = vrot.slane %v876, 3
      %v4218 = vsel %vm4197, %v4215, %v4217
      %v4219 = vrot.slane %v881, 3
      %v4220 = vsel %vm4197, %v4217, %v4219
      %v4221 = vrot.slane %v886, 3
      %v4222 = vsel %vm4197, %v4219, %v4221
      %v4223 = vrot.slane %v891, 3
      %v4224 = vsel %vm4197, %v4221, %v4223
      %v4225 = vrot.slane %v896, 3
      %v4226 = vsel %vm4197, %v4223, %v4225
      %v4227 = vrot.slane %v901, 3
      %v4228 = vsel %vm4197, %v4225, %v4227
      %v4229 = vrot.slane %v906, 3
      %v4230 = vsel %vm4197, %v4227, %v4229
      %v4231 = vrot.slane %v911, 3
      %v4232 = vsel %vm4197, %v4229, %v4231
      %v4233 = vrot.slane %v916, 3
      %v4234 = vsel %vm4197, %v4231, %v4233
      %v4235 = vrot.slane %v921, 3
      %v4236 = vsel %vm4197, %v4233, %v4235
      %v4237 = vrot.slane %v926, 3
      %v4238 = vsel %vm4197, %v4235, %v4237
      %v4239 = vrot.slane %v931, 3
      %v4240 = vsel %vm4197, %v4237, %v4239
      %v4241 = vrot.slane %v936, 3
      %v4242 = vsel %vm4197, %v4239, %v4241
      %v4243 = vrot.slane %v941, 3
      %v4244 = vsel %vm4197, %v4241, %v4243
      %v4245 = vrot.slane %v946, 3
      %v4246 = vsel %vm4197, %v4243, %v4245
      %v4247 = vrot.slane %v951, 3
      %v4248 = vsel %vm4197, %v4245, %v4247
      %v4249 = vrot.slane %v956, 3
      %v4250 = vsel %vm4197, %v4247, %v4249
      %v4251 = vrot.slane %v961, 3
      %v4252 = vsel %vm4197, %v4249, %v4251
      %v4253 = vrot.slane %v966, 3
      %v4254 = vsel %vm4197, %v4251, %v4253
      %v4255 = vrot.slane %v971, 3
      %v4256 = vsel %vm4197, %v4253, %v4255
      %v4257 = vrot.slane %v976, 3
      %v4258 = vsel %vm4197, %v4255, %v4257
      %v4259 = vrot.slane %v981, 3
      %v4260 = vsel %vm4197, %v4257, %v4259
      %v4261 = vrot.slane %v986, 3
      %v4262 = vsel %vm4197, %v4259, %v4261
      %v4263 = vrot.slane %v991, 3
      %v4264 = vsel %vm4197, %v4261, %v4263
      %v4265 = vrot.slane %v996, 3
      %v4266 = vsel %vm4197, %v4263, %v4265
      %v4267 = vrot.slane %v1001, 3
      %v4268 = vsel %vm4197, %v4265, %v4267
      %v4269 = vrot.slane %v1006, 3
      %v4270 = vsel %vm4197, %v4267, %v4269
      %v4307 = vmul.f32 %v4161, %v4200
      %v4308 = vmul.f32 %v4162, %v4202
      %v4309 = vmul.f32 %v4163, %v4204
      %v4310 = vmul.f32 %v4164, %v4206
      %v4311 = vmul.f32 %v4165, %v4208
      %v4312 = vmul.f32 %v4166, %v4210
      %v4313 = vmul.f32 %v4167, %v4212
      %v4314 = vmul.f32 %v4168, %v4214
      %v4315 = vmul.f32 %v4169, %v4216
      %v4316 = vmul.f32 %v4170, %v4218
      %v4317 = vmul.f32 %v4171, %v4220
      %v4318 = vmul.f32 %v4172, %v4222
      %v4319 = vmul.f32 %v4173, %v4224
      %v4320 = vmul.f32 %v4174, %v4226
      %v4321 = vmul.f32 %v4175, %v4228
      %v4322 = vmul.f32 %v4176, %v4230
      %v4323 = vmul.f32 %v4177, %v4232
      %v4324 = vmul.f32 %v4178, %v4234
      %v4325 = vmul.f32 %v4179, %v4236
      %v4326 = vmul.f32 %v4180, %v4238
      %v4327 = vmul.f32 %v4181, %v4240
      %v4328 = vmul.f32 %v4182, %v4242
      %v4329 = vmul.f32 %v4183, %v4244
      %v4330 = vmul.f32 %v4184, %v4246
      %v4331 = vmul.f32 %v4185, %v4248
      %v4332 = vmul.f32 %v4186, %v4250
      %v4333 = vmul.f32 %v4187, %v4252
      %v4334 = vmul.f32 %v4188, %v4254
      %v4335 = vmul.f32 %v4189, %v4256
      %v4336 = vmul.f32 %v4190, %v4258
      %v4337 = vmul.f32 %v4191, %v4260
      %v4338 = vmul.f32 %v4192, %v4262
      %v4339 = vmul.f32 %v4193, %v4264
      %v4340 = vmul.f32 %v4194, %v4266
      %v4341 = vmul.f32 %v4195, %v4268
      %v4342 = vmul.f32 %v4196, %v4270
      %4343 = vst.msk [vmem:[%s278] sm:$0xff] %vm362, 0.0
      %4344 = vst.msk [vmem:[%s278 + $0x8] sm:$0xff] %vm362, 0.0
      %vm4345 = vcmask 256000
      %4346 = vst.msk [vmem:[%s278 + $0x10] sm:$0x7] %vm4345, 0.0
      %4347 = vst.msk [vmem:[%s278 + $0x13] sm:$0xff] %vm362, %v4307
      %4348 = vst.msk [vmem:[%s278 + $0x1b] sm:$0xff] %vm362, %v4308
      %4349 = vst.msk [vmem:[%s278 + $0x23] sm:$0xff] %vm362, %v4309
      %4350 = vst.msk [vmem:[%s278 + $0x2b] sm:$0xff] %vm362, %v4310
      %4351 = vst.msk [vmem:[%s278 + $0x33] sm:$0xff] %vm362, %v4311
      %4352 = vst.msk [vmem:[%s278 + $0x3b] sm:$0xff] %vm362, %v4312
      %4353 = vst.msk [vmem:[%s278 + $0x43] sm:$0xff] %vm362, %v4313
      %4354 = vst.msk [vmem:[%s278 + $0x4b] sm:$0xff] %vm362, %v4314
      %4355 = vst.msk [vmem:[%s278 + $0x53] sm:$0xff] %vm362, %v4315
      %4356 = vst.msk [vmem:[%s278 + $0x5b] sm:$0xff] %vm362, %v4316
      %4357 = vst.msk [vmem:[%s278 + $0x63] sm:$0xff] %vm362, %v4317
      %4358 = vst.msk [vmem:[%s278 + $0x6b] sm:$0xff] %vm362, %v4318
      %4359 = vst.msk [vmem:[%s278 + $0x73] sm:$0xff] %vm362, %v4319
      %4360 = vst.msk [vmem:[%s278 + $0x7b] sm:$0xff] %vm362, %v4320
      %4361 = vst.msk [vmem:[%s278 + $0x83] sm:$0xff] %vm362, %v4321
      %4362 = vst.msk [vmem:[%s278 + $0x8b] sm:$0xff] %vm362, %v4322
      %4363 = vst.msk [vmem:[%s278 + $0x93] sm:$0xff] %vm362, %v4323
      %4364 = vst.msk [vmem:[%s278 + $0x9b] sm:$0xff] %vm362, %v4324
      %4365 = vst.msk [vmem:[%s278 + $0xa3] sm:$0xff] %vm362, %v4325
      %4366 = vst.msk [vmem:[%s278 + $0xab] sm:$0xff] %vm362, %v4326
      %4367 = vst.msk [vmem:[%s278 + $0xb3] sm:$0xff] %vm362, %v4327
      %4368 = vst.msk [vmem:[%s278 + $0xbb] sm:$0xff] %vm362, %v4328
      %4369 = vst.msk [vmem:[%s278 + $0xc3] sm:$0xff] %vm362, %v4329
      %4370 = vst.msk [vmem:[%s278 + $0xcb] sm:$0xff] %vm362, %v4330
      %4371 = vst.msk [vmem:[%s278 + $0xd3] sm:$0xff] %vm362, %v4331
      %4372 = vst.msk [vmem:[%s278 + $0xdb] sm:$0xff] %vm362, %v4332
      %4373 = vst.msk [vmem:[%s278 + $0xe3] sm:$0xff] %vm362, %v4333
      %4374 = vst.msk [vmem:[%s278 + $0xeb] sm:$0xff] %vm362, %v4334
      %4375 = vst.msk [vmem:[%s278 + $0xf3] sm:$0xff] %vm362, %v4335
      %4376 = vst.msk [vmem:[%s278 + $0xfb] sm:$0xff] %vm362, %v4336
      %4377 = vst.msk [vmem:[%s278 + $0x103] sm:$0xff] %vm362, %v4337
      %4378 = vst.msk [vmem:[%s278 + $0x10b] sm:$0xff] %vm362, %v4338
      %4379 = vst.msk [vmem:[%s278 + $0x113] sm:$0xff] %vm362, %v4339
      %4380 = vst.msk [vmem:[%s278 + $0x11b] sm:$0xff] %vm362, %v4340
      %4381 = vst.msk [vmem:[%s278 + $0x123] sm:$0xff] %vm362, %v4341
      %vm4382 = vcmask 259072
      %4383 = vst.msk [vmem:[%s278 + $0x12b] sm:$0x3f] %vm4382, %v4342
      %4384 = vst.msk [vmem:[%s278 + $0x131] sm:$0xff] %vm362, 0.0
      %4385 = vst.msk [vmem:[%s278 + $0x139] sm:$0xff] %vm362, 0.0
      %4386 = vst.msk [vmem:[%s278 + $0x141] sm:$0x7] %vm4345, 0.0
      %p4387 = scmp.lt.s32.totalorder %s18, 1
      %s4388 = scalar_select %p4387, %s18, 1
      %s4389 = smul.addr %s4388, 41
      %s4390 = smul.addr %s4389, 8
      %s4391 = scalar_lea.vmem %s7, %s4390
      // Predicated region
      $region49: #{up_block_forward.5} parent=47 // pred_check
        %p4392 = pneg %p188
      $region50: #{up_block_forward.5} parent=47 // pred_check_branch
        %4394 = sbr.rel (%p4392) target = $region52
      $region51: #{up_block_forward.5} parent=47 // pred_region
        _
      $region52: #{up_block_forward.5} parent=47 // pred_fallthru
        _
    $region48: #{up_block_forward.5} parent=5 // pred_fallthru
      _
    %p4395 = scmp.le.s32.totalorder 2, %s13
    // Predicated region
    $region53: #{up_block_forward.5} parent=5 // pred_check
      %p4396 = pneg %p4395
    $region54: #{up_block_forward.5} parent=5 // pred_check_branch
      %4398 = sbr.rel (%p4396) target = $region56
    $region55: #{up_block_forward.5} parent=5 // pred_region
      %s4399 = ssub.s32 %s13, 2
      // Predicated region
      $region57: #{up_block_forward.5} parent=55 // pred_check
        %p4400 = pneg %p194
      $region58: #{up_block_forward.5} parent=55 // pred_check_branch
        %4402 = sbr.rel (%p4400) target = $region60
      $region59: #{up_block_forward.5} parent=55 // pred_region
        %p4403 = scmp.lt.s32.totalorder %s19, 1
        %s4404 = scalar_select %p4403, %s19, 1
        %s4405 = smul.addr %s4404, 41
        %s4406 = smul.addr %s4405, 8
        %s4407 = scalar_lea.vmem %s7, %s4406
      $region60: #{up_block_forward.5} parent=55 // pred_fallthru
        _
    $region56: #{up_block_forward.5} parent=5 // pred_fallthru
      _
  $region6: #{up_block_forward.5} parent=0 // loop_footer
    %s17 = sadd.s32 1, %s13
  $region7: #{up_block_forward.5} parent=0 // loop_footer_branch
    %12 = sbr.rel target = $region3
  $region8: #{up_block_forward.5} parent=0 // loop_exit
    _

// kernel: up_block_forward.4
$region0: #{up_block_forward.4}
  #allocation0 [shape = 'u32[]', space=smem, size = 0x4, offset = 0x4, fixed_abs, tag = 'smem constant byte address 0x4 - core index']
  #allocation1 [shape = 'u32[144,128]{1,0:T(1,128)}', space=vmem, size = 0x12000, scoped, tag = 'internal scratch']
  %s0 = inlined_call_operand.vmem [shape: f32[2,324,32], index: 0, kind: input, shape index: {}]
  %s1 = inlined_call_operand.vmem [shape: f32[2,324,16], index: 1, kind: input, shape index: {}]
  %s2 = inlined_call_operand.vmem [shape: f32[324,1], index: 2, kind: input, shape index: {}]
  %s3 = inlined_call_operand.vmem [shape: f32[48,48], index: 3, kind: input, shape index: {}]
  %s4 = inlined_call_operand.vmem [shape: f32[1,48], index: 4, kind: input, shape index: {}]
  %s5 = inlined_call_operand.vmem [shape: f32[1,48], index: 5, kind: input, shape index: {}]
  %s6 = inlined_call_operand.vmem [shape: bf16[9,48,32], index: 6, kind: input, shape index: {}]
  %s7 = inlined_call_operand.vmem [shape: f32[1,32], index: 7, kind: input, shape index: {}]
  %s8 = inlined_call_operand.vmem [shape: f32[2,324,32], index: 8, kind: output, shape index: {}]
  %s9 = sld [smem:[#allocation0]]
  $region65: #{up_block_forward.4} parent=0
    _
  %s11 = ssub.s32 1, %s9
  %s12 = scalar_select 0, %s11, %s9
  loop: start=0, step=1, limit=4
  $region2: #{up_block_forward.4} parent=0 // loop_pre_header
    _
  $region3: #{up_block_forward.4} parent=0 // loop_header
    %s14 = sphi 0, %s18
    %p15 = scmp.ge.s32.totalorder %s14, 4
    %s24 = sphi 0, %s26
    %s27 = sphi 0, %s24
    %s28 = sphi 0, %s27
    %s44 = sphi 0, %s28
    %s50 = sphi 0, %s52
    %s53 = sphi 0, %s50
    %s54 = sphi 0, %s53
    %s70 = sphi 0, %s54
    %s74 = sphi 0, %s74
    %s76 = sphi 0, %s74
    %s77 = sphi 0, %s76
    %s91 = sphi 0, %s77
    %s95 = sphi 0, %s95
    %s97 = sphi 0, %s95
    %s98 = sphi 0, %s97
    %s112 = sphi 0, %s98
    %s116 = sphi 0, %s116
    %s118 = sphi 0, %s116
    %s119 = sphi 0, %s118
    %s133 = sphi 0, %s119
    %s137 = sphi 0, %s137
    %s139 = sphi 0, %s137
    %s140 = sphi 0, %s139
    %s154 = sphi 0, %s140
    %s158 = sphi 0, %s158
    %s160 = sphi 0, %s158
    %s161 = sphi 0, %s160
    %s175 = sphi 0, %s161
    %s179 = sphi 0, %s179
    %s181 = sphi 0, %s179
    %s182 = sphi 0, %s181
    %s196 = sphi 0, %s182
    %s202 = sphi 0, %s204
    %s205 = sphi 0, %s202
    %s206 = sphi 0, %s205
    %s222 = sphi 0, %s206
  $region4: #{up_block_forward.4} parent=0 // loop_header_branch
    %17 = sbr.rel (%p15) target = $region8
  $region5: #{up_block_forward.4} parent=0 // loop_body
    %s19 = ssub.s32 %s14, 1
    %s20 = ssub.s32 %s14, 2
    %s21 = sadd.s32 %s14, 1
    %s22 = ssub.s32 %s14, %s21
    %p23 = scmp.eq.s32.totalorder %s22, 0
    %s25 = sadd.s32 %s24, 1
    %s26 = scalar_select %p23, %s24, %s25
    %p29 = pneg %p23
    %p30 = scmp.eq.s32.totalorder %s14, 1
    %p31 = por %p29, %p30
    %p32 = scmp.ne.s32.totalorder %s24, %s27
    %p33 = scmp.eq.s32.totalorder %s14, 0
    %p34 = por %p32, %p33
    %p35 = scmp.ne.s32.totalorder %s24, %s27
    %p36 = scmp.eq.s32.totalorder %s19, 1
    %p37 = por %p35, %p36
    %p38 = scmp.ne.s32.totalorder %s27, %s28
    %p39 = scmp.eq.s32.totalorder %s19, 0
    %p40 = por %p38, %p39
    %p41 = scmp.ne.s32.totalorder %s27, %s28
    %p42 = scmp.eq.s32.totalorder %s20, 1
    %p43 = por %p41, %p42
    %p45 = scmp.ne.s32.totalorder %s28, %s44
    %p46 = scmp.eq.s32.totalorder %s20, 0
    %p47 = por %p45, %p46
    %s48 = ssub.s32 %s14, %s21
    %p49 = scmp.eq.s32.totalorder %s48, 0
    %s51 = sadd.s32 %s50, 1
    %s52 = scalar_select %p49, %s50, %s51
    %p55 = pneg %p49
    %p56 = scmp.eq.s32.totalorder %s14, 1
    %p57 = por %p55, %p56
    %p58 = scmp.ne.s32.totalorder %s50, %s53
    %p59 = scmp.eq.s32.totalorder %s14, 0
    %p60 = por %p58, %p59
    %p61 = scmp.ne.s32.totalorder %s50, %s53
    %p62 = scmp.eq.s32.totalorder %s19, 1
    %p63 = por %p61, %p62
    %p64 = scmp.ne.s32.totalorder %s53, %s54
    %p65 = scmp.eq.s32.totalorder %s19, 0
    %p66 = por %p64, %p65
    %p67 = scmp.ne.s32.totalorder %s53, %s54
    %p68 = scmp.eq.s32.totalorder %s20, 1
    %p69 = por %p67, %p68
    %p71 = scmp.ne.s32.totalorder %s54, %s70
    %p72 = scmp.eq.s32.totalorder %s20, 0
    %p73 = por %p71, %p72
    %s75 = sadd.s32 %s74, 1
    %p78 = scmp.eq.s32.totalorder %s14, 1
    %p79 = scmp.ne.s32.totalorder %s74, %s76
    %p80 = scmp.eq.s32.totalorder %s14, 0
    %p81 = por %p79, %p80
    %p82 = scmp.ne.s32.totalorder %s74, %s76
    %p83 = scmp.eq.s32.totalorder %s19, 1
    %p84 = por %p82, %p83
    %p85 = scmp.ne.s32.totalorder %s76, %s77
    %p86 = scmp.eq.s32.totalorder %s19, 0
    %p87 = por %p85, %p86
    %p88 = scmp.ne.s32.totalorder %s76, %s77
    %p89 = scmp.eq.s32.totalorder %s20, 1
    %p90 = por %p88, %p89
    %p92 = scmp.ne.s32.totalorder %s77, %s91
    %p93 = scmp.eq.s32.totalorder %s20, 0
    %p94 = por %p92, %p93
    %s96 = sadd.s32 %s95, 1
    %p99 = scmp.eq.s32.totalorder %s14, 1
    %p100 = scmp.ne.s32.totalorder %s95, %s97
    %p101 = scmp.eq.s32.totalorder %s14, 0
    %p102 = por %p100, %p101
    %p103 = scmp.ne.s32.totalorder %s95, %s97
    %p104 = scmp.eq.s32.totalorder %s19, 1
    %p105 = por %p103, %p104
    %p106 = scmp.ne.s32.totalorder %s97, %s98
    %p107 = scmp.eq.s32.totalorder %s19, 0
    %p108 = por %p106, %p107
    %p109 = scmp.ne.s32.totalorder %s97, %s98
    %p110 = scmp.eq.s32.totalorder %s20, 1
    %p111 = por %p109, %p110
    %p113 = scmp.ne.s32.totalorder %s98, %s112
    %p114 = scmp.eq.s32.totalorder %s20, 0
    %p115 = por %p113, %p114
    %s117 = sadd.s32 %s116, 1
    %p120 = scmp.eq.s32.totalorder %s14, 1
    %p121 = scmp.ne.s32.totalorder %s116, %s118
    %p122 = scmp.eq.s32.totalorder %s14, 0
    %p123 = por %p121, %p122
    %p124 = scmp.ne.s32.totalorder %s116, %s118
    %p125 = scmp.eq.s32.totalorder %s19, 1
    %p126 = por %p124, %p125
    %p127 = scmp.ne.s32.totalorder %s118, %s119
    %p128 = scmp.eq.s32.totalorder %s19, 0
    %p129 = por %p127, %p128
    %p130 = scmp.ne.s32.totalorder %s118, %s119
    %p131 = scmp.eq.s32.totalorder %s20, 1
    %p132 = por %p130, %p131
    %p134 = scmp.ne.s32.totalorder %s119, %s133
    %p135 = scmp.eq.s32.totalorder %s20, 0
    %p136 = por %p134, %p135
    %s138 = sadd.s32 %s137, 1
    %p141 = scmp.eq.s32.totalorder %s14, 1
    %p142 = scmp.ne.s32.totalorder %s137, %s139
    %p143 = scmp.eq.s32.totalorder %s14, 0
    %p144 = por %p142, %p143
    %p145 = scmp.ne.s32.totalorder %s137, %s139
    %p146 = scmp.eq.s32.totalorder %s19, 1
    %p147 = por %p145, %p146
    %p148 = scmp.ne.s32.totalorder %s139, %s140
    %p149 = scmp.eq.s32.totalorder %s19, 0
    %p150 = por %p148, %p149
    %p151 = scmp.ne.s32.totalorder %s139, %s140
    %p152 = scmp.eq.s32.totalorder %s20, 1
    %p153 = por %p151, %p152
    %p155 = scmp.ne.s32.totalorder %s140, %s154
    %p156 = scmp.eq.s32.totalorder %s20, 0
    %p157 = por %p155, %p156
    %s159 = sadd.s32 %s158, 1
    %p162 = scmp.eq.s32.totalorder %s14, 1
    %p163 = scmp.ne.s32.totalorder %s158, %s160
    %p164 = scmp.eq.s32.totalorder %s14, 0
    %p165 = por %p163, %p164
    %p166 = scmp.ne.s32.totalorder %s158, %s160
    %p167 = scmp.eq.s32.totalorder %s19, 1
    %p168 = por %p166, %p167
    %p169 = scmp.ne.s32.totalorder %s160, %s161
    %p170 = scmp.eq.s32.totalorder %s19, 0
    %p171 = por %p169, %p170
    %p172 = scmp.ne.s32.totalorder %s160, %s161
    %p173 = scmp.eq.s32.totalorder %s20, 1
    %p174 = por %p172, %p173
    %p176 = scmp.ne.s32.totalorder %s161, %s175
    %p177 = scmp.eq.s32.totalorder %s20, 0
    %p178 = por %p176, %p177
    %s180 = sadd.s32 %s179, 1
    %p183 = scmp.eq.s32.totalorder %s14, 1
    %p184 = scmp.ne.s32.totalorder %s179, %s181
    %p185 = scmp.eq.s32.totalorder %s14, 0
    %p186 = por %p184, %p185
    %p187 = scmp.ne.s32.totalorder %s179, %s181
    %p188 = scmp.eq.s32.totalorder %s19, 1
    %p189 = por %p187, %p188
    %p190 = scmp.ne.s32.totalorder %s181, %s182
    %p191 = scmp.eq.s32.totalorder %s19, 0
    %p192 = por %p190, %p191
    %p193 = scmp.ne.s32.totalorder %s181, %s182
    %p194 = scmp.eq.s32.totalorder %s20, 1
    %p195 = por %p193, %p194
    %p197 = scmp.ne.s32.totalorder %s182, %s196
    %p198 = scmp.eq.s32.totalorder %s20, 0
    %p199 = por %p197, %p198
    %s200 = ssub.s32 %s14, %s21
    %p201 = scmp.eq.s32.totalorder %s200, 0
    %s203 = sadd.s32 %s202, 1
    %s204 = scalar_select %p201, %s202, %s203
    %p207 = pneg %p201
    %p208 = scmp.eq.s32.totalorder %s14, 1
    %p209 = por %p207, %p208
    %p210 = scmp.ne.s32.totalorder %s202, %s205
    %p211 = scmp.eq.s32.totalorder %s14, 0
    %p212 = por %p210, %p211
    %p213 = scmp.ne.s32.totalorder %s202, %s205
    %p214 = scmp.eq.s32.totalorder %s19, 1
    %p215 = por %p213, %p214
    %p216 = scmp.ne.s32.totalorder %s205, %s206
    %p217 = scmp.eq.s32.totalorder %s19, 0
    %p218 = por %p216, %p217
    %p219 = scmp.ne.s32.totalorder %s205, %s206
    %p220 = scmp.eq.s32.totalorder %s20, 1
    %p221 = por %p219, %p220
    %p223 = scmp.ne.s32.totalorder %s206, %s222
    %p224 = scmp.eq.s32.totalorder %s20, 0
    %p225 = por %p223, %p224
    %p226 = scmp.le.s32.totalorder 1, %s14
    %p227 = scmp.lt.s32.totalorder %s14, 3
    %p228 = pnand %p226, %p227
    %p229 = pneg %p228
    // Predicated region
    $region9: #{up_block_forward.4} parent=5 // pred_check
      _
    $region10: #{up_block_forward.4} parent=5 // pred_check_branch
      %231 = sbr.rel (%p228) target = $region12
    $region11: #{up_block_forward.4} parent=5 // pred_region
      %s232 = ssub.s32 %s14, 1
      // Predicated region
      $region13: #{up_block_forward.4} parent=11 // pred_check
        %p233 = pneg %p87
      $region14: #{up_block_forward.4} parent=11 // pred_check_branch
        %235 = sbr.rel (%p233) target = $region16
      $region15: #{up_block_forward.4} parent=11 // pred_region
        _
      $region16: #{up_block_forward.4} parent=11 // pred_fallthru
        _
      // Predicated region
      $region17: #{up_block_forward.4} parent=11 // pred_check
        %p236 = pneg %p108
      $region18: #{up_block_forward.4} parent=11 // pred_check_branch
        %238 = sbr.rel (%p236) target = $region20
      $region19: #{up_block_forward.4} parent=11 // pred_region
        _
      $region20: #{up_block_forward.4} parent=11 // pred_fallthru
        _
      // Predicated region
      $region21: #{up_block_forward.4} parent=11 // pred_check
        %p239 = pneg %p129
      $region22: #{up_block_forward.4} parent=11 // pred_check_branch
        %241 = sbr.rel (%p239) target = $region24
      $region23: #{up_block_forward.4} parent=11 // pred_region
        _
      $region24: #{up_block_forward.4} parent=11 // pred_fallthru
        _
      // Predicated region
      $region25: #{up_block_forward.4} parent=11 // pred_check
        %p242 = pneg %p150
      $region26: #{up_block_forward.4} parent=11 // pred_check_branch
        %244 = sbr.rel (%p242) target = $region28
      $region27: #{up_block_forward.4} parent=11 // pred_region
        _
      $region28: #{up_block_forward.4} parent=11 // pred_fallthru
        _
      // Predicated region
      $region29: #{up_block_forward.4} parent=11 // pred_check
        %p245 = pneg %p171
      $region30: #{up_block_forward.4} parent=11 // pred_check_branch
        %247 = sbr.rel (%p245) target = $region32
      $region31: #{up_block_forward.4} parent=11 // pred_region
        _
      $region32: #{up_block_forward.4} parent=11 // pred_fallthru
        _
      // Predicated region
      $region33: #{up_block_forward.4} parent=11 // pred_check
        %p248 = pneg %p192
      $region34: #{up_block_forward.4} parent=11 // pred_check_branch
        %250 = sbr.rel (%p248) target = $region36
      $region35: #{up_block_forward.4} parent=11 // pred_region
        _
      $region36: #{up_block_forward.4} parent=11 // pred_fallthru
        _
    $region12: #{up_block_forward.4} parent=5 // pred_fallthru
      _
    %p251 = scmp.lt.s32.totalorder %s14, 2
    // Predicated region
    $region37: #{up_block_forward.4} parent=5 // pred_check
      %p252 = pneg %p251
    $region38: #{up_block_forward.4} parent=5 // pred_check_branch
      %254 = sbr.rel (%p252) target = $region40
    $region39: #{up_block_forward.4} parent=5 // pred_region
      // Predicated region
      $region41: #{up_block_forward.4} parent=39 // pred_check
        %p255 = pneg %p34
      $region42: #{up_block_forward.4} parent=39 // pred_check_branch
        %257 = sbr.rel (%p255) target = $region44
      $region43: #{up_block_forward.4} parent=39 // pred_region
        %p258 = scmp.lt.s32.totalorder %s14, 1
        %s259 = scalar_select %p258, %s14, 1
        %s260 = smul.addr %s259, 41
        %s261 = smul.addr %s260, 8
        %s262 = scalar_lea.vmem %s0, %s261
      $region44: #{up_block_forward.4} parent=39 // pred_fallthru
        _
      // Predicated region
      $region45: #{up_block_forward.4} parent=39 // pred_check
        %p263 = pneg %p60
      $region46: #{up_block_forward.4} parent=39 // pred_check_branch
        %265 = sbr.rel (%p263) target = $region48
      $region47: #{up_block_forward.4} parent=39 // pred_region
        %p266 = scmp.lt.s32.totalorder %s14, 1
        %s267 = scalar_select %p266, %s14, 1
        %s268 = smul.addr %s267, 41
        %s269 = smul.addr %s268, 8
        %s270 = scalar_lea.vmem %s1, %s269
      $region48: #{up_block_forward.4} parent=39 // pred_fallthru
        _
    $region40: #{up_block_forward.4} parent=5 // pred_fallthru
      _
    %p271 = scmp.le.s32.totalorder 1, %s14
    %p272 = scmp.lt.s32.totalorder %s14, 3
    %p273 = pnand %p271, %p272
    %p274 = pneg %p273
    // Predicated region
    $region49: #{up_block_forward.4} parent=5 // pred_check
      _
    $region50: #{up_block_forward.4} parent=5 // pred_check_branch
      %276 = sbr.rel (%p273) target = $region52
    $region51: #{up_block_forward.4} parent=5 // pred_region
      %s277 = ssub.s32 %s14, 1
      %p278 = scmp.lt.s32.totalorder %s19, 1
      %s279 = scalar_select %p278, %s19, 1
      %s280 = smul.addr %s279, 41
      %s281 = smul.addr %s280, 8
      %s282 = scalar_lea.vmem %s0, %s281
      %p283 = pneg %p40
      %p284 = pneg %p37
      %p285 = scmp.lt.s32.totalorder %s19, 1
      %s286 = scalar_select %p285, %s19, 1
      %s287 = smul.addr %s286, 41
      %s288 = smul.addr %s287, 8
      %s289 = scalar_lea.vmem %s1, %s288
      %p290 = pneg %p66
      %p291 = pneg %p63
      %p292 = pneg %p87
      %p293 = pneg %p84
      %p294 = pneg %p108
      %p295 = pneg %p105
      %p296 = pneg %p129
      %p297 = pneg %p126
      %p298 = pneg %p150
      %p299 = pneg %p147
      %p300 = pneg %p171
      %p301 = pneg %p168
      %p302 = pneg %p192
      %p303 = pneg %p189
      %p304 = pneg %p218
      %p305 = pneg %p215
      %p306 = scmp.lt.s32.totalorder %s19, 1
      %s307 = scalar_select %p306, %s19, 1
      %s308 = smul.addr %s307, 41
      %s309 = smul.addr %s308, 8
      %s310 = scalar_lea.vmem %s8, %s309
      %p311 = scmp.lt.s32.totalorder %s19, 1
      %s312 = scalar_select %p311, %s19, 1
      %s313 = smul.addr %s312, 41
      %s314 = smul.addr %s313, 8
      %s315 = scalar_lea.vmem %s0, %s314
      %p316 = scmp.lt.s32.totalorder %s19, 1
      %s317 = scalar_select %p316, %s19, 1
      %s318 = smul.addr %s317, 41
      %s319 = smul.addr %s318, 8
      %s320 = scalar_lea.vmem %s1, %s319
      %p321 = scmp.lt.s32.totalorder %s19, 1
      %s322 = scalar_select %p321, %s19, 1
      %s323 = smul.addr %s322, 41
      %s324 = smul.addr %s323, 8
      %s325 = scalar_lea.vmem %s8, %s324
      %v327 = vld [vmem:[%s315] sm:$0xff]
      %v328 = vld [vmem:[%s315 + $0x8] sm:$0xff]
      %v329 = vld [vmem:[%s315 + $0x10] sm:$0xff]
      %v330 = vld [vmem:[%s315 + $0x18] sm:$0xff]
      %v331 = vld [vmem:[%s315 + $0x20] sm:$0xff]
      %v332 = vld [vmem:[%s315 + $0x28] sm:$0xff]
      %v333 = vld [vmem:[%s315 + $0x30] sm:$0xff]
      %v334 = vld [vmem:[%s315 + $0x38] sm:$0xff]
      %v335 = vld [vmem:[%s315 + $0x40] sm:$0xff]
      %v336 = vld [vmem:[%s315 + $0x48] sm:$0xff]
      %v337 = vld [vmem:[%s315 + $0x50] sm:$0xff]
      %v338 = vld [vmem:[%s315 + $0x58] sm:$0xff]
      %v339 = vld [vmem:[%s315 + $0x60] sm:$0xff]
      %v340 = vld [vmem:[%s315 + $0x68] sm:$0xff]
      %v341 = vld [vmem:[%s315 + $0x70] sm:$0xff]
      %v342 = vld [vmem:[%s315 + $0x78] sm:$0xff]
      %v343 = vld [vmem:[%s315 + $0x80] sm:$0xff]
      %v344 = vld [vmem:[%s315 + $0x88] sm:$0xff]
      %v345 = vld [vmem:[%s315 + $0x90] sm:$0xff]
      %v346 = vld [vmem:[%s315 + $0x98] sm:$0xff]
      %v347 = vld [vmem:[%s315 + $0xa0] sm:$0xff]
      %v348 = vld [vmem:[%s315 + $0xa8] sm:$0xff]
      %v349 = vld [vmem:[%s315 + $0xb0] sm:$0xff]
      %v350 = vld [vmem:[%s315 + $0xb8] sm:$0xff]
      %v351 = vld [vmem:[%s315 + $0xc0] sm:$0xff]
      %v352 = vld [vmem:[%s315 + $0xc8] sm:$0xff]
      %v353 = vld [vmem:[%s315 + $0xd0] sm:$0xff]
      %v354 = vld [vmem:[%s315 + $0xd8] sm:$0xff]
      %v355 = vld [vmem:[%s315 + $0xe0] sm:$0xff]
      %v356 = vld [vmem:[%s315 + $0xe8] sm:$0xff]
      %v357 = vld [vmem:[%s315 + $0xf0] sm:$0xff]
      %v358 = vld [vmem:[%s315 + $0xf8] sm:$0xff]
      %v359 = vld [vmem:[%s315 + $0x100] sm:$0xff]
      %v360 = vld [vmem:[%s315 + $0x108] sm:$0xff]
      %v361 = vld [vmem:[%s315 + $0x110] sm:$0xff]
      %v362 = vld [vmem:[%s315 + $0x118] sm:$0xff]
      %v363 = vld [vmem:[%s315 + $0x120] sm:$0xff]
      %v364 = vld [vmem:[%s315 + $0x128] sm:$0xff]
      %v365 = vld [vmem:[%s315 + $0x130] sm:$0xff]
      %v366 = vld [vmem:[%s315 + $0x138] sm:$0xff]
      %v367 = vld [vmem:[%s315 + $0x140] sm:$0xf]
      %v368 = vld [vmem:[%s320] sm:$0xff]
      %v369 = vld [vmem:[%s320 + $0x8] sm:$0xff]
      %v370 = vld [vmem:[%s320 + $0x10] sm:$0xff]
      %v371 = vld [vmem:[%s320 + $0x18] sm:$0xff]
      %v372 = vld [vmem:[%s320 + $0x20] sm:$0xff]
      %v373 = vld [vmem:[%s320 + $0x28] sm:$0xff]
      %v374 = vld [vmem:[%s320 + $0x30] sm:$0xff]
      %v375 = vld [vmem:[%s320 + $0x38] sm:$0xff]
      %v376 = vld [vmem:[%s320 + $0x40] sm:$0xff]
      %v377 = vld [vmem:[%s320 + $0x48] sm:$0xff]
      %v378 = vld [vmem:[%s320 + $0x50] sm:$0xff]
      %v379 = vld [vmem:[%s320 + $0x58] sm:$0xff]
      %v380 = vld [vmem:[%s320 + $0x60] sm:$0xff]
      %v381 = vld [vmem:[%s320 + $0x68] sm:$0xff]
      %v382 = vld [vmem:[%s320 + $0x70] sm:$0xff]
      %v383 = vld [vmem:[%s320 + $0x78] sm:$0xff]
      %v384 = vld [vmem:[%s320 + $0x80] sm:$0xff]
      %v385 = vld [vmem:[%s320 + $0x88] sm:$0xff]
      %v386 = vld [vmem:[%s320 + $0x90] sm:$0xff]
      %v387 = vld [vmem:[%s320 + $0x98] sm:$0xff]
      %v388 = vld [vmem:[%s320 + $0xa0] sm:$0xff]
      %v389 = vld [vmem:[%s320 + $0xa8] sm:$0xff]
      %v390 = vld [vmem:[%s320 + $0xb0] sm:$0xff]
      %v391 = vld [vmem:[%s320 + $0xb8] sm:$0xff]
      %v392 = vld [vmem:[%s320 + $0xc0] sm:$0xff]
      %v393 = vld [vmem:[%s320 + $0xc8] sm:$0xff]
      %v394 = vld [vmem:[%s320 + $0xd0] sm:$0xff]
      %v395 = vld [vmem:[%s320 + $0xd8] sm:$0xff]
      %v396 = vld [vmem:[%s320 + $0xe0] sm:$0xff]
      %v397 = vld [vmem:[%s320 + $0xe8] sm:$0xff]
      %v398 = vld [vmem:[%s320 + $0xf0] sm:$0xff]
      %v399 = vld [vmem:[%s320 + $0xf8] sm:$0xff]
      %v400 = vld [vmem:[%s320 + $0x100] sm:$0xff]
      %v401 = vld [vmem:[%s320 + $0x108] sm:$0xff]
      %v402 = vld [vmem:[%s320 + $0x110] sm:$0xff]
      %v403 = vld [vmem:[%s320 + $0x118] sm:$0xff]
      %v404 = vld [vmem:[%s320 + $0x120] sm:$0xff]
      %v405 = vld [vmem:[%s320 + $0x128] sm:$0xff]
      %v406 = vld [vmem:[%s320 + $0x130] sm:$0xff]
      %v407 = vld [vmem:[%s320 + $0x138] sm:$0xff]
      %v408 = vld [vmem:[%s320 + $0x140] sm:$0xf]
      %450 = vrot.lane.b32.xlu0 %v368, 32
      %v451 = vpop.permute.xlu0 %450
      %452 = vrot.lane.b32.xlu0 %v369, 32
      %v453 = vpop.permute.xlu0 %452
      %454 = vrot.lane.b32.xlu0 %v370, 32
      %v455 = vpop.permute.xlu0 %454
      %456 = vrot.lane.b32.xlu0 %v371, 32
      %v457 = vpop.permute.xlu0 %456
      %458 = vrot.lane.b32.xlu0 %v372, 32
      %v459 = vpop.permute.xlu0 %458
      %460 = vrot.lane.b32.xlu0 %v373, 32
      %v461 = vpop.permute.xlu0 %460
      %462 = vrot.lane.b32.xlu0 %v374, 32
      %v463 = vpop.permute.xlu0 %462
      %464 = vrot.lane.b32.xlu0 %v375, 32
      %v465 = vpop.permute.xlu0 %464
      %466 = vrot.lane.b32.xlu0 %v376, 32
      %v467 = vpop.permute.xlu0 %466
      %468 = vrot.lane.b32.xlu0 %v377, 32
      %v469 = vpop.permute.xlu0 %468
      %470 = vrot.lane.b32.xlu0 %v378, 32
      %v471 = vpop.permute.xlu0 %470
      %472 = vrot.lane.b32.xlu0 %v379, 32
      %v473 = vpop.permute.xlu0 %472
      %474 = vrot.lane.b32.xlu0 %v380, 32
      %v475 = vpop.permute.xlu0 %474
      %476 = vrot.lane.b32.xlu0 %v381, 32
      %v477 = vpop.permute.xlu0 %476
      %478 = vrot.lane.b32.xlu0 %v382, 32
      %v479 = vpop.permute.xlu0 %478
      %480 = vrot.lane.b32.xlu0 %v383, 32
      %v481 = vpop.permute.xlu0 %480
      %482 = vrot.lane.b32.xlu0 %v384, 32
      %v483 = vpop.permute.xlu0 %482
      %484 = vrot.lane.b32.xlu0 %v385, 32
      %v485 = vpop.permute.xlu0 %484
      %486 = vrot.lane.b32.xlu0 %v386, 32
      %v487 = vpop.permute.xlu0 %486
      %488 = vrot.lane.b32.xlu0 %v387, 32
      %v489 = vpop.permute.xlu0 %488
      %490 = vrot.lane.b32.xlu0 %v388, 32
      %v491 = vpop.permute.xlu0 %490
      %492 = vrot.lane.b32.xlu0 %v389, 32
      %v493 = vpop.permute.xlu0 %492
      %494 = vrot.lane.b32.xlu0 %v390, 32
      %v495 = vpop.permute.xlu0 %494
      %496 = vrot.lane.b32.xlu0 %v391, 32
      %v497 = vpop.permute.xlu0 %496
      %498 = vrot.lane.b32.xlu0 %v392, 32
      %v499 = vpop.permute.xlu0 %498
      %500 = vrot.lane.b32.xlu0 %v393, 32
      %v501 = vpop.permute.xlu0 %500
      %502 = vrot.lane.b32.xlu0 %v394, 32
      %v503 = vpop.permute.xlu0 %502
      %504 = vrot.lane.b32.xlu0 %v395, 32
      %v505 = vpop.permute.xlu0 %504
      %506 = vrot.lane.b32.xlu0 %v396, 32
      %v507 = vpop.permute.xlu0 %506
      %508 = vrot.lane.b32.xlu0 %v397, 32
      %v509 = vpop.permute.xlu0 %508
      %510 = vrot.lane.b32.xlu0 %v398, 32
      %v511 = vpop.permute.xlu0 %510
      %512 = vrot.lane.b32.xlu0 %v399, 32
      %v513 = vpop.permute.xlu0 %512
      %514 = vrot.lane.b32.xlu0 %v400, 32
      %v515 = vpop.permute.xlu0 %514
      %516 = vrot.lane.b32.xlu0 %v401, 32
      %v517 = vpop.permute.xlu0 %516
      %518 = vrot.lane.b32.xlu0 %v402, 32
      %v519 = vpop.permute.xlu0 %518
      %520 = vrot.lane.b32.xlu0 %v403, 32
      %v521 = vpop.permute.xlu0 %520
      %522 = vrot.lane.b32.xlu0 %v404, 32
      %v523 = vpop.permute.xlu0 %522
      %524 = vrot.lane.b32.xlu0 %v405, 32
      %v525 = vpop.permute.xlu0 %524
      %526 = vrot.lane.b32.xlu0 %v406, 32
      %v527 = vpop.permute.xlu0 %526
      %528 = vrot.lane.b32.xlu0 %v407, 32
      %v529 = vpop.permute.xlu0 %528
      %530 = vrot.lane.b32.xlu0 %v408, 32
      %v531 = vpop.permute.xlu0 %530
      %vm573 = vcmask 261120
      %v574 = vsel %vm573, %v327, %v451
      %v575 = vsel %vm573, %v328, %v453
      %v576 = vsel %vm573, %v329, %v455
      %v577 = vsel %vm573, %v330, %v457
      %v578 = vsel %vm573, %v331, %v459
      %v579 = vsel %vm573, %v332, %v461
      %v580 = vsel %vm573, %v333, %v463
      %v581 = vsel %vm573, %v334, %v465
      %v582 = vsel %vm573, %v335, %v467
      %v583 = vsel %vm573, %v336, %v469
      %v584 = vsel %vm573, %v337, %v471
      %v585 = vsel %vm573, %v338, %v473
      %v586 = vsel %vm573, %v339, %v475
      %v587 = vsel %vm573, %v340, %v477
      %v588 = vsel %vm573, %v341, %v479
      %v589 = vsel %vm573, %v342, %v481
      %v590 = vsel %vm573, %v343, %v483
      %v591 = vsel %vm573, %v344, %v485
      %v592 = vsel %vm573, %v345, %v487
      %v593 = vsel %vm573, %v346, %v489
      %v594 = vsel %vm573, %v347, %v491
      %v595 = vsel %vm573, %v348, %v493
      %v596 = vsel %vm573, %v349, %v495
      %v597 = vsel %vm573, %v350, %v497
      %v598 = vsel %vm573, %v351, %v499
      %v599 = vsel %vm573, %v352, %v501
      %v600 = vsel %vm573, %v353, %v503
      %v601 = vsel %vm573, %v354, %v505
      %v602 = vsel %vm573, %v355, %v507
      %v603 = vsel %vm573, %v356, %v509
      %v604 = vsel %vm573, %v357, %v511
      %v605 = vsel %vm573, %v358, %v513
      %v606 = vsel %vm573, %v359, %v515
      %v607 = vsel %vm573, %v360, %v517
      %v608 = vsel %vm573, %v361, %v519
      %v609 = vsel %vm573, %v362, %v521
      %v610 = vsel %vm573, %v363, %v523
      %v611 = vsel %vm573, %v364, %v525
      %v612 = vsel %vm573, %v365, %v527
      %v613 = vsel %vm573, %v366, %v529
      %v614 = vsel %vm573, %v367, %v531
      %v615 = vld [vmem:[%s2] sm:$0xff]
      %v616 = vld [vmem:[%s2 + $0x8] sm:$0xff]
      %v617 = vld [vmem:[%s2 + $0x10] sm:$0xff]
      %v618 = vld [vmem:[%s2 + $0x18] sm:$0xff]
      %v619 = vld [vmem:[%s2 + $0x20] sm:$0xff]
      %v620 = vld [vmem:[%s2 + $0x28] sm:$0xff]
      %v621 = vld [vmem:[%s2 + $0x30] sm:$0xff]
      %v622 = vld [vmem:[%s2 + $0x38] sm:$0xff]
      %v623 = vld [vmem:[%s2 + $0x40] sm:$0xff]
      %v624 = vld [vmem:[%s2 + $0x48] sm:$0xff]
      %v625 = vld [vmem:[%s2 + $0x50] sm:$0xff]
      %v626 = vld [vmem:[%s2 + $0x58] sm:$0xff]
      %v627 = vld [vmem:[%s2 + $0x60] sm:$0xff]
      %v628 = vld [vmem:[%s2 + $0x68] sm:$0xff]
      %v629 = vld [vmem:[%s2 + $0x70] sm:$0xff]
      %v630 = vld [vmem:[%s2 + $0x78] sm:$0xff]
      %v631 = vld [vmem:[%s2 + $0x80] sm:$0xff]
      %v632 = vld [vmem:[%s2 + $0x88] sm:$0xff]
      %v633 = vld [vmem:[%s2 + $0x90] sm:$0xff]
      %v634 = vld [vmem:[%s2 + $0x98] sm:$0xff]
      %v635 = vld [vmem:[%s2 + $0xa0] sm:$0xff]
      %v636 = vld [vmem:[%s2 + $0xa8] sm:$0xff]
      %v637 = vld [vmem:[%s2 + $0xb0] sm:$0xff]
      %v638 = vld [vmem:[%s2 + $0xb8] sm:$0xff]
      %v639 = vld [vmem:[%s2 + $0xc0] sm:$0xff]
      %v640 = vld [vmem:[%s2 + $0xc8] sm:$0xff]
      %v641 = vld [vmem:[%s2 + $0xd0] sm:$0xff]
      %v642 = vld [vmem:[%s2 + $0xd8] sm:$0xff]
      %v643 = vld [vmem:[%s2 + $0xe0] sm:$0xff]
      %v644 = vld [vmem:[%s2 + $0xe8] sm:$0xff]
      %v645 = vld [vmem:[%s2 + $0xf0] sm:$0xff]
      %v646 = vld [vmem:[%s2 + $0xf8] sm:$0xff]
      %v647 = vld [vmem:[%s2 + $0x100] sm:$0xff]
      %v648 = vld [vmem:[%s2 + $0x108] sm:$0xff]
      %v649 = vld [vmem:[%s2 + $0x110] sm:$0xff]
      %v650 = vld [vmem:[%s2 + $0x118] sm:$0xff]
      %v651 = vld [vmem:[%s2 + $0x120] sm:$0xff]
      %v652 = vld [vmem:[%s2 + $0x128] sm:$0xff]
      %v653 = vld [vmem:[%s2 + $0x130] sm:$0xff]
      %v654 = vld [vmem:[%s2 + $0x138] sm:$0xff]
      %v655 = vld [vmem:[%s2 + $0x140] sm:$0xf]
      %vm656 = vcmask 392192
      %v657 = vsel %vm656, %v574, 0.0
      %v658 = vsel %vm656, %v575, 0.0
      %v659 = vadd.f32 %v657, %v658
      %v660 = vsel %vm656, %v576, 0.0
      %v661 = vadd.f32 %v659, %v660
      %v662 = vsel %vm656, %v577, 0.0
      %v663 = vadd.f32 %v661, %v662
      %v664 = vsel %vm656, %v578, 0.0
      %v665 = vadd.f32 %v663, %v664
      %v666 = vsel %vm656, %v579, 0.0
      %v667 = vadd.f32 %v665, %v666
      %v668 = vsel %vm656, %v580, 0.0
      %v669 = vadd.f32 %v667, %v668
      %v670 = vsel %vm656, %v581, 0.0
      %v671 = vadd.f32 %v669, %v670
      %v672 = vsel %vm656, %v582, 0.0
      %v673 = vadd.f32 %v671, %v672
      %v674 = vsel %vm656, %v583, 0.0
      %v675 = vadd.f32 %v673, %v674
      %v676 = vsel %vm656, %v584, 0.0
      %v677 = vadd.f32 %v675, %v676
      %v678 = vsel %vm656, %v585, 0.0
      %v679 = vadd.f32 %v677, %v678
      %v680 = vsel %vm656, %v586, 0.0
      %v681 = vadd.f32 %v679, %v680
      %v682 = vsel %vm656, %v587, 0.0
      %v683 = vadd.f32 %v681, %v682
      %v684 = vsel %vm656, %v588, 0.0
      %v685 = vadd.f32 %v683, %v684
      %v686 = vsel %vm656, %v589, 0.0
      %v687 = vadd.f32 %v685, %v686
      %v688 = vsel %vm656, %v590, 0.0
      %v689 = vadd.f32 %v687, %v688
      %v690 = vsel %vm656, %v591, 0.0
      %v691 = vadd.f32 %v689, %v690
      %v692 = vsel %vm656, %v592, 0.0
      %v693 = vadd.f32 %v691, %v692
      %v694 = vsel %vm656, %v593, 0.0
      %v695 = vadd.f32 %v693, %v694
      %v696 = vsel %vm656, %v594, 0.0
      %v697 = vadd.f32 %v695, %v696
      %v698 = vsel %vm656, %v595, 0.0
      %v699 = vadd.f32 %v697, %v698
      %v700 = vsel %vm656, %v596, 0.0
      %v701 = vadd.f32 %v699, %v700
      %v702 = vsel %vm656, %v597, 0.0
      %v703 = vadd.f32 %v701, %v702
      %v704 = vsel %vm656, %v598, 0.0
      %v705 = vadd.f32 %v703, %v704
      %v706 = vsel %vm656, %v599, 0.0
      %v707 = vadd.f32 %v705, %v706
      %v708 = vsel %vm656, %v600, 0.0
      %v709 = vadd.f32 %v707, %v708
      %v710 = vsel %vm656, %v601, 0.0
      %v711 = vadd.f32 %v709, %v710
      %v712 = vsel %vm656, %v602, 0.0
      %v713 = vadd.f32 %v711, %v712
      %v714 = vsel %vm656, %v603, 0.0
      %v715 = vadd.f32 %v713, %v714
      %v716 = vsel %vm656, %v604, 0.0
      %v717 = vadd.f32 %v715, %v716
      %v718 = vsel %vm656, %v605, 0.0
      %v719 = vadd.f32 %v717, %v718
      %v720 = vsel %vm656, %v606, 0.0
      %v721 = vadd.f32 %v719, %v720
      %v722 = vsel %vm656, %v607, 0.0
      %v723 = vadd.f32 %v721, %v722
      %v724 = vsel %vm656, %v608, 0.0
      %v725 = vadd.f32 %v723, %v724
      %v726 = vsel %vm656, %v609, 0.0
      %v727 = vadd.f32 %v725, %v726
      %v728 = vsel %vm656, %v610, 0.0
      %v729 = vadd.f32 %v727, %v728
      %v730 = vsel %vm656, %v611, 0.0
      %v731 = vadd.f32 %v729, %v730
      %v732 = vsel %vm656, %v612, 0.0
      %v733 = vadd.f32 %v731, %v732
      %v734 = vsel %vm656, %v613, 0.0
      %v735 = vadd.f32 %v733, %v734
      %vm736 = vcmask 388096
      %v737 = vsel %vm736, %v614, 0.0
      %v738 = vadd.f32 %v735, %v737
      %v739 = vrot.slane %v738, 4
      %v740 = vadd.f32 %v738, %v739
      %v741 = vrot.slane %v740, 2
      %v742 = vadd.f32 %v740, %v741
      %v743 = vrot.slane %v742, 1
      %v744 = vadd.f32 %v742, %v743
      %v745 = vmul.f32 %v574, %v574
      %v746 = vmul.f32 %v575, %v575
      %v747 = vmul.f32 %v576, %v576
      %v748 = vmul.f32 %v577, %v577
      %v749 = vmul.f32 %v578, %v578
      %v750 = vmul.f32 %v579, %v579
      %v751 = vmul.f32 %v580, %v580
      %v752 = vmul.f32 %v581, %v581
      %v753 = vmul.f32 %v582, %v582
      %v754 = vmul.f32 %v583, %v583
      %v755 = vmul.f32 %v584, %v584
      %v756 = vmul.f32 %v585, %v585
      %v757 = vmul.f32 %v586, %v586
      %v758 = vmul.f32 %v587, %v587
      %v759 = vmul.f32 %v588, %v588
      %v760 = vmul.f32 %v589, %v589
      %v761 = vmul.f32 %v590, %v590
      %v762 = vmul.f32 %v591, %v591
      %v763 = vmul.f32 %v592, %v592
      %v764 = vmul.f32 %v593, %v593
      %v765 = vmul.f32 %v594, %v594
      %v766 = vmul.f32 %v595, %v595
      %v767 = vmul.f32 %v596, %v596
      %v768 = vmul.f32 %v597, %v597
      %v769 = vmul.f32 %v598, %v598
      %v770 = vmul.f32 %v599, %v599
      %v771 = vmul.f32 %v600, %v600
      %v772 = vmul.f32 %v601, %v601
      %v773 = vmul.f32 %v602, %v602
      %v774 = vmul.f32 %v603, %v603
      %v775 = vmul.f32 %v604, %v604
      %v776 = vmul.f32 %v605, %v605
      %v777 = vmul.f32 %v606, %v606
      %v778 = vmul.f32 %v607, %v607
      %v779 = vmul.f32 %v608, %v608
      %v780 = vmul.f32 %v609, %v609
      %v781 = vmul.f32 %v610, %v610
      %v782 = vmul.f32 %v611, %v611
      %v783 = vmul.f32 %v612, %v612
      %v784 = vmul.f32 %v613, %v613
      %v785 = vmul.f32 %v614, %v614
      %v786 = vsel %vm656, %v745, 0.0
      %v787 = vsel %vm656, %v746, 0.0
      %v788 = vadd.f32 %v786, %v787
      %v789 = vsel %vm656, %v747, 0.0
      %v790 = vadd.f32 %v788, %v789
      %v791 = vsel %vm656, %v748, 0.0
      %v792 = vadd.f32 %v790, %v791
      %v793 = vsel %vm656, %v749, 0.0
      %v794 = vadd.f32 %v792, %v793
      %v795 = vsel %vm656, %v750, 0.0
      %v796 = vadd.f32 %v794, %v795
      %v797 = vsel %vm656, %v751, 0.0
      %v798 = vadd.f32 %v796, %v797
      %v799 = vsel %vm656, %v752, 0.0
      %v800 = vadd.f32 %v798, %v799
      %v801 = vsel %vm656, %v753, 0.0
      %v802 = vadd.f32 %v800, %v801
      %v803 = vsel %vm656, %v754, 0.0
      %v804 = vadd.f32 %v802, %v803
      %v805 = vsel %vm656, %v755, 0.0
      %v806 = vadd.f32 %v804, %v805
      %v807 = vsel %vm656, %v756, 0.0
      %v808 = vadd.f32 %v806, %v807
      %v809 = vsel %vm656, %v757, 0.0
      %v810 = vadd.f32 %v808, %v809
      %v811 = vsel %vm656, %v758, 0.0
      %v812 = vadd.f32 %v810, %v811
      %v813 = vsel %vm656, %v759, 0.0
      %v814 = vadd.f32 %v812, %v813
      %v815 = vsel %vm656, %v760, 0.0
      %v816 = vadd.f32 %v814, %v815
      %v817 = vsel %vm656, %v761, 0.0
      %v818 = vadd.f32 %v816, %v817
      %v819 = vsel %vm656, %v762, 0.0
      %v820 = vadd.f32 %v818, %v819
      %v821 = vsel %vm656, %v763, 0.0
      %v822 = vadd.f32 %v820, %v821
      %v823 = vsel %vm656, %v764, 0.0
      %v824 = vadd.f32 %v822, %v823
      %v825 = vsel %vm656, %v765, 0.0
      %v826 = vadd.f32 %v824, %v825
      %v827 = vsel %vm656, %v766, 0.0
      %v828 = vadd.f32 %v826, %v827
      %v829 = vsel %vm656, %v767, 0.0
      %v830 = vadd.f32 %v828, %v829
      %v831 = vsel %vm656, %v768, 0.0
      %v832 = vadd.f32 %v830, %v831
      %v833 = vsel %vm656, %v769, 0.0
      %v834 = vadd.f32 %v832, %v833
      %v835 = vsel %vm656, %v770, 0.0
      %v836 = vadd.f32 %v834, %v835
      %v837 = vsel %vm656, %v771, 0.0
      %v838 = vadd.f32 %v836, %v837
      %v839 = vsel %vm656, %v772, 0.0
      %v840 = vadd.f32 %v838, %v839
      %v841 = vsel %vm656, %v773, 0.0
      %v842 = vadd.f32 %v840, %v841
      %v843 = vsel %vm656, %v774, 0.0
      %v844 = vadd.f32 %v842, %v843
      %v845 = vsel %vm656, %v775, 0.0
      %v846 = vadd.f32 %v844, %v845
      %v847 = vsel %vm656, %v776, 0.0
      %v848 = vadd.f32 %v846, %v847
      %v849 = vsel %vm656, %v777, 0.0
      %v850 = vadd.f32 %v848, %v849
      %v851 = vsel %vm656, %v778, 0.0
      %v852 = vadd.f32 %v850, %v851
      %v853 = vsel %vm656, %v779, 0.0
      %v854 = vadd.f32 %v852, %v853
      %v855 = vsel %vm656, %v780, 0.0
      %v856 = vadd.f32 %v854, %v855
      %v857 = vsel %vm656, %v781, 0.0
      %v858 = vadd.f32 %v856, %v857
      %v859 = vsel %vm656, %v782, 0.0
      %v860 = vadd.f32 %v858, %v859
      %v861 = vsel %vm656, %v783, 0.0
      %v862 = vadd.f32 %v860, %v861
      %v863 = vsel %vm656, %v784, 0.0
      %v864 = vadd.f32 %v862, %v863
      %v865 = vsel %vm736, %v785, 0.0
      %v866 = vadd.f32 %v864, %v865
      %v867 = vrot.slane %v866, 4
      %v868 = vadd.f32 %v866, %v867
      %v869 = vrot.slane %v868, 2
      %v870 = vadd.f32 %v868, %v869
      %v871 = vrot.slane %v870, 1
      %v872 = vadd.f32 %v870, %v871
      %vm873 = vcmask 1040384
      %v874 = vsel %vm873, %v744, %v872
      %v875 = vld [vmem:[%s3] sm:$0xff]
      %v876 = vld [vmem:[%s3 + $0x8] sm:$0xff]
      %v877 = vld [vmem:[%s3 + $0x10] sm:$0xff]
      %v878 = vld [vmem:[%s3 + $0x18] sm:$0xff]
      %v879 = vld [vmem:[%s3 + $0x20] sm:$0xff]
      %v880 = vld [vmem:[%s3 + $0x28] sm:$0xff]
      %v882 = vsel %vm656, %v874, 0
      %884 = vmatprep.subr.mxu0 0.0
      %885 = vmatpush1.msra.mxu0 %v875
      %886 = vmatprep.subr.mxu0 0.0
      %887 = vmatpush1.msra.mxu0 %v876
      %888 = vmatprep.subr.mxu0 0.0
      %889 = vmatpush1.msra.mxu0 %v877
      %890 = vmatprep.subr.mxu0 0.0
      %891 = vmatpush1.msra.mxu0 %v878
      %892 = vmatprep.subr.mxu0 0.0
      %893 = vmatpush1.msra.mxu0 %v879
      %894 = vmatprep.subr.mxu0 0.0
      %895 = vmatpush1.msra.mxu0 %v880
      %896 = vmatprep.subr.mxu0 0.0
      %897 = vmatpush1.msra.mxu0 0.0
      %898 = vmatprep.subr.mxu0 0.0
      %899 = vmatpush1.msra.mxu0 0.0
      %900 = vmatprep.subr.mxu0 0.0
      %901 = vmatpush1.msra.mxu0 0.0
      %902 = vmatprep.subr.mxu0 0.0
      %903 = vmatpush1.msra.mxu0 0.0
      %904 = vmatprep.subr.mxu0 0.0
      %905 = vmatpush1.msra.mxu0 0.0
      %906 = vmatprep.subr.mxu0 0.0
      %907 = vmatpush1.msra.mxu0 0.0
      %908 = vmatprep.subr.mxu0 0.0
      %909 = vmatpush1.msra.mxu0 0.0
      %910 = vmatprep.subr.mxu0 0.0
      %911 = vmatpush1.msra.mxu0 0.0
      %912 = vmatprep.subr.mxu0 0.0
      %913 = vmatpush1.msra.mxu0 0.0
      %914 = vmatprep.subr.mxu0 0.0
      %915 = vmatpush1.msra.mxu0 0.0
      %916 = vmatprep.subr.mxu0 0.0
      %917 = vmatpush1.msra.mxu0 0.0
      %918 = vmatprep.subr.mxu0 0.0
      %919 = vmatpush1.msra.mxu0 0.0
      %920 = vmatprep.subr.mxu0 0.0
      %921 = vmatpush1.msra.mxu0 0.0
      %922 = vmatprep.subr.mxu0 0.0
      %923 = vmatpush1.msra.mxu0 0.0
      %924 = vmatprep.subr.mxu0 0.0
      %925 = vmatpush1.msra.mxu0 0.0
      %926 = vmatprep.subr.mxu0 0.0
      %927 = vmatpush1.msra.mxu0 0.0
      %928 = vmatprep.subr.mxu0 0.0
      %929 = vmatpush1.msra.mxu0 0.0
      %930 = vmatprep.subr.mxu0 0.0
      %931 = vmatpush1.msra.mxu0 0.0
      %932 = vmatprep.subr.mxu0 0.0
      %933 = vmatpush1.msra.mxu0 0.0
      %934 = vmatprep.subr.mxu0 0.0
      %935 = vmatpush1.msra.mxu0 0.0
      %936 = vmatprep.subr.mxu0 0.0
      %937 = vmatpush1.msra.mxu0 0.0
      %938 = vmatprep.subr.mxu0 0.0
      %939 = vmatpush1.msra.mxu0 0.0
      %940 = vmatprep.subr.mxu0 0.0
      %941 = vmatpush1.msra.mxu0 0.0
      %942 = vmatprep.subr.mxu0 0.0
      %943 = vmatpush1.msra.mxu0 0.0
      %944 = vmatprep.subr.mxu0 0.0
      %945 = vmatpush1.msra.mxu0 0.0
      %946 = vmatprep.subr.mxu0 0.0
      %947 = vmatpush1.msra.mxu0 0.0
      %948 = vmatprep.mubr.f32.mxu0 0.0
      %949 = vmatmul.mubr.f32.gmra.mrb[0].mxu0 %v882
      %v950 = vpop.f32.mrb[0].mxu0
      %v951 = vadd.f32 0.0, %v950
      %v952 = vpop.f32.mrb[0].mxu0
      %953 = vdwg.mxu0
      %v954 = vmul.f32 %v951, 0.0013020834
      %v955 = vmul.f32 %v954, %v954
      %v957 = vrot.slane %v955, 7
      %v959 = vsub.f32 %v954, %v957
      %v960 = vmax.f32 %v959, 0.0
      %v961 = vadd.f32 %v960, 1e-05
      %v962 = vrsqrt.pop %v961
      %v963 = vld [vmem:[%s4] sm:$0x1]
      %v965 = vlaneseq
      %v966 = vshrl.u32 %v965, 7
      %v967 = vsub.s32 0, %v966
      %v968 = vrot.slane %v963, %v967
      %v970 = vmul.f32 %v962, %v968
      %v971 = vlaneseq
      %v972 = vshrl.u32 %v971, 7
      %v973 = vsub.s32 0, %v972
      %v974 = vrot.slane %v954, %v973
      %v975 = vsub.f32 %v574, %v974
      %v976 = vsub.f32 %v575, %v974
      %v977 = vsub.f32 %v576, %v974
      %v978 = vsub.f32 %v577, %v974
      %v979 = vsub.f32 %v578, %v974
      %v980 = vsub.f32 %v579, %v974
      %v981 = vsub.f32 %v580, %v974
      %v982 = vsub.f32 %v581, %v974
      %v983 = vsub.f32 %v582, %v974
      %v984 = vsub.f32 %v583, %v974
      %v985 = vsub.f32 %v584, %v974
      %v986 = vsub.f32 %v585, %v974
      %v987 = vsub.f32 %v586, %v974
      %v988 = vsub.f32 %v587, %v974
      %v989 = vsub.f32 %v588, %v974
      %v990 = vsub.f32 %v589, %v974
      %v991 = vsub.f32 %v590, %v974
      %v992 = vsub.f32 %v591, %v974
      %v993 = vsub.f32 %v592, %v974
      %v994 = vsub.f32 %v593, %v974
      %v995 = vsub.f32 %v594, %v974
      %v996 = vsub.f32 %v595, %v974
      %v997 = vsub.f32 %v596, %v974
      %v998 = vsub.f32 %v597, %v974
      %v999 = vsub.f32 %v598, %v974
      %v1000 = vsub.f32 %v599, %v974
      %v1001 = vsub.f32 %v600, %v974
      %v1002 = vsub.f32 %v601, %v974
      %v1003 = vsub.f32 %v602, %v974
      %v1004 = vsub.f32 %v603, %v974
      %v1005 = vsub.f32 %v604, %v974
      %v1006 = vsub.f32 %v605, %v974
      %v1007 = vsub.f32 %v606, %v974
      %v1008 = vsub.f32 %v607, %v974
      %v1009 = vsub.f32 %v608, %v974
      %v1010 = vsub.f32 %v609, %v974
      %v1011 = vsub.f32 %v610, %v974
      %v1012 = vsub.f32 %v611, %v974
      %v1013 = vsub.f32 %v612, %v974
      %v1014 = vsub.f32 %v613, %v974
      %v1015 = vsub.f32 %v614, %v974
      %v1016 = vlaneseq
      %v1017 = vshrl.u32 %v1016, 7
      %v1018 = vsub.s32 1, %v1017
      %v1019 = vrot.slane %v970, %v1018
      %v1020 = vmul.f32 %v975, %v1019
      %v1021 = vmul.f32 %v976, %v1019
      %v1022 = vmul.f32 %v977, %v1019
      %v1023 = vmul.f32 %v978, %v1019
      %v1024 = vmul.f32 %v979, %v1019
      %v1025 = vmul.f32 %v980, %v1019
      %v1026 = vmul.f32 %v981, %v1019
      %v1027 = vmul.f32 %v982, %v1019
      %v1028 = vmul.f32 %v983, %v1019
      %v1029 = vmul.f32 %v984, %v1019
      %v1030 = vmul.f32 %v985, %v1019
      %v1031 = vmul.f32 %v986, %v1019
      %v1032 = vmul.f32 %v987, %v1019
      %v1033 = vmul.f32 %v988, %v1019
      %v1034 = vmul.f32 %v989, %v1019
      %v1035 = vmul.f32 %v990, %v1019
      %v1036 = vmul.f32 %v991, %v1019
      %v1037 = vmul.f32 %v992, %v1019
      %v1038 = vmul.f32 %v993, %v1019
      %v1039 = vmul.f32 %v994, %v1019
      %v1040 = vmul.f32 %v995, %v1019
      %v1041 = vmul.f32 %v996, %v1019
      %v1042 = vmul.f32 %v997, %v1019
      %v1043 = vmul.f32 %v998, %v1019
      %v1044 = vmul.f32 %v999, %v1019
      %v1045 = vmul.f32 %v1000, %v1019
      %v1046 = vmul.f32 %v1001, %v1019
      %v1047 = vmul.f32 %v1002, %v1019
      %v1048 = vmul.f32 %v1003, %v1019
      %v1049 = vmul.f32 %v1004, %v1019
      %v1050 = vmul.f32 %v1005, %v1019
      %v1051 = vmul.f32 %v1006, %v1019
      %v1052 = vmul.f32 %v1007, %v1019
      %v1053 = vmul.f32 %v1008, %v1019
      %v1054 = vmul.f32 %v1009, %v1019
      %v1055 = vmul.f32 %v1010, %v1019
      %v1056 = vmul.f32 %v1011, %v1019
      %v1057 = vmul.f32 %v1012, %v1019
      %v1058 = vmul.f32 %v1013, %v1019
      %v1059 = vmul.f32 %v1014, %v1019
      %v1060 = vmul.f32 %v1015, %v1019
      %v1061 = vld [vmem:[%s5] sm:$0x1]
      %v1063 = vlaneseq
      %v1064 = vshrl.u32 %v1063, 7
      %v1065 = vsub.s32 0, %v1064
      %v1066 = vrot.slane %v1061, %v1065
      %v1068 = vadd.f32 %v1020, %v1066
      %v1069 = vadd.f32 %v1021, %v1066
      %v1070 = vadd.f32 %v1022, %v1066
      %v1071 = vadd.f32 %v1023, %v1066
      %v1072 = vadd.f32 %v1024, %v1066
      %v1073 = vadd.f32 %v1025, %v1066
      %v1074 = vadd.f32 %v1026, %v1066
      %v1075 = vadd.f32 %v1027, %v1066
      %v1076 = vadd.f32 %v1028, %v1066
      %v1077 = vadd.f32 %v1029, %v1066
      %v1078 = vadd.f32 %v1030, %v1066
      %v1079 = vadd.f32 %v1031, %v1066
      %v1080 = vadd.f32 %v1032, %v1066
      %v1081 = vadd.f32 %v1033, %v1066
      %v1082 = vadd.f32 %v1034, %v1066
      %v1083 = vadd.f32 %v1035, %v1066
      %v1084 = vadd.f32 %v1036, %v1066
      %v1085 = vadd.f32 %v1037, %v1066
      %v1086 = vadd.f32 %v1038, %v1066
      %v1087 = vadd.f32 %v1039, %v1066
      %v1088 = vadd.f32 %v1040, %v1066
      %v1089 = vadd.f32 %v1041, %v1066
      %v1090 = vadd.f32 %v1042, %v1066
      %v1091 = vadd.f32 %v1043, %v1066
      %v1092 = vadd.f32 %v1044, %v1066
      %v1093 = vadd.f32 %v1045, %v1066
      %v1094 = vadd.f32 %v1046, %v1066
      %v1095 = vadd.f32 %v1047, %v1066
      %v1096 = vadd.f32 %v1048, %v1066
      %v1097 = vadd.f32 %v1049, %v1066
      %v1098 = vadd.f32 %v1050, %v1066
      %v1099 = vadd.f32 %v1051, %v1066
      %v1100 = vadd.f32 %v1052, %v1066
      %v1101 = vadd.f32 %v1053, %v1066
      %v1102 = vadd.f32 %v1054, %v1066
      %v1103 = vadd.f32 %v1055, %v1066
      %v1104 = vadd.f32 %v1056, %v1066
      %v1105 = vadd.f32 %v1057, %v1066
      %v1106 = vadd.f32 %v1058, %v1066
      %v1107 = vadd.f32 %v1059, %v1066
      %v1108 = vadd.f32 %v1060, %v1066
      %1110 = vset.pattern.permute.xlu0 0
      %1111 = vperm.xlu0 %1110, %v615
      %v1112 = vpop.permute.xlu0 %1111
      %1115 = vset.pattern.permute.xlu0 0
      %1116 = vperm.xlu0 %1115, %v616
      %v1117 = vpop.permute.xlu0 %1116
      %1120 = vset.pattern.permute.xlu0 0
      %1121 = vperm.xlu0 %1120, %v617
      %v1122 = vpop.permute.xlu0 %1121
      %1125 = vset.pattern.permute.xlu0 0
      %1126 = vperm.xlu0 %1125, %v618
      %v1127 = vpop.permute.xlu0 %1126
      %1130 = vset.pattern.permute.xlu0 0
      %1131 = vperm.xlu0 %1130, %v619
      %v1132 = vpop.permute.xlu0 %1131
      %1135 = vset.pattern.permute.xlu0 0
      %1136 = vperm.xlu0 %1135, %v620
      %v1137 = vpop.permute.xlu0 %1136
      %1140 = vset.pattern.permute.xlu0 0
      %1141 = vperm.xlu0 %1140, %v621
      %v1142 = vpop.permute.xlu0 %1141
      %1145 = vset.pattern.permute.xlu0 0
      %1146 = vperm.xlu0 %1145, %v622
      %v1147 = vpop.permute.xlu0 %1146
      %1150 = vset.pattern.permute.xlu0 0
      %1151 = vperm.xlu0 %1150, %v623
      %v1152 = vpop.permute.xlu0 %1151
      %1155 = vset.pattern.permute.xlu0 0
      %1156 = vperm.xlu0 %1155, %v624
      %v1157 = vpop.permute.xlu0 %1156
      %1160 = vset.pattern.permute.xlu0 0
      %1161 = vperm.xlu0 %1160, %v625
      %v1162 = vpop.permute.xlu0 %1161
      %1165 = vset.pattern.permute.xlu0 0
      %1166 = vperm.xlu0 %1165, %v626
      %v1167 = vpop.permute.xlu0 %1166
      %1170 = vset.pattern.permute.xlu0 0
      %1171 = vperm.xlu0 %1170, %v627
      %v1172 = vpop.permute.xlu0 %1171
      %1175 = vset.pattern.permute.xlu0 0
      %1176 = vperm.xlu0 %1175, %v628
      %v1177 = vpop.permute.xlu0 %1176
      %1180 = vset.pattern.permute.xlu0 0
      %1181 = vperm.xlu0 %1180, %v629
      %v1182 = vpop.permute.xlu0 %1181
      %1185 = vset.pattern.permute.xlu0 0
      %1186 = vperm.xlu0 %1185, %v630
      %v1187 = vpop.permute.xlu0 %1186
      %1190 = vset.pattern.permute.xlu0 0
      %1191 = vperm.xlu0 %1190, %v631
      %v1192 = vpop.permute.xlu0 %1191
      %1195 = vset.pattern.permute.xlu0 0
      %1196 = vperm.xlu0 %1195, %v632
      %v1197 = vpop.permute.xlu0 %1196
      %1200 = vset.pattern.permute.xlu0 0
      %1201 = vperm.xlu0 %1200, %v633
      %v1202 = vpop.permute.xlu0 %1201
      %1205 = vset.pattern.permute.xlu0 0
      %1206 = vperm.xlu0 %1205, %v634
      %v1207 = vpop.permute.xlu0 %1206
      %1210 = vset.pattern.permute.xlu0 0
      %1211 = vperm.xlu0 %1210, %v635
      %v1212 = vpop.permute.xlu0 %1211
      %1215 = vset.pattern.permute.xlu0 0
      %1216 = vperm.xlu0 %1215, %v636
      %v1217 = vpop.permute.xlu0 %1216
      %1220 = vset.pattern.permute.xlu0 0
      %1221 = vperm.xlu0 %1220, %v637
      %v1222 = vpop.permute.xlu0 %1221
      %1225 = vset.pattern.permute.xlu0 0
      %1226 = vperm.xlu0 %1225, %v638
      %v1227 = vpop.permute.xlu0 %1226
      %1230 = vset.pattern.permute.xlu0 0
      %1231 = vperm.xlu0 %1230, %v639
      %v1232 = vpop.permute.xlu0 %1231
      %1235 = vset.pattern.permute.xlu0 0
      %1236 = vperm.xlu0 %1235, %v640
      %v1237 = vpop.permute.xlu0 %1236
      %1240 = vset.pattern.permute.xlu0 0
      %1241 = vperm.xlu0 %1240, %v641
      %v1242 = vpop.permute.xlu0 %1241
      %1245 = vset.pattern.permute.xlu0 0
      %1246 = vperm.xlu0 %1245, %v642
      %v1247 = vpop.permute.xlu0 %1246
      %1250 = vset.pattern.permute.xlu0 0
      %1251 = vperm.xlu0 %1250, %v643
      %v1252 = vpop.permute.xlu0 %1251
      %1255 = vset.pattern.permute.xlu0 0
      %1256 = vperm.xlu0 %1255, %v644
      %v1257 = vpop.permute.xlu0 %1256
      %1260 = vset.pattern.permute.xlu0 0
      %1261 = vperm.xlu0 %1260, %v645
      %v1262 = vpop.permute.xlu0 %1261
      %1265 = vset.pattern.permute.xlu0 0
      %1266 = vperm.xlu0 %1265, %v646
      %v1267 = vpop.permute.xlu0 %1266
      %1270 = vset.pattern.permute.xlu0 0
      %1271 = vperm.xlu0 %1270, %v647
      %v1272 = vpop.permute.xlu0 %1271
      %1275 = vset.pattern.permute.xlu0 0
      %1276 = vperm.xlu0 %1275, %v648
      %v1277 = vpop.permute.xlu0 %1276
      %1280 = vset.pattern.permute.xlu0 0
      %1281 = vperm.xlu0 %1280, %v649
      %v1282 = vpop.permute.xlu0 %1281
      %1285 = vset.pattern.permute.xlu0 0
      %1286 = vperm.xlu0 %1285, %v650
      %v1287 = vpop.permute.xlu0 %1286
      %1290 = vset.pattern.permute.xlu0 0
      %1291 = vperm.xlu0 %1290, %v651
      %v1292 = vpop.permute.xlu0 %1291
      %1295 = vset.pattern.permute.xlu0 0
      %1296 = vperm.xlu0 %1295, %v652
      %v1297 = vpop.permute.xlu0 %1296
      %1300 = vset.pattern.permute.xlu0 0
      %1301 = vperm.xlu0 %1300, %v653
      %v1302 = vpop.permute.xlu0 %1301
      %1305 = vset.pattern.permute.xlu0 0
      %1306 = vperm.xlu0 %1305, %v654
      %v1307 = vpop.permute.xlu0 %1306
      %1310 = vset.pattern.permute.xlu0 0
      %1311 = vperm.xlu0 %1310, %v655
      %v1312 = vpop.permute.xlu0 %1311
      %v1314 = vmul.f32 %v1068, %v1112
      %v1315 = vmul.f32 %v1069, %v1117
      %v1316 = vmul.f32 %v1070, %v1122
      %v1317 = vmul.f32 %v1071, %v1127
      %v1318 = vmul.f32 %v1072, %v1132
      %v1319 = vmul.f32 %v1073, %v1137
      %v1320 = vmul.f32 %v1074, %v1142
      %v1321 = vmul.f32 %v1075, %v1147
      %v1322 = vmul.f32 %v1076, %v1152
      %v1323 = vmul.f32 %v1077, %v1157
      %v1324 = vmul.f32 %v1078, %v1162
      %v1325 = vmul.f32 %v1079, %v1167
      %v1326 = vmul.f32 %v1080, %v1172
      %v1327 = vmul.f32 %v1081, %v1177
      %v1328 = vmul.f32 %v1082, %v1182
      %v1329 = vmul.f32 %v1083, %v1187
      %v1330 = vmul.f32 %v1084, %v1192
      %v1331 = vmul.f32 %v1085, %v1197
      %v1332 = vmul.f32 %v1086, %v1202
      %v1333 = vmul.f32 %v1087, %v1207
      %v1334 = vmul.f32 %v1088, %v1212
      %v1335 = vmul.f32 %v1089, %v1217
      %v1336 = vmul.f32 %v1090, %v1222
      %v1337 = vmul.f32 %v1091, %v1227
      %v1338 = vmul.f32 %v1092, %v1232
      %v1339 = vmul.f32 %v1093, %v1237
      %v1340 = vmul.f32 %v1094, %v1242
      %v1341 = vmul.f32 %v1095, %v1247
      %v1342 = vmul.f32 %v1096, %v1252
      %v1343 = vmul.f32 %v1097, %v1257
      %v1344 = vmul.f32 %v1098, %v1262
      %v1345 = vmul.f32 %v1099, %v1267
      %v1346 = vmul.f32 %v1100, %v1272
      %v1347 = vmul.f32 %v1101, %v1277
      %v1348 = vmul.f32 %v1102, %v1282
      %v1349 = vmul.f32 %v1103, %v1287
      %v1350 = vmul.f32 %v1104, %v1292
      %v1351 = vmul.f32 %v1105, %v1297
      %v1352 = vmul.f32 %v1106, %v1302
      %v1353 = vmul.f32 %v1107, %v1307
      %v1354 = vmul.f32 %v1108, %v1312
      %v1355 = vpack.c.bf16 %v1315, %v1314
      %v1356 = vpack.c.bf16 %v1317, %v1316
      %v1357 = vpack.c.bf16 %v1319, %v1318
      %v1358 = vpack.c.bf16 %v1321, %v1320
      %v1359 = vpack.c.bf16 %v1323, %v1322
      %v1360 = vpack.c.bf16 %v1325, %v1324
      %v1361 = vpack.c.bf16 %v1327, %v1326
      %v1362 = vpack.c.bf16 %v1329, %v1328
      %v1363 = vpack.c.bf16 %v1331, %v1330
      %v1364 = vpack.c.bf16 %v1333, %v1332
      %v1365 = vpack.c.bf16 %v1335, %v1334
      %v1366 = vpack.c.bf16 %v1337, %v1336
      %v1367 = vpack.c.bf16 %v1339, %v1338
      %v1368 = vpack.c.bf16 %v1341, %v1340
      %v1369 = vpack.c.bf16 %v1343, %v1342
      %v1370 = vpack.c.bf16 %v1345, %v1344
      %v1371 = vpack.c.bf16 %v1347, %v1346
      %v1372 = vpack.c.bf16 %v1349, %v1348
      %v1373 = vld [vmem:[%s6] sm:$0xf]
      %v1374 = vld [vmem:[%s6 + $0x4] sm:$0xf]
      %v1375 = vld [vmem:[%s6 + $0x8] sm:$0xf]
      %v1376 = vld [vmem:[%s6 + $0xc] sm:$0xf]
      %v1377 = vld [vmem:[%s6 + $0x10] sm:$0xf]
      %v1378 = vld [vmem:[%s6 + $0x14] sm:$0xf]
      %s1379 = scalar_lea.vmem %s6, 24
      %v1380 = vld [vmem:[%s1379] sm:$0xf]
      %v1381 = vld [vmem:[%s1379 + $0x4] sm:$0xf]
      %v1382 = vld [vmem:[%s1379 + $0x8] sm:$0xf]
      %v1383 = vld [vmem:[%s1379 + $0xc] sm:$0xf]
      %v1384 = vld [vmem:[%s1379 + $0x10] sm:$0xf]
      %v1385 = vld [vmem:[%s1379 + $0x14] sm:$0xf]
      %vm1386 = vsmask.f32 7424
      %v1388 = vshrl.u32 %v1355, 16
      %v1390 = vshll.u32 %v1355, 16
      %v1392 = vrot.slane %v1390, 1
      %v1393 = vor.u32 %v1388, %v1392
      %v1395 = vshll.u32 %v1356, 16
      %v1397 = vrot.slane %v1395, 1
      %v1398 = vsel %vm1386, %v1393, %v1397
      %v1399 = vshrl.u32 %v1356, 16
      %v1401 = vor.u32 %v1399, %v1397
      %v1403 = vshll.u32 %v1357, 16
      %v1405 = vrot.slane %v1403, 1
      %v1406 = vsel %vm1386, %v1401, %v1405
      %v1407 = vshrl.u32 %v1357, 16
      %v1409 = vor.u32 %v1407, %v1405
      %v1411 = vshll.u32 %v1358, 16
      %v1413 = vrot.slane %v1411, 1
      %v1414 = vsel %vm1386, %v1409, %v1413
      %v1415 = vshrl.u32 %v1358, 16
      %v1417 = vor.u32 %v1415, %v1413
      %v1419 = vshll.u32 %v1359, 16
      %v1421 = vrot.slane %v1419, 1
      %v1422 = vsel %vm1386, %v1417, %v1421
      %v1423 = vshrl.u32 %v1359, 16
      %v1425 = vor.u32 %v1423, %v1421
      %v1427 = vshll.u32 %v1360, 16
      %v1429 = vrot.slane %v1427, 1
      %v1430 = vsel %vm1386, %v1425, %v1429
      %v1431 = vshrl.u32 %v1360, 16
      %v1433 = vor.u32 %v1431, %v1429
      %v1435 = vshll.u32 %v1361, 16
      %v1437 = vrot.slane %v1435, 1
      %v1438 = vsel %vm1386, %v1433, %v1437
      %v1439 = vshrl.u32 %v1361, 16
      %v1441 = vor.u32 %v1439, %v1437
      %v1443 = vshll.u32 %v1362, 16
      %v1445 = vrot.slane %v1443, 1
      %v1446 = vsel %vm1386, %v1441, %v1445
      %v1447 = vshrl.u32 %v1362, 16
      %v1449 = vor.u32 %v1447, %v1445
      %v1451 = vshll.u32 %v1363, 16
      %v1453 = vrot.slane %v1451, 1
      %v1454 = vsel %vm1386, %v1449, %v1453
      %v1455 = vshrl.u32 %v1363, 16
      %v1457 = vor.u32 %v1455, %v1453
      %v1459 = vshll.u32 %v1364, 16
      %v1461 = vrot.slane %v1459, 1
      %v1462 = vsel %vm1386, %v1457, %v1461
      %v1463 = vshrl.u32 %v1364, 16
      %v1465 = vor.u32 %v1463, %v1461
      %v1467 = vshll.u32 %v1365, 16
      %v1469 = vrot.slane %v1467, 1
      %v1470 = vsel %vm1386, %v1465, %v1469
      %v1471 = vshrl.u32 %v1365, 16
      %v1473 = vor.u32 %v1471, %v1469
      %v1475 = vshll.u32 %v1366, 16
      %v1477 = vrot.slane %v1475, 1
      %v1478 = vsel %vm1386, %v1473, %v1477
      %v1479 = vshrl.u32 %v1366, 16
      %v1481 = vor.u32 %v1479, %v1477
      %v1483 = vshll.u32 %v1367, 16
      %v1485 = vrot.slane %v1483, 1
      %v1486 = vsel %vm1386, %v1481, %v1485
      %v1487 = vshrl.u32 %v1367, 16
      %v1489 = vor.u32 %v1487, %v1485
      %v1491 = vshll.u32 %v1368, 16
      %v1493 = vrot.slane %v1491, 1
      %v1494 = vsel %vm1386, %v1489, %v1493
      %v1495 = vshrl.u32 %v1368, 16
      %v1497 = vor.u32 %v1495, %v1493
      %v1499 = vshll.u32 %v1369, 16
      %v1501 = vrot.slane %v1499, 1
      %v1502 = vsel %vm1386, %v1497, %v1501
      %v1503 = vshrl.u32 %v1369, 16
      %v1505 = vor.u32 %v1503, %v1501
      %v1507 = vshll.u32 %v1370, 16
      %v1509 = vrot.slane %v1507, 1
      %v1510 = vsel %vm1386, %v1505, %v1509
      %v1511 = vshrl.u32 %v1370, 16
      %v1513 = vor.u32 %v1511, %v1509
      %v1515 = vshll.u32 %v1371, 16
      %v1517 = vrot.slane %v1515, 1
      %v1518 = vsel %vm1386, %v1513, %v1517
      %v1519 = vshrl.u32 %v1371, 16
      %v1521 = vor.u32 %v1519, %v1517
      %v1523 = vshll.u32 %v1372, 16
      %v1525 = vrot.slane %v1523, 1
      %v1526 = vsel %vm1386, %v1521, %v1525
      %v1527 = vshrl.u32 %v1372, 16
      %v1529 = vor.u32 %v1527, %v1525
      %v1536 = vunpack.c.l.b16 %v1380
      %v1537 = vunpack.c.l.b16 %v1381
      %v1538 = vunpack.c.l.b16 %v1382
      %v1539 = vunpack.c.l.b16 %v1383
      %v1540 = vunpack.c.l.b16 %v1384
      %v1541 = vunpack.c.l.b16 %v1385
      %v1542 = vpack.c.b16 %v1537, %v1536
      %v1543 = vpack.c.b16 %v1539, %v1538
      %v1544 = vpack.c.b16 %v1541, %v1540
      %v1549 = vsel %vm656, %v1398, 0
      %v1552 = vsel %vm656, %v1406, 0
      %v1555 = vsel %vm656, %v1414, 0
      %v1558 = vsel %vm656, %v1422, 0
      %v1561 = vsel %vm656, %v1430, 0
      %v1564 = vsel %vm656, %v1438, 0
      %v1567 = vsel %vm656, %v1446, 0
      %v1570 = vsel %vm656, %v1454, 0
      %v1573 = vsel %vm656, %v1462, 0
      %v1576 = vsel %vm656, %v1470, 0
      %v1579 = vsel %vm656, %v1478, 0
      %v1582 = vsel %vm656, %v1486, 0
      %v1585 = vsel %vm656, %v1494, 0
      %v1588 = vsel %vm656, %v1502, 0
      %v1591 = vsel %vm656, %v1510, 0
      %v1594 = vsel %vm656, %v1518, 0
      %v1597 = vsel %vm656, %v1526, 0
      %v1600 = vsel %vm656, %v1529, 0
      %1602 = vmatprep.subr.bf16.mxu0 0
      %1603 = vmatpush1.bf16.msra.mxu0 %v1542
      %1604 = vmatprep.subr.bf16.mxu0 0
      %1605 = vmatpush1.bf16.msra.mxu0 %v1543
      %1606 = vmatprep.subr.bf16.mxu0 0
      %1607 = vmatpush1.bf16.msra.mxu0 %v1544
      %1608 = vmatprep.subr.bf16.mxu0 0
      %1609 = vmatpush1.bf16.msra.mxu0 0
      %1610 = vmatprep.subr.bf16.mxu0 0
      %1611 = vmatpush1.bf16.msra.mxu0 0
      %1612 = vmatprep.subr.bf16.mxu0 0
      %1613 = vmatpush1.bf16.msra.mxu0 0
      %1614 = vmatprep.subr.bf16.mxu0 0
      %1615 = vmatpush1.bf16.msra.mxu0 0
      %1616 = vmatprep.subr.bf16.mxu0 0
      %1617 = vmatpush1.bf16.msra.mxu0 0
      %1618 = vmatprep.subr.bf16.mxu0 0
      %1619 = vmatpush1.bf16.msra.mxu0 0
      %1620 = vmatprep.subr.bf16.mxu0 0
      %1621 = vmatpush1.bf16.msra.mxu0 0
      %1622 = vmatprep.subr.bf16.mxu0 0
      %1623 = vmatpush1.bf16.msra.mxu0 0
      %1624 = vmatprep.subr.bf16.mxu0 0
      %1625 = vmatpush1.bf16.msra.mxu0 0
      %1626 = vmatprep.subr.bf16.mxu0 0
      %1627 = vmatpush1.bf16.msra.mxu0 0
      %1628 = vmatprep.subr.bf16.mxu0 0
      %1629 = vmatpush1.bf16.msra.mxu0 0
      %1630 = vmatprep.subr.bf16.mxu0 0
      %1631 = vmatpush1.bf16.msra.mxu0 0
      %1632 = vmatprep.subr.bf16.mxu0 0
      %1633 = vmatpush1.bf16.msra.mxu0 0
      %1634 = vmatprep.mubr.bf16.mxu0 0
      %1635 = vmatmul.mubr.bf16.gmra.mrb[0].mxu0 %v1549
      %v1636 = vpop.f32.mrb[0].mxu0
      %v1637 = vadd.f32 0.0, %v1636
      %v1638 = vpop.f32.mrb[0].mxu0
      %v1639 = vpop.f32.mrb[0].mxu0
      %v1640 = vadd.f32 0.0, %v1639
      %v1641 = vpop.f32.mrb[0].mxu0
      %1642 = vmatprep.mubr.bf16.mxu0 0
      %1643 = vmatmul.mubr.bf16.gmra.mrb[0].mxu0 %v1552
      %v1644 = vpop.f32.mrb[0].mxu0
      %v1645 = vadd.f32 0.0, %v1644
      %v1646 = vpop.f32.mrb[0].mxu0
      %v1647 = vpop.f32.mrb[0].mxu0
      %v1648 = vadd.f32 0.0, %v1647
      %v1649 = vpop.f32.mrb[0].mxu0
      %1650 = vmatprep.mubr.bf16.mxu0 0
      %1651 = vmatmul.mubr.bf16.gmra.mrb[0].mxu0 %v1555
      %v1652 = vpop.f32.mrb[0].mxu0
      %v1653 = vadd.f32 0.0, %v1652
      %v1654 = vpop.f32.mrb[0].mxu0
      %v1655 = vpop.f32.mrb[0].mxu0
      %v1656 = vadd.f32 0.0, %v1655
      %v1657 = vpop.f32.mrb[0].mxu0
      %1658 = vmatprep.mubr.bf16.mxu0 0
      %1659 = vmatmul.mubr.bf16.gmra.mrb[0].mxu0 %v1558
      %v1660 = vpop.f32.mrb[0].mxu0
      %v1661 = vadd.f32 0.0, %v1660
      %v1662 = vpop.f32.mrb[0].mxu0
      %v1663 = vpop.f32.mrb[0].mxu0
      %v1664 = vadd.f32 0.0, %v1663
      %v1665 = vpop.f32.mrb[0].mxu0
      %1666 = vmatprep.mubr.bf16.mxu0 0
      %1667 = vmatmul.mubr.bf16.gmra.mrb[0].mxu0 %v1561
      %v1668 = vpop.f32.mrb[0].mxu0
      %v1669 = vadd.f32 0.0, %v1668
      %v1670 = vpop.f32.mrb[0].mxu0
      %v1671 = vpop.f32.mrb[0].mxu0
      %v1672 = vadd.f32 0.0, %v1671
      %v1673 = vpop.f32.mrb[0].mxu0
      %1674 = vmatprep.mubr.bf16.mxu0 0
      %1675 = vmatmul.mubr.bf16.gmra.mrb[0].mxu0 %v1564
      %v1676 = vpop.f32.mrb[0].mxu0
      %v1677 = vadd.f32 0.0, %v1676
      %v1678 = vpop.f32.mrb[0].mxu0
      %v1679 = vpop.f32.mrb[0].mxu0
      %v1680 = vadd.f32 0.0, %v1679
      %v1681 = vpop.f32.mrb[0].mxu0
      %1682 = vmatprep.mubr.bf16.mxu0 0
      %1683 = vmatmul.mubr.bf16.gmra.mrb[0].mxu0 %v1567
      %v1684 = vpop.f32.mrb[0].mxu0
      %v1685 = vadd.f32 0.0, %v1684
      %v1686 = vpop.f32.mrb[0].mxu0
      %v1687 = vpop.f32.mrb[0].mxu0
      %v1688 = vadd.f32 0.0, %v1687
      %v1689 = vpop.f32.mrb[0].mxu0
      %1690 = vmatprep.mubr.bf16.mxu0 0
      %1691 = vmatmul.mubr.bf16.gmra.mrb[0].mxu0 %v1570
      %v1692 = vpop.f32.mrb[0].mxu0
      %v1693 = vadd.f32 0.0, %v1692
      %v1694 = vpop.f32.mrb[0].mxu0
      %v1695 = vpop.f32.mrb[0].mxu0
      %v1696 = vadd.f32 0.0, %v1695
      %v1697 = vpop.f32.mrb[0].mxu0
      %1698 = vmatprep.mubr.bf16.mxu0 0
      %1699 = vmatmul.mubr.bf16.gmra.mrb[0].mxu0 %v1573
      %v1700 = vpop.f32.mrb[0].mxu0
      %v1701 = vadd.f32 0.0, %v1700
      %v1702 = vpop.f32.mrb[0].mxu0
      %v1703 = vpop.f32.mrb[0].mxu0
      %v1704 = vadd.f32 0.0, %v1703
      %v1705 = vpop.f32.mrb[0].mxu0
      %1706 = vmatprep.mubr.bf16.mxu0 0
      %1707 = vmatmul.mubr.bf16.gmra.mrb[0].mxu0 %v1576
      %v1708 = vpop.f32.mrb[0].mxu0
      %v1709 = vadd.f32 0.0, %v1708
      %v1710 = vpop.f32.mrb[0].mxu0
      %v1711 = vpop.f32.mrb[0].mxu0
      %v1712 = vadd.f32 0.0, %v1711
      %v1713 = vpop.f32.mrb[0].mxu0
      %1714 = vmatprep.mubr.bf16.mxu0 0
      %1715 = vmatmul.mubr.bf16.gmra.mrb[0].mxu0 %v1579
      %v1716 = vpop.f32.mrb[0].mxu0
      %v1717 = vadd.f32 0.0, %v1716
      %v1718 = vpop.f32.mrb[0].mxu0
      %v1719 = vpop.f32.mrb[0].mxu0
      %v1720 = vadd.f32 0.0, %v1719
      %v1721 = vpop.f32.mrb[0].mxu0
      %1722 = vmatprep.mubr.bf16.mxu0 0
      %1723 = vmatmul.mubr.bf16.gmra.mrb[0].mxu0 %v1582
      %v1724 = vpop.f32.mrb[0].mxu0
      %v1725 = vadd.f32 0.0, %v1724
      %v1726 = vpop.f32.mrb[0].mxu0
      %v1727 = vpop.f32.mrb[0].mxu0
      %v1728 = vadd.f32 0.0, %v1727
      %v1729 = vpop.f32.mrb[0].mxu0
      %1730 = vmatprep.mubr.bf16.mxu0 0
      %1731 = vmatmul.mubr.bf16.gmra.mrb[0].mxu0 %v1585
      %v1732 = vpop.f32.mrb[0].mxu0
      %v1733 = vadd.f32 0.0, %v1732
      %v1734 = vpop.f32.mrb[0].mxu0
      %v1735 = vpop.f32.mrb[0].mxu0
      %v1736 = vadd.f32 0.0, %v1735
      %v1737 = vpop.f32.mrb[0].mxu0
      %1738 = vmatprep.mubr.bf16.mxu0 0
      %1739 = vmatmul.mubr.bf16.gmra.mrb[0].mxu0 %v1588
      %v1740 = vpop.f32.mrb[0].mxu0
      %v1741 = vadd.f32 0.0, %v1740
      %v1742 = vpop.f32.mrb[0].mxu0
      %v1743 = vpop.f32.mrb[0].mxu0
      %v1744 = vadd.f32 0.0, %v1743
      %v1745 = vpop.f32.mrb[0].mxu0
      %1746 = vmatprep.mubr.bf16.mxu0 0
      %1747 = vmatmul.mubr.bf16.gmra.mrb[0].mxu0 %v1591
      %v1748 = vpop.f32.mrb[0].mxu0
      %v1749 = vadd.f32 0.0, %v1748
      %v1750 = vpop.f32.mrb[0].mxu0
      %v1751 = vpop.f32.mrb[0].mxu0
      %v1752 = vadd.f32 0.0, %v1751
      %v1753 = vpop.f32.mrb[0].mxu0
      %1754 = vmatprep.mubr.bf16.mxu0 0
      %1755 = vmatmul.mubr.bf16.gmra.mrb[0].mxu0 %v1594
      %v1756 = vpop.f32.mrb[0].mxu0
      %v1757 = vadd.f32 0.0, %v1756
      %v1758 = vpop.f32.mrb[0].mxu0
      %v1759 = vpop.f32.mrb[0].mxu0
      %v1760 = vadd.f32 0.0, %v1759
      %v1761 = vpop.f32.mrb[0].mxu0
      %1762 = vmatprep.mubr.bf16.mxu0 0
      %1763 = vmatmul.mubr.bf16.gmra.mrb[0].mxu0 %v1597
      %v1764 = vpop.f32.mrb[0].mxu0
      %v1765 = vadd.f32 0.0, %v1764
      %v1766 = vpop.f32.mrb[0].mxu0
      %v1767 = vpop.f32.mrb[0].mxu0
      %v1768 = vadd.f32 0.0, %v1767
      %v1769 = vpop.f32.mrb[0].mxu0
      %1770 = vmatprep.mubr.bf16.mxu0 0
      %1771 = vmatmul.mubr.bf16.gmra.mrb[0].mxu0 %v1600
      %v1772 = vpop.f32.mrb[0].mxu0
      %v1773 = vadd.f32 0.0, %v1772
      %v1774 = vpop.f32.mrb[0].mxu0
      %v1775 = vpop.f32.mrb[0].mxu0
      %v1776 = vadd.f32 0.0, %v1775
      %v1777 = vpop.f32.mrb[0].mxu0
      %1778 = vdwg.mxu0
      %v1785 = vunpack.c.l.b16 %v1373
      %v1786 = vunpack.c.l.b16 %v1374
      %v1787 = vunpack.c.l.b16 %v1375
      %v1788 = vunpack.c.l.b16 %v1376
      %v1789 = vunpack.c.l.b16 %v1377
      %v1790 = vunpack.c.l.b16 %v1378
      %v1791 = vpack.c.b16 %v1786, %v1785
      %v1792 = vpack.c.b16 %v1788, %v1787
      %v1793 = vpack.c.b16 %v1790, %v1789
      %v1797 = vsel %vm656, %v1355, 0
      %v1799 = vsel %vm656, %v1356, 0
      %v1801 = vsel %vm656, %v1357, 0
      %v1803 = vsel %vm656, %v1358, 0
      %v1805 = vsel %vm656, %v1359, 0
      %v1807 = vsel %vm656, %v1360, 0
      %v1809 = vsel %vm656, %v1361, 0
      %v1811 = vsel %vm656, %v1362, 0
      %v1813 = vsel %vm656, %v1363, 0
      %v1815 = vsel %vm656, %v1364, 0
      %v1817 = vsel %vm656, %v1365, 0
      %v1819 = vsel %vm656, %v1366, 0
      %v1821 = vsel %vm656, %v1367, 0
      %v1823 = vsel %vm656, %v1368, 0
      %v1825 = vsel %vm656, %v1369, 0
      %v1827 = vsel %vm656, %v1370, 0
      %v1829 = vsel %vm656, %v1371, 0
      %v1831 = vsel %vm656, %v1372, 0
      %1833 = vmatprep.subr.bf16.mxu0 0
      %1834 = vmatpush1.bf16.msra.mxu0 %v1791
      %1835 = vmatprep.subr.bf16.mxu0 0
      %1836 = vmatpush1.bf16.msra.mxu0 %v1792
      %1837 = vmatprep.subr.bf16.mxu0 0
      %1838 = vmatpush1.bf16.msra.mxu0 %v1793
      %1839 = vmatprep.subr.bf16.mxu0 0
      %1840 = vmatpush1.bf16.msra.mxu0 0
      %1841 = vmatprep.subr.bf16.mxu0 0
      %1842 = vmatpush1.bf16.msra.mxu0 0
      %1843 = vmatprep.subr.bf16.mxu0 0
      %1844 = vmatpush1.bf16.msra.mxu0 0
      %1845 = vmatprep.subr.bf16.mxu0 0
      %1846 = vmatpush1.bf16.msra.mxu0 0
      %1847 = vmatprep.subr.bf16.mxu0 0
      %1848 = vmatpush1.bf16.msra.mxu0 0
      %1849 = vmatprep.subr.bf16.mxu0 0
      %1850 = vmatpush1.bf16.msra.mxu0 0
      %1851 = vmatprep.subr.bf16.mxu0 0
      %1852 = vmatpush1.bf16.msra.mxu0 0
      %1853 = vmatprep.subr.bf16.mxu0 0
      %1854 = vmatpush1.bf16.msra.mxu0 0
      %1855 = vmatprep.subr.bf16.mxu0 0
      %1856 = vmatpush1.bf16.msra.mxu0 0
      %1857 = vmatprep.subr.bf16.mxu0 0
      %1858 = vmatpush1.bf16.msra.mxu0 0
      %1859 = vmatprep.subr.bf16.mxu0 0
      %1860 = vmatpush1.bf16.msra.mxu0 0
      %1861 = vmatprep.subr.bf16.mxu0 0
      %1862 = vmatpush1.bf16.msra.mxu0 0
      %1863 = vmatprep.subr.bf16.mxu0 0
      %1864 = vmatpush1.bf16.msra.mxu0 0
      %1865 = vmatprep.mubr.bf16.mxu0 0
      %1866 = vmatmul.mubr.bf16.gmra.mrb[0].mxu0 %v1797
      %v1867 = vpop.f32.mrb[0].mxu0
      %v1868 = vadd.f32 %v1637, %v1867
      %v1869 = vpop.f32.mrb[0].mxu0
      %v1870 = vpop.f32.mrb[0].mxu0
      %v1871 = vadd.f32 %v1640, %v1870
      %v1872 = vpop.f32.mrb[0].mxu0
      %1873 = vmatprep.mubr.bf16.mxu0 0
      %1874 = vmatmul.mubr.bf16.gmra.mrb[0].mxu0 %v1799
      %v1875 = vpop.f32.mrb[0].mxu0
      %v1876 = vadd.f32 %v1645, %v1875
      %v1877 = vpop.f32.mrb[0].mxu0
      %v1878 = vpop.f32.mrb[0].mxu0
      %v1879 = vadd.f32 %v1648, %v1878
      %v1880 = vpop.f32.mrb[0].mxu0
      %1881 = vmatprep.mubr.bf16.mxu0 0
      %1882 = vmatmul.mubr.bf16.gmra.mrb[0].mxu0 %v1801
      %v1883 = vpop.f32.mrb[0].mxu0
      %v1884 = vadd.f32 %v1653, %v1883
      %v1885 = vpop.f32.mrb[0].mxu0
      %v1886 = vpop.f32.mrb[0].mxu0
      %v1887 = vadd.f32 %v1656, %v1886
      %v1888 = vpop.f32.mrb[0].mxu0
      %1889 = vmatprep.mubr.bf16.mxu0 0
      %1890 = vmatmul.mubr.bf16.gmra.mrb[0].mxu0 %v1803
      %v1891 = vpop.f32.mrb[0].mxu0
      %v1892 = vadd.f32 %v1661, %v1891
      %v1893 = vpop.f32.mrb[0].mxu0
      %v1894 = vpop.f32.mrb[0].mxu0
      %v1895 = vadd.f32 %v1664, %v1894
      %v1896 = vpop.f32.mrb[0].mxu0
      %1897 = vmatprep.mubr.bf16.mxu0 0
      %1898 = vmatmul.mubr.bf16.gmra.mrb[0].mxu0 %v1805
      %v1899 = vpop.f32.mrb[0].mxu0
      %v1900 = vadd.f32 %v1669, %v1899
      %v1901 = vpop.f32.mrb[0].mxu0
      %v1902 = vpop.f32.mrb[0].mxu0
      %v1903 = vadd.f32 %v1672, %v1902
      %v1904 = vpop.f32.mrb[0].mxu0
      %1905 = vmatprep.mubr.bf16.mxu0 0
      %1906 = vmatmul.mubr.bf16.gmra.mrb[0].mxu0 %v1807
      %v1907 = vpop.f32.mrb[0].mxu0
      %v1908 = vadd.f32 %v1677, %v1907
      %v1909 = vpop.f32.mrb[0].mxu0
      %v1910 = vpop.f32.mrb[0].mxu0
      %v1911 = vadd.f32 %v1680, %v1910
      %v1912 = vpop.f32.mrb[0].mxu0
      %1913 = vmatprep.mubr.bf16.mxu0 0
      %1914 = vmatmul.mubr.bf16.gmra.mrb[0].mxu0 %v1809
      %v1915 = vpop.f32.mrb[0].mxu0
      %v1916 = vadd.f32 %v1685, %v1915
      %v1917 = vpop.f32.mrb[0].mxu0
      %v1918 = vpop.f32.mrb[0].mxu0
      %v1919 = vadd.f32 %v1688, %v1918
      %v1920 = vpop.f32.mrb[0].mxu0
      %1921 = vmatprep.mubr.bf16.mxu0 0
      %1922 = vmatmul.mubr.bf16.gmra.mrb[0].mxu0 %v1811
      %v1923 = vpop.f32.mrb[0].mxu0
      %v1924 = vadd.f32 %v1693, %v1923
      %v1925 = vpop.f32.mrb[0].mxu0
      %v1926 = vpop.f32.mrb[0].mxu0
      %v1927 = vadd.f32 %v1696, %v1926
      %v1928 = vpop.f32.mrb[0].mxu0
      %1929 = vmatprep.mubr.bf16.mxu0 0
      %1930 = vmatmul.mubr.bf16.gmra.mrb[0].mxu0 %v1813
      %v1931 = vpop.f32.mrb[0].mxu0
      %v1932 = vadd.f32 %v1701, %v1931
      %v1933 = vpop.f32.mrb[0].mxu0
      %v1934 = vpop.f32.mrb[0].mxu0
      %v1935 = vadd.f32 %v1704, %v1934
      %v1936 = vpop.f32.mrb[0].mxu0
      %1937 = vmatprep.mubr.bf16.mxu0 0
      %1938 = vmatmul.mubr.bf16.gmra.mrb[0].mxu0 %v1815
      %v1939 = vpop.f32.mrb[0].mxu0
      %v1940 = vadd.f32 %v1709, %v1939
      %v1941 = vpop.f32.mrb[0].mxu0
      %v1942 = vpop.f32.mrb[0].mxu0
      %v1943 = vadd.f32 %v1712, %v1942
      %v1944 = vpop.f32.mrb[0].mxu0
      %1945 = vmatprep.mubr.bf16.mxu0 0
      %1946 = vmatmul.mubr.bf16.gmra.mrb[0].mxu0 %v1817
      %v1947 = vpop.f32.mrb[0].mxu0
      %v1948 = vadd.f32 %v1717, %v1947
      %v1949 = vpop.f32.mrb[0].mxu0
      %v1950 = vpop.f32.mrb[0].mxu0
      %v1951 = vadd.f32 %v1720, %v1950
      %v1952 = vpop.f32.mrb[0].mxu0
      %1953 = vmatprep.mubr.bf16.mxu0 0
      %1954 = vmatmul.mubr.bf16.gmra.mrb[0].mxu0 %v1819
      %v1955 = vpop.f32.mrb[0].mxu0
      %v1956 = vadd.f32 %v1725, %v1955
      %v1957 = vpop.f32.mrb[0].mxu0
      %v1958 = vpop.f32.mrb[0].mxu0
      %v1959 = vadd.f32 %v1728, %v1958
      %v1960 = vpop.f32.mrb[0].mxu0
      %1961 = vmatprep.mubr.bf16.mxu0 0
      %1962 = vmatmul.mubr.bf16.gmra.mrb[0].mxu0 %v1821
      %v1963 = vpop.f32.mrb[0].mxu0
      %v1964 = vadd.f32 %v1733, %v1963
      %v1965 = vpop.f32.mrb[0].mxu0
      %v1966 = vpop.f32.mrb[0].mxu0
      %v1967 = vadd.f32 %v1736, %v1966
      %v1968 = vpop.f32.mrb[0].mxu0
      %1969 = vmatprep.mubr.bf16.mxu0 0
      %1970 = vmatmul.mubr.bf16.gmra.mrb[0].mxu0 %v1823
      %v1971 = vpop.f32.mrb[0].mxu0
      %v1972 = vadd.f32 %v1741, %v1971
      %v1973 = vpop.f32.mrb[0].mxu0
      %v1974 = vpop.f32.mrb[0].mxu0
      %v1975 = vadd.f32 %v1744, %v1974
      %v1976 = vpop.f32.mrb[0].mxu0
      %1977 = vmatprep.mubr.bf16.mxu0 0
      %1978 = vmatmul.mubr.bf16.gmra.mrb[0].mxu0 %v1825
      %v1979 = vpop.f32.mrb[0].mxu0
      %v1980 = vadd.f32 %v1749, %v1979
      %v1981 = vpop.f32.mrb[0].mxu0
      %v1982 = vpop.f32.mrb[0].mxu0
      %v1983 = vadd.f32 %v1752, %v1982
      %v1984 = vpop.f32.mrb[0].mxu0
      %1985 = vmatprep.mubr.bf16.mxu0 0
      %1986 = vmatmul.mubr.bf16.gmra.mrb[0].mxu0 %v1827
      %v1987 = vpop.f32.mrb[0].mxu0
      %v1988 = vadd.f32 %v1757, %v1987
      %v1989 = vpop.f32.mrb[0].mxu0
      %v1990 = vpop.f32.mrb[0].mxu0
      %v1991 = vadd.f32 %v1760, %v1990
      %v1992 = vpop.f32.mrb[0].mxu0
      %1993 = vmatprep.mubr.bf16.mxu0 0
      %1994 = vmatmul.mubr.bf16.gmra.mrb[0].mxu0 %v1829
      %v1995 = vpop.f32.mrb[0].mxu0
      %v1996 = vadd.f32 %v1765, %v1995
      %v1997 = vpop.f32.mrb[0].mxu0
      %v1998 = vpop.f32.mrb[0].mxu0
      %v1999 = vadd.f32 %v1768, %v1998
      %v2000 = vpop.f32.mrb[0].mxu0
      %2001 = vmatprep.mubr.bf16.mxu0 0
      %2002 = vmatmul.mubr.bf16.gmra.mrb[0].mxu0 %v1831
      %v2003 = vpop.f32.mrb[0].mxu0
      %v2004 = vadd.f32 %v1773, %v2003
      %v2005 = vpop.f32.mrb[0].mxu0
      %v2006 = vpop.f32.mrb[0].mxu0
      %v2007 = vadd.f32 %v1776, %v2006
      %v2008 = vpop.f32.mrb[0].mxu0
      %2009 = vdwg.mxu0
      %s2010 = scalar_lea.vmem %s6, 48
      %v2011 = vld [vmem:[%s2010] sm:$0xf]
      %v2012 = vld [vmem:[%s2010 + $0x4] sm:$0xf]
      %v2013 = vld [vmem:[%s2010 + $0x8] sm:$0xf]
      %v2014 = vld [vmem:[%s2010 + $0xc] sm:$0xf]
      %v2015 = vld [vmem:[%s2010 + $0x10] sm:$0xf]
      %v2016 = vld [vmem:[%s2010 + $0x14] sm:$0xf]
      %vm2035 = vcmask 1046528
      %v2036 = vrot.slane %v1355, 1
      %v2037 = vrot.slane %v1356, 1
      %v2038 = vsel %vm2035, %v2036, %v2037
      %v2039 = vrot.slane %v1357, 1
      %v2040 = vsel %vm2035, %v2037, %v2039
      %v2041 = vrot.slane %v1358, 1
      %v2042 = vsel %vm2035, %v2039, %v2041
      %v2043 = vrot.slane %v1359, 1
      %v2044 = vsel %vm2035, %v2041, %v2043
      %v2045 = vrot.slane %v1360, 1
      %v2046 = vsel %vm2035, %v2043, %v2045
      %v2047 = vrot.slane %v1361, 1
      %v2048 = vsel %vm2035, %v2045, %v2047
      %v2049 = vrot.slane %v1362, 1
      %v2050 = vsel %vm2035, %v2047, %v2049
      %v2051 = vrot.slane %v1363, 1
      %v2052 = vsel %vm2035, %v2049, %v2051
      %v2053 = vrot.slane %v1364, 1
      %v2054 = vsel %vm2035, %v2051, %v2053
      %v2055 = vrot.slane %v1365, 1
      %v2056 = vsel %vm2035, %v2053, %v2055
      %v2057 = vrot.slane %v1366, 1
      %v2058 = vsel %vm2035, %v2055, %v2057
      %v2059 = vrot.slane %v1367, 1
      %v2060 = vsel %vm2035, %v2057, %v2059
      %v2061 = vrot.slane %v1368, 1
      %v2062 = vsel %vm2035, %v2059, %v2061
      %v2063 = vrot.slane %v1369, 1
      %v2064 = vsel %vm2035, %v2061, %v2063
      %v2065 = vrot.slane %v1370, 1
      %v2066 = vsel %vm2035, %v2063, %v2065
      %v2067 = vrot.slane %v1371, 1
      %v2068 = vsel %vm2035, %v2065, %v2067
      %v2069 = vrot.slane %v1372, 1
      %v2070 = vsel %vm2035, %v2067, %v2069
      %v2077 = vunpack.c.l.b16 %v2011
      %v2078 = vunpack.c.l.b16 %v2012
      %v2079 = vunpack.c.l.b16 %v2013
      %v2080 = vunpack.c.l.b16 %v2014
      %v2081 = vunpack.c.l.b16 %v2015
      %v2082 = vunpack.c.l.b16 %v2016
      %v2083 = vpack.c.b16 %v2078, %v2077
      %v2084 = vpack.c.b16 %v2080, %v2079
      %v2085 = vpack.c.b16 %v2082, %v2081
      %v2090 = vsel %vm656, %v2038, 0
      %v2093 = vsel %vm656, %v2040, 0
      %v2096 = vsel %vm656, %v2042, 0
      %v2099 = vsel %vm656, %v2044, 0
      %v2102 = vsel %vm656, %v2046, 0
      %v2105 = vsel %vm656, %v2048, 0
      %v2108 = vsel %vm656, %v2050, 0
      %v2111 = vsel %vm656, %v2052, 0
      %v2114 = vsel %vm656, %v2054, 0
      %v2117 = vsel %vm656, %v2056, 0
      %v2120 = vsel %vm656, %v2058, 0
      %v2123 = vsel %vm656, %v2060, 0
      %v2126 = vsel %vm656, %v2062, 0
      %v2129 = vsel %vm656, %v2064, 0
      %v2132 = vsel %vm656, %v2066, 0
      %v2135 = vsel %vm656, %v2068, 0
      %v2138 = vsel %vm656, %v2070, 0
      %v2141 = vsel %vm656, %v2069, 0
      %2143 = vmatprep.subr.bf16.mxu0 0
      %2144 = vmatpush1.bf16.msra.mxu0 %v2083
      %2145 = vmatprep.subr.bf16.mxu0 0
      %2146 = vmatpush1.bf16.msra.mxu0 %v2084
      %2147 = vmatprep.subr.bf16.mxu0 0
      %2148 = vmatpush1.bf16.msra.mxu0 %v2085
      %2149 = vmatprep.subr.bf16.mxu0 0
      %2150 = vmatpush1.bf16.msra.mxu0 0
      %2151 = vmatprep.subr.bf16.mxu0 0
      %2152 = vmatpush1.bf16.msra.mxu0 0
      %2153 = vmatprep.subr.bf16.mxu0 0
      %2154 = vmatpush1.bf16.msra.mxu0 0
      %2155 = vmatprep.subr.bf16.mxu0 0
      %2156 = vmatpush1.bf16.msra.mxu0 0
      %2157 = vmatprep.subr.bf16.mxu0 0
      %2158 = vmatpush1.bf16.msra.mxu0 0
      %2159 = vmatprep.subr.bf16.mxu0 0
      %2160 = vmatpush1.bf16.msra.mxu0 0
      %2161 = vmatprep.subr.bf16.mxu0 0
      %2162 = vmatpush1.bf16.msra.mxu0 0
      %2163 = vmatprep.subr.bf16.mxu0 0
      %2164 = vmatpush1.bf16.msra.mxu0 0
      %2165 = vmatprep.subr.bf16.mxu0 0
      %2166 = vmatpush1.bf16.msra.mxu0 0
      %2167 = vmatprep.subr.bf16.mxu0 0
      %2168 = vmatpush1.bf16.msra.mxu0 0
      %2169 = vmatprep.subr.bf16.mxu0 0
      %2170 = vmatpush1.bf16.msra.mxu0 0
      %2171 = vmatprep.subr.bf16.mxu0 0
      %2172 = vmatpush1.bf16.msra.mxu0 0
      %2173 = vmatprep.subr.bf16.mxu0 0
      %2174 = vmatpush1.bf16.msra.mxu0 0
      %2175 = vmatprep.mubr.bf16.mxu0 0
      %2176 = vmatmul.mubr.bf16.gmra.mrb[0].mxu0 %v2090
      %v2177 = vpop.f32.mrb[0].mxu0
      %v2178 = vadd.f32 0.0, %v2177
      %v2179 = vpop.f32.mrb[0].mxu0
      %v2180 = vpop.f32.mrb[0].mxu0
      %v2181 = vadd.f32 0.0, %v2180
      %v2182 = vpop.f32.mrb[0].mxu0
      %2183 = vmatprep.mubr.bf16.mxu0 0
      %2184 = vmatmul.mubr.bf16.gmra.mrb[0].mxu0 %v2093
      %v2185 = vpop.f32.mrb[0].mxu0
      %v2186 = vadd.f32 0.0, %v2185
      %v2187 = vpop.f32.mrb[0].mxu0
      %v2188 = vpop.f32.mrb[0].mxu0
      %v2189 = vadd.f32 0.0, %v2188
      %v2190 = vpop.f32.mrb[0].mxu0
      %2191 = vmatprep.mubr.bf16.mxu0 0
      %2192 = vmatmul.mubr.bf16.gmra.mrb[0].mxu0 %v2096
      %v2193 = vpop.f32.mrb[0].mxu0
      %v2194 = vadd.f32 0.0, %v2193
      %v2195 = vpop.f32.mrb[0].mxu0
      %v2196 = vpop.f32.mrb[0].mxu0
      %v2197 = vadd.f32 0.0, %v2196
      %v2198 = vpop.f32.mrb[0].mxu0
      %2199 = vmatprep.mubr.bf16.mxu0 0
      %2200 = vmatmul.mubr.bf16.gmra.mrb[0].mxu0 %v2099
      %v2201 = vpop.f32.mrb[0].mxu0
      %v2202 = vadd.f32 0.0, %v2201
      %v2203 = vpop.f32.mrb[0].mxu0
      %v2204 = vpop.f32.mrb[0].mxu0
      %v2205 = vadd.f32 0.0, %v2204
      %v2206 = vpop.f32.mrb[0].mxu0
      %2207 = vmatprep.mubr.bf16.mxu0 0
      %2208 = vmatmul.mubr.bf16.gmra.mrb[0].mxu0 %v2102
      %v2209 = vpop.f32.mrb[0].mxu0
      %v2210 = vadd.f32 0.0, %v2209
      %v2211 = vpop.f32.mrb[0].mxu0
      %v2212 = vpop.f32.mrb[0].mxu0
      %v2213 = vadd.f32 0.0, %v2212
      %v2214 = vpop.f32.mrb[0].mxu0
      %2215 = vmatprep.mubr.bf16.mxu0 0
      %2216 = vmatmul.mubr.bf16.gmra.mrb[0].mxu0 %v2105
      %v2217 = vpop.f32.mrb[0].mxu0
      %v2218 = vadd.f32 0.0, %v2217
      %v2219 = vpop.f32.mrb[0].mxu0
      %v2220 = vpop.f32.mrb[0].mxu0
      %v2221 = vadd.f32 0.0, %v2220
      %v2222 = vpop.f32.mrb[0].mxu0
      %2223 = vmatprep.mubr.bf16.mxu0 0
      %2224 = vmatmul.mubr.bf16.gmra.mrb[0].mxu0 %v2108
      %v2225 = vpop.f32.mrb[0].mxu0
      %v2226 = vadd.f32 0.0, %v2225
      %v2227 = vpop.f32.mrb[0].mxu0
      %v2228 = vpop.f32.mrb[0].mxu0
      %v2229 = vadd.f32 0.0, %v2228
      %v2230 = vpop.f32.mrb[0].mxu0
      %2231 = vmatprep.mubr.bf16.mxu0 0
      %2232 = vmatmul.mubr.bf16.gmra.mrb[0].mxu0 %v2111
      %v2233 = vpop.f32.mrb[0].mxu0
      %v2234 = vadd.f32 0.0, %v2233
      %v2235 = vpop.f32.mrb[0].mxu0
      %v2236 = vpop.f32.mrb[0].mxu0
      %v2237 = vadd.f32 0.0, %v2236
      %v2238 = vpop.f32.mrb[0].mxu0
      %2239 = vmatprep.mubr.bf16.mxu0 0
      %2240 = vmatmul.mubr.bf16.gmra.mrb[0].mxu0 %v2114
      %v2241 = vpop.f32.mrb[0].mxu0
      %v2242 = vadd.f32 0.0, %v2241
      %v2243 = vpop.f32.mrb[0].mxu0
      %v2244 = vpop.f32.mrb[0].mxu0
      %v2245 = vadd.f32 0.0, %v2244
      %v2246 = vpop.f32.mrb[0].mxu0
      %2247 = vmatprep.mubr.bf16.mxu0 0
      %2248 = vmatmul.mubr.bf16.gmra.mrb[0].mxu0 %v2117
      %v2249 = vpop.f32.mrb[0].mxu0
      %v2250 = vadd.f32 0.0, %v2249
      %v2251 = vpop.f32.mrb[0].mxu0
      %v2252 = vpop.f32.mrb[0].mxu0
      %v2253 = vadd.f32 0.0, %v2252
      %v2254 = vpop.f32.mrb[0].mxu0
      %2255 = vmatprep.mubr.bf16.mxu0 0
      %2256 = vmatmul.mubr.bf16.gmra.mrb[0].mxu0 %v2120
      %v2257 = vpop.f32.mrb[0].mxu0
      %v2258 = vadd.f32 0.0, %v2257
      %v2259 = vpop.f32.mrb[0].mxu0
      %v2260 = vpop.f32.mrb[0].mxu0
      %v2261 = vadd.f32 0.0, %v2260
      %v2262 = vpop.f32.mrb[0].mxu0
      %2263 = vmatprep.mubr.bf16.mxu0 0
      %2264 = vmatmul.mubr.bf16.gmra.mrb[0].mxu0 %v2123
      %v2265 = vpop.f32.mrb[0].mxu0
      %v2266 = vadd.f32 0.0, %v2265
      %v2267 = vpop.f32.mrb[0].mxu0
      %v2268 = vpop.f32.mrb[0].mxu0
      %v2269 = vadd.f32 0.0, %v2268
      %v2270 = vpop.f32.mrb[0].mxu0
      %2271 = vmatprep.mubr.bf16.mxu0 0
      %2272 = vmatmul.mubr.bf16.gmra.mrb[0].mxu0 %v2126
      %v2273 = vpop.f32.mrb[0].mxu0
      %v2274 = vadd.f32 0.0, %v2273
      %v2275 = vpop.f32.mrb[0].mxu0
      %v2276 = vpop.f32.mrb[0].mxu0
      %v2277 = vadd.f32 0.0, %v2276
      %v2278 = vpop.f32.mrb[0].mxu0
      %2279 = vmatprep.mubr.bf16.mxu0 0
      %2280 = vmatmul.mubr.bf16.gmra.mrb[0].mxu0 %v2129
      %v2281 = vpop.f32.mrb[0].mxu0
      %v2282 = vadd.f32 0.0, %v2281
      %v2283 = vpop.f32.mrb[0].mxu0
      %v2284 = vpop.f32.mrb[0].mxu0
      %v2285 = vadd.f32 0.0, %v2284
      %v2286 = vpop.f32.mrb[0].mxu0
      %2287 = vmatprep.mubr.bf16.mxu0 0
      %2288 = vmatmul.mubr.bf16.gmra.mrb[0].mxu0 %v2132
      %v2289 = vpop.f32.mrb[0].mxu0
      %v2290 = vadd.f32 0.0, %v2289
      %v2291 = vpop.f32.mrb[0].mxu0
      %v2292 = vpop.f32.mrb[0].mxu0
      %v2293 = vadd.f32 0.0, %v2292
      %v2294 = vpop.f32.mrb[0].mxu0
      %2295 = vmatprep.mubr.bf16.mxu0 0
      %2296 = vmatmul.mubr.bf16.gmra.mrb[0].mxu0 %v2135
      %v2297 = vpop.f32.mrb[0].mxu0
      %v2298 = vadd.f32 0.0, %v2297
      %v2299 = vpop.f32.mrb[0].mxu0
      %v2300 = vpop.f32.mrb[0].mxu0
      %v2301 = vadd.f32 0.0, %v2300
      %v2302 = vpop.f32.mrb[0].mxu0
      %2303 = vmatprep.mubr.bf16.mxu0 0
      %2304 = vmatmul.mubr.bf16.gmra.mrb[0].mxu0 %v2138
      %v2305 = vpop.f32.mrb[0].mxu0
      %v2306 = vadd.f32 0.0, %v2305
      %v2307 = vpop.f32.mrb[0].mxu0
      %v2308 = vpop.f32.mrb[0].mxu0
      %v2309 = vadd.f32 0.0, %v2308
      %v2310 = vpop.f32.mrb[0].mxu0
      %2311 = vmatprep.mubr.bf16.mxu0 0
      %2312 = vmatmul.mubr.bf16.gmra.mrb[0].mxu0 %v2141
      %v2313 = vpop.f32.mrb[0].mxu0
      %v2314 = vadd.f32 0.0, %v2313
      %v2315 = vpop.f32.mrb[0].mxu0
      %v2316 = vpop.f32.mrb[0].mxu0
      %v2317 = vadd.f32 0.0, %v2316
      %v2318 = vpop.f32.mrb[0].mxu0
      %2319 = vdwg.mxu0
      %v2320 = vadd.f32 %v1868, %v2178
      %v2321 = vadd.f32 %v1871, %v2181
      %v2322 = vadd.f32 %v1876, %v2186
      %v2323 = vadd.f32 %v1879, %v2189
      %v2324 = vadd.f32 %v1884, %v2194
      %v2325 = vadd.f32 %v1887, %v2197
      %v2326 = vadd.f32 %v1892, %v2202
      %v2327 = vadd.f32 %v1895, %v2205
      %v2328 = vadd.f32 %v1900, %v2210
      %v2329 = vadd.f32 %v1903, %v2213
      %v2330 = vadd.f32 %v1908, %v2218
      %v2331 = vadd.f32 %v1911, %v2221
      %v2332 = vadd.f32 %v1916, %v2226
      %v2333 = vadd.f32 %v1919, %v2229
      %v2334 = vadd.f32 %v1924, %v2234
      %v2335 = vadd.f32 %v1927, %v2237
      %v2336 = vadd.f32 %v1932, %v2242
      %v2337 = vadd.f32 %v1935, %v2245
      %v2338 = vadd.f32 %v1940, %v2250
      %v2339 = vadd.f32 %v1943, %v2253
      %v2340 = vadd.f32 %v1948, %v2258
      %v2341 = vadd.f32 %v1951, %v2261
      %v2342 = vadd.f32 %v1956, %v2266
      %v2343 = vadd.f32 %v1959, %v2269
      %v2344 = vadd.f32 %v1964, %v2274
      %v2345 = vadd.f32 %v1967, %v2277
      %v2346 = vadd.f32 %v1972, %v2282
      %v2347 = vadd.f32 %v1975, %v2285
      %v2348 = vadd.f32 %v1980, %v2290
      %v2349 = vadd.f32 %v1983, %v2293
      %v2350 = vadd.f32 %v1988, %v2298
      %v2351 = vadd.f32 %v1991, %v2301
      %v2352 = vadd.f32 %v1996, %v2306
      %v2353 = vadd.f32 %v1999, %v2309
      %v2354 = vadd.f32 %v2004, %v2314
      %v2355 = vadd.f32 %v2007, %v2317
      %v2356 = vpack.c.bf16 %v1351, %v1350
      %s2357 = scalar_lea.vmem %s6, 72
      %v2358 = vld [vmem:[%s2357] sm:$0xf]
      %v2359 = vld [vmem:[%s2357 + $0x4] sm:$0xf]
      %v2360 = vld [vmem:[%s2357 + $0x8] sm:$0xf]
      %v2361 = vld [vmem:[%s2357 + $0xc] sm:$0xf]
      %v2362 = vld [vmem:[%s2357 + $0x10] sm:$0xf]
      %v2363 = vld [vmem:[%s2357 + $0x14] sm:$0xf]
      %v2365 = vrot.slane %v2356, 1
      %v2366 = vsel %vm2035, %v2069, %v2365
      %v2373 = vunpack.c.l.b16 %v2358
      %v2374 = vunpack.c.l.b16 %v2359
      %v2375 = vunpack.c.l.b16 %v2360
      %v2376 = vunpack.c.l.b16 %v2361
      %v2377 = vunpack.c.l.b16 %v2362
      %v2378 = vunpack.c.l.b16 %v2363
      %v2379 = vpack.c.b16 %v2374, %v2373
      %v2380 = vpack.c.b16 %v2376, %v2375
      %v2381 = vpack.c.b16 %v2378, %v2377
      %v2386 = vsel %vm656, %v2366, 0
      %v2389 = vsel %vm656, %v2365, 0
      %2391 = vmatprep.subr.bf16.mxu0 0
      %2392 = vmatpush1.bf16.msra.mxu0 %v2379
      %2393 = vmatprep.subr.bf16.mxu0 0
      %2394 = vmatpush1.bf16.msra.mxu0 %v2380
      %2395 = vmatprep.subr.bf16.mxu0 0
      %2396 = vmatpush1.bf16.msra.mxu0 %v2381
      %2397 = vmatprep.subr.bf16.mxu0 0
      %2398 = vmatpush1.bf16.msra.mxu0 0
      %2399 = vmatprep.subr.bf16.mxu0 0
      %2400 = vmatpush1.bf16.msra.mxu0 0
      %2401 = vmatprep.subr.bf16.mxu0 0
      %2402 = vmatpush1.bf16.msra.mxu0 0
      %2403 = vmatprep.subr.bf16.mxu0 0
      %2404 = vmatpush1.bf16.msra.mxu0 0
      %2405 = vmatprep.subr.bf16.mxu0 0
      %2406 = vmatpush1.bf16.msra.mxu0 0
      %2407 = vmatprep.subr.bf16.mxu0 0
      %2408 = vmatpush1.bf16.msra.mxu0 0
      %2409 = vmatprep.subr.bf16.mxu0 0
      %2410 = vmatpush1.bf16.msra.mxu0 0
      %2411 = vmatprep.subr.bf16.mxu0 0
      %2412 = vmatpush1.bf16.msra.mxu0 0
      %2413 = vmatprep.subr.bf16.mxu0 0
      %2414 = vmatpush1.bf16.msra.mxu0 0
      %2415 = vmatprep.subr.bf16.mxu0 0
      %2416 = vmatpush1.bf16.msra.mxu0 0
      %2417 = vmatprep.subr.bf16.mxu0 0
      %2418 = vmatpush1.bf16.msra.mxu0 0
      %2419 = vmatprep.subr.bf16.mxu0 0
      %2420 = vmatpush1.bf16.msra.mxu0 0
      %2421 = vmatprep.subr.bf16.mxu0 0
      %2422 = vmatpush1.bf16.msra.mxu0 0
      %2423 = vmatprep.mubr.bf16.mxu0 0
      %2424 = vmatmul.mubr.bf16.gmra.mrb[0].mxu0 %v2093
      %v2425 = vpop.f32.mrb[0].mxu0
      %v2426 = vadd.f32 0.0, %v2425
      %v2427 = vpop.f32.mrb[0].mxu0
      %v2428 = vpop.f32.mrb[0].mxu0
      %v2429 = vadd.f32 0.0, %v2428
      %v2430 = vpop.f32.mrb[0].mxu0
      %2431 = vmatprep.mubr.bf16.mxu0 0
      %2432 = vmatmul.mubr.bf16.gmra.mrb[0].mxu0 %v2096
      %v2433 = vpop.f32.mrb[0].mxu0
      %v2434 = vadd.f32 0.0, %v2433
      %v2435 = vpop.f32.mrb[0].mxu0
      %v2436 = vpop.f32.mrb[0].mxu0
      %v2437 = vadd.f32 0.0, %v2436
      %v2438 = vpop.f32.mrb[0].mxu0
      %2439 = vmatprep.mubr.bf16.mxu0 0
      %2440 = vmatmul.mubr.bf16.gmra.mrb[0].mxu0 %v2099
      %v2441 = vpop.f32.mrb[0].mxu0
      %v2442 = vadd.f32 0.0, %v2441
      %v2443 = vpop.f32.mrb[0].mxu0
      %v2444 = vpop.f32.mrb[0].mxu0
      %v2445 = vadd.f32 0.0, %v2444
      %v2446 = vpop.f32.mrb[0].mxu0
      %2447 = vmatprep.mubr.bf16.mxu0 0
      %2448 = vmatmul.mubr.bf16.gmra.mrb[0].mxu0 %v2102
      %v2449 = vpop.f32.mrb[0].mxu0
      %v2450 = vadd.f32 0.0, %v2449
      %v2451 = vpop.f32.mrb[0].mxu0
      %v2452 = vpop.f32.mrb[0].mxu0
      %v2453 = vadd.f32 0.0, %v2452
      %v2454 = vpop.f32.mrb[0].mxu0
      %2455 = vmatprep.mubr.bf16.mxu0 0
      %2456 = vmatmul.mubr.bf16.gmra.mrb[0].mxu0 %v2105
      %v2457 = vpop.f32.mrb[0].mxu0
      %v2458 = vadd.f32 0.0, %v2457
      %v2459 = vpop.f32.mrb[0].mxu0
      %v2460 = vpop.f32.mrb[0].mxu0
      %v2461 = vadd.f32 0.0, %v2460
      %v2462 = vpop.f32.mrb[0].mxu0
      %2463 = vmatprep.mubr.bf16.mxu0 0
      %2464 = vmatmul.mubr.bf16.gmra.mrb[0].mxu0 %v2108
      %v2465 = vpop.f32.mrb[0].mxu0
      %v2466 = vadd.f32 0.0, %v2465
      %v2467 = vpop.f32.mrb[0].mxu0
      %v2468 = vpop.f32.mrb[0].mxu0
      %v2469 = vadd.f32 0.0, %v2468
      %v2470 = vpop.f32.mrb[0].mxu0
      %2471 = vmatprep.mubr.bf16.mxu0 0
      %2472 = vmatmul.mubr.bf16.gmra.mrb[0].mxu0 %v2111
      %v2473 = vpop.f32.mrb[0].mxu0
      %v2474 = vadd.f32 0.0, %v2473
      %v2475 = vpop.f32.mrb[0].mxu0
      %v2476 = vpop.f32.mrb[0].mxu0
      %v2477 = vadd.f32 0.0, %v2476
      %v2478 = vpop.f32.mrb[0].mxu0
      %2479 = vmatprep.mubr.bf16.mxu0 0
      %2480 = vmatmul.mubr.bf16.gmra.mrb[0].mxu0 %v2114
      %v2481 = vpop.f32.mrb[0].mxu0
      %v2482 = vadd.f32 0.0, %v2481
      %v2483 = vpop.f32.mrb[0].mxu0
      %v2484 = vpop.f32.mrb[0].mxu0
      %v2485 = vadd.f32 0.0, %v2484
      %v2486 = vpop.f32.mrb[0].mxu0
      %2487 = vmatprep.mubr.bf16.mxu0 0
      %2488 = vmatmul.mubr.bf16.gmra.mrb[0].mxu0 %v2117
      %v2489 = vpop.f32.mrb[0].mxu0
      %v2490 = vadd.f32 0.0, %v2489
      %v2491 = vpop.f32.mrb[0].mxu0
      %v2492 = vpop.f32.mrb[0].mxu0
      %v2493 = vadd.f32 0.0, %v2492
      %v2494 = vpop.f32.mrb[0].mxu0
      %2495 = vmatprep.mubr.bf16.mxu0 0
      %2496 = vmatmul.mubr.bf16.gmra.mrb[0].mxu0 %v2120
      %v2497 = vpop.f32.mrb[0].mxu0
      %v2498 = vadd.f32 0.0, %v2497
      %v2499 = vpop.f32.mrb[0].mxu0
      %v2500 = vpop.f32.mrb[0].mxu0
      %v2501 = vadd.f32 0.0, %v2500
      %v2502 = vpop.f32.mrb[0].mxu0
      %2503 = vmatprep.mubr.bf16.mxu0 0
      %2504 = vmatmul.mubr.bf16.gmra.mrb[0].mxu0 %v2123
      %v2505 = vpop.f32.mrb[0].mxu0
      %v2506 = vadd.f32 0.0, %v2505
      %v2507 = vpop.f32.mrb[0].mxu0
      %v2508 = vpop.f32.mrb[0].mxu0
      %v2509 = vadd.f32 0.0, %v2508
      %v2510 = vpop.f32.mrb[0].mxu0
      %2511 = vmatprep.mubr.bf16.mxu0 0
      %2512 = vmatmul.mubr.bf16.gmra.mrb[0].mxu0 %v2126
      %v2513 = vpop.f32.mrb[0].mxu0
      %v2514 = vadd.f32 0.0, %v2513
      %v2515 = vpop.f32.mrb[0].mxu0
      %v2516 = vpop.f32.mrb[0].mxu0
      %v2517 = vadd.f32 0.0, %v2516
      %v2518 = vpop.f32.mrb[0].mxu0
      %2519 = vmatprep.mubr.bf16.mxu0 0
      %2520 = vmatmul.mubr.bf16.gmra.mrb[0].mxu0 %v2129
      %v2521 = vpop.f32.mrb[0].mxu0
      %v2522 = vadd.f32 0.0, %v2521
      %v2523 = vpop.f32.mrb[0].mxu0
      %v2524 = vpop.f32.mrb[0].mxu0
      %v2525 = vadd.f32 0.0, %v2524
      %v2526 = vpop.f32.mrb[0].mxu0
      %2527 = vmatprep.mubr.bf16.mxu0 0
      %2528 = vmatmul.mubr.bf16.gmra.mrb[0].mxu0 %v2132
      %v2529 = vpop.f32.mrb[0].mxu0
      %v2530 = vadd.f32 0.0, %v2529
      %v2531 = vpop.f32.mrb[0].mxu0
      %v2532 = vpop.f32.mrb[0].mxu0
      %v2533 = vadd.f32 0.0, %v2532
      %v2534 = vpop.f32.mrb[0].mxu0
      %2535 = vmatprep.mubr.bf16.mxu0 0
      %2536 = vmatmul.mubr.bf16.gmra.mrb[0].mxu0 %v2135
      %v2537 = vpop.f32.mrb[0].mxu0
      %v2538 = vadd.f32 0.0, %v2537
      %v2539 = vpop.f32.mrb[0].mxu0
      %v2540 = vpop.f32.mrb[0].mxu0
      %v2541 = vadd.f32 0.0, %v2540
      %v2542 = vpop.f32.mrb[0].mxu0
      %2543 = vmatprep.mubr.bf16.mxu0 0
      %2544 = vmatmul.mubr.bf16.gmra.mrb[0].mxu0 %v2138
      %v2545 = vpop.f32.mrb[0].mxu0
      %v2546 = vadd.f32 0.0, %v2545
      %v2547 = vpop.f32.mrb[0].mxu0
      %v2548 = vpop.f32.mrb[0].mxu0
      %v2549 = vadd.f32 0.0, %v2548
      %v2550 = vpop.f32.mrb[0].mxu0
      %2551 = vmatprep.mubr.bf16.mxu0 0
      %2552 = vmatmul.mubr.bf16.gmra.mrb[0].mxu0 %v2386
      %v2553 = vpop.f32.mrb[0].mxu0
      %v2554 = vadd.f32 0.0, %v2553
      %v2555 = vpop.f32.mrb[0].mxu0
      %v2556 = vpop.f32.mrb[0].mxu0
      %v2557 = vadd.f32 0.0, %v2556
      %v2558 = vpop.f32.mrb[0].mxu0
      %2559 = vmatprep.mubr.bf16.mxu0 0
      %2560 = vmatmul.mubr.bf16.gmra.mrb[0].mxu0 %v2389
      %v2561 = vpop.f32.mrb[0].mxu0
      %v2562 = vadd.f32 0.0, %v2561
      %v2563 = vpop.f32.mrb[0].mxu0
      %v2564 = vpop.f32.mrb[0].mxu0
      %v2565 = vadd.f32 0.0, %v2564
      %v2566 = vpop.f32.mrb[0].mxu0
      %2567 = vdwg.mxu0
      %v2568 = vadd.f32 %v2320, %v2426
      %v2569 = vadd.f32 %v2321, %v2429
      %v2570 = vadd.f32 %v2322, %v2434
      %v2571 = vadd.f32 %v2323, %v2437
      %v2572 = vadd.f32 %v2324, %v2442
      %v2573 = vadd.f32 %v2325, %v2445
      %v2574 = vadd.f32 %v2326, %v2450
      %v2575 = vadd.f32 %v2327, %v2453
      %v2576 = vadd.f32 %v2328, %v2458
      %v2577 = vadd.f32 %v2329, %v2461
      %v2578 = vadd.f32 %v2330, %v2466
      %v2579 = vadd.f32 %v2331, %v2469
      %v2580 = vadd.f32 %v2332, %v2474
      %v2581 = vadd.f32 %v2333, %v2477
      %v2582 = vadd.f32 %v2334, %v2482
      %v2583 = vadd.f32 %v2335, %v2485
      %v2584 = vadd.f32 %v2336, %v2490
      %v2585 = vadd.f32 %v2337, %v2493
      %v2586 = vadd.f32 %v2338, %v2498
      %v2587 = vadd.f32 %v2339, %v2501
      %v2588 = vadd.f32 %v2340, %v2506
      %v2589 = vadd.f32 %v2341, %v2509
      %v2590 = vadd.f32 %v2342, %v2514
      %v2591 = vadd.f32 %v2343, %v2517
      %v2592 = vadd.f32 %v2344, %v2522
      %v2593 = vadd.f32 %v2345, %v2525
      %v2594 = vadd.f32 %v2346, %v2530
      %v2595 = vadd.f32 %v2347, %v2533
      %v2596 = vadd.f32 %v2348, %v2538
      %v2597 = vadd.f32 %v2349, %v2541
      %v2598 = vadd.f32 %v2350, %v2546
      %v2599 = vadd.f32 %v2351, %v2549
      %v2600 = vadd.f32 %v2352, %v2554
      %v2601 = vadd.f32 %v2353, %v2557
      %v2602 = vadd.f32 %v2354, %v2562
      %v2603 = vadd.f32 %v2355, %v2565
      %v2604 = vpack.c.bf16 %v1352, %v1352
      %s2605 = scalar_lea.vmem %s6, 96
      %v2606 = vld [vmem:[%s2605] sm:$0xf]
      %v2607 = vld [vmem:[%s2605 + $0x4] sm:$0xf]
      %v2608 = vld [vmem:[%s2605 + $0x8] sm:$0xf]
      %v2609 = vld [vmem:[%s2605 + $0xc] sm:$0xf]
      %v2610 = vld [vmem:[%s2605 + $0x10] sm:$0xf]
      %v2611 = vld [vmem:[%s2605 + $0x14] sm:$0xf]
      %vm2612 = vsmask.f32 6400
      %v2613 = vrot.slane %v1399, 1
      %v2614 = vrot.slane %v1395, 2
      %v2615 = vor.u32 %v2613, %v2614
      %v2616 = vrot.slane %v1407, 1
      %v2617 = vrot.slane %v1403, 2
      %v2618 = vor.u32 %v2616, %v2617
      %v2619 = vsel %vm2612, %v2615, %v2618
      %v2620 = vrot.slane %v1415, 1
      %v2621 = vrot.slane %v1411, 2
      %v2622 = vor.u32 %v2620, %v2621
      %v2623 = vsel %vm2612, %v2618, %v2622
      %v2624 = vrot.slane %v1423, 1
      %v2625 = vrot.slane %v1419, 2
      %v2626 = vor.u32 %v2624, %v2625
      %v2627 = vsel %vm2612, %v2622, %v2626
      %v2628 = vrot.slane %v1431, 1
      %v2629 = vrot.slane %v1427, 2
      %v2630 = vor.u32 %v2628, %v2629
      %v2631 = vsel %vm2612, %v2626, %v2630
      %v2632 = vrot.slane %v1439, 1
      %v2633 = vrot.slane %v1435, 2
      %v2634 = vor.u32 %v2632, %v2633
      %v2635 = vsel %vm2612, %v2630, %v2634
      %v2636 = vrot.slane %v1447, 1
      %v2637 = vrot.slane %v1443, 2
      %v2638 = vor.u32 %v2636, %v2637
      %v2639 = vsel %vm2612, %v2634, %v2638
      %v2640 = vrot.slane %v1455, 1
      %v2641 = vrot.slane %v1451, 2
      %v2642 = vor.u32 %v2640, %v2641
      %v2643 = vsel %vm2612, %v2638, %v2642
      %v2644 = vrot.slane %v1463, 1
      %v2645 = vrot.slane %v1459, 2
      %v2646 = vor.u32 %v2644, %v2645
      %v2647 = vsel %vm2612, %v2642, %v2646
      %v2648 = vrot.slane %v1471, 1
      %v2649 = vrot.slane %v1467, 2
      %v2650 = vor.u32 %v2648, %v2649
      %v2651 = vsel %vm2612, %v2646, %v2650
      %v2652 = vrot.slane %v1479, 1
      %v2653 = vrot.slane %v1475, 2
      %v2654 = vor.u32 %v2652, %v2653
      %v2655 = vsel %vm2612, %v2650, %v2654
      %v2656 = vrot.slane %v1487, 1
      %v2657 = vrot.slane %v1483, 2
      %v2658 = vor.u32 %v2656, %v2657
      %v2659 = vsel %vm2612, %v2654, %v2658
      %v2660 = vrot.slane %v1495, 1
      %v2661 = vrot.slane %v1491, 2
      %v2662 = vor.u32 %v2660, %v2661
      %v2663 = vsel %vm2612, %v2658, %v2662
      %v2664 = vrot.slane %v1503, 1
      %v2665 = vrot.slane %v1499, 2
      %v2666 = vor.u32 %v2664, %v2665
      %v2667 = vsel %vm2612, %v2662, %v2666
      %v2668 = vrot.slane %v1511, 1
      %v2669 = vrot.slane %v1507, 2
      %v2670 = vor.u32 %v2668, %v2669
      %v2671 = vsel %vm2612, %v2666, %v2670
      %v2672 = vrot.slane %v1519, 1
      %v2673 = vrot.slane %v1515, 2
      %v2674 = vor.u32 %v2672, %v2673
      %v2675 = vsel %vm2612, %v2670, %v2674
      %v2676 = vrot.slane %v1527, 1
      %v2677 = vrot.slane %v1523, 2
      %v2678 = vor.u32 %v2676, %v2677
      %v2679 = vsel %vm2612, %v2674, %v2678
      %v2681 = vshrl.u32 %v2356, 16
      %v2683 = vrot.slane %v2681, 1
      %v2684 = vshll.u32 %v2356, 16
      %v2686 = vrot.slane %v2684, 2
      %v2687 = vor.u32 %v2683, %v2686
      %v2688 = vsel %vm2612, %v2678, %v2687
      %v2690 = vshll.u32 %v2604, 16
      %v2692 = vrot.slane %v2690, 2
      %v2693 = vsel %vm2612, %v2687, %v2692
      %v2700 = vunpack.c.l.b16 %v2606
      %v2701 = vunpack.c.l.b16 %v2607
      %v2702 = vunpack.c.l.b16 %v2608
      %v2703 = vunpack.c.l.b16 %v2609
      %v2704 = vunpack.c.l.b16 %v2610
      %v2705 = vunpack.c.l.b16 %v2611
      %v2706 = vpack.c.b16 %v2701, %v2700
      %v2707 = vpack.c.b16 %v2703, %v2702
      %v2708 = vpack.c.b16 %v2705, %v2704
      %v2713 = vsel %vm656, %v2619, 0
      %v2716 = vsel %vm656, %v2623, 0
      %v2719 = vsel %vm656, %v2627, 0
      %v2722 = vsel %vm656, %v2631, 0
      %v2725 = vsel %vm656, %v2635, 0
      %v2728 = vsel %vm656, %v2639, 0
      %v2731 = vsel %vm656, %v2643, 0
      %v2734 = vsel %vm656, %v2647, 0
      %v2737 = vsel %vm656, %v2651, 0
      %v2740 = vsel %vm656, %v2655, 0
      %v2743 = vsel %vm656, %v2659, 0
      %v2746 = vsel %vm656, %v2663, 0
      %v2749 = vsel %vm656, %v2667, 0
      %v2752 = vsel %vm656, %v2671, 0
      %v2755 = vsel %vm656, %v2675, 0
      %v2758 = vsel %vm656, %v2679, 0
      %v2761 = vsel %vm656, %v2688, 0
      %v2764 = vsel %vm656, %v2693, 0
      %2766 = vmatprep.subr.bf16.mxu0 0
      %2767 = vmatpush1.bf16.msra.mxu0 %v2706
      %2768 = vmatprep.subr.bf16.mxu0 0
      %2769 = vmatpush1.bf16.msra.mxu0 %v2707
      %2770 = vmatprep.subr.bf16.mxu0 0
      %2771 = vmatpush1.bf16.msra.mxu0 %v2708
      %2772 = vmatprep.subr.bf16.mxu0 0
      %2773 = vmatpush1.bf16.msra.mxu0 0
      %2774 = vmatprep.subr.bf16.mxu0 0
      %2775 = vmatpush1.bf16.msra.mxu0 0
      %2776 = vmatprep.subr.bf16.mxu0 0
      %2777 = vmatpush1.bf16.msra.mxu0 0
      %2778 = vmatprep.subr.bf16.mxu0 0
      %2779 = vmatpush1.bf16.msra.mxu0 0
      %2780 = vmatprep.subr.bf16.mxu0 0
      %2781 = vmatpush1.bf16.msra.mxu0 0
      %2782 = vmatprep.subr.bf16.mxu0 0
      %2783 = vmatpush1.bf16.msra.mxu0 0
      %2784 = vmatprep.subr.bf16.mxu0 0
      %2785 = vmatpush1.bf16.msra.mxu0 0
      %2786 = vmatprep.subr.bf16.mxu0 0
      %2787 = vmatpush1.bf16.msra.mxu0 0
      %2788 = vmatprep.subr.bf16.mxu0 0
      %2789 = vmatpush1.bf16.msra.mxu0 0
      %2790 = vmatprep.subr.bf16.mxu0 0
      %2791 = vmatpush1.bf16.msra.mxu0 0
      %2792 = vmatprep.subr.bf16.mxu0 0
      %2793 = vmatpush1.bf16.msra.mxu0 0
      %2794 = vmatprep.subr.bf16.mxu0 0
      %2795 = vmatpush1.bf16.msra.mxu0 0
      %2796 = vmatprep.subr.bf16.mxu0 0
      %2797 = vmatpush1.bf16.msra.mxu0 0
      %2798 = vmatprep.mubr.bf16.mxu0 0
      %2799 = vmatmul.mubr.bf16.gmra.mrb[0].mxu0 %v2713
      %v2800 = vpop.f32.mrb[0].mxu0
      %v2801 = vadd.f32 0.0, %v2800
      %v2802 = vpop.f32.mrb[0].mxu0
      %v2803 = vpop.f32.mrb[0].mxu0
      %v2804 = vadd.f32 0.0, %v2803
      %v2805 = vpop.f32.mrb[0].mxu0
      %2806 = vmatprep.mubr.bf16.mxu0 0
      %2807 = vmatmul.mubr.bf16.gmra.mrb[0].mxu0 %v2716
      %v2808 = vpop.f32.mrb[0].mxu0
      %v2809 = vadd.f32 0.0, %v2808
      %v2810 = vpop.f32.mrb[0].mxu0
      %v2811 = vpop.f32.mrb[0].mxu0
      %v2812 = vadd.f32 0.0, %v2811
      %v2813 = vpop.f32.mrb[0].mxu0
      %2814 = vmatprep.mubr.bf16.mxu0 0
      %2815 = vmatmul.mubr.bf16.gmra.mrb[0].mxu0 %v2719
      %v2816 = vpop.f32.mrb[0].mxu0
      %v2817 = vadd.f32 0.0, %v2816
      %v2818 = vpop.f32.mrb[0].mxu0
      %v2819 = vpop.f32.mrb[0].mxu0
      %v2820 = vadd.f32 0.0, %v2819
      %v2821 = vpop.f32.mrb[0].mxu0
      %2822 = vmatprep.mubr.bf16.mxu0 0
      %2823 = vmatmul.mubr.bf16.gmra.mrb[0].mxu0 %v2722
      %v2824 = vpop.f32.mrb[0].mxu0
      %v2825 = vadd.f32 0.0, %v2824
      %v2826 = vpop.f32.mrb[0].mxu0
      %v2827 = vpop.f32.mrb[0].mxu0
      %v2828 = vadd.f32 0.0, %v2827
      %v2829 = vpop.f32.mrb[0].mxu0
      %2830 = vmatprep.mubr.bf16.mxu0 0
      %2831 = vmatmul.mubr.bf16.gmra.mrb[0].mxu0 %v2725
      %v2832 = vpop.f32.mrb[0].mxu0
      %v2833 = vadd.f32 0.0, %v2832
      %v2834 = vpop.f32.mrb[0].mxu0
      %v2835 = vpop.f32.mrb[0].mxu0
      %v2836 = vadd.f32 0.0, %v2835
      %v2837 = vpop.f32.mrb[0].mxu0
      %2838 = vmatprep.mubr.bf16.mxu0 0
      %2839 = vmatmul.mubr.bf16.gmra.mrb[0].mxu0 %v2728
      %v2840 = vpop.f32.mrb[0].mxu0
      %v2841 = vadd.f32 0.0, %v2840
      %v2842 = vpop.f32.mrb[0].mxu0
      %v2843 = vpop.f32.mrb[0].mxu0
      %v2844 = vadd.f32 0.0, %v2843
      %v2845 = vpop.f32.mrb[0].mxu0
      %2846 = vmatprep.mubr.bf16.mxu0 0
      %2847 = vmatmul.mubr.bf16.gmra.mrb[0].mxu0 %v2731
      %v2848 = vpop.f32.mrb[0].mxu0
      %v2849 = vadd.f32 0.0, %v2848
      %v2850 = vpop.f32.mrb[0].mxu0
      %v2851 = vpop.f32.mrb[0].mxu0
      %v2852 = vadd.f32 0.0, %v2851
      %v2853 = vpop.f32.mrb[0].mxu0
      %2854 = vmatprep.mubr.bf16.mxu0 0
      %2855 = vmatmul.mubr.bf16.gmra.mrb[0].mxu0 %v2734
      %v2856 = vpop.f32.mrb[0].mxu0
      %v2857 = vadd.f32 0.0, %v2856
      %v2858 = vpop.f32.mrb[0].mxu0
      %v2859 = vpop.f32.mrb[0].mxu0
      %v2860 = vadd.f32 0.0, %v2859
      %v2861 = vpop.f32.mrb[0].mxu0
      %2862 = vmatprep.mubr.bf16.mxu0 0
      %2863 = vmatmul.mubr.bf16.gmra.mrb[0].mxu0 %v2737
      %v2864 = vpop.f32.mrb[0].mxu0
      %v2865 = vadd.f32 0.0, %v2864
      %v2866 = vpop.f32.mrb[0].mxu0
      %v2867 = vpop.f32.mrb[0].mxu0
      %v2868 = vadd.f32 0.0, %v2867
      %v2869 = vpop.f32.mrb[0].mxu0
      %2870 = vmatprep.mubr.bf16.mxu0 0
      %2871 = vmatmul.mubr.bf16.gmra.mrb[0].mxu0 %v2740
      %v2872 = vpop.f32.mrb[0].mxu0
      %v2873 = vadd.f32 0.0, %v2872
      %v2874 = vpop.f32.mrb[0].mxu0
      %v2875 = vpop.f32.mrb[0].mxu0
      %v2876 = vadd.f32 0.0, %v2875
      %v2877 = vpop.f32.mrb[0].mxu0
      %2878 = vmatprep.mubr.bf16.mxu0 0
      %2879 = vmatmul.mubr.bf16.gmra.mrb[0].mxu0 %v2743
      %v2880 = vpop.f32.mrb[0].mxu0
      %v2881 = vadd.f32 0.0, %v2880
      %v2882 = vpop.f32.mrb[0].mxu0
      %v2883 = vpop.f32.mrb[0].mxu0
      %v2884 = vadd.f32 0.0, %v2883
      %v2885 = vpop.f32.mrb[0].mxu0
      %2886 = vmatprep.mubr.bf16.mxu0 0
      %2887 = vmatmul.mubr.bf16.gmra.mrb[0].mxu0 %v2746
      %v2888 = vpop.f32.mrb[0].mxu0
      %v2889 = vadd.f32 0.0, %v2888
      %v2890 = vpop.f32.mrb[0].mxu0
      %v2891 = vpop.f32.mrb[0].mxu0
      %v2892 = vadd.f32 0.0, %v2891
      %v2893 = vpop.f32.mrb[0].mxu0
      %2894 = vmatprep.mubr.bf16.mxu0 0
      %2895 = vmatmul.mubr.bf16.gmra.mrb[0].mxu0 %v2749
      %v2896 = vpop.f32.mrb[0].mxu0
      %v2897 = vadd.f32 0.0, %v2896
      %v2898 = vpop.f32.mrb[0].mxu0
      %v2899 = vpop.f32.mrb[0].mxu0
      %v2900 = vadd.f32 0.0, %v2899
      %v2901 = vpop.f32.mrb[0].mxu0
      %2902 = vmatprep.mubr.bf16.mxu0 0
      %2903 = vmatmul.mubr.bf16.gmra.mrb[0].mxu0 %v2752
      %v2904 = vpop.f32.mrb[0].mxu0
      %v2905 = vadd.f32 0.0, %v2904
      %v2906 = vpop.f32.mrb[0].mxu0
      %v2907 = vpop.f32.mrb[0].mxu0
      %v2908 = vadd.f32 0.0, %v2907
      %v2909 = vpop.f32.mrb[0].mxu0
      %2910 = vmatprep.mubr.bf16.mxu0 0
      %2911 = vmatmul.mubr.bf16.gmra.mrb[0].mxu0 %v2755
      %v2912 = vpop.f32.mrb[0].mxu0
      %v2913 = vadd.f32 0.0, %v2912
      %v2914 = vpop.f32.mrb[0].mxu0
      %v2915 = vpop.f32.mrb[0].mxu0
      %v2916 = vadd.f32 0.0, %v2915
      %v2917 = vpop.f32.mrb[0].mxu0
      %2918 = vmatprep.mubr.bf16.mxu0 0
      %2919 = vmatmul.mubr.bf16.gmra.mrb[0].mxu0 %v2758
      %v2920 = vpop.f32.mrb[0].mxu0
      %v2921 = vadd.f32 0.0, %v2920
      %v2922 = vpop.f32.mrb[0].mxu0
      %v2923 = vpop.f32.mrb[0].mxu0
      %v2924 = vadd.f32 0.0, %v2923
      %v2925 = vpop.f32.mrb[0].mxu0
      %2926 = vmatprep.mubr.bf16.mxu0 0
      %2927 = vmatmul.mubr.bf16.gmra.mrb[0].mxu0 %v2761
      %v2928 = vpop.f32.mrb[0].mxu0
      %v2929 = vadd.f32 0.0, %v2928
      %v2930 = vpop.f32.mrb[0].mxu0
      %v2931 = vpop.f32.mrb[0].mxu0
      %v2932 = vadd.f32 0.0, %v2931
      %v2933 = vpop.f32.mrb[0].mxu0
      %2934 = vmatprep.mubr.bf16.mxu0 0
      %2935 = vmatmul.mubr.bf16.gmra.mrb[0].mxu0 %v2764
      %v2936 = vpop.f32.mrb[0].mxu0
      %v2937 = vadd.f32 0.0, %v2936
      %v2938 = vpop.f32.mrb[0].mxu0
      %v2939 = vpop.f32.mrb[0].mxu0
      %v2940 = vadd.f32 0.0, %v2939
      %v2941 = vpop.f32.mrb[0].mxu0
      %2942 = vdwg.mxu0
      %v2943 = vadd.f32 %v2568, %v2801
      %v2944 = vadd.f32 %v2569, %v2804
      %v2945 = vadd.f32 %v2570, %v2809
      %v2946 = vadd.f32 %v2571, %v2812
      %v2947 = vadd.f32 %v2572, %v2817
      %v2948 = vadd.f32 %v2573, %v2820
      %v2949 = vadd.f32 %v2574, %v2825
      %v2950 = vadd.f32 %v2575, %v2828
      %v2951 = vadd.f32 %v2576, %v2833
      %v2952 = vadd.f32 %v2577, %v2836
      %v2953 = vadd.f32 %v2578, %v2841
      %v2954 = vadd.f32 %v2579, %v2844
      %v2955 = vadd.f32 %v2580, %v2849
      %v2956 = vadd.f32 %v2581, %v2852
      %v2957 = vadd.f32 %v2582, %v2857
      %v2958 = vadd.f32 %v2583, %v2860
      %v2959 = vadd.f32 %v2584, %v2865
      %v2960 = vadd.f32 %v2585, %v2868
      %v2961 = vadd.f32 %v2586, %v2873
      %v2962 = vadd.f32 %v2587, %v2876
      %v2963 = vadd.f32 %v2588, %v2881
      %v2964 = vadd.f32 %v2589, %v2884
      %v2965 = vadd.f32 %v2590, %v2889
      %v2966 = vadd.f32 %v2591, %v2892
      %v2967 = vadd.f32 %v2592, %v2897
      %v2968 = vadd.f32 %v2593, %v2900
      %v2969 = vadd.f32 %v2594, %v2905
      %v2970 = vadd.f32 %v2595, %v2908
      %v2971 = vadd.f32 %v2596, %v2913
      %v2972 = vadd.f32 %v2597, %v2916
      %v2973 = vadd.f32 %v2598, %v2921
      %v2974 = vadd.f32 %v2599, %v2924
      %v2975 = vadd.f32 %v2600, %v2929
      %v2976 = vadd.f32 %v2601, %v2932
      %v2977 = vadd.f32 %v2602, %v2937
      %v2978 = vadd.f32 %v2603, %v2940
      %s2979 = scalar_lea.vmem %s6, 120
      %v2980 = vld [vmem:[%s2979] sm:$0xf]
      %v2981 = vld [vmem:[%s2979 + $0x4] sm:$0xf]
      %v2982 = vld [vmem:[%s2979 + $0x8] sm:$0xf]
      %v2983 = vld [vmem:[%s2979 + $0xc] sm:$0xf]
      %v2984 = vld [vmem:[%s2979 + $0x10] sm:$0xf]
      %v2985 = vld [vmem:[%s2979 + $0x14] sm:$0xf]
      %vm2987 = vcmask 1045504
      %v2988 = vrot.slane %v1356, 2
      %v2989 = vrot.slane %v1357, 2
      %v2990 = vsel %vm2987, %v2988, %v2989
      %v2991 = vrot.slane %v1358, 2
      %v2992 = vsel %vm2987, %v2989, %v2991
      %v2993 = vrot.slane %v1359, 2
      %v2994 = vsel %vm2987, %v2991, %v2993
      %v2995 = vrot.slane %v1360, 2
      %v2996 = vsel %vm2987, %v2993, %v2995
      %v2997 = vrot.slane %v1361, 2
      %v2998 = vsel %vm2987, %v2995, %v2997
      %v2999 = vrot.slane %v1362, 2
      %v3000 = vsel %vm2987, %v2997, %v2999
      %v3001 = vrot.slane %v1363, 2
      %v3002 = vsel %vm2987, %v2999, %v3001
      %v3003 = vrot.slane %v1364, 2
      %v3004 = vsel %vm2987, %v3001, %v3003
      %v3005 = vrot.slane %v1365, 2
      %v3006 = vsel %vm2987, %v3003, %v3005
      %v3007 = vrot.slane %v1366, 2
      %v3008 = vsel %vm2987, %v3005, %v3007
      %v3009 = vrot.slane %v1367, 2
      %v3010 = vsel %vm2987, %v3007, %v3009
      %v3011 = vrot.slane %v1368, 2
      %v3012 = vsel %vm2987, %v3009, %v3011
      %v3013 = vrot.slane %v1369, 2
      %v3014 = vsel %vm2987, %v3011, %v3013
      %v3015 = vrot.slane %v1370, 2
      %v3016 = vsel %vm2987, %v3013, %v3015
      %v3017 = vrot.slane %v1371, 2
      %v3018 = vsel %vm2987, %v3015, %v3017
      %v3019 = vrot.slane %v1372, 2
      %v3020 = vsel %vm2987, %v3017, %v3019
      %v3021 = vrot.slane %v2356, 2
      %v3022 = vsel %vm2987, %v3019, %v3021
      %v3023 = vrot.slane %v2604, 2
      %v3024 = vsel %vm2987, %v3021, %v3023
      %v3031 = vunpack.c.l.b16 %v2980
      %v3032 = vunpack.c.l.b16 %v2981
      %v3033 = vunpack.c.l.b16 %v2982
      %v3034 = vunpack.c.l.b16 %v2983
      %v3035 = vunpack.c.l.b16 %v2984
      %v3036 = vunpack.c.l.b16 %v2985
      %v3037 = vpack.c.b16 %v3032, %v3031
      %v3038 = vpack.c.b16 %v3034, %v3033
      %v3039 = vpack.c.b16 %v3036, %v3035
      %v3044 = vsel %vm656, %v2990, 0
      %v3047 = vsel %vm656, %v2992, 0
      %v3050 = vsel %vm656, %v2994, 0
      %v3053 = vsel %vm656, %v2996, 0
      %v3056 = vsel %vm656, %v2998, 0
      %v3059 = vsel %vm656, %v3000, 0
      %v3062 = vsel %vm656, %v3002, 0
      %v3065 = vsel %vm656, %v3004, 0
      %v3068 = vsel %vm656, %v3006, 0
      %v3071 = vsel %vm656, %v3008, 0
      %v3074 = vsel %vm656, %v3010, 0
      %v3077 = vsel %vm656, %v3012, 0
      %v3080 = vsel %vm656, %v3014, 0
      %v3083 = vsel %vm656, %v3016, 0
      %v3086 = vsel %vm656, %v3018, 0
      %v3089 = vsel %vm656, %v3020, 0
      %v3092 = vsel %vm656, %v3022, 0
      %v3095 = vsel %vm656, %v3024, 0
      %3097 = vmatprep.subr.bf16.mxu0 0
      %3098 = vmatpush1.bf16.msra.mxu0 %v3037
      %3099 = vmatprep.subr.bf16.mxu0 0
      %3100 = vmatpush1.bf16.msra.mxu0 %v3038
      %3101 = vmatprep.subr.bf16.mxu0 0
      %3102 = vmatpush1.bf16.msra.mxu0 %v3039
      %3103 = vmatprep.subr.bf16.mxu0 0
      %3104 = vmatpush1.bf16.msra.mxu0 0
      %3105 = vmatprep.subr.bf16.mxu0 0
      %3106 = vmatpush1.bf16.msra.mxu0 0
      %3107 = vmatprep.subr.bf16.mxu0 0
      %3108 = vmatpush1.bf16.msra.mxu0 0
      %3109 = vmatprep.subr.bf16.mxu0 0
      %3110 = vmatpush1.bf16.msra.mxu0 0
      %3111 = vmatprep.subr.bf16.mxu0 0
      %3112 = vmatpush1.bf16.msra.mxu0 0
      %3113 = vmatprep.subr.bf16.mxu0 0
      %3114 = vmatpush1.bf16.msra.mxu0 0
      %3115 = vmatprep.subr.bf16.mxu0 0
      %3116 = vmatpush1.bf16.msra.mxu0 0
      %3117 = vmatprep.subr.bf16.mxu0 0
      %3118 = vmatpush1.bf16.msra.mxu0 0
      %3119 = vmatprep.subr.bf16.mxu0 0
      %3120 = vmatpush1.bf16.msra.mxu0 0
      %3121 = vmatprep.subr.bf16.mxu0 0
      %3122 = vmatpush1.bf16.msra.mxu0 0
      %3123 = vmatprep.subr.bf16.mxu0 0
      %3124 = vmatpush1.bf16.msra.mxu0 0
      %3125 = vmatprep.subr.bf16.mxu0 0
      %3126 = vmatpush1.bf16.msra.mxu0 0
      %3127 = vmatprep.subr.bf16.mxu0 0
      %3128 = vmatpush1.bf16.msra.mxu0 0
      %3129 = vmatprep.mubr.bf16.mxu0 0
      %3130 = vmatmul.mubr.bf16.gmra.mrb[0].mxu0 %v3044
      %v3131 = vpop.f32.mrb[0].mxu0
      %v3132 = vadd.f32 0.0, %v3131
      %v3133 = vpop.f32.mrb[0].mxu0
      %v3134 = vpop.f32.mrb[0].mxu0
      %v3135 = vadd.f32 0.0, %v3134
      %v3136 = vpop.f32.mrb[0].mxu0
      %3137 = vmatprep.mubr.bf16.mxu0 0
      %3138 = vmatmul.mubr.bf16.gmra.mrb[0].mxu0 %v3047
      %v3139 = vpop.f32.mrb[0].mxu0
      %v3140 = vadd.f32 0.0, %v3139
      %v3141 = vpop.f32.mrb[0].mxu0
      %v3142 = vpop.f32.mrb[0].mxu0
      %v3143 = vadd.f32 0.0, %v3142
      %v3144 = vpop.f32.mrb[0].mxu0
      %3145 = vmatprep.mubr.bf16.mxu0 0
      %3146 = vmatmul.mubr.bf16.gmra.mrb[0].mxu0 %v3050
      %v3147 = vpop.f32.mrb[0].mxu0
      %v3148 = vadd.f32 0.0, %v3147
      %v3149 = vpop.f32.mrb[0].mxu0
      %v3150 = vpop.f32.mrb[0].mxu0
      %v3151 = vadd.f32 0.0, %v3150
      %v3152 = vpop.f32.mrb[0].mxu0
      %3153 = vmatprep.mubr.bf16.mxu0 0
      %3154 = vmatmul.mubr.bf16.gmra.mrb[0].mxu0 %v3053
      %v3155 = vpop.f32.mrb[0].mxu0
      %v3156 = vadd.f32 0.0, %v3155
      %v3157 = vpop.f32.mrb[0].mxu0
      %v3158 = vpop.f32.mrb[0].mxu0
      %v3159 = vadd.f32 0.0, %v3158
      %v3160 = vpop.f32.mrb[0].mxu0
      %3161 = vmatprep.mubr.bf16.mxu0 0
      %3162 = vmatmul.mubr.bf16.gmra.mrb[0].mxu0 %v3056
      %v3163 = vpop.f32.mrb[0].mxu0
      %v3164 = vadd.f32 0.0, %v3163
      %v3165 = vpop.f32.mrb[0].mxu0
      %v3166 = vpop.f32.mrb[0].mxu0
      %v3167 = vadd.f32 0.0, %v3166
      %v3168 = vpop.f32.mrb[0].mxu0
      %3169 = vmatprep.mubr.bf16.mxu0 0
      %3170 = vmatmul.mubr.bf16.gmra.mrb[0].mxu0 %v3059
      %v3171 = vpop.f32.mrb[0].mxu0
      %v3172 = vadd.f32 0.0, %v3171
      %v3173 = vpop.f32.mrb[0].mxu0
      %v3174 = vpop.f32.mrb[0].mxu0
      %v3175 = vadd.f32 0.0, %v3174
      %v3176 = vpop.f32.mrb[0].mxu0
      %3177 = vmatprep.mubr.bf16.mxu0 0
      %3178 = vmatmul.mubr.bf16.gmra.mrb[0].mxu0 %v3062
      %v3179 = vpop.f32.mrb[0].mxu0
      %v3180 = vadd.f32 0.0, %v3179
      %v3181 = vpop.f32.mrb[0].mxu0
      %v3182 = vpop.f32.mrb[0].mxu0
      %v3183 = vadd.f32 0.0, %v3182
      %v3184 = vpop.f32.mrb[0].mxu0
      %3185 = vmatprep.mubr.bf16.mxu0 0
      %3186 = vmatmul.mubr.bf16.gmra.mrb[0].mxu0 %v3065
      %v3187 = vpop.f32.mrb[0].mxu0
      %v3188 = vadd.f32 0.0, %v3187
      %v3189 = vpop.f32.mrb[0].mxu0
      %v3190 = vpop.f32.mrb[0].mxu0
      %v3191 = vadd.f32 0.0, %v3190
      %v3192 = vpop.f32.mrb[0].mxu0
      %3193 = vmatprep.mubr.bf16.mxu0 0
      %3194 = vmatmul.mubr.bf16.gmra.mrb[0].mxu0 %v3068
      %v3195 = vpop.f32.mrb[0].mxu0
      %v3196 = vadd.f32 0.0, %v3195
      %v3197 = vpop.f32.mrb[0].mxu0
      %v3198 = vpop.f32.mrb[0].mxu0
      %v3199 = vadd.f32 0.0, %v3198
      %v3200 = vpop.f32.mrb[0].mxu0
      %3201 = vmatprep.mubr.bf16.mxu0 0
      %3202 = vmatmul.mubr.bf16.gmra.mrb[0].mxu0 %v3071
      %v3203 = vpop.f32.mrb[0].mxu0
      %v3204 = vadd.f32 0.0, %v3203
      %v3205 = vpop.f32.mrb[0].mxu0
      %v3206 = vpop.f32.mrb[0].mxu0
      %v3207 = vadd.f32 0.0, %v3206
      %v3208 = vpop.f32.mrb[0].mxu0
      %3209 = vmatprep.mubr.bf16.mxu0 0
      %3210 = vmatmul.mubr.bf16.gmra.mrb[0].mxu0 %v3074
      %v3211 = vpop.f32.mrb[0].mxu0
      %v3212 = vadd.f32 0.0, %v3211
      %v3213 = vpop.f32.mrb[0].mxu0
      %v3214 = vpop.f32.mrb[0].mxu0
      %v3215 = vadd.f32 0.0, %v3214
      %v3216 = vpop.f32.mrb[0].mxu0
      %3217 = vmatprep.mubr.bf16.mxu0 0
      %3218 = vmatmul.mubr.bf16.gmra.mrb[0].mxu0 %v3077
      %v3219 = vpop.f32.mrb[0].mxu0
      %v3220 = vadd.f32 0.0, %v3219
      %v3221 = vpop.f32.mrb[0].mxu0
      %v3222 = vpop.f32.mrb[0].mxu0
      %v3223 = vadd.f32 0.0, %v3222
      %v3224 = vpop.f32.mrb[0].mxu0
      %3225 = vmatprep.mubr.bf16.mxu0 0
      %3226 = vmatmul.mubr.bf16.gmra.mrb[0].mxu0 %v3080
      %v3227 = vpop.f32.mrb[0].mxu0
      %v3228 = vadd.f32 0.0, %v3227
      %v3229 = vpop.f32.mrb[0].mxu0
      %v3230 = vpop.f32.mrb[0].mxu0
      %v3231 = vadd.f32 0.0, %v3230
      %v3232 = vpop.f32.mrb[0].mxu0
      %3233 = vmatprep.mubr.bf16.mxu0 0
      %3234 = vmatmul.mubr.bf16.gmra.mrb[0].mxu0 %v3083
      %v3235 = vpop.f32.mrb[0].mxu0
      %v3236 = vadd.f32 0.0, %v3235
      %v3237 = vpop.f32.mrb[0].mxu0
      %v3238 = vpop.f32.mrb[0].mxu0
      %v3239 = vadd.f32 0.0, %v3238
      %v3240 = vpop.f32.mrb[0].mxu0
      %3241 = vmatprep.mubr.bf16.mxu0 0
      %3242 = vmatmul.mubr.bf16.gmra.mrb[0].mxu0 %v3086
      %v3243 = vpop.f32.mrb[0].mxu0
      %v3244 = vadd.f32 0.0, %v3243
      %v3245 = vpop.f32.mrb[0].mxu0
      %v3246 = vpop.f32.mrb[0].mxu0
      %v3247 = vadd.f32 0.0, %v3246
      %v3248 = vpop.f32.mrb[0].mxu0
      %3249 = vmatprep.mubr.bf16.mxu0 0
      %3250 = vmatmul.mubr.bf16.gmra.mrb[0].mxu0 %v3089
      %v3251 = vpop.f32.mrb[0].mxu0
      %v3252 = vadd.f32 0.0, %v3251
      %v3253 = vpop.f32.mrb[0].mxu0
      %v3254 = vpop.f32.mrb[0].mxu0
      %v3255 = vadd.f32 0.0, %v3254
      %v3256 = vpop.f32.mrb[0].mxu0
      %3257 = vmatprep.mubr.bf16.mxu0 0
      %3258 = vmatmul.mubr.bf16.gmra.mrb[0].mxu0 %v3092
      %v3259 = vpop.f32.mrb[0].mxu0
      %v3260 = vadd.f32 0.0, %v3259
      %v3261 = vpop.f32.mrb[0].mxu0
      %v3262 = vpop.f32.mrb[0].mxu0
      %v3263 = vadd.f32 0.0, %v3262
      %v3264 = vpop.f32.mrb[0].mxu0
      %3265 = vmatprep.mubr.bf16.mxu0 0
      %3266 = vmatmul.mubr.bf16.gmra.mrb[0].mxu0 %v3095
      %v3267 = vpop.f32.mrb[0].mxu0
      %v3268 = vadd.f32 0.0, %v3267
      %v3269 = vpop.f32.mrb[0].mxu0
      %v3270 = vpop.f32.mrb[0].mxu0
      %v3271 = vadd.f32 0.0, %v3270
      %v3272 = vpop.f32.mrb[0].mxu0
      %3273 = vdwg.mxu0
      %v3274 = vadd.f32 %v2943, %v3132
      %v3275 = vadd.f32 %v2944, %v3135
      %v3276 = vadd.f32 %v2945, %v3140
      %v3277 = vadd.f32 %v2946, %v3143
      %v3278 = vadd.f32 %v2947, %v3148
      %v3279 = vadd.f32 %v2948, %v3151
      %v3280 = vadd.f32 %v2949, %v3156
      %v3281 = vadd.f32 %v2950, %v3159
      %v3282 = vadd.f32 %v2951, %v3164
      %v3283 = vadd.f32 %v2952, %v3167
      %v3284 = vadd.f32 %v2953, %v3172
      %v3285 = vadd.f32 %v2954, %v3175
      %v3286 = vadd.f32 %v2955, %v3180
      %v3287 = vadd.f32 %v2956, %v3183
      %v3288 = vadd.f32 %v2957, %v3188
      %v3289 = vadd.f32 %v2958, %v3191
      %v3290 = vadd.f32 %v2959, %v3196
      %v3291 = vadd.f32 %v2960, %v3199
      %v3292 = vadd.f32 %v2961, %v3204
      %v3293 = vadd.f32 %v2962, %v3207
      %v3294 = vadd.f32 %v2963, %v3212
      %v3295 = vadd.f32 %v2964, %v3215
      %v3296 = vadd.f32 %v2965, %v3220
      %v3297 = vadd.f32 %v2966, %v3223
      %v3298 = vadd.f32 %v2967, %v3228
      %v3299 = vadd.f32 %v2968, %v3231
      %v3300 = vadd.f32 %v2969, %v3236
      %v3301 = vadd.f32 %v2970, %v3239
      %v3302 = vadd.f32 %v2971, %v3244
      %v3303 = vadd.f32 %v2972, %v3247
      %v3304 = vadd.f32 %v2973, %v3252
      %v3305 = vadd.f32 %v2974, %v3255
      %v3306 = vadd.f32 %v2975, %v3260
      %v3307 = vadd.f32 %v2976, %v3263
      %v3308 = vadd.f32 %v2977, %v3268
      %v3309 = vadd.f32 %v2978, %v3271
      %v3310 = vpack.c.bf16 %v1353, %v1352
      %v3311 = vpack.c.bf16 %v1354, %v1354
      %s3312 = scalar_lea.vmem %s6, 144
      %v3313 = vld [vmem:[%s3312] sm:$0xf]
      %v3314 = vld [vmem:[%s3312 + $0x4] sm:$0xf]
      %v3315 = vld [vmem:[%s3312 + $0x8] sm:$0xf]
      %v3316 = vld [vmem:[%s3312 + $0xc] sm:$0xf]
      %v3317 = vld [vmem:[%s3312 + $0x10] sm:$0xf]
      %v3318 = vld [vmem:[%s3312 + $0x14] sm:$0xf]
      %v3321 = vrot.slane %v3310, 2
      %v3322 = vsel %vm2987, %v3021, %v3321
      %v3323 = vrot.slane %v3311, 2
      %v3324 = vsel %vm2987, %v3321, %v3323
      %v3331 = vunpack.c.l.b16 %v3313
      %v3332 = vunpack.c.l.b16 %v3314
      %v3333 = vunpack.c.l.b16 %v3315
      %v3334 = vunpack.c.l.b16 %v3316
      %v3335 = vunpack.c.l.b16 %v3317
      %v3336 = vunpack.c.l.b16 %v3318
      %v3337 = vpack.c.b16 %v3332, %v3331
      %v3338 = vpack.c.b16 %v3334, %v3333
      %v3339 = vpack.c.b16 %v3336, %v3335
      %v3344 = vsel %vm656, %v3322, 0
      %v3347 = vsel %vm656, %v3324, 0
      %3349 = vmatprep.subr.bf16.mxu0 0
      %3350 = vmatpush1.bf16.msra.mxu0 %v3337
      %3351 = vmatprep.subr.bf16.mxu0 0
      %3352 = vmatpush1.bf16.msra.mxu0 %v3338
      %3353 = vmatprep.subr.bf16.mxu0 0
      %3354 = vmatpush1.bf16.msra.mxu0 %v3339
      %3355 = vmatprep.subr.bf16.mxu0 0
      %3356 = vmatpush1.bf16.msra.mxu0 0
      %3357 = vmatprep.subr.bf16.mxu0 0
      %3358 = vmatpush1.bf16.msra.mxu0 0
      %3359 = vmatprep.subr.bf16.mxu0 0
      %3360 = vmatpush1.bf16.msra.mxu0 0
      %3361 = vmatprep.subr.bf16.mxu0 0
      %3362 = vmatpush1.bf16.msra.mxu0 0
      %3363 = vmatprep.subr.bf16.mxu0 0
      %3364 = vmatpush1.bf16.msra.mxu0 0
      %3365 = vmatprep.subr.bf16.mxu0 0
      %3366 = vmatpush1.bf16.msra.mxu0 0
      %3367 = vmatprep.subr.bf16.mxu0 0
      %3368 = vmatpush1.bf16.msra.mxu0 0
      %3369 = vmatprep.subr.bf16.mxu0 0
      %3370 = vmatpush1.bf16.msra.mxu0 0
      %3371 = vmatprep.subr.bf16.mxu0 0
      %3372 = vmatpush1.bf16.msra.mxu0 0
      %3373 = vmatprep.subr.bf16.mxu0 0
      %3374 = vmatpush1.bf16.msra.mxu0 0
      %3375 = vmatprep.subr.bf16.mxu0 0
      %3376 = vmatpush1.bf16.msra.mxu0 0
      %3377 = vmatprep.subr.bf16.mxu0 0
      %3378 = vmatpush1.bf16.msra.mxu0 0
      %3379 = vmatprep.subr.bf16.mxu0 0
      %3380 = vmatpush1.bf16.msra.mxu0 0
      %3381 = vmatprep.mubr.bf16.mxu0 0
      %3382 = vmatmul.mubr.bf16.gmra.mrb[0].mxu0 %v3047
      %v3383 = vpop.f32.mrb[0].mxu0
      %v3384 = vadd.f32 0.0, %v3383
      %v3385 = vpop.f32.mrb[0].mxu0
      %v3386 = vpop.f32.mrb[0].mxu0
      %v3387 = vadd.f32 0.0, %v3386
      %v3388 = vpop.f32.mrb[0].mxu0
      %3389 = vmatprep.mubr.bf16.mxu0 0
      %3390 = vmatmul.mubr.bf16.gmra.mrb[0].mxu0 %v3050
      %v3391 = vpop.f32.mrb[0].mxu0
      %v3392 = vadd.f32 0.0, %v3391
      %v3393 = vpop.f32.mrb[0].mxu0
      %v3394 = vpop.f32.mrb[0].mxu0
      %v3395 = vadd.f32 0.0, %v3394
      %v3396 = vpop.f32.mrb[0].mxu0
      %3397 = vmatprep.mubr.bf16.mxu0 0
      %3398 = vmatmul.mubr.bf16.gmra.mrb[0].mxu0 %v3053
      %v3399 = vpop.f32.mrb[0].mxu0
      %v3400 = vadd.f32 0.0, %v3399
      %v3401 = vpop.f32.mrb[0].mxu0
      %v3402 = vpop.f32.mrb[0].mxu0
      %v3403 = vadd.f32 0.0, %v3402
      %v3404 = vpop.f32.mrb[0].mxu0
      %3405 = vmatprep.mubr.bf16.mxu0 0
      %3406 = vmatmul.mubr.bf16.gmra.mrb[0].mxu0 %v3056
      %v3407 = vpop.f32.mrb[0].mxu0
      %v3408 = vadd.f32 0.0, %v3407
      %v3409 = vpop.f32.mrb[0].mxu0
      %v3410 = vpop.f32.mrb[0].mxu0
      %v3411 = vadd.f32 0.0, %v3410
      %v3412 = vpop.f32.mrb[0].mxu0
      %3413 = vmatprep.mubr.bf16.mxu0 0
      %3414 = vmatmul.mubr.bf16.gmra.mrb[0].mxu0 %v3059
      %v3415 = vpop.f32.mrb[0].mxu0
      %v3416 = vadd.f32 0.0, %v3415
      %v3417 = vpop.f32.mrb[0].mxu0
      %v3418 = vpop.f32.mrb[0].mxu0
      %v3419 = vadd.f32 0.0, %v3418
      %v3420 = vpop.f32.mrb[0].mxu0
      %3421 = vmatprep.mubr.bf16.mxu0 0
      %3422 = vmatmul.mubr.bf16.gmra.mrb[0].mxu0 %v3062
      %v3423 = vpop.f32.mrb[0].mxu0
      %v3424 = vadd.f32 0.0, %v3423
      %v3425 = vpop.f32.mrb[0].mxu0
      %v3426 = vpop.f32.mrb[0].mxu0
      %v3427 = vadd.f32 0.0, %v3426
      %v3428 = vpop.f32.mrb[0].mxu0
      %3429 = vmatprep.mubr.bf16.mxu0 0
      %3430 = vmatmul.mubr.bf16.gmra.mrb[0].mxu0 %v3065
      %v3431 = vpop.f32.mrb[0].mxu0
      %v3432 = vadd.f32 0.0, %v3431
      %v3433 = vpop.f32.mrb[0].mxu0
      %v3434 = vpop.f32.mrb[0].mxu0
      %v3435 = vadd.f32 0.0, %v3434
      %v3436 = vpop.f32.mrb[0].mxu0
      %3437 = vmatprep.mubr.bf16.mxu0 0
      %3438 = vmatmul.mubr.bf16.gmra.mrb[0].mxu0 %v3068
      %v3439 = vpop.f32.mrb[0].mxu0
      %v3440 = vadd.f32 0.0, %v3439
      %v3441 = vpop.f32.mrb[0].mxu0
      %v3442 = vpop.f32.mrb[0].mxu0
      %v3443 = vadd.f32 0.0, %v3442
      %v3444 = vpop.f32.mrb[0].mxu0
      %3445 = vmatprep.mubr.bf16.mxu0 0
      %3446 = vmatmul.mubr.bf16.gmra.mrb[0].mxu0 %v3071
      %v3447 = vpop.f32.mrb[0].mxu0
      %v3448 = vadd.f32 0.0, %v3447
      %v3449 = vpop.f32.mrb[0].mxu0
      %v3450 = vpop.f32.mrb[0].mxu0
      %v3451 = vadd.f32 0.0, %v3450
      %v3452 = vpop.f32.mrb[0].mxu0
      %3453 = vmatprep.mubr.bf16.mxu0 0
      %3454 = vmatmul.mubr.bf16.gmra.mrb[0].mxu0 %v3074
      %v3455 = vpop.f32.mrb[0].mxu0
      %v3456 = vadd.f32 0.0, %v3455
      %v3457 = vpop.f32.mrb[0].mxu0
      %v3458 = vpop.f32.mrb[0].mxu0
      %v3459 = vadd.f32 0.0, %v3458
      %v3460 = vpop.f32.mrb[0].mxu0
      %3461 = vmatprep.mubr.bf16.mxu0 0
      %3462 = vmatmul.mubr.bf16.gmra.mrb[0].mxu0 %v3077
      %v3463 = vpop.f32.mrb[0].mxu0
      %v3464 = vadd.f32 0.0, %v3463
      %v3465 = vpop.f32.mrb[0].mxu0
      %v3466 = vpop.f32.mrb[0].mxu0
      %v3467 = vadd.f32 0.0, %v3466
      %v3468 = vpop.f32.mrb[0].mxu0
      %3469 = vmatprep.mubr.bf16.mxu0 0
      %3470 = vmatmul.mubr.bf16.gmra.mrb[0].mxu0 %v3080
      %v3471 = vpop.f32.mrb[0].mxu0
      %v3472 = vadd.f32 0.0, %v3471
      %v3473 = vpop.f32.mrb[0].mxu0
      %v3474 = vpop.f32.mrb[0].mxu0
      %v3475 = vadd.f32 0.0, %v3474
      %v3476 = vpop.f32.mrb[0].mxu0
      %3477 = vmatprep.mubr.bf16.mxu0 0
      %3478 = vmatmul.mubr.bf16.gmra.mrb[0].mxu0 %v3083
      %v3479 = vpop.f32.mrb[0].mxu0
      %v3480 = vadd.f32 0.0, %v3479
      %v3481 = vpop.f32.mrb[0].mxu0
      %v3482 = vpop.f32.mrb[0].mxu0
      %v3483 = vadd.f32 0.0, %v3482
      %v3484 = vpop.f32.mrb[0].mxu0
      %3485 = vmatprep.mubr.bf16.mxu0 0
      %3486 = vmatmul.mubr.bf16.gmra.mrb[0].mxu0 %v3086
      %v3487 = vpop.f32.mrb[0].mxu0
      %v3488 = vadd.f32 0.0, %v3487
      %v3489 = vpop.f32.mrb[0].mxu0
      %v3490 = vpop.f32.mrb[0].mxu0
      %v3491 = vadd.f32 0.0, %v3490
      %v3492 = vpop.f32.mrb[0].mxu0
      %3493 = vmatprep.mubr.bf16.mxu0 0
      %3494 = vmatmul.mubr.bf16.gmra.mrb[0].mxu0 %v3089
      %v3495 = vpop.f32.mrb[0].mxu0
      %v3496 = vadd.f32 0.0, %v3495
      %v3497 = vpop.f32.mrb[0].mxu0
      %v3498 = vpop.f32.mrb[0].mxu0
      %v3499 = vadd.f32 0.0, %v3498
      %v3500 = vpop.f32.mrb[0].mxu0
      %3501 = vmatprep.mubr.bf16.mxu0 0
      %3502 = vmatmul.mubr.bf16.gmra.mrb[0].mxu0 %v3092
      %v3503 = vpop.f32.mrb[0].mxu0
      %v3504 = vadd.f32 0.0, %v3503
      %v3505 = vpop.f32.mrb[0].mxu0
      %v3506 = vpop.f32.mrb[0].mxu0
      %v3507 = vadd.f32 0.0, %v3506
      %v3508 = vpop.f32.mrb[0].mxu0
      %3509 = vmatprep.mubr.bf16.mxu0 0
      %3510 = vmatmul.mubr.bf16.gmra.mrb[0].mxu0 %v3344
      %v3511 = vpop.f32.mrb[0].mxu0
      %v3512 = vadd.f32 0.0, %v3511
      %v3513 = vpop.f32.mrb[0].mxu0
      %v3514 = vpop.f32.mrb[0].mxu0
      %v3515 = vadd.f32 0.0, %v3514
      %v3516 = vpop.f32.mrb[0].mxu0
      %3517 = vmatprep.mubr.bf16.mxu0 0
      %3518 = vmatmul.mubr.bf16.gmra.mrb[0].mxu0 %v3347
      %v3519 = vpop.f32.mrb[0].mxu0
      %v3520 = vadd.f32 0.0, %v3519
      %v3521 = vpop.f32.mrb[0].mxu0
      %v3522 = vpop.f32.mrb[0].mxu0
      %v3523 = vadd.f32 0.0, %v3522
      %v3524 = vpop.f32.mrb[0].mxu0
      %3525 = vdwg.mxu0
      %v3526 = vadd.f32 %v3274, %v3384
      %v3527 = vadd.f32 %v3275, %v3387
      %v3528 = vadd.f32 %v3276, %v3392
      %v3529 = vadd.f32 %v3277, %v3395
      %v3530 = vadd.f32 %v3278, %v3400
      %v3531 = vadd.f32 %v3279, %v3403
      %v3532 = vadd.f32 %v3280, %v3408
      %v3533 = vadd.f32 %v3281, %v3411
      %v3534 = vadd.f32 %v3282, %v3416
      %v3535 = vadd.f32 %v3283, %v3419
      %v3536 = vadd.f32 %v3284, %v3424
      %v3537 = vadd.f32 %v3285, %v3427
      %v3538 = vadd.f32 %v3286, %v3432
      %v3539 = vadd.f32 %v3287, %v3435
      %v3540 = vadd.f32 %v3288, %v3440
      %v3541 = vadd.f32 %v3289, %v3443
      %v3542 = vadd.f32 %v3290, %v3448
      %v3543 = vadd.f32 %v3291, %v3451
      %v3544 = vadd.f32 %v3292, %v3456
      %v3545 = vadd.f32 %v3293, %v3459
      %v3546 = vadd.f32 %v3294, %v3464
      %v3547 = vadd.f32 %v3295, %v3467
      %v3548 = vadd.f32 %v3296, %v3472
      %v3549 = vadd.f32 %v3297, %v3475
      %v3550 = vadd.f32 %v3298, %v3480
      %v3551 = vadd.f32 %v3299, %v3483
      %v3552 = vadd.f32 %v3300, %v3488
      %v3553 = vadd.f32 %v3301, %v3491
      %v3554 = vadd.f32 %v3302, %v3496
      %v3555 = vadd.f32 %v3303, %v3499
      %v3556 = vadd.f32 %v3304, %v3504
      %v3557 = vadd.f32 %v3305, %v3507
      %v3558 = vadd.f32 %v3306, %v3512
      %v3559 = vadd.f32 %v3307, %v3515
      %v3560 = vadd.f32 %v3308, %v3520
      %v3561 = vadd.f32 %v3309, %v3523
      %s3562 = scalar_lea.vmem %s6, 168
      %v3563 = vld [vmem:[%s3562] sm:$0xf]
      %v3564 = vld [vmem:[%s3562 + $0x4] sm:$0xf]
      %v3565 = vld [vmem:[%s3562 + $0x8] sm:$0xf]
      %v3566 = vld [vmem:[%s3562 + $0xc] sm:$0xf]
      %v3567 = vld [vmem:[%s3562 + $0x10] sm:$0xf]
      %v3568 = vld [vmem:[%s3562 + $0x14] sm:$0xf]
      %vm3569 = vsmask.f32 5376
      %v3570 = vrot.slane %v1407, 2
      %v3571 = vrot.slane %v1403, 3
      %v3572 = vor.u32 %v3570, %v3571
      %v3573 = vrot.slane %v1415, 2
      %v3574 = vrot.slane %v1411, 3
      %v3575 = vor.u32 %v3573, %v3574
      %v3576 = vsel %vm3569, %v3572, %v3575
      %v3577 = vrot.slane %v1423, 2
      %v3578 = vrot.slane %v1419, 3
      %v3579 = vor.u32 %v3577, %v3578
      %v3580 = vsel %vm3569, %v3575, %v3579
      %v3581 = vrot.slane %v1431, 2
      %v3582 = vrot.slane %v1427, 3
      %v3583 = vor.u32 %v3581, %v3582
      %v3584 = vsel %vm3569, %v3579, %v3583
      %v3585 = vrot.slane %v1439, 2
      %v3586 = vrot.slane %v1435, 3
      %v3587 = vor.u32 %v3585, %v3586
      %v3588 = vsel %vm3569, %v3583, %v3587
      %v3589 = vrot.slane %v1447, 2
      %v3590 = vrot.slane %v1443, 3
      %v3591 = vor.u32 %v3589, %v3590
      %v3592 = vsel %vm3569, %v3587, %v3591
      %v3593 = vrot.slane %v1455, 2
      %v3594 = vrot.slane %v1451, 3
      %v3595 = vor.u32 %v3593, %v3594
      %v3596 = vsel %vm3569, %v3591, %v3595
      %v3597 = vrot.slane %v1463, 2
      %v3598 = vrot.slane %v1459, 3
      %v3599 = vor.u32 %v3597, %v3598
      %v3600 = vsel %vm3569, %v3595, %v3599
      %v3601 = vrot.slane %v1471, 2
      %v3602 = vrot.slane %v1467, 3
      %v3603 = vor.u32 %v3601, %v3602
      %v3604 = vsel %vm3569, %v3599, %v3603
      %v3605 = vrot.slane %v1479, 2
      %v3606 = vrot.slane %v1475, 3
      %v3607 = vor.u32 %v3605, %v3606
      %v3608 = vsel %vm3569, %v3603, %v3607
      %v3609 = vrot.slane %v1487, 2
      %v3610 = vrot.slane %v1483, 3
      %v3611 = vor.u32 %v3609, %v3610
      %v3612 = vsel %vm3569, %v3607, %v3611
      %v3613 = vrot.slane %v1495, 2
      %v3614 = vrot.slane %v1491, 3
      %v3615 = vor.u32 %v3613, %v3614
      %v3616 = vsel %vm3569, %v3611, %v3615
      %v3617 = vrot.slane %v1503, 2
      %v3618 = vrot.slane %v1499, 3
      %v3619 = vor.u32 %v3617, %v3618
      %v3620 = vsel %vm3569, %v3615, %v3619
      %v3621 = vrot.slane %v1511, 2
      %v3622 = vrot.slane %v1507, 3
      %v3623 = vor.u32 %v3621, %v3622
      %v3624 = vsel %vm3569, %v3619, %v3623
      %v3625 = vrot.slane %v1519, 2
      %v3626 = vrot.slane %v1515, 3
      %v3627 = vor.u32 %v3625, %v3626
      %v3628 = vsel %vm3569, %v3623, %v3627
      %v3629 = vrot.slane %v1527, 2
      %v3630 = vrot.slane %v1523, 3
      %v3631 = vor.u32 %v3629, %v3630
      %v3632 = vsel %vm3569, %v3627, %v3631
      %v3633 = vrot.slane %v2681, 2
      %v3634 = vrot.slane %v2684, 3
      %v3635 = vor.u32 %v3633, %v3634
      %v3636 = vsel %vm3569, %v3631, %v3635
      %v3638 = vshrl.u32 %v3310, 16
      %v3640 = vrot.slane %v3638, 2
      %v3641 = vshll.u32 %v3310, 16
      %v3643 = vrot.slane %v3641, 3
      %v3644 = vor.u32 %v3640, %v3643
      %v3645 = vsel %vm3569, %v3635, %v3644
      %v3647 = vshrl.u32 %v3311, 16
      %v3649 = vrot.slane %v3647, 2
      %v3650 = vshll.u32 %v3311, 16
      %v3652 = vrot.slane %v3650, 3
      %v3653 = vor.u32 %v3649, %v3652
      %v3654 = vsel %vm3569, %v3644, %v3653
      %v3661 = vunpack.c.l.b16 %v3563
      %v3662 = vunpack.c.l.b16 %v3564
      %v3663 = vunpack.c.l.b16 %v3565
      %v3664 = vunpack.c.l.b16 %v3566
      %v3665 = vunpack.c.l.b16 %v3567
      %v3666 = vunpack.c.l.b16 %v3568
      %v3667 = vpack.c.b16 %v3662, %v3661
      %v3668 = vpack.c.b16 %v3664, %v3663
      %v3669 = vpack.c.b16 %v3666, %v3665
      %v3674 = vsel %vm656, %v3576, 0
      %v3677 = vsel %vm656, %v3580, 0
      %v3680 = vsel %vm656, %v3584, 0
      %v3683 = vsel %vm656, %v3588, 0
      %v3686 = vsel %vm656, %v3592, 0
      %v3689 = vsel %vm656, %v3596, 0
      %v3692 = vsel %vm656, %v3600, 0
      %v3695 = vsel %vm656, %v3604, 0
      %v3698 = vsel %vm656, %v3608, 0
      %v3701 = vsel %vm656, %v3612, 0
      %v3704 = vsel %vm656, %v3616, 0
      %v3707 = vsel %vm656, %v3620, 0
      %v3710 = vsel %vm656, %v3624, 0
      %v3713 = vsel %vm656, %v3628, 0
      %v3716 = vsel %vm656, %v3632, 0
      %v3719 = vsel %vm656, %v3636, 0
      %v3722 = vsel %vm656, %v3645, 0
      %v3725 = vsel %vm656, %v3654, 0
      %3727 = vmatprep.subr.bf16.mxu0 0
      %3728 = vmatpush1.bf16.msra.mxu0 %v3667
      %3729 = vmatprep.subr.bf16.mxu0 0
      %3730 = vmatpush1.bf16.msra.mxu0 %v3668
      %3731 = vmatprep.subr.bf16.mxu0 0
      %3732 = vmatpush1.bf16.msra.mxu0 %v3669
      %3733 = vmatprep.subr.bf16.mxu0 0
      %3734 = vmatpush1.bf16.msra.mxu0 0
      %3735 = vmatprep.subr.bf16.mxu0 0
      %3736 = vmatpush1.bf16.msra.mxu0 0
      %3737 = vmatprep.subr.bf16.mxu0 0
      %3738 = vmatpush1.bf16.msra.mxu0 0
      %3739 = vmatprep.subr.bf16.mxu0 0
      %3740 = vmatpush1.bf16.msra.mxu0 0
      %3741 = vmatprep.subr.bf16.mxu0 0
      %3742 = vmatpush1.bf16.msra.mxu0 0
      %3743 = vmatprep.subr.bf16.mxu0 0
      %3744 = vmatpush1.bf16.msra.mxu0 0
      %3745 = vmatprep.subr.bf16.mxu0 0
      %3746 = vmatpush1.bf16.msra.mxu0 0
      %3747 = vmatprep.subr.bf16.mxu0 0
      %3748 = vmatpush1.bf16.msra.mxu0 0
      %3749 = vmatprep.subr.bf16.mxu0 0
      %3750 = vmatpush1.bf16.msra.mxu0 0
      %3751 = vmatprep.subr.bf16.mxu0 0
      %3752 = vmatpush1.bf16.msra.mxu0 0
      %3753 = vmatprep.subr.bf16.mxu0 0
      %3754 = vmatpush1.bf16.msra.mxu0 0
      %3755 = vmatprep.subr.bf16.mxu0 0
      %3756 = vmatpush1.bf16.msra.mxu0 0
      %3757 = vmatprep.subr.bf16.mxu0 0
      %3758 = vmatpush1.bf16.msra.mxu0 0
      %3759 = vmatprep.mubr.bf16.mxu0 0
      %3760 = vmatmul.mubr.bf16.gmra.mrb[0].mxu0 %v3674
      %v3761 = vpop.f32.mrb[0].mxu0
      %v3762 = vadd.f32 0.0, %v3761
      %v3763 = vpop.f32.mrb[0].mxu0
      %v3764 = vpop.f32.mrb[0].mxu0
      %v3765 = vadd.f32 0.0, %v3764
      %v3766 = vpop.f32.mrb[0].mxu0
      %3767 = vmatprep.mubr.bf16.mxu0 0
      %3768 = vmatmul.mubr.bf16.gmra.mrb[0].mxu0 %v3677
      %v3769 = vpop.f32.mrb[0].mxu0
      %v3770 = vadd.f32 0.0, %v3769
      %v3771 = vpop.f32.mrb[0].mxu0
      %v3772 = vpop.f32.mrb[0].mxu0
      %v3773 = vadd.f32 0.0, %v3772
      %v3774 = vpop.f32.mrb[0].mxu0
      %3775 = vmatprep.mubr.bf16.mxu0 0
      %3776 = vmatmul.mubr.bf16.gmra.mrb[0].mxu0 %v3680
      %v3777 = vpop.f32.mrb[0].mxu0
      %v3778 = vadd.f32 0.0, %v3777
      %v3779 = vpop.f32.mrb[0].mxu0
      %v3780 = vpop.f32.mrb[0].mxu0
      %v3781 = vadd.f32 0.0, %v3780
      %v3782 = vpop.f32.mrb[0].mxu0
      %3783 = vmatprep.mubr.bf16.mxu0 0
      %3784 = vmatmul.mubr.bf16.gmra.mrb[0].mxu0 %v3683
      %v3785 = vpop.f32.mrb[0].mxu0
      %v3786 = vadd.f32 0.0, %v3785
      %v3787 = vpop.f32.mrb[0].mxu0
      %v3788 = vpop.f32.mrb[0].mxu0
      %v3789 = vadd.f32 0.0, %v3788
      %v3790 = vpop.f32.mrb[0].mxu0
      %3791 = vmatprep.mubr.bf16.mxu0 0
      %3792 = vmatmul.mubr.bf16.gmra.mrb[0].mxu0 %v3686
      %v3793 = vpop.f32.mrb[0].mxu0
      %v3794 = vadd.f32 0.0, %v3793
      %v3795 = vpop.f32.mrb[0].mxu0
      %v3796 = vpop.f32.mrb[0].mxu0
      %v3797 = vadd.f32 0.0, %v3796
      %v3798 = vpop.f32.mrb[0].mxu0
      %3799 = vmatprep.mubr.bf16.mxu0 0
      %3800 = vmatmul.mubr.bf16.gmra.mrb[0].mxu0 %v3689
      %v3801 = vpop.f32.mrb[0].mxu0
      %v3802 = vadd.f32 0.0, %v3801
      %v3803 = vpop.f32.mrb[0].mxu0
      %v3804 = vpop.f32.mrb[0].mxu0
      %v3805 = vadd.f32 0.0, %v3804
      %v3806 = vpop.f32.mrb[0].mxu0
      %3807 = vmatprep.mubr.bf16.mxu0 0
      %3808 = vmatmul.mubr.bf16.gmra.mrb[0].mxu0 %v3692
      %v3809 = vpop.f32.mrb[0].mxu0
      %v3810 = vadd.f32 0.0, %v3809
      %v3811 = vpop.f32.mrb[0].mxu0
      %v3812 = vpop.f32.mrb[0].mxu0
      %v3813 = vadd.f32 0.0, %v3812
      %v3814 = vpop.f32.mrb[0].mxu0
      %3815 = vmatprep.mubr.bf16.mxu0 0
      %3816 = vmatmul.mubr.bf16.gmra.mrb[0].mxu0 %v3695
      %v3817 = vpop.f32.mrb[0].mxu0
      %v3818 = vadd.f32 0.0, %v3817
      %v3819 = vpop.f32.mrb[0].mxu0
      %v3820 = vpop.f32.mrb[0].mxu0
      %v3821 = vadd.f32 0.0, %v3820
      %v3822 = vpop.f32.mrb[0].mxu0
      %3823 = vmatprep.mubr.bf16.mxu0 0
      %3824 = vmatmul.mubr.bf16.gmra.mrb[0].mxu0 %v3698
      %v3825 = vpop.f32.mrb[0].mxu0
      %v3826 = vadd.f32 0.0, %v3825
      %v3827 = vpop.f32.mrb[0].mxu0
      %v3828 = vpop.f32.mrb[0].mxu0
      %v3829 = vadd.f32 0.0, %v3828
      %v3830 = vpop.f32.mrb[0].mxu0
      %3831 = vmatprep.mubr.bf16.mxu0 0
      %3832 = vmatmul.mubr.bf16.gmra.mrb[0].mxu0 %v3701
      %v3833 = vpop.f32.mrb[0].mxu0
      %v3834 = vadd.f32 0.0, %v3833
      %v3835 = vpop.f32.mrb[0].mxu0
      %v3836 = vpop.f32.mrb[0].mxu0
      %v3837 = vadd.f32 0.0, %v3836
      %v3838 = vpop.f32.mrb[0].mxu0
      %3839 = vmatprep.mubr.bf16.mxu0 0
      %3840 = vmatmul.mubr.bf16.gmra.mrb[0].mxu0 %v3704
      %v3841 = vpop.f32.mrb[0].mxu0
      %v3842 = vadd.f32 0.0, %v3841
      %v3843 = vpop.f32.mrb[0].mxu0
      %v3844 = vpop.f32.mrb[0].mxu0
      %v3845 = vadd.f32 0.0, %v3844
      %v3846 = vpop.f32.mrb[0].mxu0
      %3847 = vmatprep.mubr.bf16.mxu0 0
      %3848 = vmatmul.mubr.bf16.gmra.mrb[0].mxu0 %v3707
      %v3849 = vpop.f32.mrb[0].mxu0
      %v3850 = vadd.f32 0.0, %v3849
      %v3851 = vpop.f32.mrb[0].mxu0
      %v3852 = vpop.f32.mrb[0].mxu0
      %v3853 = vadd.f32 0.0, %v3852
      %v3854 = vpop.f32.mrb[0].mxu0
      %3855 = vmatprep.mubr.bf16.mxu0 0
      %3856 = vmatmul.mubr.bf16.gmra.mrb[0].mxu0 %v3710
      %v3857 = vpop.f32.mrb[0].mxu0
      %v3858 = vadd.f32 0.0, %v3857
      %v3859 = vpop.f32.mrb[0].mxu0
      %v3860 = vpop.f32.mrb[0].mxu0
      %v3861 = vadd.f32 0.0, %v3860
      %v3862 = vpop.f32.mrb[0].mxu0
      %3863 = vmatprep.mubr.bf16.mxu0 0
      %3864 = vmatmul.mubr.bf16.gmra.mrb[0].mxu0 %v3713
      %v3865 = vpop.f32.mrb[0].mxu0
      %v3866 = vadd.f32 0.0, %v3865
      %v3867 = vpop.f32.mrb[0].mxu0
      %v3868 = vpop.f32.mrb[0].mxu0
      %v3869 = vadd.f32 0.0, %v3868
      %v3870 = vpop.f32.mrb[0].mxu0
      %3871 = vmatprep.mubr.bf16.mxu0 0
      %3872 = vmatmul.mubr.bf16.gmra.mrb[0].mxu0 %v3716
      %v3873 = vpop.f32.mrb[0].mxu0
      %v3874 = vadd.f32 0.0, %v3873
      %v3875 = vpop.f32.mrb[0].mxu0
      %v3876 = vpop.f32.mrb[0].mxu0
      %v3877 = vadd.f32 0.0, %v3876
      %v3878 = vpop.f32.mrb[0].mxu0
      %3879 = vmatprep.mubr.bf16.mxu0 0
      %3880 = vmatmul.mubr.bf16.gmra.mrb[0].mxu0 %v3719
      %v3881 = vpop.f32.mrb[0].mxu0
      %v3882 = vadd.f32 0.0, %v3881
      %v3883 = vpop.f32.mrb[0].mxu0
      %v3884 = vpop.f32.mrb[0].mxu0
      %v3885 = vadd.f32 0.0, %v3884
      %v3886 = vpop.f32.mrb[0].mxu0
      %3887 = vmatprep.mubr.bf16.mxu0 0
      %3888 = vmatmul.mubr.bf16.gmra.mrb[0].mxu0 %v3722
      %v3889 = vpop.f32.mrb[0].mxu0
      %v3890 = vadd.f32 0.0, %v3889
      %v3891 = vpop.f32.mrb[0].mxu0
      %v3892 = vpop.f32.mrb[0].mxu0
      %v3893 = vadd.f32 0.0, %v3892
      %v3894 = vpop.f32.mrb[0].mxu0
      %3895 = vmatprep.mubr.bf16.mxu0 0
      %3896 = vmatmul.mubr.bf16.gmra.mrb[0].mxu0 %v3725
      %v3897 = vpop.f32.mrb[0].mxu0
      %v3898 = vadd.f32 0.0, %v3897
      %v3899 = vpop.f32.mrb[0].mxu0
      %v3900 = vpop.f32.mrb[0].mxu0
      %v3901 = vadd.f32 0.0, %v3900
      %v3902 = vpop.f32.mrb[0].mxu0
      %3903 = vdwg.mxu0
      %v3904 = vadd.f32 %v3526, %v3762
      %v3905 = vadd.f32 %v3527, %v3765
      %v3906 = vadd.f32 %v3528, %v3770
      %v3907 = vadd.f32 %v3529, %v3773
      %v3908 = vadd.f32 %v3530, %v3778
      %v3909 = vadd.f32 %v3531, %v3781
      %v3910 = vadd.f32 %v3532, %v3786
      %v3911 = vadd.f32 %v3533, %v3789
      %v3912 = vadd.f32 %v3534, %v3794
      %v3913 = vadd.f32 %v3535, %v3797
      %v3914 = vadd.f32 %v3536, %v3802
      %v3915 = vadd.f32 %v3537, %v3805
      %v3916 = vadd.f32 %v3538, %v3810
      %v3917 = vadd.f32 %v3539, %v3813
      %v3918 = vadd.f32 %v3540, %v3818
      %v3919 = vadd.f32 %v3541, %v3821
      %v3920 = vadd.f32 %v3542, %v3826
      %v3921 = vadd.f32 %v3543, %v3829
      %v3922 = vadd.f32 %v3544, %v3834
      %v3923 = vadd.f32 %v3545, %v3837
      %v3924 = vadd.f32 %v3546, %v3842
      %v3925 = vadd.f32 %v3547, %v3845
      %v3926 = vadd.f32 %v3548, %v3850
      %v3927 = vadd.f32 %v3549, %v3853
      %v3928 = vadd.f32 %v3550, %v3858
      %v3929 = vadd.f32 %v3551, %v3861
      %v3930 = vadd.f32 %v3552, %v3866
      %v3931 = vadd.f32 %v3553, %v3869
      %v3932 = vadd.f32 %v3554, %v3874
      %v3933 = vadd.f32 %v3555, %v3877
      %v3934 = vadd.f32 %v3556, %v3882
      %v3935 = vadd.f32 %v3557, %v3885
      %v3936 = vadd.f32 %v3558, %v3890
      %v3937 = vadd.f32 %v3559, %v3893
      %v3938 = vadd.f32 %v3560, %v3898
      %v3939 = vadd.f32 %v3561, %v3901
      %s3940 = scalar_lea.vmem %s6, 192
      %v3941 = vld [vmem:[%s3940] sm:$0xf]
      %v3942 = vld [vmem:[%s3940 + $0x4] sm:$0xf]
      %v3943 = vld [vmem:[%s3940 + $0x8] sm:$0xf]
      %v3944 = vld [vmem:[%s3940 + $0xc] sm:$0xf]
      %v3945 = vld [vmem:[%s3940 + $0x10] sm:$0xf]
      %v3946 = vld [vmem:[%s3940 + $0x14] sm:$0xf]
      %vm3947 = vcmask 1044480
      %v3948 = vrot.slane %v1357, 3
      %v3949 = vrot.slane %v1358, 3
      %v3950 = vsel %vm3947, %v3948, %v3949
      %v3951 = vrot.slane %v1359, 3
      %v3952 = vsel %vm3947, %v3949, %v3951
      %v3953 = vrot.slane %v1360, 3
      %v3954 = vsel %vm3947, %v3951, %v3953
      %v3955 = vrot.slane %v1361, 3
      %v3956 = vsel %vm3947, %v3953, %v3955
      %v3957 = vrot.slane %v1362, 3
      %v3958 = vsel %vm3947, %v3955, %v3957
      %v3959 = vrot.slane %v1363, 3
      %v3960 = vsel %vm3947, %v3957, %v3959
      %v3961 = vrot.slane %v1364, 3
      %v3962 = vsel %vm3947, %v3959, %v3961
      %v3963 = vrot.slane %v1365, 3
      %v3964 = vsel %vm3947, %v3961, %v3963
      %v3965 = vrot.slane %v1366, 3
      %v3966 = vsel %vm3947, %v3963, %v3965
      %v3967 = vrot.slane %v1367, 3
      %v3968 = vsel %vm3947, %v3965, %v3967
      %v3969 = vrot.slane %v1368, 3
      %v3970 = vsel %vm3947, %v3967, %v3969
      %v3971 = vrot.slane %v1369, 3
      %v3972 = vsel %vm3947, %v3969, %v3971
      %v3973 = vrot.slane %v1370, 3
      %v3974 = vsel %vm3947, %v3971, %v3973
      %v3975 = vrot.slane %v1371, 3
      %v3976 = vsel %vm3947, %v3973, %v3975
      %v3977 = vrot.slane %v1372, 3
      %v3978 = vsel %vm3947, %v3975, %v3977
      %v3979 = vrot.slane %v2356, 3
      %v3980 = vsel %vm3947, %v3977, %v3979
      %v3981 = vrot.slane %v3310, 3
      %v3982 = vsel %vm3947, %v3979, %v3981
      %v3983 = vrot.slane %v3311, 3
      %v3984 = vsel %vm3947, %v3981, %v3983
      %v3991 = vunpack.c.l.b16 %v3941
      %v3992 = vunpack.c.l.b16 %v3942
      %v3993 = vunpack.c.l.b16 %v3943
      %v3994 = vunpack.c.l.b16 %v3944
      %v3995 = vunpack.c.l.b16 %v3945
      %v3996 = vunpack.c.l.b16 %v3946
      %v3997 = vpack.c.b16 %v3992, %v3991
      %v3998 = vpack.c.b16 %v3994, %v3993
      %v3999 = vpack.c.b16 %v3996, %v3995
      %v4004 = vsel %vm656, %v3950, 0
      %v4007 = vsel %vm656, %v3952, 0
      %v4010 = vsel %vm656, %v3954, 0
      %v4013 = vsel %vm656, %v3956, 0
      %v4016 = vsel %vm656, %v3958, 0
      %v4019 = vsel %vm656, %v3960, 0
      %v4022 = vsel %vm656, %v3962, 0
      %v4025 = vsel %vm656, %v3964, 0
      %v4028 = vsel %vm656, %v3966, 0
      %v4031 = vsel %vm656, %v3968, 0
      %v4034 = vsel %vm656, %v3970, 0
      %v4037 = vsel %vm656, %v3972, 0
      %v4040 = vsel %vm656, %v3974, 0
      %v4043 = vsel %vm656, %v3976, 0
      %v4046 = vsel %vm656, %v3978, 0
      %v4049 = vsel %vm656, %v3980, 0
      %v4052 = vsel %vm656, %v3982, 0
      %v4055 = vsel %vm656, %v3984, 0
      %4057 = vmatprep.subr.bf16.mxu0 0
      %4058 = vmatpush1.bf16.msra.mxu0 %v3997
      %4059 = vmatprep.subr.bf16.mxu0 0
      %4060 = vmatpush1.bf16.msra.mxu0 %v3998
      %4061 = vmatprep.subr.bf16.mxu0 0
      %4062 = vmatpush1.bf16.msra.mxu0 %v3999
      %4063 = vmatprep.subr.bf16.mxu0 0
      %4064 = vmatpush1.bf16.msra.mxu0 0
      %4065 = vmatprep.subr.bf16.mxu0 0
      %4066 = vmatpush1.bf16.msra.mxu0 0
      %4067 = vmatprep.subr.bf16.mxu0 0
      %4068 = vmatpush1.bf16.msra.mxu0 0
      %4069 = vmatprep.subr.bf16.mxu0 0
      %4070 = vmatpush1.bf16.msra.mxu0 0
      %4071 = vmatprep.subr.bf16.mxu0 0
      %4072 = vmatpush1.bf16.msra.mxu0 0
      %4073 = vmatprep.subr.bf16.mxu0 0
      %4074 = vmatpush1.bf16.msra.mxu0 0
      %4075 = vmatprep.subr.bf16.mxu0 0
      %4076 = vmatpush1.bf16.msra.mxu0 0
      %4077 = vmatprep.subr.bf16.mxu0 0
      %4078 = vmatpush1.bf16.msra.mxu0 0
      %4079 = vmatprep.subr.bf16.mxu0 0
      %4080 = vmatpush1.bf16.msra.mxu0 0
      %4081 = vmatprep.subr.bf16.mxu0 0
      %4082 = vmatpush1.bf16.msra.mxu0 0
      %4083 = vmatprep.subr.bf16.mxu0 0
      %4084 = vmatpush1.bf16.msra.mxu0 0
      %4085 = vmatprep.subr.bf16.mxu0 0
      %4086 = vmatpush1.bf16.msra.mxu0 0
      %4087 = vmatprep.subr.bf16.mxu0 0
      %4088 = vmatpush1.bf16.msra.mxu0 0
      %4089 = vmatprep.mubr.bf16.mxu0 0
      %4090 = vmatmul.mubr.bf16.gmra.mrb[0].mxu0 %v4004
      %v4091 = vpop.f32.mrb[0].mxu0
      %v4092 = vadd.f32 0.0, %v4091
      %v4093 = vpop.f32.mrb[0].mxu0
      %v4094 = vpop.f32.mrb[0].mxu0
      %v4095 = vadd.f32 0.0, %v4094
      %v4096 = vpop.f32.mrb[0].mxu0
      %4097 = vmatprep.mubr.bf16.mxu0 0
      %4098 = vmatmul.mubr.bf16.gmra.mrb[0].mxu0 %v4007
      %v4099 = vpop.f32.mrb[0].mxu0
      %v4100 = vadd.f32 0.0, %v4099
      %v4101 = vpop.f32.mrb[0].mxu0
      %v4102 = vpop.f32.mrb[0].mxu0
      %v4103 = vadd.f32 0.0, %v4102
      %v4104 = vpop.f32.mrb[0].mxu0
      %4105 = vmatprep.mubr.bf16.mxu0 0
      %4106 = vmatmul.mubr.bf16.gmra.mrb[0].mxu0 %v4010
      %v4107 = vpop.f32.mrb[0].mxu0
      %v4108 = vadd.f32 0.0, %v4107
      %v4109 = vpop.f32.mrb[0].mxu0
      %v4110 = vpop.f32.mrb[0].mxu0
      %v4111 = vadd.f32 0.0, %v4110
      %v4112 = vpop.f32.mrb[0].mxu0
      %4113 = vmatprep.mubr.bf16.mxu0 0
      %4114 = vmatmul.mubr.bf16.gmra.mrb[0].mxu0 %v4013
      %v4115 = vpop.f32.mrb[0].mxu0
      %v4116 = vadd.f32 0.0, %v4115
      %v4117 = vpop.f32.mrb[0].mxu0
      %v4118 = vpop.f32.mrb[0].mxu0
      %v4119 = vadd.f32 0.0, %v4118
      %v4120 = vpop.f32.mrb[0].mxu0
      %4121 = vmatprep.mubr.bf16.mxu0 0
      %4122 = vmatmul.mubr.bf16.gmra.mrb[0].mxu0 %v4016
      %v4123 = vpop.f32.mrb[0].mxu0
      %v4124 = vadd.f32 0.0, %v4123
      %v4125 = vpop.f32.mrb[0].mxu0
      %v4126 = vpop.f32.mrb[0].mxu0
      %v4127 = vadd.f32 0.0, %v4126
      %v4128 = vpop.f32.mrb[0].mxu0
      %4129 = vmatprep.mubr.bf16.mxu0 0
      %4130 = vmatmul.mubr.bf16.gmra.mrb[0].mxu0 %v4019
      %v4131 = vpop.f32.mrb[0].mxu0
      %v4132 = vadd.f32 0.0, %v4131
      %v4133 = vpop.f32.mrb[0].mxu0
      %v4134 = vpop.f32.mrb[0].mxu0
      %v4135 = vadd.f32 0.0, %v4134
      %v4136 = vpop.f32.mrb[0].mxu0
      %4137 = vmatprep.mubr.bf16.mxu0 0
      %4138 = vmatmul.mubr.bf16.gmra.mrb[0].mxu0 %v4022
      %v4139 = vpop.f32.mrb[0].mxu0
      %v4140 = vadd.f32 0.0, %v4139
      %v4141 = vpop.f32.mrb[0].mxu0
      %v4142 = vpop.f32.mrb[0].mxu0
      %v4143 = vadd.f32 0.0, %v4142
      %v4144 = vpop.f32.mrb[0].mxu0
      %4145 = vmatprep.mubr.bf16.mxu0 0
      %4146 = vmatmul.mubr.bf16.gmra.mrb[0].mxu0 %v4025
      %v4147 = vpop.f32.mrb[0].mxu0
      %v4148 = vadd.f32 0.0, %v4147
      %v4149 = vpop.f32.mrb[0].mxu0
      %v4150 = vpop.f32.mrb[0].mxu0
      %v4151 = vadd.f32 0.0, %v4150
      %v4152 = vpop.f32.mrb[0].mxu0
      %4153 = vmatprep.mubr.bf16.mxu0 0
      %4154 = vmatmul.mubr.bf16.gmra.mrb[0].mxu0 %v4028
      %v4155 = vpop.f32.mrb[0].mxu0
      %v4156 = vadd.f32 0.0, %v4155
      %v4157 = vpop.f32.mrb[0].mxu0
      %v4158 = vpop.f32.mrb[0].mxu0
      %v4159 = vadd.f32 0.0, %v4158
      %v4160 = vpop.f32.mrb[0].mxu0
      %4161 = vmatprep.mubr.bf16.mxu0 0
      %4162 = vmatmul.mubr.bf16.gmra.mrb[0].mxu0 %v4031
      %v4163 = vpop.f32.mrb[0].mxu0
      %v4164 = vadd.f32 0.0, %v4163
      %v4165 = vpop.f32.mrb[0].mxu0
      %v4166 = vpop.f32.mrb[0].mxu0
      %v4167 = vadd.f32 0.0, %v4166
      %v4168 = vpop.f32.mrb[0].mxu0
      %4169 = vmatprep.mubr.bf16.mxu0 0
      %4170 = vmatmul.mubr.bf16.gmra.mrb[0].mxu0 %v4034
      %v4171 = vpop.f32.mrb[0].mxu0
      %v4172 = vadd.f32 0.0, %v4171
      %v4173 = vpop.f32.mrb[0].mxu0
      %v4174 = vpop.f32.mrb[0].mxu0
      %v4175 = vadd.f32 0.0, %v4174
      %v4176 = vpop.f32.mrb[0].mxu0
      %4177 = vmatprep.mubr.bf16.mxu0 0
      %4178 = vmatmul.mubr.bf16.gmra.mrb[0].mxu0 %v4037
      %v4179 = vpop.f32.mrb[0].mxu0
      %v4180 = vadd.f32 0.0, %v4179
      %v4181 = vpop.f32.mrb[0].mxu0
      %v4182 = vpop.f32.mrb[0].mxu0
      %v4183 = vadd.f32 0.0, %v4182
      %v4184 = vpop.f32.mrb[0].mxu0
      %4185 = vmatprep.mubr.bf16.mxu0 0
      %4186 = vmatmul.mubr.bf16.gmra.mrb[0].mxu0 %v4040
      %v4187 = vpop.f32.mrb[0].mxu0
      %v4188 = vadd.f32 0.0, %v4187
      %v4189 = vpop.f32.mrb[0].mxu0
      %v4190 = vpop.f32.mrb[0].mxu0
      %v4191 = vadd.f32 0.0, %v4190
      %v4192 = vpop.f32.mrb[0].mxu0
      %4193 = vmatprep.mubr.bf16.mxu0 0
      %4194 = vmatmul.mubr.bf16.gmra.mrb[0].mxu0 %v4043
      %v4195 = vpop.f32.mrb[0].mxu0
      %v4196 = vadd.f32 0.0, %v4195
      %v4197 = vpop.f32.mrb[0].mxu0
      %v4198 = vpop.f32.mrb[0].mxu0
      %v4199 = vadd.f32 0.0, %v4198
      %v4200 = vpop.f32.mrb[0].mxu0
      %4201 = vmatprep.mubr.bf16.mxu0 0
      %4202 = vmatmul.mubr.bf16.gmra.mrb[0].mxu0 %v4046
      %v4203 = vpop.f32.mrb[0].mxu0
      %v4204 = vadd.f32 0.0, %v4203
      %v4205 = vpop.f32.mrb[0].mxu0
      %v4206 = vpop.f32.mrb[0].mxu0
      %v4207 = vadd.f32 0.0, %v4206
      %v4208 = vpop.f32.mrb[0].mxu0
      %4209 = vmatprep.mubr.bf16.mxu0 0
      %4210 = vmatmul.mubr.bf16.gmra.mrb[0].mxu0 %v4049
      %v4211 = vpop.f32.mrb[0].mxu0
      %v4212 = vadd.f32 0.0, %v4211
      %v4213 = vpop.f32.mrb[0].mxu0
      %v4214 = vpop.f32.mrb[0].mxu0
      %v4215 = vadd.f32 0.0, %v4214
      %v4216 = vpop.f32.mrb[0].mxu0
      %4217 = vmatprep.mubr.bf16.mxu0 0
      %4218 = vmatmul.mubr.bf16.gmra.mrb[0].mxu0 %v4052
      %v4219 = vpop.f32.mrb[0].mxu0
      %v4220 = vadd.f32 0.0, %v4219
      %v4221 = vpop.f32.mrb[0].mxu0
      %v4222 = vpop.f32.mrb[0].mxu0
      %v4223 = vadd.f32 0.0, %v4222
      %v4224 = vpop.f32.mrb[0].mxu0
      %4225 = vmatprep.mubr.bf16.mxu0 0
      %4226 = vmatmul.mubr.bf16.gmra.mrb[0].mxu0 %v4055
      %v4227 = vpop.f32.mrb[0].mxu0
      %v4228 = vadd.f32 0.0, %v4227
      %v4229 = vpop.f32.mrb[0].mxu0
      %v4230 = vpop.f32.mrb[0].mxu0
      %v4231 = vadd.f32 0.0, %v4230
      %v4232 = vpop.f32.mrb[0].mxu0
      %4233 = vdwg.mxu0
      %v4234 = vadd.f32 %v3904, %v4092
      %v4235 = vadd.f32 %v3905, %v4095
      %v4236 = vadd.f32 %v3906, %v4100
      %v4237 = vadd.f32 %v3907, %v4103
      %v4238 = vadd.f32 %v3908, %v4108
      %v4239 = vadd.f32 %v3909, %v4111
      %v4240 = vadd.f32 %v3910, %v4116
      %v4241 = vadd.f32 %v3911, %v4119
      %v4242 = vadd.f32 %v3912, %v4124
      %v4243 = vadd.f32 %v3913, %v4127
      %v4244 = vadd.f32 %v3914, %v4132
      %v4245 = vadd.f32 %v3915, %v4135
      %v4246 = vadd.f32 %v3916, %v4140
      %v4247 = vadd.f32 %v3917, %v4143
      %v4248 = vadd.f32 %v3918, %v4148
      %v4249 = vadd.f32 %v3919, %v4151
      %v4250 = vadd.f32 %v3920, %v4156
      %v4251 = vadd.f32 %v3921, %v4159
      %v4252 = vadd.f32 %v3922, %v4164
      %v4253 = vadd.f32 %v3923, %v4167
      %v4254 = vadd.f32 %v3924, %v4172
      %v4255 = vadd.f32 %v3925, %v4175
      %v4256 = vadd.f32 %v3926, %v4180
      %v4257 = vadd.f32 %v3927, %v4183
      %v4258 = vadd.f32 %v3928, %v4188
      %v4259 = vadd.f32 %v3929, %v4191
      %v4260 = vadd.f32 %v3930, %v4196
      %v4261 = vadd.f32 %v3931, %v4199
      %v4262 = vadd.f32 %v3932, %v4204
      %v4263 = vadd.f32 %v3933, %v4207
      %v4264 = vadd.f32 %v3934, %v4212
      %v4265 = vadd.f32 %v3935, %v4215
      %v4266 = vadd.f32 %v3936, %v4220
      %v4267 = vadd.f32 %v3937, %v4223
      %v4268 = vadd.f32 %v3938, %v4228
      %v4269 = vadd.f32 %v3939, %v4231
      %v4270 = vld [vmem:[%s7] sm:$0x1]
      %v4272 = vlaneseq
      %v4273 = vshrl.u32 %v4272, 7
      %v4274 = vsub.s32 0, %v4273
      %v4275 = vrot.slane %v4270, %v4274
      %v4277 = vadd.f32 %v4234, %v4275
      %v4278 = vadd.f32 %v4235, %v4275
      %v4279 = vadd.f32 %v4236, %v4275
      %v4280 = vadd.f32 %v4237, %v4275
      %v4281 = vadd.f32 %v4238, %v4275
      %v4282 = vadd.f32 %v4239, %v4275
      %v4283 = vadd.f32 %v4240, %v4275
      %v4284 = vadd.f32 %v4241, %v4275
      %v4285 = vadd.f32 %v4242, %v4275
      %v4286 = vadd.f32 %v4243, %v4275
      %v4287 = vadd.f32 %v4244, %v4275
      %v4288 = vadd.f32 %v4245, %v4275
      %v4289 = vadd.f32 %v4246, %v4275
      %v4290 = vadd.f32 %v4247, %v4275
      %v4291 = vadd.f32 %v4248, %v4275
      %v4292 = vadd.f32 %v4249, %v4275
      %v4293 = vadd.f32 %v4250, %v4275
      %v4294 = vadd.f32 %v4251, %v4275
      %v4295 = vadd.f32 %v4252, %v4275
      %v4296 = vadd.f32 %v4253, %v4275
      %v4297 = vadd.f32 %v4254, %v4275
      %v4298 = vadd.f32 %v4255, %v4275
      %v4299 = vadd.f32 %v4256, %v4275
      %v4300 = vadd.f32 %v4257, %v4275
      %v4301 = vadd.f32 %v4258, %v4275
      %v4302 = vadd.f32 %v4259, %v4275
      %v4303 = vadd.f32 %v4260, %v4275
      %v4304 = vadd.f32 %v4261, %v4275
      %v4305 = vadd.f32 %v4262, %v4275
      %v4306 = vadd.f32 %v4263, %v4275
      %v4307 = vadd.f32 %v4264, %v4275
      %v4308 = vadd.f32 %v4265, %v4275
      %v4309 = vadd.f32 %v4266, %v4275
      %v4310 = vadd.f32 %v4267, %v4275
      %v4311 = vadd.f32 %v4268, %v4275
      %v4312 = vadd.f32 %v4269, %v4275
      %vm4313 = vcmask 1044480
      %v4314 = vrot.slane %v1122, 3
      %v4315 = vrot.slane %v1127, 3
      %v4316 = vsel %vm4313, %v4314, %v4315
      %v4317 = vrot.slane %v1132, 3
      %v4318 = vsel %vm4313, %v4315, %v4317
      %v4319 = vrot.slane %v1137, 3
      %v4320 = vsel %vm4313, %v4317, %v4319
      %v4321 = vrot.slane %v1142, 3
      %v4322 = vsel %vm4313, %v4319, %v4321
      %v4323 = vrot.slane %v1147, 3
      %v4324 = vsel %vm4313, %v4321, %v4323
      %v4325 = vrot.slane %v1152, 3
      %v4326 = vsel %vm4313, %v4323, %v4325
      %v4327 = vrot.slane %v1157, 3
      %v4328 = vsel %vm4313, %v4325, %v4327
      %v4329 = vrot.slane %v1162, 3
      %v4330 = vsel %vm4313, %v4327, %v4329
      %v4331 = vrot.slane %v1167, 3
      %v4332 = vsel %vm4313, %v4329, %v4331
      %v4333 = vrot.slane %v1172, 3
      %v4334 = vsel %vm4313, %v4331, %v4333
      %v4335 = vrot.slane %v1177, 3
      %v4336 = vsel %vm4313, %v4333, %v4335
      %v4337 = vrot.slane %v1182, 3
      %v4338 = vsel %vm4313, %v4335, %v4337
      %v4339 = vrot.slane %v1187, 3
      %v4340 = vsel %vm4313, %v4337, %v4339
      %v4341 = vrot.slane %v1192, 3
      %v4342 = vsel %vm4313, %v4339, %v4341
      %v4343 = vrot.slane %v1197, 3
      %v4344 = vsel %vm4313, %v4341, %v4343
      %v4345 = vrot.slane %v1202, 3
      %v4346 = vsel %vm4313, %v4343, %v4345
      %v4347 = vrot.slane %v1207, 3
      %v4348 = vsel %vm4313, %v4345, %v4347
      %v4349 = vrot.slane %v1212, 3
      %v4350 = vsel %vm4313, %v4347, %v4349
      %v4351 = vrot.slane %v1217, 3
      %v4352 = vsel %vm4313, %v4349, %v4351
      %v4353 = vrot.slane %v1222, 3
      %v4354 = vsel %vm4313, %v4351, %v4353
      %v4355 = vrot.slane %v1227, 3
      %v4356 = vsel %vm4313, %v4353, %v4355
      %v4357 = vrot.slane %v1232, 3
      %v4358 = vsel %vm4313, %v4355, %v4357
      %v4359 = vrot.slane %v1237, 3
      %v4360 = vsel %vm4313, %v4357, %v4359
      %v4361 = vrot.slane %v1242, 3
      %v4362 = vsel %vm4313, %v4359, %v4361
      %v4363 = vrot.slane %v1247, 3
      %v4364 = vsel %vm4313, %v4361, %v4363
      %v4365 = vrot.slane %v1252, 3
      %v4366 = vsel %vm4313, %v4363, %v4365
      %v4367 = vrot.slane %v1257, 3
      %v4368 = vsel %vm4313, %v4365, %v4367
      %v4369 = vrot.slane %v1262, 3
      %v4370 = vsel %vm4313, %v4367, %v4369
      %v4371 = vrot.slane %v1267, 3
      %v4372 = vsel %vm4313, %v4369, %v4371
      %v4373 = vrot.slane %v1272, 3
      %v4374 = vsel %vm4313, %v4371, %v4373
      %v4375 = vrot.slane %v1277, 3
      %v4376 = vsel %vm4313, %v4373, %v4375
      %v4377 = vrot.slane %v1282, 3
      %v4378 = vsel %vm4313, %v4375, %v4377
      %v4379 = vrot.slane %v1287, 3
      %v4380 = vsel %vm4313, %v4377, %v4379
      %v4381 = vrot.slane %v1292, 3
      %v4382 = vsel %vm4313, %v4379, %v4381
      %v4383 = vrot.slane %v1297, 3
      %v4384 = vsel %vm4313, %v4381, %v4383
      %v4385 = vrot.slane %v1302, 3
      %v4386 = vsel %vm4313, %v4383, %v4385
      %v4423 = vmul.f32 %v4277, %v4316
      %v4424 = vmul.f32 %v4278, %v4318
      %v4425 = vmul.f32 %v4279, %v4320
      %v4426 = vmul.f32 %v4280, %v4322
      %v4427 = vmul.f32 %v4281, %v4324
      %v4428 = vmul.f32 %v4282, %v4326
      %v4429 = vmul.f32 %v4283, %v4328
      %v4430 = vmul.f32 %v4284, %v4330
      %v4431 = vmul.f32 %v4285, %v4332
      %v4432 = vmul.f32 %v4286, %v4334
      %v4433 = vmul.f32 %v4287, %v4336
      %v4434 = vmul.f32 %v4288, %v4338
      %v4435 = vmul.f32 %v4289, %v4340
      %v4436 = vmul.f32 %v4290, %v4342
      %v4437 = vmul.f32 %v4291, %v4344
      %v4438 = vmul.f32 %v4292, %v4346
      %v4439 = vmul.f32 %v4293, %v4348
      %v4440 = vmul.f32 %v4294, %v4350
      %v4441 = vmul.f32 %v4295, %v4352
      %v4442 = vmul.f32 %v4296, %v4354
      %v4443 = vmul.f32 %v4297, %v4356
      %v4444 = vmul.f32 %v4298, %v4358
      %v4445 = vmul.f32 %v4299, %v4360
      %v4446 = vmul.f32 %v4300, %v4362
      %v4447 = vmul.f32 %v4301, %v4364
      %v4448 = vmul.f32 %v4302, %v4366
      %v4449 = vmul.f32 %v4303, %v4368
      %v4450 = vmul.f32 %v4304, %v4370
      %v4451 = vmul.f32 %v4305, %v4372
      %v4452 = vmul.f32 %v4306, %v4374
      %v4453 = vmul.f32 %v4307, %v4376
      %v4454 = vmul.f32 %v4308, %v4378
      %v4455 = vmul.f32 %v4309, %v4380
      %v4456 = vmul.f32 %v4310, %v4382
      %v4457 = vmul.f32 %v4311, %v4384
      %v4458 = vmul.f32 %v4312, %v4386
      %4459 = vst.msk [vmem:[%s325] sm:$0xff] %vm573, 0.0
      %4460 = vst.msk [vmem:[%s325 + $0x8] sm:$0xff] %vm573, 0.0
      %vm4461 = vcmask 256000
      %4462 = vst.msk [vmem:[%s325 + $0x10] sm:$0x7] %vm4461, 0.0
      %4463 = vst.msk [vmem:[%s325 + $0x13] sm:$0xff] %vm573, %v4423
      %4464 = vst.msk [vmem:[%s325 + $0x1b] sm:$0xff] %vm573, %v4424
      %4465 = vst.msk [vmem:[%s325 + $0x23] sm:$0xff] %vm573, %v4425
      %4466 = vst.msk [vmem:[%s325 + $0x2b] sm:$0xff] %vm573, %v4426
      %4467 = vst.msk [vmem:[%s325 + $0x33] sm:$0xff] %vm573, %v4427
      %4468 = vst.msk [vmem:[%s325 + $0x3b] sm:$0xff] %vm573, %v4428
      %4469 = vst.msk [vmem:[%s325 + $0x43] sm:$0xff] %vm573, %v4429
      %4470 = vst.msk [vmem:[%s325 + $0x4b] sm:$0xff] %vm573, %v4430
      %4471 = vst.msk [vmem:[%s325 + $0x53] sm:$0xff] %vm573, %v4431
      %4472 = vst.msk [vmem:[%s325 + $0x5b] sm:$0xff] %vm573, %v4432
      %4473 = vst.msk [vmem:[%s325 + $0x63] sm:$0xff] %vm573, %v4433
      %4474 = vst.msk [vmem:[%s325 + $0x6b] sm:$0xff] %vm573, %v4434
      %4475 = vst.msk [vmem:[%s325 + $0x73] sm:$0xff] %vm573, %v4435
      %4476 = vst.msk [vmem:[%s325 + $0x7b] sm:$0xff] %vm573, %v4436
      %4477 = vst.msk [vmem:[%s325 + $0x83] sm:$0xff] %vm573, %v4437
      %4478 = vst.msk [vmem:[%s325 + $0x8b] sm:$0xff] %vm573, %v4438
      %4479 = vst.msk [vmem:[%s325 + $0x93] sm:$0xff] %vm573, %v4439
      %4480 = vst.msk [vmem:[%s325 + $0x9b] sm:$0xff] %vm573, %v4440
      %4481 = vst.msk [vmem:[%s325 + $0xa3] sm:$0xff] %vm573, %v4441
      %4482 = vst.msk [vmem:[%s325 + $0xab] sm:$0xff] %vm573, %v4442
      %4483 = vst.msk [vmem:[%s325 + $0xb3] sm:$0xff] %vm573, %v4443
      %4484 = vst.msk [vmem:[%s325 + $0xbb] sm:$0xff] %vm573, %v4444
      %4485 = vst.msk [vmem:[%s325 + $0xc3] sm:$0xff] %vm573, %v4445
      %4486 = vst.msk [vmem:[%s325 + $0xcb] sm:$0xff] %vm573, %v4446
      %4487 = vst.msk [vmem:[%s325 + $0xd3] sm:$0xff] %vm573, %v4447
      %4488 = vst.msk [vmem:[%s325 + $0xdb] sm:$0xff] %vm573, %v4448
      %4489 = vst.msk [vmem:[%s325 + $0xe3] sm:$0xff] %vm573, %v4449
      %4490 = vst.msk [vmem:[%s325 + $0xeb] sm:$0xff] %vm573, %v4450
      %4491 = vst.msk [vmem:[%s325 + $0xf3] sm:$0xff] %vm573, %v4451
      %4492 = vst.msk [vmem:[%s325 + $0xfb] sm:$0xff] %vm573, %v4452
      %4493 = vst.msk [vmem:[%s325 + $0x103] sm:$0xff] %vm573, %v4453
      %4494 = vst.msk [vmem:[%s325 + $0x10b] sm:$0xff] %vm573, %v4454
      %4495 = vst.msk [vmem:[%s325 + $0x113] sm:$0xff] %vm573, %v4455
      %4496 = vst.msk [vmem:[%s325 + $0x11b] sm:$0xff] %vm573, %v4456
      %4497 = vst.msk [vmem:[%s325 + $0x123] sm:$0xff] %vm573, %v4457
      %vm4498 = vcmask 259072
      %4499 = vst.msk [vmem:[%s325 + $0x12b] sm:$0x3f] %vm4498, %v4458
      %4500 = vst.msk [vmem:[%s325 + $0x131] sm:$0xff] %vm573, 0.0
      %4501 = vst.msk [vmem:[%s325 + $0x139] sm:$0xff] %vm573, 0.0
      %4502 = vst.msk [vmem:[%s325 + $0x141] sm:$0x7] %vm4461, 0.0
      %p4503 = scmp.lt.s32.totalorder %s19, 1
      %s4504 = scalar_select %p4503, %s19, 1
      %s4505 = smul.addr %s4504, 41
      %s4506 = smul.addr %s4505, 8
      %s4507 = scalar_lea.vmem %s8, %s4506
      // Predicated region
      $region53: #{up_block_forward.4} parent=51 // pred_check
        %p4508 = pneg %p215
      $region54: #{up_block_forward.4} parent=51 // pred_check_branch
        %4510 = sbr.rel (%p4508) target = $region56
      $region55: #{up_block_forward.4} parent=51 // pred_region
        _
      $region56: #{up_block_forward.4} parent=51 // pred_fallthru
        _
    $region52: #{up_block_forward.4} parent=5 // pred_fallthru
      _
    %p4511 = scmp.le.s32.totalorder 2, %s14
    // Predicated region
    $region57: #{up_block_forward.4} parent=5 // pred_check
      %p4512 = pneg %p4511
    $region58: #{up_block_forward.4} parent=5 // pred_check_branch
      %4514 = sbr.rel (%p4512) target = $region60
    $region59: #{up_block_forward.4} parent=5 // pred_region
      %s4515 = ssub.s32 %s14, 2
      // Predicated region
      $region61: #{up_block_forward.4} parent=59 // pred_check
        %p4516 = pneg %p221
      $region62: #{up_block_forward.4} parent=59 // pred_check_branch
        %4518 = sbr.rel (%p4516) target = $region64
      $region63: #{up_block_forward.4} parent=59 // pred_region
        %p4519 = scmp.lt.s32.totalorder %s20, 1
        %s4520 = scalar_select %p4519, %s20, 1
        %s4521 = smul.addr %s4520, 41
        %s4522 = smul.addr %s4521, 8
        %s4523 = scalar_lea.vmem %s8, %s4522
      $region64: #{up_block_forward.4} parent=59 // pred_fallthru
        _
    $region60: #{up_block_forward.4} parent=5 // pred_fallthru
      _
  $region6: #{up_block_forward.4} parent=0 // loop_footer
    %s18 = sadd.s32 1, %s14
  $region7: #{up_block_forward.4} parent=0 // loop_footer_branch
    %13 = sbr.rel target = $region3
  $region8: #{up_block_forward.4} parent=0 // loop_exit
    _

</llo_original>
